<compile_context>
chip_gen: v7x
topology: tpu7x:2x2x1
jax: 0.10.0
libtpu: 0.0.40
codegen_flags: <defaults>
</compile_context>

<pallas_src>
import math
import numpy as np
import jax
import jax.numpy as jnp
from jax.experimental import pallas as pl
from jax.experimental.pallas import tpu as pltpu


def _make_kernel(B, H, W, Cin, width, scale, red, compute_dtype=jnp.bfloat16):
    N = B * H * W
    HW = H * W
    EPS = 1e-5
    # 3x3 tap (kh, kw) reads the input at spatial offset (kh-1, kw-1), i.e. at
    # flat column n + sh with sh = (kh-1)*W + (kw-1).
    TAP_SHIFT = [(kh - 1) * W + (kw - 1) for kh in range(3) for kw in range(3)]

    def kernel(x_ref, valid_ref, pool_ref,
               w1_ref, g1_ref, b1_ref, wconv_ref, gm_ref, bm_ref,
               fc1w_ref, fc1b_ref, fc2w_ref, fc2b_ref,
               g2_ref, b2_ref, w3_ref, g3_ref, b3_ref, o_ref):

        def mm(a, b):
            # MXU matmul in compute_dtype (bf16-native on v5e/v6e/v7x), f32 acc.
            return jnp.dot(a.astype(compute_dtype), b.astype(compute_dtype),
                           preferred_element_type=jnp.float32)

        def bn(v, gamma, beta):
            # nn.BatchNorm2d training mode (biased batch statistics), folded
            # into a single per-channel multiply-add.  Stats stay f32; the
            # variance is two-pass (centered) for fidelity.
            mu = jnp.mean(v, axis=1, keepdims=True)
            var = jnp.mean(jnp.square(v - mu), axis=1, keepdims=True)
            s = gamma * jax.lax.rsqrt(var + EPS)
            return v * s + (beta - mu * s)

        def relu(v):
            return jnp.maximum(v, 0.0)

        def sigmoid(v):
            return pl.reciprocal(1.0 + jnp.exp(-v), approx=True)

        x = x_ref[...]                                  # (Cin, N) f32
        xc = x.astype(compute_dtype)                    # cast once for conv1
        valid = valid_ref[...]                          # (9, 1, N), read once

        # ---- conv1 (1x1) + bn1 + relu, then hierarchical 3x3 convs + BN ----
        # conv1/bn1 are applied per width-chunk (per-channel BN stats make the
        # chunks independent), keeping every slab sublane-aligned.
        sp_chunks = []
        sp_prev = None
        for i in range(scale):
            t_i = relu(bn(mm(w1_ref[i], xc), g1_ref[i], b1_ref[i]))  # (width, N)
            sp_in = t_i if i == 0 else sp_prev + t_i
            wc = wconv_ref[i]                           # (9, width, width)
            acc = mm(wc[4], sp_in)                      # centre tap: no shift
            for k in range(9):
                if k == 4:
                    continue
                sh = TAP_SHIFT[k]
                # Lane rotation (XLU) + boundary mask == zero-padded row shift:
                # every wrapped column is zeroed by `valid`.
                tap = pltpu.roll(sp_in, (-sh) % N, axis=1) * valid[k]
                acc = acc + mm(wc[k], tap)
            sp_i = bn(acc, gm_ref[i], bm_ref[i])        # (width, N), no relu
            sp_prev = sp_i
            sp_chunks.append(sp_i)

        # ---- SPR attention: global + 2x2 adaptive avg pool as one matmul ----
        P = pool_ref[...]                               # (N, 5B)
        fc2b = fc2b_ref[...]                            # (width, 1)
        attn_cols = []                                  # [i][b] -> (width, 1)
        for i in range(scale):
            pooled = mm(sp_chunks[i], P)                # (width, 5B) f32
            hid = []
            for r in range(red):                        # red = width//reduction
                m = pooled * fc1w_ref[r]                # (width, 5B), VPU
                csum = jnp.sum(m, axis=0, keepdims=True)             # (1, 5B)
                h = csum[:, 0:B]
                for k in range(1, 5):
                    h = h + csum[:, k * B:(k + 1) * B]
                hid.append(relu(h + fc1b_ref[:, r:r + 1]))           # (1, B)
            cols = []
            for b in range(B):
                a = fc2b
                for r in range(red):
                    a = a + hid[r][:, b:b + 1] * fc2w_ref[:, r:r + 1]
                cols.append(sigmoid(a))                 # (width, 1)
            attn_cols.append(cols)

        # ---- softmax over the scale dimension, per (batch, channel) ---------
        w_cols = [[None] * B for _ in range(scale)]
        for b in range(B):
            m = attn_cols[0][b]
            for i in range(1, scale):
                m = jnp.maximum(m, attn_cols[i][b])
            es = [jnp.exp(attn_cols[i][b] - m) for i in range(scale)]
            den = es[0]
            for e in es[1:]:
                den = den + e
            inv = pl.reciprocal(den, approx=True)
            for i in range(scale):
                w_cols[i][b] = es[i] * inv

        # ---- reweight (per-batch lane blocks) + bn2 + relu + conv3 (1x1) ----
        out3 = None
        for i in range(scale):
            blocks = [sp_chunks[i][:, b * HW:(b + 1) * HW] * w_cols[i][b]
                      for b in range(B)]                # lane-aligned 256-wide
            wsp = jnp.concatenate(blocks, axis=1)       # (width, N)
            y = relu(bn(wsp, g2_ref[i], b2_ref[i]))
            part = mm(w3_ref[i], y)                     # (Cin, N)
            out3 = part if out3 is None else out3 + part

        # ---- bn3 + residual + relu; lane-dense (Cin, N=512) store -----------
        o_ref[...] = relu(bn(out3, g3_ref[...], b3_ref[...]) + x)

    return kernel


def _make_aux(B, H, W):
    """Host-side constants: per-tap conv validity (9, 1, N) and the SPR pooling
    matrix (N, 5B) that implements global + 2x2 adaptive average pooling as a
    single MXU matmul.  Both are per-position only (no per-channel copies)."""
    N, HW = B * H * W, H * W
    H2, W2 = H // 2, W // 2
    n = np.arange(N)
    b = n // HW
    h = (n // W) % H
    w = n % W

    valid = np.zeros((9, 1, N), np.float32)
    for kh in range(3):
        for kw in range(3):
            dh, dw = kh - 1, kw - 1
            ok = (h + dh >= 0) & (h + dh < H) & (w + dw >= 0) & (w + dw < W)
            valid[kh * 3 + kw, 0] = ok

    # Column k*B + b: k = 0 -> global avg pool of batch b; k = 1..4 -> quadrant
    # q = k-1 (q = 2*qi + qj) of the 2x2 adaptive average pool of batch b.
    pool = np.zeros((N, 5 * B), np.float32)
    for bb in range(B):
        pool[:, bb] = (b == bb) / HW
        for qi in range(2):
            for qj in range(2):
                q = 2 * qi + qj
                msk = ((b == bb) & (h >= qi * H2) & (h < (qi + 1) * H2) &
                       (w >= qj * W2) & (w < (qj + 1) * W2))
                pool[:, (1 + q) * B + bb] = msk / (H2 * W2)
    return jnp.asarray(valid), jnp.asarray(pool)


def init_params(key, inplanes, base_width=30, scale=3, reduction=16):
    """Deterministic synthetic parameters, generated in PyTorch layouts and
    repacked into the kernel's channels-first packed layouts."""
    width = int(math.floor(inplanes * (base_width / 64.0)))
    red = width // reduction
    assert red >= 1, "need floor(inplanes*baseWidth/64) >= reduction"
    ks = jax.random.split(key, 15)

    def nrm(k, shape, s=0.1):
        return (s * jax.random.normal(k, shape)).astype(jnp.float32)

    conv1_w = nrm(ks[0], (width * scale, inplanes))       # conv1x1 (O, I)
    bn1_g = 1.0 + nrm(ks[1], (width * scale,))
    bn1_b = nrm(ks[2], (width * scale,))
    convs_w = nrm(ks[3], (scale, width, width, 3, 3))     # per-scale conv3x3 OIHW
    bnm_g = 1.0 + nrm(ks[4], (scale, width))
    bnm_b = nrm(ks[5], (scale, width))
    fc1_w = nrm(ks[6], (red, width * 5))                  # SPR fc1 (O, I), bias
    fc1_b = nrm(ks[7], (red,))
    fc2_w = nrm(ks[8], (width, red))                      # SPR fc2 (O, I), bias
    fc2_b = nrm(ks[9], (width,))
    bn2_g = 1.0 + nrm(ks[10], (width * scale,))
    bn2_b = nrm(ks[11], (width * scale,))
    conv3_w = nrm(ks[12], (inplanes, width * scale))      # conv1x1 (O, I)
    bn3_g = 1.0 + nrm(ks[13], (inplanes,))
    bn3_b = nrm(ks[14], (inplanes,))

    # Channels-first kernel layouts.
    w1 = conv1_w.reshape(scale, width, inplanes)                       # [i,o,cin]
    wconv = jnp.transpose(convs_w, (0, 3, 4, 1, 2)).reshape(scale, 9, width, width)
    w3 = jnp.transpose(conv3_w.reshape(inplanes, scale, width), (1, 0, 2))

    # SPR fc1 input ordering in torch: [gap channels] ++ [width + 4*c + q].
    # Repack to [r, c, k] with k = 0 (gap), k = 1..4 (quadrant q = k-1).
    jidx = np.zeros((width, 5), np.int32)
    jidx[:, 0] = np.arange(width)
    for k in range(1, 5):
        jidx[:, k] = width + 4 * np.arange(width) + (k - 1)
    fc1w = fc1_w[:, jnp.asarray(jidx)]                                 # (red, width, 5)

    return dict(
        w1=w1, g1=bn1_g.reshape(scale, width, 1), b1=bn1_b.reshape(scale, width, 1),
        wconv=wconv,
        gm=bnm_g.reshape(scale, width, 1), bm=bnm_b.reshape(scale, width, 1),
        fc1w=fc1w, fc1b=fc1_b.reshape(1, red),
        fc2w=fc2_w, fc2b=fc2_b.reshape(width, 1),
        g2=bn2_g.reshape(scale, width, 1), b2=bn2_b.reshape(scale, width, 1),
        w3=w3, g3=bn3_g.reshape(inplanes, 1), b3=bn3_b.reshape(inplanes, 1),
    )


def mspa_block_forward(x_nchw, params, compute_dtype=jnp.bfloat16):
    """Fused MSPABlock forward.  Matmul inputs are cast to `compute_dtype`
    (default bf16: MXU-native on v5e/v6e/v7x); accumulation, BatchNorm
    statistics and all element-wise math stay float32.  Pass
    compute_dtype=jnp.float32 for exact-fidelity matmuls."""
    B, Cin, H, W = x_nchw.shape
    scale, width = params["gm"].shape[0], params["gm"].shape[1]
    red = params["fc1w"].shape[0]
    assert H % 2 == 0 and W % 2 == 0, "AdaptiveAvgPool2d(2) needs even H, W"
    N = B * H * W
    cd = compute_dtype

    # channels-first, spatial-flattened: (Cin, N) with n = (b*H + h)*W + w.
    x_cn = jnp.transpose(x_nchw, (1, 0, 2, 3)).reshape(Cin, N).astype(jnp.float32)
    valid, pool = _make_aux(B, H, W)

    # fc1 weight expanded over the batch columns of the pooled (width, 5B) slab.
    fc1w = params["fc1w"]                                              # (red, width, 5)
    G = jnp.broadcast_to(fc1w[:, :, :, None],
                         (red, width, 5, B)).reshape(red, width, 5 * B)

    args = (x_cn, valid, pool.astype(cd),
            params["w1"].astype(cd), params["g1"], params["b1"],
            params["wconv"].astype(cd), params["gm"], params["bm"],
            G, params["fc1b"], params["fc2w"], params["fc2b"],
            params["g2"], params["b2"],
            params["w3"].astype(cd), params["g3"], params["b3"])

    kernel = _make_kernel(B, H, W, Cin, width, scale, red, cd)
    vspec = pl.BlockSpec(memory_space=pltpu.MemorySpace.VMEM)

    # Single fused invocation: training-mode BatchNorm statistics couple all
    # B*H*W positions, so the activations stay VMEM-resident at this size.
    # TODO(synk): for production H,W (and both v7x TensorCores) split BN into a
    # stats pass + normalize pass and tile N over a parallel grid with halo'd
    # input BlockSpecs, budgeting VMEM per generation via pltpu.get_tpu_info().
    out_cn = pl.pallas_call(
        kernel,
        out_shape=jax.ShapeDtypeStruct((Cin, N), jnp.float32),
        in_specs=[vspec] * len(args),
        out_specs=vspec,
        input_output_aliases={0: 0},
    )(*args)
    return out_cn.reshape(Cin, B, H, W).transpose(1, 0, 2, 3)


if __name__ == "__main__":
    key = jax.random.PRNGKey(0)
    kx, kp = jax.random.split(key)
    # inplanes=64 -> width = floor(64*30/64) = 30, scale = 3, SPR bottleneck = 1
    B, Cin, H, W = 2, 64, 16, 16
    x = jax.random.normal(kx, (B, Cin, H, W), dtype=jnp.float32)
    params = init_params(kp, Cin, base_width=30, scale=3)
    out = mspa_block_forward(x, params)       # bf16 MXU inputs, f32 stats/accum
    out = jax.block_until_ready(out)
    assert out.shape == (B, Cin, H, W)
    assert bool(jnp.all(jnp.isfinite(out)))
    print("KERNEL_OK")
</pallas_src>

<mosaic_0001>
module attributes {stable_mosaic.version = 11 : i64} {
  func.func @kernel(%arg0: memref<64x512xf32, #tpu.memory_space<vmem>>, %arg1: memref<9x1x512xf32, #tpu.memory_space<vmem>>, %arg2: memref<512x10xbf16, #tpu.memory_space<vmem>>, %arg3: memref<3x30x64xbf16, #tpu.memory_space<vmem>>, %arg4: memref<3x30x1xf32, #tpu.memory_space<vmem>>, %arg5: memref<3x30x1xf32, #tpu.memory_space<vmem>>, %arg6: memref<3x9x30x30xbf16, #tpu.memory_space<vmem>>, %arg7: memref<3x30x1xf32, #tpu.memory_space<vmem>>, %arg8: memref<3x30x1xf32, #tpu.memory_space<vmem>>, %arg9: memref<1x30x10xf32, #tpu.memory_space<vmem>>, %arg10: memref<1x1xf32, #tpu.memory_space<vmem>>, %arg11: memref<30x1xf32, #tpu.memory_space<vmem>>, %arg12: memref<30x1xf32, #tpu.memory_space<vmem>>, %arg13: memref<3x30x1xf32, #tpu.memory_space<vmem>>, %arg14: memref<3x30x1xf32, #tpu.memory_space<vmem>>, %arg15: memref<3x64x30xbf16, #tpu.memory_space<vmem>>, %arg16: memref<64x1xf32, #tpu.memory_space<vmem>>, %arg17: memref<64x1xf32, #tpu.memory_space<vmem>>, %arg18: memref<64x512xf32, #tpu.memory_space<vmem>>) attributes {dimension_semantics = [], scalar_prefetch = 0 : i64, scratch_operands = 0 : i64, tpu.core_type = #tpu.core_type<tc>} {
    %c0 = arith.constant 0 : index
    %c0_0 = arith.constant 0 : index
    %0 = vector.load %arg0[%c0, %c0_0] : memref<64x512xf32, #tpu.memory_space<vmem>>, vector<64x512xf32>
    %1 = arith.truncf %0 : vector<64x512xf32> to vector<64x512xbf16>
    %c0_1 = arith.constant 0 : index
    %c0_2 = arith.constant 0 : index
    %c0_3 = arith.constant 0 : index
    %2 = vector.load %arg1[%c0_1, %c0_2, %c0_3] : memref<9x1x512xf32, #tpu.memory_space<vmem>>, vector<9x1x512xf32>
    %c0_4 = arith.constant 0 : index
    %c0_5 = arith.constant 0 : index
    %c0_6 = arith.constant 0 : index
    %3 = vector.load %arg3[%c0_4, %c0_5, %c0_6] : memref<3x30x64xbf16, #tpu.memory_space<vmem>>, vector<1x30x64xbf16>
    %4 = vector.shape_cast %3 : vector<1x30x64xbf16> to vector<30x64xbf16>
    %cst = arith.constant dense<0.000000e+00> : vector<30x512xf32>
    %5 = tpu.matmul %4, %1, %cst {dimension_numbers = #tpu.dot_dimension_numbers<[1], [0], [0], [1], [0, 0, 1, 1], [], []>} : vector<30x64xbf16>, vector<64x512xbf16>, vector<30x512xf32> -> vector<30x512xf32>
    %c0_7 = arith.constant 0 : index
    %c0_8 = arith.constant 0 : index
    %c0_9 = arith.constant 0 : index
    %6 = vector.load %arg4[%c0_7, %c0_8, %c0_9] : memref<3x30x1xf32, #tpu.memory_space<vmem>>, vector<1x30x1xf32>
    %7 = vector.shape_cast %6 : vector<1x30x1xf32> to vector<30x1xf32>
    %c0_10 = arith.constant 0 : index
    %c0_11 = arith.constant 0 : index
    %c0_12 = arith.constant 0 : index
    %8 = vector.load %arg5[%c0_10, %c0_11, %c0_12] : memref<3x30x1xf32, #tpu.memory_space<vmem>>, vector<1x30x1xf32>
    %9 = vector.shape_cast %8 : vector<1x30x1xf32> to vector<30x1xf32>
    %cst_13 = arith.constant dense<0.000000e+00> : vector<30xf32>
    %10 = vector.multi_reduction <add>, %5, %cst_13 [1] : vector<30x512xf32> to vector<30xf32>
    %11 = vector.shape_cast %10 : vector<30xf32> to vector<30x1xf32>
    %cst_14 = arith.constant 5.120000e+02 : f32
    %12 = vector.broadcast %cst_14 : f32 to vector<30x1xf32>
    %13 = arith.divf %11, %12 : vector<30x1xf32>
    %14 = vector.broadcast %13 : vector<30x1xf32> to vector<30x512xf32>
    %15 = arith.subf %5, %14 : vector<30x512xf32>
    %16 = arith.mulf %15, %15 : vector<30x512xf32>
    %cst_15 = arith.constant dense<0.000000e+00> : vector<30xf32>
    %17 = vector.multi_reduction <add>, %16, %cst_15 [1] : vector<30x512xf32> to vector<30xf32>
    %18 = vector.shape_cast %17 : vector<30xf32> to vector<30x1xf32>
    %cst_16 = arith.constant 5.120000e+02 : f32
    %19 = vector.broadcast %cst_16 : f32 to vector<30x1xf32>
    %20 = arith.divf %18, %19 : vector<30x1xf32>
    %cst_17 = arith.constant 9.99999974E-6 : f32
    %21 = vector.broadcast %cst_17 : f32 to vector<30x1xf32>
    %22 = arith.addf %20, %21 : vector<30x1xf32>
    %23 = math.rsqrt %22 : vector<30x1xf32>
    %24 = arith.mulf %7, %23 : vector<30x1xf32>
    %25 = vector.broadcast %24 : vector<30x1xf32> to vector<30x512xf32>
    %26 = arith.mulf %5, %25 : vector<30x512xf32>
    %27 = arith.mulf %13, %24 : vector<30x1xf32>
    %28 = arith.subf %9, %27 : vector<30x1xf32>
    %29 = vector.broadcast %28 : vector<30x1xf32> to vector<30x512xf32>
    %30 = arith.addf %26, %29 : vector<30x512xf32>
    %cst_18 = arith.constant 0.000000e+00 : f32
    %31 = vector.broadcast %cst_18 : f32 to vector<30x512xf32>
    %32 = arith.maximumf %30, %31 : vector<30x512xf32>
    %c0_19 = arith.constant 0 : index
    %c0_20 = arith.constant 0 : index
    %c0_21 = arith.constant 0 : index
    %c0_22 = arith.constant 0 : index
    %33 = vector.load %arg6[%c0_19, %c0_20, %c0_21, %c0_22] : memref<3x9x30x30xbf16, #tpu.memory_space<vmem>>, vector<1x9x30x30xbf16>
    %34 = vector.shape_cast %33 : vector<1x9x30x30xbf16> to vector<9x30x30xbf16>
    %35 = vector.extract_strided_slice %34 {offsets = [4, 0, 0], sizes = [1, 30, 30], strides = [1, 1, 1]} : vector<9x30x30xbf16> to vector<1x30x30xbf16>
    %36 = vector.shape_cast %35 : vector<1x30x30xbf16> to vector<30x30xbf16>
    %37 = arith.truncf %32 : vector<30x512xf32> to vector<30x512xbf16>
    %cst_23 = arith.constant dense<0.000000e+00> : vector<30x512xf32>
    %38 = tpu.matmul %36, %37, %cst_23 {dimension_numbers = #tpu.dot_dimension_numbers<[1], [0], [0], [1], [0, 0, 1, 1], [], []>} : vector<30x30xbf16>, vector<30x512xbf16>, vector<30x512xf32> -> vector<30x512xf32>
    %c17_i32 = arith.constant 17 : i32
    %39 = tpu.dynamic_rotate %32 by %c17_i32 dim 1 : vector<30x512xf32>, i32 -> vector<30x512xf32>
    %40 = vector.extract_strided_slice %2 {offsets = [0, 0, 0], sizes = [1, 1, 512], strides = [1, 1, 1]} : vector<9x1x512xf32> to vector<1x1x512xf32>
    %41 = vector.shape_cast %40 : vector<1x1x512xf32> to vector<1x512xf32>
    %42 = vector.broadcast %41 : vector<1x512xf32> to vector<30x512xf32>
    %43 = arith.mulf %39, %42 : vector<30x512xf32>
    %44 = vector.extract_strided_slice %34 {offsets = [0, 0, 0], sizes = [1, 30, 30], strides = [1, 1, 1]} : vector<9x30x30xbf16> to vector<1x30x30xbf16>
    %45 = vector.shape_cast %44 : vector<1x30x30xbf16> to vector<30x30xbf16>
    %46 = arith.truncf %43 : vector<30x512xf32> to vector<30x512xbf16>
    %cst_24 = arith.constant dense<0.000000e+00> : vector<30x512xf32>
    %47 = tpu.matmul %45, %46, %cst_24 {dimension_numbers = #tpu.dot_dimension_numbers<[1], [0], [0], [1], [0, 0, 1, 1], [], []>} : vector<30x30xbf16>, vector<30x512xbf16>, vector<30x512xf32> -> vector<30x512xf32>
    %48 = arith.addf %38, %47 : vector<30x512xf32>
    %c16_i32 = arith.constant 16 : i32
    %49 = tpu.dynamic_rotate %32 by %c16_i32 dim 1 : vector<30x512xf32>, i32 -> vector<30x512xf32>
    %50 = vector.extract_strided_slice %2 {offsets = [1, 0, 0], sizes = [1, 1, 512], strides = [1, 1, 1]} : vector<9x1x512xf32> to vector<1x1x512xf32>
    %51 = vector.shape_cast %50 : vector<1x1x512xf32> to vector<1x512xf32>
    %52 = vector.broadcast %51 : vector<1x512xf32> to vector<30x512xf32>
    %53 = arith.mulf %49, %52 : vector<30x512xf32>
    %54 = vector.extract_strided_slice %34 {offsets = [1, 0, 0], sizes = [1, 30, 30], strides = [1, 1, 1]} : vector<9x30x30xbf16> to vector<1x30x30xbf16>
    %55 = vector.shape_cast %54 : vector<1x30x30xbf16> to vector<30x30xbf16>
    %56 = arith.truncf %53 : vector<30x512xf32> to vector<30x512xbf16>
    %cst_25 = arith.constant dense<0.000000e+00> : vector<30x512xf32>
    %57 = tpu.matmul %55, %56, %cst_25 {dimension_numbers = #tpu.dot_dimension_numbers<[1], [0], [0], [1], [0, 0, 1, 1], [], []>} : vector<30x30xbf16>, vector<30x512xbf16>, vector<30x512xf32> -> vector<30x512xf32>
    %58 = arith.addf %48, %57 : vector<30x512xf32>
    %c15_i32 = arith.constant 15 : i32
    %59 = tpu.dynamic_rotate %32 by %c15_i32 dim 1 : vector<30x512xf32>, i32 -> vector<30x512xf32>
    %60 = vector.extract_strided_slice %2 {offsets = [2, 0, 0], sizes = [1, 1, 512], strides = [1, 1, 1]} : vector<9x1x512xf32> to vector<1x1x512xf32>
    %61 = vector.shape_cast %60 : vector<1x1x512xf32> to vector<1x512xf32>
    %62 = vector.broadcast %61 : vector<1x512xf32> to vector<30x512xf32>
    %63 = arith.mulf %59, %62 : vector<30x512xf32>
    %64 = vector.extract_strided_slice %34 {offsets = [2, 0, 0], sizes = [1, 30, 30], strides = [1, 1, 1]} : vector<9x30x30xbf16> to vector<1x30x30xbf16>
    %65 = vector.shape_cast %64 : vector<1x30x30xbf16> to vector<30x30xbf16>
    %66 = arith.truncf %63 : vector<30x512xf32> to vector<30x512xbf16>
    %cst_26 = arith.constant dense<0.000000e+00> : vector<30x512xf32>
    %67 = tpu.matmul %65, %66, %cst_26 {dimension_numbers = #tpu.dot_dimension_numbers<[1], [0], [0], [1], [0, 0, 1, 1], [], []>} : vector<30x30xbf16>, vector<30x512xbf16>, vector<30x512xf32> -> vector<30x512xf32>
    %68 = arith.addf %58, %67 : vector<30x512xf32>
    %c1_i32 = arith.constant 1 : i32
    %69 = tpu.dynamic_rotate %32 by %c1_i32 dim 1 : vector<30x512xf32>, i32 -> vector<30x512xf32>
    %70 = vector.extract_strided_slice %2 {offsets = [3, 0, 0], sizes = [1, 1, 512], strides = [1, 1, 1]} : vector<9x1x512xf32> to vector<1x1x512xf32>
    %71 = vector.shape_cast %70 : vector<1x1x512xf32> to vector<1x512xf32>
    %72 = vector.broadcast %71 : vector<1x512xf32> to vector<30x512xf32>
    %73 = arith.mulf %69, %72 : vector<30x512xf32>
    %74 = vector.extract_strided_slice %34 {offsets = [3, 0, 0], sizes = [1, 30, 30], strides = [1, 1, 1]} : vector<9x30x30xbf16> to vector<1x30x30xbf16>
    %75 = vector.shape_cast %74 : vector<1x30x30xbf16> to vector<30x30xbf16>
    %76 = arith.truncf %73 : vector<30x512xf32> to vector<30x512xbf16>
    %cst_27 = arith.constant dense<0.000000e+00> : vector<30x512xf32>
    %77 = tpu.matmul %75, %76, %cst_27 {dimension_numbers = #tpu.dot_dimension_numbers<[1], [0], [0], [1], [0, 0, 1, 1], [], []>} : vector<30x30xbf16>, vector<30x512xbf16>, vector<30x512xf32> -> vector<30x512xf32>
    %78 = arith.addf %68, %77 : vector<30x512xf32>
    %c511_i32 = arith.constant 511 : i32
    %79 = tpu.dynamic_rotate %32 by %c511_i32 dim 1 : vector<30x512xf32>, i32 -> vector<30x512xf32>
    %80 = vector.extract_strided_slice %2 {offsets = [5, 0, 0], sizes = [1, 1, 512], strides = [1, 1, 1]} : vector<9x1x512xf32> to vector<1x1x512xf32>
    %81 = vector.shape_cast %80 : vector<1x1x512xf32> to vector<1x512xf32>
    %82 = vector.broadcast %81 : vector<1x512xf32> to vector<30x512xf32>
    %83 = arith.mulf %79, %82 : vector<30x512xf32>
    %84 = vector.extract_strided_slice %34 {offsets = [5, 0, 0], sizes = [1, 30, 30], strides = [1, 1, 1]} : vector<9x30x30xbf16> to vector<1x30x30xbf16>
    %85 = vector.shape_cast %84 : vector<1x30x30xbf16> to vector<30x30xbf16>
    %86 = arith.truncf %83 : vector<30x512xf32> to vector<30x512xbf16>
    %cst_28 = arith.constant dense<0.000000e+00> : vector<30x512xf32>
    %87 = tpu.matmul %85, %86, %cst_28 {dimension_numbers = #tpu.dot_dimension_numbers<[1], [0], [0], [1], [0, 0, 1, 1], [], []>} : vector<30x30xbf16>, vector<30x512xbf16>, vector<30x512xf32> -> vector<30x512xf32>
    %88 = arith.addf %78, %87 : vector<30x512xf32>
    %c497_i32 = arith.constant 497 : i32
    %89 = tpu.dynamic_rotate %32 by %c497_i32 dim 1 : vector<30x512xf32>, i32 -> vector<30x512xf32>
    %90 = vector.extract_strided_slice %2 {offsets = [6, 0, 0], sizes = [1, 1, 512], strides = [1, 1, 1]} : vector<9x1x512xf32> to vector<1x1x512xf32>
    %91 = vector.shape_cast %90 : vector<1x1x512xf32> to vector<1x512xf32>
    %92 = vector.broadcast %91 : vector<1x512xf32> to vector<30x512xf32>
    %93 = arith.mulf %89, %92 : vector<30x512xf32>
    %94 = vector.extract_strided_slice %34 {offsets = [6, 0, 0], sizes = [1, 30, 30], strides = [1, 1, 1]} : vector<9x30x30xbf16> to vector<1x30x30xbf16>
    %95 = vector.shape_cast %94 : vector<1x30x30xbf16> to vector<30x30xbf16>
    %96 = arith.truncf %93 : vector<30x512xf32> to vector<30x512xbf16>
    %cst_29 = arith.constant dense<0.000000e+00> : vector<30x512xf32>
    %97 = tpu.matmul %95, %96, %cst_29 {dimension_numbers = #tpu.dot_dimension_numbers<[1], [0], [0], [1], [0, 0, 1, 1], [], []>} : vector<30x30xbf16>, vector<30x512xbf16>, vector<30x512xf32> -> vector<30x512xf32>
    %98 = arith.addf %88, %97 : vector<30x512xf32>
    %c496_i32 = arith.constant 496 : i32
    %99 = tpu.dynamic_rotate %32 by %c496_i32 dim 1 : vector<30x512xf32>, i32 -> vector<30x512xf32>
    %100 = vector.extract_strided_slice %2 {offsets = [7, 0, 0], sizes = [1, 1, 512], strides = [1, 1, 1]} : vector<9x1x512xf32> to vector<1x1x512xf32>
    %101 = vector.shape_cast %100 : vector<1x1x512xf32> to vector<1x512xf32>
    %102 = vector.broadcast %101 : vector<1x512xf32> to vector<30x512xf32>
    %103 = arith.mulf %99, %102 : vector<30x512xf32>
    %104 = vector.extract_strided_slice %34 {offsets = [7, 0, 0], sizes = [1, 30, 30], strides = [1, 1, 1]} : vector<9x30x30xbf16> to vector<1x30x30xbf16>
    %105 = vector.shape_cast %104 : vector<1x30x30xbf16> to vector<30x30xbf16>
    %106 = arith.truncf %103 : vector<30x512xf32> to vector<30x512xbf16>
    %cst_30 = arith.constant dense<0.000000e+00> : vector<30x512xf32>
    %107 = tpu.matmul %105, %106, %cst_30 {dimension_numbers = #tpu.dot_dimension_numbers<[1], [0], [0], [1], [0, 0, 1, 1], [], []>} : vector<30x30xbf16>, vector<30x512xbf16>, vector<30x512xf32> -> vector<30x512xf32>
    %108 = arith.addf %98, %107 : vector<30x512xf32>
    %c495_i32 = arith.constant 495 : i32
    %109 = tpu.dynamic_rotate %32 by %c495_i32 dim 1 : vector<30x512xf32>, i32 -> vector<30x512xf32>
    %110 = vector.extract_strided_slice %2 {offsets = [8, 0, 0], sizes = [1, 1, 512], strides = [1, 1, 1]} : vector<9x1x512xf32> to vector<1x1x512xf32>
    %111 = vector.shape_cast %110 : vector<1x1x512xf32> to vector<1x512xf32>
    %112 = vector.broadcast %111 : vector<1x512xf32> to vector<30x512xf32>
    %113 = arith.mulf %109, %112 : vector<30x512xf32>
    %114 = vector.extract_strided_slice %34 {offsets = [8, 0, 0], sizes = [1, 30, 30], strides = [1, 1, 1]} : vector<9x30x30xbf16> to vector<1x30x30xbf16>
    %115 = vector.shape_cast %114 : vector<1x30x30xbf16> to vector<30x30xbf16>
    %116 = arith.truncf %113 : vector<30x512xf32> to vector<30x512xbf16>
    %cst_31 = arith.constant dense<0.000000e+00> : vector<30x512xf32>
    %117 = tpu.matmul %115, %116, %cst_31 {dimension_numbers = #tpu.dot_dimension_numbers<[1], [0], [0], [1], [0, 0, 1, 1], [], []>} : vector<30x30xbf16>, vector<30x512xbf16>, vector<30x512xf32> -> vector<30x512xf32>
    %118 = arith.addf %108, %117 : vector<30x512xf32>
    %c0_32 = arith.constant 0 : index
    %c0_33 = arith.constant 0 : index
    %c0_34 = arith.constant 0 : index
    %119 = vector.load %arg7[%c0_32, %c0_33, %c0_34] : memref<3x30x1xf32, #tpu.memory_space<vmem>>, vector<1x30x1xf32>
    %120 = vector.shape_cast %119 : vector<1x30x1xf32> to vector<30x1xf32>
    %c0_35 = arith.constant 0 : index
    %c0_36 = arith.constant 0 : index
    %c0_37 = arith.constant 0 : index
    %121 = vector.load %arg8[%c0_35, %c0_36, %c0_37] : memref<3x30x1xf32, #tpu.memory_space<vmem>>, vector<1x30x1xf32>
    %122 = vector.shape_cast %121 : vector<1x30x1xf32> to vector<30x1xf32>
    %cst_38 = arith.constant dense<0.000000e+00> : vector<30xf32>
    %123 = vector.multi_reduction <add>, %118, %cst_38 [1] : vector<30x512xf32> to vector<30xf32>
    %124 = vector.shape_cast %123 : vector<30xf32> to vector<30x1xf32>
    %cst_39 = arith.constant 5.120000e+02 : f32
    %125 = vector.broadcast %cst_39 : f32 to vector<30x1xf32>
    %126 = arith.divf %124, %125 : vector<30x1xf32>
    %127 = vector.broadcast %126 : vector<30x1xf32> to vector<30x512xf32>
    %128 = arith.subf %118, %127 : vector<30x512xf32>
    %129 = arith.mulf %128, %128 : vector<30x512xf32>
    %cst_40 = arith.constant dense<0.000000e+00> : vector<30xf32>
    %130 = vector.multi_reduction <add>, %129, %cst_40 [1] : vector<30x512xf32> to vector<30xf32>
    %131 = vector.shape_cast %130 : vector<30xf32> to vector<30x1xf32>
    %cst_41 = arith.constant 5.120000e+02 : f32
    %132 = vector.broadcast %cst_41 : f32 to vector<30x1xf32>
    %133 = arith.divf %131, %132 : vector<30x1xf32>
    %cst_42 = arith.constant 9.99999974E-6 : f32
    %134 = vector.broadcast %cst_42 : f32 to vector<30x1xf32>
    %135 = arith.addf %133, %134 : vector<30x1xf32>
    %136 = math.rsqrt %135 : vector<30x1xf32>
    %137 = arith.mulf %120, %136 : vector<30x1xf32>
    %138 = vector.broadcast %137 : vector<30x1xf32> to vector<30x512xf32>
    %139 = arith.mulf %118, %138 : vector<30x512xf32>
    %140 = arith.mulf %126, %137 : vector<30x1xf32>
    %141 = arith.subf %122, %140 : vector<30x1xf32>
    %142 = vector.broadcast %141 : vector<30x1xf32> to vector<30x512xf32>
    %143 = arith.addf %139, %142 : vector<30x512xf32>
    %c1 = arith.constant 1 : index
    %c0_43 = arith.constant 0 : index
    %c0_44 = arith.constant 0 : index
    %144 = vector.load %arg3[%c1, %c0_43, %c0_44] : memref<3x30x64xbf16, #tpu.memory_space<vmem>>, vector<1x30x64xbf16>
    %145 = vector.shape_cast %144 : vector<1x30x64xbf16> to vector<30x64xbf16>
    %cst_45 = arith.constant dense<0.000000e+00> : vector<30x512xf32>
    %146 = tpu.matmul %145, %1, %cst_45 {dimension_numbers = #tpu.dot_dimension_numbers<[1], [0], [0], [1], [0, 0, 1, 1], [], []>} : vector<30x64xbf16>, vector<64x512xbf16>, vector<30x512xf32> -> vector<30x512xf32>
    %c1_46 = arith.constant 1 : index
    %c0_47 = arith.constant 0 : index
    %c0_48 = arith.constant 0 : index
    %147 = vector.load %arg4[%c1_46, %c0_47, %c0_48] : memref<3x30x1xf32, #tpu.memory_space<vmem>>, vector<1x30x1xf32>
    %148 = vector.shape_cast %147 : vector<1x30x1xf32> to vector<30x1xf32>
    %c1_49 = arith.constant 1 : index
    %c0_50 = arith.constant 0 : index
    %c0_51 = arith.constant 0 : index
    %149 = vector.load %arg5[%c1_49, %c0_50, %c0_51] : memref<3x30x1xf32, #tpu.memory_space<vmem>>, vector<1x30x1xf32>
    %150 = vector.shape_cast %149 : vector<1x30x1xf32> to vector<30x1xf32>
    %cst_52 = arith.constant dense<0.000000e+00> : vector<30xf32>
    %151 = vector.multi_reduction <add>, %146, %cst_52 [1] : vector<30x512xf32> to vector<30xf32>
    %152 = vector.shape_cast %151 : vector<30xf32> to vector<30x1xf32>
    %cst_53 = arith.constant 5.120000e+02 : f32
    %153 = vector.broadcast %cst_53 : f32 to vector<30x1xf32>
    %154 = arith.divf %152, %153 : vector<30x1xf32>
    %155 = vector.broadcast %154 : vector<30x1xf32> to vector<30x512xf32>
    %156 = arith.subf %146, %155 : vector<30x512xf32>
    %157 = arith.mulf %156, %156 : vector<30x512xf32>
    %cst_54 = arith.constant dense<0.000000e+00> : vector<30xf32>
    %158 = vector.multi_reduction <add>, %157, %cst_54 [1] : vector<30x512xf32> to vector<30xf32>
    %159 = vector.shape_cast %158 : vector<30xf32> to vector<30x1xf32>
    %cst_55 = arith.constant 5.120000e+02 : f32
    %160 = vector.broadcast %cst_55 : f32 to vector<30x1xf32>
    %161 = arith.divf %159, %160 : vector<30x1xf32>
    %cst_56 = arith.constant 9.99999974E-6 : f32
    %162 = vector.broadcast %cst_56 : f32 to vector<30x1xf32>
    %163 = arith.addf %161, %162 : vector<30x1xf32>
    %164 = math.rsqrt %163 : vector<30x1xf32>
    %165 = arith.mulf %148, %164 : vector<30x1xf32>
    %166 = vector.broadcast %165 : vector<30x1xf32> to vector<30x512xf32>
    %167 = arith.mulf %146, %166 : vector<30x512xf32>
    %168 = arith.mulf %154, %165 : vector<30x1xf32>
    %169 = arith.subf %150, %168 : vector<30x1xf32>
    %170 = vector.broadcast %169 : vector<30x1xf32> to vector<30x512xf32>
    %171 = arith.addf %167, %170 : vector<30x512xf32>
    %cst_57 = arith.constant 0.000000e+00 : f32
    %172 = vector.broadcast %cst_57 : f32 to vector<30x512xf32>
    %173 = arith.maximumf %171, %172 : vector<30x512xf32>
    %174 = arith.addf %143, %173 : vector<30x512xf32>
    %c1_58 = arith.constant 1 : index
    %c0_59 = arith.constant 0 : index
    %c0_60 = arith.constant 0 : index
    %c0_61 = arith.constant 0 : index
    %175 = vector.load %arg6[%c1_58, %c0_59, %c0_60, %c0_61] : memref<3x9x30x30xbf16, #tpu.memory_space<vmem>>, vector<1x9x30x30xbf16>
    %176 = vector.shape_cast %175 : vector<1x9x30x30xbf16> to vector<9x30x30xbf16>
    %177 = vector.extract_strided_slice %176 {offsets = [4, 0, 0], sizes = [1, 30, 30], strides = [1, 1, 1]} : vector<9x30x30xbf16> to vector<1x30x30xbf16>
    %178 = vector.shape_cast %177 : vector<1x30x30xbf16> to vector<30x30xbf16>
    %179 = arith.truncf %174 : vector<30x512xf32> to vector<30x512xbf16>
    %cst_62 = arith.constant dense<0.000000e+00> : vector<30x512xf32>
    %180 = tpu.matmul %178, %179, %cst_62 {dimension_numbers = #tpu.dot_dimension_numbers<[1], [0], [0], [1], [0, 0, 1, 1], [], []>} : vector<30x30xbf16>, vector<30x512xbf16>, vector<30x512xf32> -> vector<30x512xf32>
    %c17_i32_63 = arith.constant 17 : i32
    %181 = tpu.dynamic_rotate %174 by %c17_i32_63 dim 1 : vector<30x512xf32>, i32 -> vector<30x512xf32>
    %182 = vector.extract_strided_slice %2 {offsets = [0, 0, 0], sizes = [1, 1, 512], strides = [1, 1, 1]} : vector<9x1x512xf32> to vector<1x1x512xf32>
    %183 = vector.shape_cast %182 : vector<1x1x512xf32> to vector<1x512xf32>
    %184 = vector.broadcast %183 : vector<1x512xf32> to vector<30x512xf32>
    %185 = arith.mulf %181, %184 : vector<30x512xf32>
    %186 = vector.extract_strided_slice %176 {offsets = [0, 0, 0], sizes = [1, 30, 30], strides = [1, 1, 1]} : vector<9x30x30xbf16> to vector<1x30x30xbf16>
    %187 = vector.shape_cast %186 : vector<1x30x30xbf16> to vector<30x30xbf16>
    %188 = arith.truncf %185 : vector<30x512xf32> to vector<30x512xbf16>
    %cst_64 = arith.constant dense<0.000000e+00> : vector<30x512xf32>
    %189 = tpu.matmul %187, %188, %cst_64 {dimension_numbers = #tpu.dot_dimension_numbers<[1], [0], [0], [1], [0, 0, 1, 1], [], []>} : vector<30x30xbf16>, vector<30x512xbf16>, vector<30x512xf32> -> vector<30x512xf32>
    %190 = arith.addf %180, %189 : vector<30x512xf32>
    %c16_i32_65 = arith.constant 16 : i32
    %191 = tpu.dynamic_rotate %174 by %c16_i32_65 dim 1 : vector<30x512xf32>, i32 -> vector<30x512xf32>
    %192 = vector.extract_strided_slice %2 {offsets = [1, 0, 0], sizes = [1, 1, 512], strides = [1, 1, 1]} : vector<9x1x512xf32> to vector<1x1x512xf32>
    %193 = vector.shape_cast %192 : vector<1x1x512xf32> to vector<1x512xf32>
    %194 = vector.broadcast %193 : vector<1x512xf32> to vector<30x512xf32>
    %195 = arith.mulf %191, %194 : vector<30x512xf32>
    %196 = vector.extract_strided_slice %176 {offsets = [1, 0, 0], sizes = [1, 30, 30], strides = [1, 1, 1]} : vector<9x30x30xbf16> to vector<1x30x30xbf16>
    %197 = vector.shape_cast %196 : vector<1x30x30xbf16> to vector<30x30xbf16>
    %198 = arith.truncf %195 : vector<30x512xf32> to vector<30x512xbf16>
    %cst_66 = arith.constant dense<0.000000e+00> : vector<30x512xf32>
    %199 = tpu.matmul %197, %198, %cst_66 {dimension_numbers = #tpu.dot_dimension_numbers<[1], [0], [0], [1], [0, 0, 1, 1], [], []>} : vector<30x30xbf16>, vector<30x512xbf16>, vector<30x512xf32> -> vector<30x512xf32>
    %200 = arith.addf %190, %199 : vector<30x512xf32>
    %c15_i32_67 = arith.constant 15 : i32
    %201 = tpu.dynamic_rotate %174 by %c15_i32_67 dim 1 : vector<30x512xf32>, i32 -> vector<30x512xf32>
    %202 = vector.extract_strided_slice %2 {offsets = [2, 0, 0], sizes = [1, 1, 512], strides = [1, 1, 1]} : vector<9x1x512xf32> to vector<1x1x512xf32>
    %203 = vector.shape_cast %202 : vector<1x1x512xf32> to vector<1x512xf32>
    %204 = vector.broadcast %203 : vector<1x512xf32> to vector<30x512xf32>
    %205 = arith.mulf %201, %204 : vector<30x512xf32>
    %206 = vector.extract_strided_slice %176 {offsets = [2, 0, 0], sizes = [1, 30, 30], strides = [1, 1, 1]} : vector<9x30x30xbf16> to vector<1x30x30xbf16>
    %207 = vector.shape_cast %206 : vector<1x30x30xbf16> to vector<30x30xbf16>
    %208 = arith.truncf %205 : vector<30x512xf32> to vector<30x512xbf16>
    %cst_68 = arith.constant dense<0.000000e+00> : vector<30x512xf32>
    %209 = tpu.matmul %207, %208, %cst_68 {dimension_numbers = #tpu.dot_dimension_numbers<[1], [0], [0], [1], [0, 0, 1, 1], [], []>} : vector<30x30xbf16>, vector<30x512xbf16>, vector<30x512xf32> -> vector<30x512xf32>
    %210 = arith.addf %200, %209 : vector<30x512xf32>
    %c1_i32_69 = arith.constant 1 : i32
    %211 = tpu.dynamic_rotate %174 by %c1_i32_69 dim 1 : vector<30x512xf32>, i32 -> vector<30x512xf32>
    %212 = vector.extract_strided_slice %2 {offsets = [3, 0, 0], sizes = [1, 1, 512], strides = [1, 1, 1]} : vector<9x1x512xf32> to vector<1x1x512xf32>
    %213 = vector.shape_cast %212 : vector<1x1x512xf32> to vector<1x512xf32>
    %214 = vector.broadcast %213 : vector<1x512xf32> to vector<30x512xf32>
    %215 = arith.mulf %211, %214 : vector<30x512xf32>
    %216 = vector.extract_strided_slice %176 {offsets = [3, 0, 0], sizes = [1, 30, 30], strides = [1, 1, 1]} : vector<9x30x30xbf16> to vector<1x30x30xbf16>
    %217 = vector.shape_cast %216 : vector<1x30x30xbf16> to vector<30x30xbf16>
    %218 = arith.truncf %215 : vector<30x512xf32> to vector<30x512xbf16>
    %cst_70 = arith.constant dense<0.000000e+00> : vector<30x512xf32>
    %219 = tpu.matmul %217, %218, %cst_70 {dimension_numbers = #tpu.dot_dimension_numbers<[1], [0], [0], [1], [0, 0, 1, 1], [], []>} : vector<30x30xbf16>, vector<30x512xbf16>, vector<30x512xf32> -> vector<30x512xf32>
    %220 = arith.addf %210, %219 : vector<30x512xf32>
    %c511_i32_71 = arith.constant 511 : i32
    %221 = tpu.dynamic_rotate %174 by %c511_i32_71 dim 1 : vector<30x512xf32>, i32 -> vector<30x512xf32>
    %222 = vector.extract_strided_slice %2 {offsets = [5, 0, 0], sizes = [1, 1, 512], strides = [1, 1, 1]} : vector<9x1x512xf32> to vector<1x1x512xf32>
    %223 = vector.shape_cast %222 : vector<1x1x512xf32> to vector<1x512xf32>
    %224 = vector.broadcast %223 : vector<1x512xf32> to vector<30x512xf32>
    %225 = arith.mulf %221, %224 : vector<30x512xf32>
    %226 = vector.extract_strided_slice %176 {offsets = [5, 0, 0], sizes = [1, 30, 30], strides = [1, 1, 1]} : vector<9x30x30xbf16> to vector<1x30x30xbf16>
    %227 = vector.shape_cast %226 : vector<1x30x30xbf16> to vector<30x30xbf16>
    %228 = arith.truncf %225 : vector<30x512xf32> to vector<30x512xbf16>
    %cst_72 = arith.constant dense<0.000000e+00> : vector<30x512xf32>
    %229 = tpu.matmul %227, %228, %cst_72 {dimension_numbers = #tpu.dot_dimension_numbers<[1], [0], [0], [1], [0, 0, 1, 1], [], []>} : vector<30x30xbf16>, vector<30x512xbf16>, vector<30x512xf32> -> vector<30x512xf32>
    %230 = arith.addf %220, %229 : vector<30x512xf32>
    %c497_i32_73 = arith.constant 497 : i32
    %231 = tpu.dynamic_rotate %174 by %c497_i32_73 dim 1 : vector<30x512xf32>, i32 -> vector<30x512xf32>
    %232 = vector.extract_strided_slice %2 {offsets = [6, 0, 0], sizes = [1, 1, 512], strides = [1, 1, 1]} : vector<9x1x512xf32> to vector<1x1x512xf32>
    %233 = vector.shape_cast %232 : vector<1x1x512xf32> to vector<1x512xf32>
    %234 = vector.broadcast %233 : vector<1x512xf32> to vector<30x512xf32>
    %235 = arith.mulf %231, %234 : vector<30x512xf32>
    %236 = vector.extract_strided_slice %176 {offsets = [6, 0, 0], sizes = [1, 30, 30], strides = [1, 1, 1]} : vector<9x30x30xbf16> to vector<1x30x30xbf16>
    %237 = vector.shape_cast %236 : vector<1x30x30xbf16> to vector<30x30xbf16>
    %238 = arith.truncf %235 : vector<30x512xf32> to vector<30x512xbf16>
    %cst_74 = arith.constant dense<0.000000e+00> : vector<30x512xf32>
    %239 = tpu.matmul %237, %238, %cst_74 {dimension_numbers = #tpu.dot_dimension_numbers<[1], [0], [0], [1], [0, 0, 1, 1], [], []>} : vector<30x30xbf16>, vector<30x512xbf16>, vector<30x512xf32> -> vector<30x512xf32>
    %240 = arith.addf %230, %239 : vector<30x512xf32>
    %c496_i32_75 = arith.constant 496 : i32
    %241 = tpu.dynamic_rotate %174 by %c496_i32_75 dim 1 : vector<30x512xf32>, i32 -> vector<30x512xf32>
    %242 = vector.extract_strided_slice %2 {offsets = [7, 0, 0], sizes = [1, 1, 512], strides = [1, 1, 1]} : vector<9x1x512xf32> to vector<1x1x512xf32>
    %243 = vector.shape_cast %242 : vector<1x1x512xf32> to vector<1x512xf32>
    %244 = vector.broadcast %243 : vector<1x512xf32> to vector<30x512xf32>
    %245 = arith.mulf %241, %244 : vector<30x512xf32>
    %246 = vector.extract_strided_slice %176 {offsets = [7, 0, 0], sizes = [1, 30, 30], strides = [1, 1, 1]} : vector<9x30x30xbf16> to vector<1x30x30xbf16>
    %247 = vector.shape_cast %246 : vector<1x30x30xbf16> to vector<30x30xbf16>
    %248 = arith.truncf %245 : vector<30x512xf32> to vector<30x512xbf16>
    %cst_76 = arith.constant dense<0.000000e+00> : vector<30x512xf32>
    %249 = tpu.matmul %247, %248, %cst_76 {dimension_numbers = #tpu.dot_dimension_numbers<[1], [0], [0], [1], [0, 0, 1, 1], [], []>} : vector<30x30xbf16>, vector<30x512xbf16>, vector<30x512xf32> -> vector<30x512xf32>
    %250 = arith.addf %240, %249 : vector<30x512xf32>
    %c495_i32_77 = arith.constant 495 : i32
    %251 = tpu.dynamic_rotate %174 by %c495_i32_77 dim 1 : vector<30x512xf32>, i32 -> vector<30x512xf32>
    %252 = vector.extract_strided_slice %2 {offsets = [8, 0, 0], sizes = [1, 1, 512], strides = [1, 1, 1]} : vector<9x1x512xf32> to vector<1x1x512xf32>
    %253 = vector.shape_cast %252 : vector<1x1x512xf32> to vector<1x512xf32>
    %254 = vector.broadcast %253 : vector<1x512xf32> to vector<30x512xf32>
    %255 = arith.mulf %251, %254 : vector<30x512xf32>
    %256 = vector.extract_strided_slice %176 {offsets = [8, 0, 0], sizes = [1, 30, 30], strides = [1, 1, 1]} : vector<9x30x30xbf16> to vector<1x30x30xbf16>
    %257 = vector.shape_cast %256 : vector<1x30x30xbf16> to vector<30x30xbf16>
    %258 = arith.truncf %255 : vector<30x512xf32> to vector<30x512xbf16>
    %cst_78 = arith.constant dense<0.000000e+00> : vector<30x512xf32>
    %259 = tpu.matmul %257, %258, %cst_78 {dimension_numbers = #tpu.dot_dimension_numbers<[1], [0], [0], [1], [0, 0, 1, 1], [], []>} : vector<30x30xbf16>, vector<30x512xbf16>, vector<30x512xf32> -> vector<30x512xf32>
    %260 = arith.addf %250, %259 : vector<30x512xf32>
    %c1_79 = arith.constant 1 : index
    %c0_80 = arith.constant 0 : index
    %c0_81 = arith.constant 0 : index
    %261 = vector.load %arg7[%c1_79, %c0_80, %c0_81] : memref<3x30x1xf32, #tpu.memory_space<vmem>>, vector<1x30x1xf32>
    %262 = vector.shape_cast %261 : vector<1x30x1xf32> to vector<30x1xf32>
    %c1_82 = arith.constant 1 : index
    %c0_83 = arith.constant 0 : index
    %c0_84 = arith.constant 0 : index
    %263 = vector.load %arg8[%c1_82, %c0_83, %c0_84] : memref<3x30x1xf32, #tpu.memory_space<vmem>>, vector<1x30x1xf32>
    %264 = vector.shape_cast %263 : vector<1x30x1xf32> to vector<30x1xf32>
    %cst_85 = arith.constant dense<0.000000e+00> : vector<30xf32>
    %265 = vector.multi_reduction <add>, %260, %cst_85 [1] : vector<30x512xf32> to vector<30xf32>
    %266 = vector.shape_cast %265 : vector<30xf32> to vector<30x1xf32>
    %cst_86 = arith.constant 5.120000e+02 : f32
    %267 = vector.broadcast %cst_86 : f32 to vector<30x1xf32>
    %268 = arith.divf %266, %267 : vector<30x1xf32>
    %269 = vector.broadcast %268 : vector<30x1xf32> to vector<30x512xf32>
    %270 = arith.subf %260, %269 : vector<30x512xf32>
    %271 = arith.mulf %270, %270 : vector<30x512xf32>
    %cst_87 = arith.constant dense<0.000000e+00> : vector<30xf32>
    %272 = vector.multi_reduction <add>, %271, %cst_87 [1] : vector<30x512xf32> to vector<30xf32>
    %273 = vector.shape_cast %272 : vector<30xf32> to vector<30x1xf32>
    %cst_88 = arith.constant 5.120000e+02 : f32
    %274 = vector.broadcast %cst_88 : f32 to vector<30x1xf32>
    %275 = arith.divf %273, %274 : vector<30x1xf32>
    %cst_89 = arith.constant 9.99999974E-6 : f32
    %276 = vector.broadcast %cst_89 : f32 to vector<30x1xf32>
    %277 = arith.addf %275, %276 : vector<30x1xf32>
    %278 = math.rsqrt %277 : vector<30x1xf32>
    %279 = arith.mulf %262, %278 : vector<30x1xf32>
    %280 = vector.broadcast %279 : vector<30x1xf32> to vector<30x512xf32>
    %281 = arith.mulf %260, %280 : vector<30x512xf32>
    %282 = arith.mulf %268, %279 : vector<30x1xf32>
    %283 = arith.subf %264, %282 : vector<30x1xf32>
    %284 = vector.broadcast %283 : vector<30x1xf32> to vector<30x512xf32>
    %285 = arith.addf %281, %284 : vector<30x512xf32>
    %c2 = arith.constant 2 : index
    %c0_90 = arith.constant 0 : index
    %c0_91 = arith.constant 0 : index
    %286 = vector.load %arg3[%c2, %c0_90, %c0_91] : memref<3x30x64xbf16, #tpu.memory_space<vmem>>, vector<1x30x64xbf16>
    %287 = vector.shape_cast %286 : vector<1x30x64xbf16> to vector<30x64xbf16>
    %cst_92 = arith.constant dense<0.000000e+00> : vector<30x512xf32>
    %288 = tpu.matmul %287, %1, %cst_92 {dimension_numbers = #tpu.dot_dimension_numbers<[1], [0], [0], [1], [0, 0, 1, 1], [], []>} : vector<30x64xbf16>, vector<64x512xbf16>, vector<30x512xf32> -> vector<30x512xf32>
    %c2_93 = arith.constant 2 : index
    %c0_94 = arith.constant 0 : index
    %c0_95 = arith.constant 0 : index
    %289 = vector.load %arg4[%c2_93, %c0_94, %c0_95] : memref<3x30x1xf32, #tpu.memory_space<vmem>>, vector<1x30x1xf32>
    %290 = vector.shape_cast %289 : vector<1x30x1xf32> to vector<30x1xf32>
    %c2_96 = arith.constant 2 : index
    %c0_97 = arith.constant 0 : index
    %c0_98 = arith.constant 0 : index
    %291 = vector.load %arg5[%c2_96, %c0_97, %c0_98] : memref<3x30x1xf32, #tpu.memory_space<vmem>>, vector<1x30x1xf32>
    %292 = vector.shape_cast %291 : vector<1x30x1xf32> to vector<30x1xf32>
    %cst_99 = arith.constant dense<0.000000e+00> : vector<30xf32>
    %293 = vector.multi_reduction <add>, %288, %cst_99 [1] : vector<30x512xf32> to vector<30xf32>
    %294 = vector.shape_cast %293 : vector<30xf32> to vector<30x1xf32>
    %cst_100 = arith.constant 5.120000e+02 : f32
    %295 = vector.broadcast %cst_100 : f32 to vector<30x1xf32>
    %296 = arith.divf %294, %295 : vector<30x1xf32>
    %297 = vector.broadcast %296 : vector<30x1xf32> to vector<30x512xf32>
    %298 = arith.subf %288, %297 : vector<30x512xf32>
    %299 = arith.mulf %298, %298 : vector<30x512xf32>
    %cst_101 = arith.constant dense<0.000000e+00> : vector<30xf32>
    %300 = vector.multi_reduction <add>, %299, %cst_101 [1] : vector<30x512xf32> to vector<30xf32>
    %301 = vector.shape_cast %300 : vector<30xf32> to vector<30x1xf32>
    %cst_102 = arith.constant 5.120000e+02 : f32
    %302 = vector.broadcast %cst_102 : f32 to vector<30x1xf32>
    %303 = arith.divf %301, %302 : vector<30x1xf32>
    %cst_103 = arith.constant 9.99999974E-6 : f32
    %304 = vector.broadcast %cst_103 : f32 to vector<30x1xf32>
    %305 = arith.addf %303, %304 : vector<30x1xf32>
    %306 = math.rsqrt %305 : vector<30x1xf32>
    %307 = arith.mulf %290, %306 : vector<30x1xf32>
    %308 = vector.broadcast %307 : vector<30x1xf32> to vector<30x512xf32>
    %309 = arith.mulf %288, %308 : vector<30x512xf32>
    %310 = arith.mulf %296, %307 : vector<30x1xf32>
    %311 = arith.subf %292, %310 : vector<30x1xf32>
    %312 = vector.broadcast %311 : vector<30x1xf32> to vector<30x512xf32>
    %313 = arith.addf %309, %312 : vector<30x512xf32>
    %cst_104 = arith.constant 0.000000e+00 : f32
    %314 = vector.broadcast %cst_104 : f32 to vector<30x512xf32>
    %315 = arith.maximumf %313, %314 : vector<30x512xf32>
    %316 = arith.addf %285, %315 : vector<30x512xf32>
    %c2_105 = arith.constant 2 : index
    %c0_106 = arith.constant 0 : index
    %c0_107 = arith.constant 0 : index
    %c0_108 = arith.constant 0 : index
    %317 = vector.load %arg6[%c2_105, %c0_106, %c0_107, %c0_108] : memref<3x9x30x30xbf16, #tpu.memory_space<vmem>>, vector<1x9x30x30xbf16>
    %318 = vector.shape_cast %317 : vector<1x9x30x30xbf16> to vector<9x30x30xbf16>
    %319 = vector.extract_strided_slice %318 {offsets = [4, 0, 0], sizes = [1, 30, 30], strides = [1, 1, 1]} : vector<9x30x30xbf16> to vector<1x30x30xbf16>
    %320 = vector.shape_cast %319 : vector<1x30x30xbf16> to vector<30x30xbf16>
    %321 = arith.truncf %316 : vector<30x512xf32> to vector<30x512xbf16>
    %cst_109 = arith.constant dense<0.000000e+00> : vector<30x512xf32>
    %322 = tpu.matmul %320, %321, %cst_109 {dimension_numbers = #tpu.dot_dimension_numbers<[1], [0], [0], [1], [0, 0, 1, 1], [], []>} : vector<30x30xbf16>, vector<30x512xbf16>, vector<30x512xf32> -> vector<30x512xf32>
    %c17_i32_110 = arith.constant 17 : i32
    %323 = tpu.dynamic_rotate %316 by %c17_i32_110 dim 1 : vector<30x512xf32>, i32 -> vector<30x512xf32>
    %324 = vector.extract_strided_slice %2 {offsets = [0, 0, 0], sizes = [1, 1, 512], strides = [1, 1, 1]} : vector<9x1x512xf32> to vector<1x1x512xf32>
    %325 = vector.shape_cast %324 : vector<1x1x512xf32> to vector<1x512xf32>
    %326 = vector.broadcast %325 : vector<1x512xf32> to vector<30x512xf32>
    %327 = arith.mulf %323, %326 : vector<30x512xf32>
    %328 = vector.extract_strided_slice %318 {offsets = [0, 0, 0], sizes = [1, 30, 30], strides = [1, 1, 1]} : vector<9x30x30xbf16> to vector<1x30x30xbf16>
    %329 = vector.shape_cast %328 : vector<1x30x30xbf16> to vector<30x30xbf16>
    %330 = arith.truncf %327 : vector<30x512xf32> to vector<30x512xbf16>
    %cst_111 = arith.constant dense<0.000000e+00> : vector<30x512xf32>
    %331 = tpu.matmul %329, %330, %cst_111 {dimension_numbers = #tpu.dot_dimension_numbers<[1], [0], [0], [1], [0, 0, 1, 1], [], []>} : vector<30x30xbf16>, vector<30x512xbf16>, vector<30x512xf32> -> vector<30x512xf32>
    %332 = arith.addf %322, %331 : vector<30x512xf32>
    %c16_i32_112 = arith.constant 16 : i32
    %333 = tpu.dynamic_rotate %316 by %c16_i32_112 dim 1 : vector<30x512xf32>, i32 -> vector<30x512xf32>
    %334 = vector.extract_strided_slice %2 {offsets = [1, 0, 0], sizes = [1, 1, 512], strides = [1, 1, 1]} : vector<9x1x512xf32> to vector<1x1x512xf32>
    %335 = vector.shape_cast %334 : vector<1x1x512xf32> to vector<1x512xf32>
    %336 = vector.broadcast %335 : vector<1x512xf32> to vector<30x512xf32>
    %337 = arith.mulf %333, %336 : vector<30x512xf32>
    %338 = vector.extract_strided_slice %318 {offsets = [1, 0, 0], sizes = [1, 30, 30], strides = [1, 1, 1]} : vector<9x30x30xbf16> to vector<1x30x30xbf16>
    %339 = vector.shape_cast %338 : vector<1x30x30xbf16> to vector<30x30xbf16>
    %340 = arith.truncf %337 : vector<30x512xf32> to vector<30x512xbf16>
    %cst_113 = arith.constant dense<0.000000e+00> : vector<30x512xf32>
    %341 = tpu.matmul %339, %340, %cst_113 {dimension_numbers = #tpu.dot_dimension_numbers<[1], [0], [0], [1], [0, 0, 1, 1], [], []>} : vector<30x30xbf16>, vector<30x512xbf16>, vector<30x512xf32> -> vector<30x512xf32>
    %342 = arith.addf %332, %341 : vector<30x512xf32>
    %c15_i32_114 = arith.constant 15 : i32
    %343 = tpu.dynamic_rotate %316 by %c15_i32_114 dim 1 : vector<30x512xf32>, i32 -> vector<30x512xf32>
    %344 = vector.extract_strided_slice %2 {offsets = [2, 0, 0], sizes = [1, 1, 512], strides = [1, 1, 1]} : vector<9x1x512xf32> to vector<1x1x512xf32>
    %345 = vector.shape_cast %344 : vector<1x1x512xf32> to vector<1x512xf32>
    %346 = vector.broadcast %345 : vector<1x512xf32> to vector<30x512xf32>
    %347 = arith.mulf %343, %346 : vector<30x512xf32>
    %348 = vector.extract_strided_slice %318 {offsets = [2, 0, 0], sizes = [1, 30, 30], strides = [1, 1, 1]} : vector<9x30x30xbf16> to vector<1x30x30xbf16>
    %349 = vector.shape_cast %348 : vector<1x30x30xbf16> to vector<30x30xbf16>
    %350 = arith.truncf %347 : vector<30x512xf32> to vector<30x512xbf16>
    %cst_115 = arith.constant dense<0.000000e+00> : vector<30x512xf32>
    %351 = tpu.matmul %349, %350, %cst_115 {dimension_numbers = #tpu.dot_dimension_numbers<[1], [0], [0], [1], [0, 0, 1, 1], [], []>} : vector<30x30xbf16>, vector<30x512xbf16>, vector<30x512xf32> -> vector<30x512xf32>
    %352 = arith.addf %342, %351 : vector<30x512xf32>
    %c1_i32_116 = arith.constant 1 : i32
    %353 = tpu.dynamic_rotate %316 by %c1_i32_116 dim 1 : vector<30x512xf32>, i32 -> vector<30x512xf32>
    %354 = vector.extract_strided_slice %2 {offsets = [3, 0, 0], sizes = [1, 1, 512], strides = [1, 1, 1]} : vector<9x1x512xf32> to vector<1x1x512xf32>
    %355 = vector.shape_cast %354 : vector<1x1x512xf32> to vector<1x512xf32>
    %356 = vector.broadcast %355 : vector<1x512xf32> to vector<30x512xf32>
    %357 = arith.mulf %353, %356 : vector<30x512xf32>
    %358 = vector.extract_strided_slice %318 {offsets = [3, 0, 0], sizes = [1, 30, 30], strides = [1, 1, 1]} : vector<9x30x30xbf16> to vector<1x30x30xbf16>
    %359 = vector.shape_cast %358 : vector<1x30x30xbf16> to vector<30x30xbf16>
    %360 = arith.truncf %357 : vector<30x512xf32> to vector<30x512xbf16>
    %cst_117 = arith.constant dense<0.000000e+00> : vector<30x512xf32>
    %361 = tpu.matmul %359, %360, %cst_117 {dimension_numbers = #tpu.dot_dimension_numbers<[1], [0], [0], [1], [0, 0, 1, 1], [], []>} : vector<30x30xbf16>, vector<30x512xbf16>, vector<30x512xf32> -> vector<30x512xf32>
    %362 = arith.addf %352, %361 : vector<30x512xf32>
    %c511_i32_118 = arith.constant 511 : i32
    %363 = tpu.dynamic_rotate %316 by %c511_i32_118 dim 1 : vector<30x512xf32>, i32 -> vector<30x512xf32>
    %364 = vector.extract_strided_slice %2 {offsets = [5, 0, 0], sizes = [1, 1, 512], strides = [1, 1, 1]} : vector<9x1x512xf32> to vector<1x1x512xf32>
    %365 = vector.shape_cast %364 : vector<1x1x512xf32> to vector<1x512xf32>
    %366 = vector.broadcast %365 : vector<1x512xf32> to vector<30x512xf32>
    %367 = arith.mulf %363, %366 : vector<30x512xf32>
    %368 = vector.extract_strided_slice %318 {offsets = [5, 0, 0], sizes = [1, 30, 30], strides = [1, 1, 1]} : vector<9x30x30xbf16> to vector<1x30x30xbf16>
    %369 = vector.shape_cast %368 : vector<1x30x30xbf16> to vector<30x30xbf16>
    %370 = arith.truncf %367 : vector<30x512xf32> to vector<30x512xbf16>
    %cst_119 = arith.constant dense<0.000000e+00> : vector<30x512xf32>
    %371 = tpu.matmul %369, %370, %cst_119 {dimension_numbers = #tpu.dot_dimension_numbers<[1], [0], [0], [1], [0, 0, 1, 1], [], []>} : vector<30x30xbf16>, vector<30x512xbf16>, vector<30x512xf32> -> vector<30x512xf32>
    %372 = arith.addf %362, %371 : vector<30x512xf32>
    %c497_i32_120 = arith.constant 497 : i32
    %373 = tpu.dynamic_rotate %316 by %c497_i32_120 dim 1 : vector<30x512xf32>, i32 -> vector<30x512xf32>
    %374 = vector.extract_strided_slice %2 {offsets = [6, 0, 0], sizes = [1, 1, 512], strides = [1, 1, 1]} : vector<9x1x512xf32> to vector<1x1x512xf32>
    %375 = vector.shape_cast %374 : vector<1x1x512xf32> to vector<1x512xf32>
    %376 = vector.broadcast %375 : vector<1x512xf32> to vector<30x512xf32>
    %377 = arith.mulf %373, %376 : vector<30x512xf32>
    %378 = vector.extract_strided_slice %318 {offsets = [6, 0, 0], sizes = [1, 30, 30], strides = [1, 1, 1]} : vector<9x30x30xbf16> to vector<1x30x30xbf16>
    %379 = vector.shape_cast %378 : vector<1x30x30xbf16> to vector<30x30xbf16>
    %380 = arith.truncf %377 : vector<30x512xf32> to vector<30x512xbf16>
    %cst_121 = arith.constant dense<0.000000e+00> : vector<30x512xf32>
    %381 = tpu.matmul %379, %380, %cst_121 {dimension_numbers = #tpu.dot_dimension_numbers<[1], [0], [0], [1], [0, 0, 1, 1], [], []>} : vector<30x30xbf16>, vector<30x512xbf16>, vector<30x512xf32> -> vector<30x512xf32>
    %382 = arith.addf %372, %381 : vector<30x512xf32>
    %c496_i32_122 = arith.constant 496 : i32
    %383 = tpu.dynamic_rotate %316 by %c496_i32_122 dim 1 : vector<30x512xf32>, i32 -> vector<30x512xf32>
    %384 = vector.extract_strided_slice %2 {offsets = [7, 0, 0], sizes = [1, 1, 512], strides = [1, 1, 1]} : vector<9x1x512xf32> to vector<1x1x512xf32>
    %385 = vector.shape_cast %384 : vector<1x1x512xf32> to vector<1x512xf32>
    %386 = vector.broadcast %385 : vector<1x512xf32> to vector<30x512xf32>
    %387 = arith.mulf %383, %386 : vector<30x512xf32>
    %388 = vector.extract_strided_slice %318 {offsets = [7, 0, 0], sizes = [1, 30, 30], strides = [1, 1, 1]} : vector<9x30x30xbf16> to vector<1x30x30xbf16>
    %389 = vector.shape_cast %388 : vector<1x30x30xbf16> to vector<30x30xbf16>
    %390 = arith.truncf %387 : vector<30x512xf32> to vector<30x512xbf16>
    %cst_123 = arith.constant dense<0.000000e+00> : vector<30x512xf32>
    %391 = tpu.matmul %389, %390, %cst_123 {dimension_numbers = #tpu.dot_dimension_numbers<[1], [0], [0], [1], [0, 0, 1, 1], [], []>} : vector<30x30xbf16>, vector<30x512xbf16>, vector<30x512xf32> -> vector<30x512xf32>
    %392 = arith.addf %382, %391 : vector<30x512xf32>
    %c495_i32_124 = arith.constant 495 : i32
    %393 = tpu.dynamic_rotate %316 by %c495_i32_124 dim 1 : vector<30x512xf32>, i32 -> vector<30x512xf32>
    %394 = vector.extract_strided_slice %2 {offsets = [8, 0, 0], sizes = [1, 1, 512], strides = [1, 1, 1]} : vector<9x1x512xf32> to vector<1x1x512xf32>
    %395 = vector.shape_cast %394 : vector<1x1x512xf32> to vector<1x512xf32>
    %396 = vector.broadcast %395 : vector<1x512xf32> to vector<30x512xf32>
    %397 = arith.mulf %393, %396 : vector<30x512xf32>
    %398 = vector.extract_strided_slice %318 {offsets = [8, 0, 0], sizes = [1, 30, 30], strides = [1, 1, 1]} : vector<9x30x30xbf16> to vector<1x30x30xbf16>
    %399 = vector.shape_cast %398 : vector<1x30x30xbf16> to vector<30x30xbf16>
    %400 = arith.truncf %397 : vector<30x512xf32> to vector<30x512xbf16>
    %cst_125 = arith.constant dense<0.000000e+00> : vector<30x512xf32>
    %401 = tpu.matmul %399, %400, %cst_125 {dimension_numbers = #tpu.dot_dimension_numbers<[1], [0], [0], [1], [0, 0, 1, 1], [], []>} : vector<30x30xbf16>, vector<30x512xbf16>, vector<30x512xf32> -> vector<30x512xf32>
    %402 = arith.addf %392, %401 : vector<30x512xf32>
    %c2_126 = arith.constant 2 : index
    %c0_127 = arith.constant 0 : index
    %c0_128 = arith.constant 0 : index
    %403 = vector.load %arg7[%c2_126, %c0_127, %c0_128] : memref<3x30x1xf32, #tpu.memory_space<vmem>>, vector<1x30x1xf32>
    %404 = vector.shape_cast %403 : vector<1x30x1xf32> to vector<30x1xf32>
    %c2_129 = arith.constant 2 : index
    %c0_130 = arith.constant 0 : index
    %c0_131 = arith.constant 0 : index
    %405 = vector.load %arg8[%c2_129, %c0_130, %c0_131] : memref<3x30x1xf32, #tpu.memory_space<vmem>>, vector<1x30x1xf32>
    %406 = vector.shape_cast %405 : vector<1x30x1xf32> to vector<30x1xf32>
    %cst_132 = arith.constant dense<0.000000e+00> : vector<30xf32>
    %407 = vector.multi_reduction <add>, %402, %cst_132 [1] : vector<30x512xf32> to vector<30xf32>
    %408 = vector.shape_cast %407 : vector<30xf32> to vector<30x1xf32>
    %cst_133 = arith.constant 5.120000e+02 : f32
    %409 = vector.broadcast %cst_133 : f32 to vector<30x1xf32>
    %410 = arith.divf %408, %409 : vector<30x1xf32>
    %411 = vector.broadcast %410 : vector<30x1xf32> to vector<30x512xf32>
    %412 = arith.subf %402, %411 : vector<30x512xf32>
    %413 = arith.mulf %412, %412 : vector<30x512xf32>
    %cst_134 = arith.constant dense<0.000000e+00> : vector<30xf32>
    %414 = vector.multi_reduction <add>, %413, %cst_134 [1] : vector<30x512xf32> to vector<30xf32>
    %415 = vector.shape_cast %414 : vector<30xf32> to vector<30x1xf32>
    %cst_135 = arith.constant 5.120000e+02 : f32
    %416 = vector.broadcast %cst_135 : f32 to vector<30x1xf32>
    %417 = arith.divf %415, %416 : vector<30x1xf32>
    %cst_136 = arith.constant 9.99999974E-6 : f32
    %418 = vector.broadcast %cst_136 : f32 to vector<30x1xf32>
    %419 = arith.addf %417, %418 : vector<30x1xf32>
    %420 = math.rsqrt %419 : vector<30x1xf32>
    %421 = arith.mulf %404, %420 : vector<30x1xf32>
    %422 = vector.broadcast %421 : vector<30x1xf32> to vector<30x512xf32>
    %423 = arith.mulf %402, %422 : vector<30x512xf32>
    %424 = arith.mulf %410, %421 : vector<30x1xf32>
    %425 = arith.subf %406, %424 : vector<30x1xf32>
    %426 = vector.broadcast %425 : vector<30x1xf32> to vector<30x512xf32>
    %427 = arith.addf %423, %426 : vector<30x512xf32>
    %c0_137 = arith.constant 0 : index
    %c0_138 = arith.constant 0 : index
    %428 = vector.load %arg2[%c0_137, %c0_138] : memref<512x10xbf16, #tpu.memory_space<vmem>>, vector<512x10xbf16>
    %c0_139 = arith.constant 0 : index
    %c0_140 = arith.constant 0 : index
    %429 = vector.load %arg12[%c0_139, %c0_140] : memref<30x1xf32, #tpu.memory_space<vmem>>, vector<30x1xf32>
    %430 = arith.truncf %143 : vector<30x512xf32> to vector<30x512xbf16>
    %cst_141 = arith.constant dense<0.000000e+00> : vector<30x10xf32>
    %431 = tpu.matmul %430, %428, %cst_141 {dimension_numbers = #tpu.dot_dimension_numbers<[1], [0], [0], [1], [0, 0, 1, 1], [], []>} : vector<30x512xbf16>, vector<512x10xbf16>, vector<30x10xf32> -> vector<30x10xf32>
    %c0_142 = arith.constant 0 : index
    %c0_143 = arith.constant 0 : index
    %c0_144 = arith.constant 0 : index
    %432 = vector.load %arg9[%c0_142, %c0_143, %c0_144] : memref<1x30x10xf32, #tpu.memory_space<vmem>>, vector<1x30x10xf32>
    %433 = vector.shape_cast %432 : vector<1x30x10xf32> to vector<30x10xf32>
    %434 = arith.mulf %431, %433 : vector<30x10xf32>
    %cst_145 = arith.constant dense<0.000000e+00> : vector<10xf32>
    %435 = vector.multi_reduction <add>, %434, %cst_145 [0] : vector<30x10xf32> to vector<10xf32>
    %436 = vector.shape_cast %435 : vector<10xf32> to vector<1x10xf32>
    %437 = vector.extract_strided_slice %436 {offsets = [0, 0], sizes = [1, 2], strides = [1, 1]} : vector<1x10xf32> to vector<1x2xf32>
    %438 = vector.extract_strided_slice %436 {offsets = [0, 2], sizes = [1, 2], strides = [1, 1]} : vector<1x10xf32> to vector<1x2xf32>
    %439 = arith.addf %437, %438 : vector<1x2xf32>
    %440 = vector.extract_strided_slice %436 {offsets = [0, 4], sizes = [1, 2], strides = [1, 1]} : vector<1x10xf32> to vector<1x2xf32>
    %441 = arith.addf %439, %440 : vector<1x2xf32>
    %442 = vector.extract_strided_slice %436 {offsets = [0, 6], sizes = [1, 2], strides = [1, 1]} : vector<1x10xf32> to vector<1x2xf32>
    %443 = arith.addf %441, %442 : vector<1x2xf32>
    %444 = vector.extract_strided_slice %436 {offsets = [0, 8], sizes = [1, 2], strides = [1, 1]} : vector<1x10xf32> to vector<1x2xf32>
    %445 = arith.addf %443, %444 : vector<1x2xf32>
    %c0_146 = arith.constant 0 : index
    %c0_147 = arith.constant 0 : index
    %446 = vector.load %arg10[%c0_146, %c0_147] : memref<1x1xf32, #tpu.memory_space<vmem>>, vector<1x1xf32>
    %447 = vector.broadcast %446 : vector<1x1xf32> to vector<1x2xf32>
    %448 = arith.addf %445, %447 : vector<1x2xf32>
    %cst_148 = arith.constant 0.000000e+00 : f32
    %449 = vector.broadcast %cst_148 : f32 to vector<1x2xf32>
    %450 = arith.maximumf %448, %449 : vector<1x2xf32>
    %451 = vector.extract_strided_slice %450 {offsets = [0, 0], sizes = [1, 1], strides = [1, 1]} : vector<1x2xf32> to vector<1x1xf32>
    %c0_149 = arith.constant 0 : index
    %c0_150 = arith.constant 0 : index
    %452 = vector.load %arg11[%c0_149, %c0_150] : memref<30x1xf32, #tpu.memory_space<vmem>>, vector<30x1xf32>
    %453 = vector.broadcast %451 : vector<1x1xf32> to vector<30x1xf32>
    %454 = arith.mulf %453, %452 : vector<30x1xf32>
    %455 = arith.addf %429, %454 : vector<30x1xf32>
    %cst_151 = arith.constant 0.000000e+00 : f32
    %456 = vector.broadcast %cst_151 : f32 to vector<30x1xf32>
    %457 = arith.subf %456, %455 : vector<30x1xf32>
    %458 = math.exp %457 : vector<30x1xf32>
    %cst_152 = arith.constant 1.000000e+00 : f32
    %459 = vector.broadcast %cst_152 : f32 to vector<30x1xf32>
    %460 = arith.addf %459, %458 : vector<30x1xf32>
    %461 = tpu.reciprocal %460 {approx = true} : vector<30x1xf32> -> vector<30x1xf32>
    %462 = vector.extract_strided_slice %450 {offsets = [0, 1], sizes = [1, 1], strides = [1, 1]} : vector<1x2xf32> to vector<1x1xf32>
    %c0_153 = arith.constant 0 : index
    %c0_154 = arith.constant 0 : index
    %463 = vector.load %arg11[%c0_153, %c0_154] : memref<30x1xf32, #tpu.memory_space<vmem>>, vector<30x1xf32>
    %464 = vector.broadcast %462 : vector<1x1xf32> to vector<30x1xf32>
    %465 = arith.mulf %464, %463 : vector<30x1xf32>
    %466 = arith.addf %429, %465 : vector<30x1xf32>
    %cst_155 = arith.constant 0.000000e+00 : f32
    %467 = vector.broadcast %cst_155 : f32 to vector<30x1xf32>
    %468 = arith.subf %467, %466 : vector<30x1xf32>
    %469 = math.exp %468 : vector<30x1xf32>
    %cst_156 = arith.constant 1.000000e+00 : f32
    %470 = vector.broadcast %cst_156 : f32 to vector<30x1xf32>
    %471 = arith.addf %470, %469 : vector<30x1xf32>
    %472 = tpu.reciprocal %471 {approx = true} : vector<30x1xf32> -> vector<30x1xf32>
    %473 = arith.truncf %285 : vector<30x512xf32> to vector<30x512xbf16>
    %cst_157 = arith.constant dense<0.000000e+00> : vector<30x10xf32>
    %474 = tpu.matmul %473, %428, %cst_157 {dimension_numbers = #tpu.dot_dimension_numbers<[1], [0], [0], [1], [0, 0, 1, 1], [], []>} : vector<30x512xbf16>, vector<512x10xbf16>, vector<30x10xf32> -> vector<30x10xf32>
    %c0_158 = arith.constant 0 : index
    %c0_159 = arith.constant 0 : index
    %c0_160 = arith.constant 0 : index
    %475 = vector.load %arg9[%c0_158, %c0_159, %c0_160] : memref<1x30x10xf32, #tpu.memory_space<vmem>>, vector<1x30x10xf32>
    %476 = vector.shape_cast %475 : vector<1x30x10xf32> to vector<30x10xf32>
    %477 = arith.mulf %474, %476 : vector<30x10xf32>
    %cst_161 = arith.constant dense<0.000000e+00> : vector<10xf32>
    %478 = vector.multi_reduction <add>, %477, %cst_161 [0] : vector<30x10xf32> to vector<10xf32>
    %479 = vector.shape_cast %478 : vector<10xf32> to vector<1x10xf32>
    %480 = vector.extract_strided_slice %479 {offsets = [0, 0], sizes = [1, 2], strides = [1, 1]} : vector<1x10xf32> to vector<1x2xf32>
    %481 = vector.extract_strided_slice %479 {offsets = [0, 2], sizes = [1, 2], strides = [1, 1]} : vector<1x10xf32> to vector<1x2xf32>
    %482 = arith.addf %480, %481 : vector<1x2xf32>
    %483 = vector.extract_strided_slice %479 {offsets = [0, 4], sizes = [1, 2], strides = [1, 1]} : vector<1x10xf32> to vector<1x2xf32>
    %484 = arith.addf %482, %483 : vector<1x2xf32>
    %485 = vector.extract_strided_slice %479 {offsets = [0, 6], sizes = [1, 2], strides = [1, 1]} : vector<1x10xf32> to vector<1x2xf32>
    %486 = arith.addf %484, %485 : vector<1x2xf32>
    %487 = vector.extract_strided_slice %479 {offsets = [0, 8], sizes = [1, 2], strides = [1, 1]} : vector<1x10xf32> to vector<1x2xf32>
    %488 = arith.addf %486, %487 : vector<1x2xf32>
    %c0_162 = arith.constant 0 : index
    %c0_163 = arith.constant 0 : index
    %489 = vector.load %arg10[%c0_162, %c0_163] : memref<1x1xf32, #tpu.memory_space<vmem>>, vector<1x1xf32>
    %490 = vector.broadcast %489 : vector<1x1xf32> to vector<1x2xf32>
    %491 = arith.addf %488, %490 : vector<1x2xf32>
    %cst_164 = arith.constant 0.000000e+00 : f32
    %492 = vector.broadcast %cst_164 : f32 to vector<1x2xf32>
    %493 = arith.maximumf %491, %492 : vector<1x2xf32>
    %494 = vector.extract_strided_slice %493 {offsets = [0, 0], sizes = [1, 1], strides = [1, 1]} : vector<1x2xf32> to vector<1x1xf32>
    %c0_165 = arith.constant 0 : index
    %c0_166 = arith.constant 0 : index
    %495 = vector.load %arg11[%c0_165, %c0_166] : memref<30x1xf32, #tpu.memory_space<vmem>>, vector<30x1xf32>
    %496 = vector.broadcast %494 : vector<1x1xf32> to vector<30x1xf32>
    %497 = arith.mulf %496, %495 : vector<30x1xf32>
    %498 = arith.addf %429, %497 : vector<30x1xf32>
    %cst_167 = arith.constant 0.000000e+00 : f32
    %499 = vector.broadcast %cst_167 : f32 to vector<30x1xf32>
    %500 = arith.subf %499, %498 : vector<30x1xf32>
    %501 = math.exp %500 : vector<30x1xf32>
    %cst_168 = arith.constant 1.000000e+00 : f32
    %502 = vector.broadcast %cst_168 : f32 to vector<30x1xf32>
    %503 = arith.addf %502, %501 : vector<30x1xf32>
    %504 = tpu.reciprocal %503 {approx = true} : vector<30x1xf32> -> vector<30x1xf32>
    %505 = vector.extract_strided_slice %493 {offsets = [0, 1], sizes = [1, 1], strides = [1, 1]} : vector<1x2xf32> to vector<1x1xf32>
    %c0_169 = arith.constant 0 : index
    %c0_170 = arith.constant 0 : index
    %506 = vector.load %arg11[%c0_169, %c0_170] : memref<30x1xf32, #tpu.memory_space<vmem>>, vector<30x1xf32>
    %507 = vector.broadcast %505 : vector<1x1xf32> to vector<30x1xf32>
    %508 = arith.mulf %507, %506 : vector<30x1xf32>
    %509 = arith.addf %429, %508 : vector<30x1xf32>
    %cst_171 = arith.constant 0.000000e+00 : f32
    %510 = vector.broadcast %cst_171 : f32 to vector<30x1xf32>
    %511 = arith.subf %510, %509 : vector<30x1xf32>
    %512 = math.exp %511 : vector<30x1xf32>
    %cst_172 = arith.constant 1.000000e+00 : f32
    %513 = vector.broadcast %cst_172 : f32 to vector<30x1xf32>
    %514 = arith.addf %513, %512 : vector<30x1xf32>
    %515 = tpu.reciprocal %514 {approx = true} : vector<30x1xf32> -> vector<30x1xf32>
    %516 = arith.truncf %427 : vector<30x512xf32> to vector<30x512xbf16>
    %cst_173 = arith.constant dense<0.000000e+00> : vector<30x10xf32>
    %517 = tpu.matmul %516, %428, %cst_173 {dimension_numbers = #tpu.dot_dimension_numbers<[1], [0], [0], [1], [0, 0, 1, 1], [], []>} : vector<30x512xbf16>, vector<512x10xbf16>, vector<30x10xf32> -> vector<30x10xf32>
    %c0_174 = arith.constant 0 : index
    %c0_175 = arith.constant 0 : index
    %c0_176 = arith.constant 0 : index
    %518 = vector.load %arg9[%c0_174, %c0_175, %c0_176] : memref<1x30x10xf32, #tpu.memory_space<vmem>>, vector<1x30x10xf32>
    %519 = vector.shape_cast %518 : vector<1x30x10xf32> to vector<30x10xf32>
    %520 = arith.mulf %517, %519 : vector<30x10xf32>
    %cst_177 = arith.constant dense<0.000000e+00> : vector<10xf32>
    %521 = vector.multi_reduction <add>, %520, %cst_177 [0] : vector<30x10xf32> to vector<10xf32>
    %522 = vector.shape_cast %521 : vector<10xf32> to vector<1x10xf32>
    %523 = vector.extract_strided_slice %522 {offsets = [0, 0], sizes = [1, 2], strides = [1, 1]} : vector<1x10xf32> to vector<1x2xf32>
    %524 = vector.extract_strided_slice %522 {offsets = [0, 2], sizes = [1, 2], strides = [1, 1]} : vector<1x10xf32> to vector<1x2xf32>
    %525 = arith.addf %523, %524 : vector<1x2xf32>
    %526 = vector.extract_strided_slice %522 {offsets = [0, 4], sizes = [1, 2], strides = [1, 1]} : vector<1x10xf32> to vector<1x2xf32>
    %527 = arith.addf %525, %526 : vector<1x2xf32>
    %528 = vector.extract_strided_slice %522 {offsets = [0, 6], sizes = [1, 2], strides = [1, 1]} : vector<1x10xf32> to vector<1x2xf32>
    %529 = arith.addf %527, %528 : vector<1x2xf32>
    %530 = vector.extract_strided_slice %522 {offsets = [0, 8], sizes = [1, 2], strides = [1, 1]} : vector<1x10xf32> to vector<1x2xf32>
    %531 = arith.addf %529, %530 : vector<1x2xf32>
    %c0_178 = arith.constant 0 : index
    %c0_179 = arith.constant 0 : index
    %532 = vector.load %arg10[%c0_178, %c0_179] : memref<1x1xf32, #tpu.memory_space<vmem>>, vector<1x1xf32>
    %533 = vector.broadcast %532 : vector<1x1xf32> to vector<1x2xf32>
    %534 = arith.addf %531, %533 : vector<1x2xf32>
    %cst_180 = arith.constant 0.000000e+00 : f32
    %535 = vector.broadcast %cst_180 : f32 to vector<1x2xf32>
    %536 = arith.maximumf %534, %535 : vector<1x2xf32>
    %537 = vector.extract_strided_slice %536 {offsets = [0, 0], sizes = [1, 1], strides = [1, 1]} : vector<1x2xf32> to vector<1x1xf32>
    %c0_181 = arith.constant 0 : index
    %c0_182 = arith.constant 0 : index
    %538 = vector.load %arg11[%c0_181, %c0_182] : memref<30x1xf32, #tpu.memory_space<vmem>>, vector<30x1xf32>
    %539 = vector.broadcast %537 : vector<1x1xf32> to vector<30x1xf32>
    %540 = arith.mulf %539, %538 : vector<30x1xf32>
    %541 = arith.addf %429, %540 : vector<30x1xf32>
    %cst_183 = arith.constant 0.000000e+00 : f32
    %542 = vector.broadcast %cst_183 : f32 to vector<30x1xf32>
    %543 = arith.subf %542, %541 : vector<30x1xf32>
    %544 = math.exp %543 : vector<30x1xf32>
    %cst_184 = arith.constant 1.000000e+00 : f32
    %545 = vector.broadcast %cst_184 : f32 to vector<30x1xf32>
    %546 = arith.addf %545, %544 : vector<30x1xf32>
    %547 = tpu.reciprocal %546 {approx = true} : vector<30x1xf32> -> vector<30x1xf32>
    %548 = vector.extract_strided_slice %536 {offsets = [0, 1], sizes = [1, 1], strides = [1, 1]} : vector<1x2xf32> to vector<1x1xf32>
    %c0_185 = arith.constant 0 : index
    %c0_186 = arith.constant 0 : index
    %549 = vector.load %arg11[%c0_185, %c0_186] : memref<30x1xf32, #tpu.memory_space<vmem>>, vector<30x1xf32>
    %550 = vector.broadcast %548 : vector<1x1xf32> to vector<30x1xf32>
    %551 = arith.mulf %550, %549 : vector<30x1xf32>
    %552 = arith.addf %429, %551 : vector<30x1xf32>
    %cst_187 = arith.constant 0.000000e+00 : f32
    %553 = vector.broadcast %cst_187 : f32 to vector<30x1xf32>
    %554 = arith.subf %553, %552 : vector<30x1xf32>
    %555 = math.exp %554 : vector<30x1xf32>
    %cst_188 = arith.constant 1.000000e+00 : f32
    %556 = vector.broadcast %cst_188 : f32 to vector<30x1xf32>
    %557 = arith.addf %556, %555 : vector<30x1xf32>
    %558 = tpu.reciprocal %557 {approx = true} : vector<30x1xf32> -> vector<30x1xf32>
    %559 = arith.maximumf %461, %504 : vector<30x1xf32>
    %560 = arith.maximumf %559, %547 : vector<30x1xf32>
    %561 = arith.subf %461, %560 : vector<30x1xf32>
    %562 = math.exp %561 : vector<30x1xf32>
    %563 = arith.subf %504, %560 : vector<30x1xf32>
    %564 = math.exp %563 : vector<30x1xf32>
    %565 = arith.subf %547, %560 : vector<30x1xf32>
    %566 = math.exp %565 : vector<30x1xf32>
    %567 = arith.addf %562, %564 : vector<30x1xf32>
    %568 = arith.addf %567, %566 : vector<30x1xf32>
    %569 = tpu.reciprocal %568 {approx = true} : vector<30x1xf32> -> vector<30x1xf32>
    %570 = arith.mulf %562, %569 : vector<30x1xf32>
    %571 = arith.mulf %564, %569 : vector<30x1xf32>
    %572 = arith.mulf %566, %569 : vector<30x1xf32>
    %573 = arith.maximumf %472, %515 : vector<30x1xf32>
    %574 = arith.maximumf %573, %558 : vector<30x1xf32>
    %575 = arith.subf %472, %574 : vector<30x1xf32>
    %576 = math.exp %575 : vector<30x1xf32>
    %577 = arith.subf %515, %574 : vector<30x1xf32>
    %578 = math.exp %577 : vector<30x1xf32>
    %579 = arith.subf %558, %574 : vector<30x1xf32>
    %580 = math.exp %579 : vector<30x1xf32>
    %581 = arith.addf %576, %578 : vector<30x1xf32>
    %582 = arith.addf %581, %580 : vector<30x1xf32>
    %583 = tpu.reciprocal %582 {approx = true} : vector<30x1xf32> -> vector<30x1xf32>
    %584 = arith.mulf %576, %583 : vector<30x1xf32>
    %585 = arith.mulf %578, %583 : vector<30x1xf32>
    %586 = arith.mulf %580, %583 : vector<30x1xf32>
    %587 = vector.extract_strided_slice %143 {offsets = [0, 0], sizes = [30, 256], strides = [1, 1]} : vector<30x512xf32> to vector<30x256xf32>
    %588 = vector.broadcast %570 : vector<30x1xf32> to vector<30x256xf32>
    %589 = arith.mulf %587, %588 : vector<30x256xf32>
    %590 = vector.extract_strided_slice %143 {offsets = [0, 256], sizes = [30, 256], strides = [1, 1]} : vector<30x512xf32> to vector<30x256xf32>
    %591 = vector.broadcast %584 : vector<30x1xf32> to vector<30x256xf32>
    %592 = arith.mulf %590, %591 : vector<30x256xf32>
    %593 = tpu.concatenate %589, %592 in 1 : vector<30x256xf32>, vector<30x256xf32> -> vector<30x512xf32>
    %c0_189 = arith.constant 0 : index
    %c0_190 = arith.constant 0 : index
    %c0_191 = arith.constant 0 : index
    %594 = vector.load %arg13[%c0_189, %c0_190, %c0_191] : memref<3x30x1xf32, #tpu.memory_space<vmem>>, vector<1x30x1xf32>
    %595 = vector.shape_cast %594 : vector<1x30x1xf32> to vector<30x1xf32>
    %c0_192 = arith.constant 0 : index
    %c0_193 = arith.constant 0 : index
    %c0_194 = arith.constant 0 : index
    %596 = vector.load %arg14[%c0_192, %c0_193, %c0_194] : memref<3x30x1xf32, #tpu.memory_space<vmem>>, vector<1x30x1xf32>
    %597 = vector.shape_cast %596 : vector<1x30x1xf32> to vector<30x1xf32>
    %cst_195 = arith.constant dense<0.000000e+00> : vector<30xf32>
    %598 = vector.multi_reduction <add>, %593, %cst_195 [1] : vector<30x512xf32> to vector<30xf32>
    %599 = vector.shape_cast %598 : vector<30xf32> to vector<30x1xf32>
    %cst_196 = arith.constant 5.120000e+02 : f32
    %600 = vector.broadcast %cst_196 : f32 to vector<30x1xf32>
    %601 = arith.divf %599, %600 : vector<30x1xf32>
    %602 = vector.broadcast %601 : vector<30x1xf32> to vector<30x512xf32>
    %603 = arith.subf %593, %602 : vector<30x512xf32>
    %604 = arith.mulf %603, %603 : vector<30x512xf32>
    %cst_197 = arith.constant dense<0.000000e+00> : vector<30xf32>
    %605 = vector.multi_reduction <add>, %604, %cst_197 [1] : vector<30x512xf32> to vector<30xf32>
    %606 = vector.shape_cast %605 : vector<30xf32> to vector<30x1xf32>
    %cst_198 = arith.constant 5.120000e+02 : f32
    %607 = vector.broadcast %cst_198 : f32 to vector<30x1xf32>
    %608 = arith.divf %606, %607 : vector<30x1xf32>
    %cst_199 = arith.constant 9.99999974E-6 : f32
    %609 = vector.broadcast %cst_199 : f32 to vector<30x1xf32>
    %610 = arith.addf %608, %609 : vector<30x1xf32>
    %611 = math.rsqrt %610 : vector<30x1xf32>
    %612 = arith.mulf %595, %611 : vector<30x1xf32>
    %613 = vector.broadcast %612 : vector<30x1xf32> to vector<30x512xf32>
    %614 = arith.mulf %593, %613 : vector<30x512xf32>
    %615 = arith.mulf %601, %612 : vector<30x1xf32>
    %616 = arith.subf %597, %615 : vector<30x1xf32>
    %617 = vector.broadcast %616 : vector<30x1xf32> to vector<30x512xf32>
    %618 = arith.addf %614, %617 : vector<30x512xf32>
    %cst_200 = arith.constant 0.000000e+00 : f32
    %619 = vector.broadcast %cst_200 : f32 to vector<30x512xf32>
    %620 = arith.maximumf %618, %619 : vector<30x512xf32>
    %c0_201 = arith.constant 0 : index
    %c0_202 = arith.constant 0 : index
    %c0_203 = arith.constant 0 : index
    %621 = vector.load %arg15[%c0_201, %c0_202, %c0_203] : memref<3x64x30xbf16, #tpu.memory_space<vmem>>, vector<1x64x30xbf16>
    %622 = vector.shape_cast %621 : vector<1x64x30xbf16> to vector<64x30xbf16>
    %623 = arith.truncf %620 : vector<30x512xf32> to vector<30x512xbf16>
    %cst_204 = arith.constant dense<0.000000e+00> : vector<64x512xf32>
    %624 = tpu.matmul %622, %623, %cst_204 {dimension_numbers = #tpu.dot_dimension_numbers<[1], [0], [0], [1], [0, 0, 1, 1], [], []>} : vector<64x30xbf16>, vector<30x512xbf16>, vector<64x512xf32> -> vector<64x512xf32>
    %625 = vector.extract_strided_slice %285 {offsets = [0, 0], sizes = [30, 256], strides = [1, 1]} : vector<30x512xf32> to vector<30x256xf32>
    %626 = vector.broadcast %571 : vector<30x1xf32> to vector<30x256xf32>
    %627 = arith.mulf %625, %626 : vector<30x256xf32>
    %628 = vector.extract_strided_slice %285 {offsets = [0, 256], sizes = [30, 256], strides = [1, 1]} : vector<30x512xf32> to vector<30x256xf32>
    %629 = vector.broadcast %585 : vector<30x1xf32> to vector<30x256xf32>
    %630 = arith.mulf %628, %629 : vector<30x256xf32>
    %631 = tpu.concatenate %627, %630 in 1 : vector<30x256xf32>, vector<30x256xf32> -> vector<30x512xf32>
    %c1_205 = arith.constant 1 : index
    %c0_206 = arith.constant 0 : index
    %c0_207 = arith.constant 0 : index
    %632 = vector.load %arg13[%c1_205, %c0_206, %c0_207] : memref<3x30x1xf32, #tpu.memory_space<vmem>>, vector<1x30x1xf32>
    %633 = vector.shape_cast %632 : vector<1x30x1xf32> to vector<30x1xf32>
    %c1_208 = arith.constant 1 : index
    %c0_209 = arith.constant 0 : index
    %c0_210 = arith.constant 0 : index
    %634 = vector.load %arg14[%c1_208, %c0_209, %c0_210] : memref<3x30x1xf32, #tpu.memory_space<vmem>>, vector<1x30x1xf32>
    %635 = vector.shape_cast %634 : vector<1x30x1xf32> to vector<30x1xf32>
    %cst_211 = arith.constant dense<0.000000e+00> : vector<30xf32>
    %636 = vector.multi_reduction <add>, %631, %cst_211 [1] : vector<30x512xf32> to vector<30xf32>
    %637 = vector.shape_cast %636 : vector<30xf32> to vector<30x1xf32>
    %cst_212 = arith.constant 5.120000e+02 : f32
    %638 = vector.broadcast %cst_212 : f32 to vector<30x1xf32>
    %639 = arith.divf %637, %638 : vector<30x1xf32>
    %640 = vector.broadcast %639 : vector<30x1xf32> to vector<30x512xf32>
    %641 = arith.subf %631, %640 : vector<30x512xf32>
    %642 = arith.mulf %641, %641 : vector<30x512xf32>
    %cst_213 = arith.constant dense<0.000000e+00> : vector<30xf32>
    %643 = vector.multi_reduction <add>, %642, %cst_213 [1] : vector<30x512xf32> to vector<30xf32>
    %644 = vector.shape_cast %643 : vector<30xf32> to vector<30x1xf32>
    %cst_214 = arith.constant 5.120000e+02 : f32
    %645 = vector.broadcast %cst_214 : f32 to vector<30x1xf32>
    %646 = arith.divf %644, %645 : vector<30x1xf32>
    %cst_215 = arith.constant 9.99999974E-6 : f32
    %647 = vector.broadcast %cst_215 : f32 to vector<30x1xf32>
    %648 = arith.addf %646, %647 : vector<30x1xf32>
    %649 = math.rsqrt %648 : vector<30x1xf32>
    %650 = arith.mulf %633, %649 : vector<30x1xf32>
    %651 = vector.broadcast %650 : vector<30x1xf32> to vector<30x512xf32>
    %652 = arith.mulf %631, %651 : vector<30x512xf32>
    %653 = arith.mulf %639, %650 : vector<30x1xf32>
    %654 = arith.subf %635, %653 : vector<30x1xf32>
    %655 = vector.broadcast %654 : vector<30x1xf32> to vector<30x512xf32>
    %656 = arith.addf %652, %655 : vector<30x512xf32>
    %cst_216 = arith.constant 0.000000e+00 : f32
    %657 = vector.broadcast %cst_216 : f32 to vector<30x512xf32>
    %658 = arith.maximumf %656, %657 : vector<30x512xf32>
    %c1_217 = arith.constant 1 : index
    %c0_218 = arith.constant 0 : index
    %c0_219 = arith.constant 0 : index
    %659 = vector.load %arg15[%c1_217, %c0_218, %c0_219] : memref<3x64x30xbf16, #tpu.memory_space<vmem>>, vector<1x64x30xbf16>
    %660 = vector.shape_cast %659 : vector<1x64x30xbf16> to vector<64x30xbf16>
    %661 = arith.truncf %658 : vector<30x512xf32> to vector<30x512xbf16>
    %cst_220 = arith.constant dense<0.000000e+00> : vector<64x512xf32>
    %662 = tpu.matmul %660, %661, %cst_220 {dimension_numbers = #tpu.dot_dimension_numbers<[1], [0], [0], [1], [0, 0, 1, 1], [], []>} : vector<64x30xbf16>, vector<30x512xbf16>, vector<64x512xf32> -> vector<64x512xf32>
    %663 = arith.addf %624, %662 : vector<64x512xf32>
    %664 = vector.extract_strided_slice %427 {offsets = [0, 0], sizes = [30, 256], strides = [1, 1]} : vector<30x512xf32> to vector<30x256xf32>
    %665 = vector.broadcast %572 : vector<30x1xf32> to vector<30x256xf32>
    %666 = arith.mulf %664, %665 : vector<30x256xf32>
    %667 = vector.extract_strided_slice %427 {offsets = [0, 256], sizes = [30, 256], strides = [1, 1]} : vector<30x512xf32> to vector<30x256xf32>
    %668 = vector.broadcast %586 : vector<30x1xf32> to vector<30x256xf32>
    %669 = arith.mulf %667, %668 : vector<30x256xf32>
    %670 = tpu.concatenate %666, %669 in 1 : vector<30x256xf32>, vector<30x256xf32> -> vector<30x512xf32>
    %c2_221 = arith.constant 2 : index
    %c0_222 = arith.constant 0 : index
    %c0_223 = arith.constant 0 : index
    %671 = vector.load %arg13[%c2_221, %c0_222, %c0_223] : memref<3x30x1xf32, #tpu.memory_space<vmem>>, vector<1x30x1xf32>
    %672 = vector.shape_cast %671 : vector<1x30x1xf32> to vector<30x1xf32>
    %c2_224 = arith.constant 2 : index
    %c0_225 = arith.constant 0 : index
    %c0_226 = arith.constant 0 : index
    %673 = vector.load %arg14[%c2_224, %c0_225, %c0_226] : memref<3x30x1xf32, #tpu.memory_space<vmem>>, vector<1x30x1xf32>
    %674 = vector.shape_cast %673 : vector<1x30x1xf32> to vector<30x1xf32>
    %cst_227 = arith.constant dense<0.000000e+00> : vector<30xf32>
    %675 = vector.multi_reduction <add>, %670, %cst_227 [1] : vector<30x512xf32> to vector<30xf32>
    %676 = vector.shape_cast %675 : vector<30xf32> to vector<30x1xf32>
    %cst_228 = arith.constant 5.120000e+02 : f32
    %677 = vector.broadcast %cst_228 : f32 to vector<30x1xf32>
    %678 = arith.divf %676, %677 : vector<30x1xf32>
    %679 = vector.broadcast %678 : vector<30x1xf32> to vector<30x512xf32>
    %680 = arith.subf %670, %679 : vector<30x512xf32>
    %681 = arith.mulf %680, %680 : vector<30x512xf32>
    %cst_229 = arith.constant dense<0.000000e+00> : vector<30xf32>
    %682 = vector.multi_reduction <add>, %681, %cst_229 [1] : vector<30x512xf32> to vector<30xf32>
    %683 = vector.shape_cast %682 : vector<30xf32> to vector<30x1xf32>
    %cst_230 = arith.constant 5.120000e+02 : f32
    %684 = vector.broadcast %cst_230 : f32 to vector<30x1xf32>
    %685 = arith.divf %683, %684 : vector<30x1xf32>
    %cst_231 = arith.constant 9.99999974E-6 : f32
    %686 = vector.broadcast %cst_231 : f32 to vector<30x1xf32>
    %687 = arith.addf %685, %686 : vector<30x1xf32>
    %688 = math.rsqrt %687 : vector<30x1xf32>
    %689 = arith.mulf %672, %688 : vector<30x1xf32>
    %690 = vector.broadcast %689 : vector<30x1xf32> to vector<30x512xf32>
    %691 = arith.mulf %670, %690 : vector<30x512xf32>
    %692 = arith.mulf %678, %689 : vector<30x1xf32>
    %693 = arith.subf %674, %692 : vector<30x1xf32>
    %694 = vector.broadcast %693 : vector<30x1xf32> to vector<30x512xf32>
    %695 = arith.addf %691, %694 : vector<30x512xf32>
    %cst_232 = arith.constant 0.000000e+00 : f32
    %696 = vector.broadcast %cst_232 : f32 to vector<30x512xf32>
    %697 = arith.maximumf %695, %696 : vector<30x512xf32>
    %c2_233 = arith.constant 2 : index
    %c0_234 = arith.constant 0 : index
    %c0_235 = arith.constant 0 : index
    %698 = vector.load %arg15[%c2_233, %c0_234, %c0_235] : memref<3x64x30xbf16, #tpu.memory_space<vmem>>, vector<1x64x30xbf16>
    %699 = vector.shape_cast %698 : vector<1x64x30xbf16> to vector<64x30xbf16>
    %700 = arith.truncf %697 : vector<30x512xf32> to vector<30x512xbf16>
    %cst_236 = arith.constant dense<0.000000e+00> : vector<64x512xf32>
    %701 = tpu.matmul %699, %700, %cst_236 {dimension_numbers = #tpu.dot_dimension_numbers<[1], [0], [0], [1], [0, 0, 1, 1], [], []>} : vector<64x30xbf16>, vector<30x512xbf16>, vector<64x512xf32> -> vector<64x512xf32>
    %702 = arith.addf %663, %701 : vector<64x512xf32>
    %c0_237 = arith.constant 0 : index
    %c0_238 = arith.constant 0 : index
    %703 = vector.load %arg16[%c0_237, %c0_238] : memref<64x1xf32, #tpu.memory_space<vmem>>, vector<64x1xf32>
    %c0_239 = arith.constant 0 : index
    %c0_240 = arith.constant 0 : index
    %704 = vector.load %arg17[%c0_239, %c0_240] : memref<64x1xf32, #tpu.memory_space<vmem>>, vector<64x1xf32>
    %cst_241 = arith.constant dense<0.000000e+00> : vector<64xf32>
    %705 = vector.multi_reduction <add>, %702, %cst_241 [1] : vector<64x512xf32> to vector<64xf32>
    %706 = vector.shape_cast %705 : vector<64xf32> to vector<64x1xf32>
    %cst_242 = arith.constant 5.120000e+02 : f32
    %707 = vector.broadcast %cst_242 : f32 to vector<64x1xf32>
    %708 = arith.divf %706, %707 : vector<64x1xf32>
    %709 = vector.broadcast %708 : vector<64x1xf32> to vector<64x512xf32>
    %710 = arith.subf %702, %709 : vector<64x512xf32>
    %711 = arith.mulf %710, %710 : vector<64x512xf32>
    %cst_243 = arith.constant dense<0.000000e+00> : vector<64xf32>
    %712 = vector.multi_reduction <add>, %711, %cst_243 [1] : vector<64x512xf32> to vector<64xf32>
    %713 = vector.shape_cast %712 : vector<64xf32> to vector<64x1xf32>
    %cst_244 = arith.constant 5.120000e+02 : f32
    %714 = vector.broadcast %cst_244 : f32 to vector<64x1xf32>
    %715 = arith.divf %713, %714 : vector<64x1xf32>
    %cst_245 = arith.constant 9.99999974E-6 : f32
    %716 = vector.broadcast %cst_245 : f32 to vector<64x1xf32>
    %717 = arith.addf %715, %716 : vector<64x1xf32>
    %718 = math.rsqrt %717 : vector<64x1xf32>
    %719 = arith.mulf %703, %718 : vector<64x1xf32>
    %720 = vector.broadcast %719 : vector<64x1xf32> to vector<64x512xf32>
    %721 = arith.mulf %702, %720 : vector<64x512xf32>
    %722 = arith.mulf %708, %719 : vector<64x1xf32>
    %723 = arith.subf %704, %722 : vector<64x1xf32>
    %724 = vector.broadcast %723 : vector<64x1xf32> to vector<64x512xf32>
    %725 = arith.addf %721, %724 : vector<64x512xf32>
    %726 = arith.addf %725, %0 : vector<64x512xf32>
    %cst_246 = arith.constant 0.000000e+00 : f32
    %727 = vector.broadcast %cst_246 : f32 to vector<64x512xf32>
    %728 = arith.maximumf %726, %727 : vector<64x512xf32>
    %c0_247 = arith.constant 0 : index
    %c0_248 = arith.constant 0 : index
    %729 = vector.load %arg18[%c0_247, %c0_248] : memref<64x512xf32, #tpu.memory_space<vmem>>, vector<64x512xf32>
    tpu.vector_store %arg18[%c0_247, %c0_248], %728 {strides = array<i32>} : memref<64x512xf32, #tpu.memory_space<vmem>>, vector<64x512xf32>,
    return
  }
}

</mosaic_0001>

<llo_original>
// kernel: tpu_custom_call.1
$region0: #{tpu_custom_call.1}
  #allocation0 [shape = 'u32[]', space=smem, size = 0x4, offset = 0x4, fixed_abs, tag = 'smem constant byte address 0x4 - core index']
  #allocation1 [shape = 'u32[144,128]{1,0:T(1,128)}', space=vmem, size = 0x12000, scoped, tag = 'internal scratch']
  #allocation2 [shape = 'f32[1,1]{1,0:T(1,128)S(1)}', space=vmem, size = 0x200, scoped, tag = 'scoped memory for tpu_custom_call.1']
  %s0 = inlined_call_operand.hbm [shape: f32[64,512], index: 0, kind: input, shape index: {}, may-alias: {0,18}]
  %s1 = inlined_call_operand.vmem [shape: f32[9,1,512], index: 1, kind: input, shape index: {}]
  %s2 = inlined_call_operand.vmem [shape: bf16[512,10], index: 2, kind: input, shape index: {}]
  %s3 = inlined_call_operand.vmem [shape: bf16[3,30,64], index: 3, kind: input, shape index: {}]
  %s4 = inlined_call_operand.vmem [shape: f32[3,30,1], index: 4, kind: input, shape index: {}]
  %s5 = inlined_call_operand.vmem [shape: f32[3,30,1], index: 5, kind: input, shape index: {}]
  %s6 = inlined_call_operand.vmem [shape: bf16[3,9,30,30], index: 6, kind: input, shape index: {}]
  %s7 = inlined_call_operand.vmem [shape: f32[3,30,1], index: 7, kind: input, shape index: {}]
  %s8 = inlined_call_operand.vmem [shape: f32[3,30,1], index: 8, kind: input, shape index: {}]
  %s9 = inlined_call_operand.vmem [shape: f32[1,30,10], index: 9, kind: input, shape index: {}]
  %s10 = inlined_call_operand.<no memory space> [shape: f32[1,1], index: 10, kind: input, shape index: {}]
  %s11 = inlined_call_operand.vmem [shape: f32[30,1], index: 11, kind: input, shape index: {}]
  %s12 = inlined_call_operand.vmem [shape: f32[30,1], index: 12, kind: input, shape index: {}]
  %s13 = inlined_call_operand.vmem [shape: f32[3,30,1], index: 13, kind: input, shape index: {}]
  %s14 = inlined_call_operand.vmem [shape: f32[3,30,1], index: 14, kind: input, shape index: {}]
  %s15 = inlined_call_operand.vmem [shape: bf16[3,64,30], index: 15, kind: input, shape index: {}]
  %s16 = inlined_call_operand.vmem [shape: f32[64,1], index: 16, kind: input, shape index: {}]
  %s17 = inlined_call_operand.vmem [shape: f32[64,1], index: 17, kind: input, shape index: {}]
  %s18 = inlined_call_operand.hbm [shape: f32[64,512], index: 18, kind: output, shape index: {}, may-alias: {0,18}]
  %s19 = sld [smem:[#allocation0]]
  $region86: #{tpu_custom_call.1} parent=0
    _
  %s21 = ssub.s32 1, %s19
  %s22 = scalar_select 0, %s21, %s19
  %v23 = vstv %s10
  %24 = vst [vmem:[#allocation2] sm:$0x1] %v23
  $region1: #{tpu_custom_call.1} parent=0
    #allocation3 [shape = 'u8[131072]{0}', space=vmem, size = 0x20000, scoped, tag = 'input window, operand 0, single buffered']
    #allocation4 [shape = 's32[1]{0}', space=sflag, size = 0x4, scoped, tag = 'scoped memory for tpu_custom_call.1']
    #allocation5 [shape = 's32[1]{0}', space=sflag, size = 0x4, scoped, tag = 'scoped memory for tpu_custom_call.1']
    #allocation6 [shape = 'u8[131072]{0}', space=vmem, size = 0x20000, scoped, tag = 'output window, operand 0, single buffered']
    %25 = vsyncpa [#allocation4], 0
    %26 = vsyncpa [#allocation5], 0
    // Predicated region
    $region2: #{tpu_custom_call.1} parent=1 // pred_check
      _
    $region3: #{tpu_custom_call.1} parent=1 // pred_check_branch
      %28 = sbr.rel (0) target = $region5
    $region4: #{tpu_custom_call.1} parent=1 // pred_region
      %s30 = ssub.s32 4096, 4096
      %31 = vsyncadd [#allocation4], %s30
      %s32 = sshll.u32 [#allocation3], 4
      %s33 = int_to_ptr.vmem [resolvable:$true] %s32
      %38 = dma.hbm_to_vmem [thread:$0]  %s0, 4096, %s33, [#allocation4], 512, 512, 32
    $region5: #{tpu_custom_call.1} parent=1 // pred_fallthru
      _
    // Predicated region
    $region6: #{tpu_custom_call.1} parent=1 // pred_check
      _
    $region7: #{tpu_custom_call.1} parent=1 // pred_check_branch
      %40 = sbr.rel (0) target = $region9
    $region8: #{tpu_custom_call.1} parent=1 // pred_region
      _
    $region9: #{tpu_custom_call.1} parent=1 // pred_fallthru
      _
    // Predicated region
    $region10: #{tpu_custom_call.1} parent=1 // pred_check
      _
    $region11: #{tpu_custom_call.1} parent=1 // pred_check_branch
      %42 = sbr.rel (0) target = $region13
    $region12: #{tpu_custom_call.1} parent=1 // pred_region
      _
    $region13: #{tpu_custom_call.1} parent=1 // pred_fallthru
      _
    // Predicated region
    $region14: #{tpu_custom_call.1} parent=1 // pred_check
      _
    $region15: #{tpu_custom_call.1} parent=1 // pred_check_branch
      %44 = sbr.rel (0) target = $region17
    $region16: #{tpu_custom_call.1} parent=1 // pred_region
      _
    $region17: #{tpu_custom_call.1} parent=1 // pred_fallthru
      _
    // Predicated region
    $region18: #{tpu_custom_call.1} parent=1 // pred_check
      _
    $region19: #{tpu_custom_call.1} parent=1 // pred_check_branch
      %46 = sbr.rel (0) target = $region21
    $region20: #{tpu_custom_call.1} parent=1 // pred_region
      _
    $region21: #{tpu_custom_call.1} parent=1 // pred_fallthru
      _
    // Predicated region
    $region22: #{tpu_custom_call.1} parent=1 // pred_check
      _
    $region23: #{tpu_custom_call.1} parent=1 // pred_check_branch
      %48 = sbr.rel (0) target = $region25
    $region24: #{tpu_custom_call.1} parent=1 // pred_region
      _
    $region25: #{tpu_custom_call.1} parent=1 // pred_fallthru
      _
    // Predicated region
    $region26: #{tpu_custom_call.1} parent=1 // pred_check
      _
    $region27: #{tpu_custom_call.1} parent=1 // pred_check_branch
      %50 = sbr.rel (0) target = $region29
    $region28: #{tpu_custom_call.1} parent=1 // pred_region
      _
    $region29: #{tpu_custom_call.1} parent=1 // pred_fallthru
      _
    // Predicated region
    $region30: #{tpu_custom_call.1} parent=1 // pred_check
      _
    $region31: #{tpu_custom_call.1} parent=1 // pred_check_branch
      %52 = sbr.rel (0) target = $region33
    $region32: #{tpu_custom_call.1} parent=1 // pred_region
      _
    $region33: #{tpu_custom_call.1} parent=1 // pred_fallthru
      _
    // Predicated region
    $region34: #{tpu_custom_call.1} parent=1 // pred_check
      _
    $region35: #{tpu_custom_call.1} parent=1 // pred_check_branch
      %54 = sbr.rel (0) target = $region37
    $region36: #{tpu_custom_call.1} parent=1 // pred_region
      _
    $region37: #{tpu_custom_call.1} parent=1 // pred_fallthru
      _
    // Predicated region
    $region38: #{tpu_custom_call.1} parent=1 // pred_check
      _
    $region39: #{tpu_custom_call.1} parent=1 // pred_check_branch
      %56 = sbr.rel (0) target = $region41
    $region40: #{tpu_custom_call.1} parent=1 // pred_region
      _
    $region41: #{tpu_custom_call.1} parent=1 // pred_fallthru
      _
    // Predicated region
    $region42: #{tpu_custom_call.1} parent=1 // pred_check
      _
    $region43: #{tpu_custom_call.1} parent=1 // pred_check_branch
      %58 = sbr.rel (0) target = $region45
    $region44: #{tpu_custom_call.1} parent=1 // pred_region
      _
    $region45: #{tpu_custom_call.1} parent=1 // pred_fallthru
      _
    // Predicated region
    $region46: #{tpu_custom_call.1} parent=1 // pred_check
      _
    $region47: #{tpu_custom_call.1} parent=1 // pred_check_branch
      %60 = sbr.rel (0) target = $region49
    $region48: #{tpu_custom_call.1} parent=1 // pred_region
      _
    $region49: #{tpu_custom_call.1} parent=1 // pred_fallthru
      _
    // Predicated region
    $region50: #{tpu_custom_call.1} parent=1 // pred_check
      _
    $region51: #{tpu_custom_call.1} parent=1 // pred_check_branch
      %62 = sbr.rel (0) target = $region53
    $region52: #{tpu_custom_call.1} parent=1 // pred_region
      _
    $region53: #{tpu_custom_call.1} parent=1 // pred_fallthru
      _
    // Predicated region
    $region54: #{tpu_custom_call.1} parent=1 // pred_check
      _
    $region55: #{tpu_custom_call.1} parent=1 // pred_check_branch
      %64 = sbr.rel (0) target = $region57
    $region56: #{tpu_custom_call.1} parent=1 // pred_region
      _
    $region57: #{tpu_custom_call.1} parent=1 // pred_fallthru
      _
    // Predicated region
    $region58: #{tpu_custom_call.1} parent=1 // pred_check
      _
    $region59: #{tpu_custom_call.1} parent=1 // pred_check_branch
      %66 = sbr.rel (0) target = $region61
    $region60: #{tpu_custom_call.1} parent=1 // pred_region
      _
    $region61: #{tpu_custom_call.1} parent=1 // pred_fallthru
      _
    // Predicated region
    $region62: #{tpu_custom_call.1} parent=1 // pred_check
      _
    $region63: #{tpu_custom_call.1} parent=1 // pred_check_branch
      %68 = sbr.rel (0) target = $region65
    $region64: #{tpu_custom_call.1} parent=1 // pred_region
      _
    $region65: #{tpu_custom_call.1} parent=1 // pred_fallthru
      _
    // Predicated region
    $region66: #{tpu_custom_call.1} parent=1 // pred_check
      _
    $region67: #{tpu_custom_call.1} parent=1 // pred_check_branch
      %70 = sbr.rel (0) target = $region69
    $region68: #{tpu_custom_call.1} parent=1 // pred_region
      _
    $region69: #{tpu_custom_call.1} parent=1 // pred_fallthru
      _
    // Predicated region
    $region70: #{tpu_custom_call.1} parent=1 // pred_check
      _
    $region71: #{tpu_custom_call.1} parent=1 // pred_check_branch
      %72 = sbr.rel (0) target = $region73
    $region72: #{tpu_custom_call.1} parent=1 // pred_region
      _
    $region73: #{tpu_custom_call.1} parent=1 // pred_fallthru
      _
    // Predicated region
    $region74: #{tpu_custom_call.1} parent=1 // pred_check
      _
    $region75: #{tpu_custom_call.1} parent=1 // pred_check_branch
      %74 = sbr.rel (0) target = $region77
    $region76: #{tpu_custom_call.1} parent=1 // pred_region
      %75 = dma.done [#allocation4], 4096
    $region77: #{tpu_custom_call.1} parent=1 // pred_fallthru
      _
    %v77 = vld [vmem:[#allocation3] sm:$0xff]
    %v78 = vld [vmem:[#allocation3 + $0x8] sm:$0xff]
    %v79 = vld [vmem:[#allocation3 + $0x10] sm:$0xff]
    %v80 = vld [vmem:[#allocation3 + $0x18] sm:$0xff]
    %v81 = vld [vmem:[#allocation3 + $0x20] sm:$0xff]
    %v82 = vld [vmem:[#allocation3 + $0x28] sm:$0xff]
    %v83 = vld [vmem:[#allocation3 + $0x30] sm:$0xff]
    %v84 = vld [vmem:[#allocation3 + $0x38] sm:$0xff]
    %v85 = vld [vmem:[#allocation3 + $0x40] sm:$0xff]
    %v86 = vld [vmem:[#allocation3 + $0x48] sm:$0xff]
    %v87 = vld [vmem:[#allocation3 + $0x50] sm:$0xff]
    %v88 = vld [vmem:[#allocation3 + $0x58] sm:$0xff]
    %v89 = vld [vmem:[#allocation3 + $0x60] sm:$0xff]
    %v90 = vld [vmem:[#allocation3 + $0x68] sm:$0xff]
    %v91 = vld [vmem:[#allocation3 + $0x70] sm:$0xff]
    %v92 = vld [vmem:[#allocation3 + $0x78] sm:$0xff]
    %v93 = vld [vmem:[#allocation3 + $0x80] sm:$0xff]
    %v94 = vld [vmem:[#allocation3 + $0x88] sm:$0xff]
    %v95 = vld [vmem:[#allocation3 + $0x90] sm:$0xff]
    %v96 = vld [vmem:[#allocation3 + $0x98] sm:$0xff]
    %v97 = vld [vmem:[#allocation3 + $0xa0] sm:$0xff]
    %v98 = vld [vmem:[#allocation3 + $0xa8] sm:$0xff]
    %v99 = vld [vmem:[#allocation3 + $0xb0] sm:$0xff]
    %v100 = vld [vmem:[#allocation3 + $0xb8] sm:$0xff]
    %v101 = vld [vmem:[#allocation3 + $0xc0] sm:$0xff]
    %v102 = vld [vmem:[#allocation3 + $0xc8] sm:$0xff]
    %v103 = vld [vmem:[#allocation3 + $0xd0] sm:$0xff]
    %v104 = vld [vmem:[#allocation3 + $0xd8] sm:$0xff]
    %v105 = vld [vmem:[#allocation3 + $0xe0] sm:$0xff]
    %v106 = vld [vmem:[#allocation3 + $0xe8] sm:$0xff]
    %v107 = vld [vmem:[#allocation3 + $0xf0] sm:$0xff]
    %v108 = vld [vmem:[#allocation3 + $0xf8] sm:$0xff]
    %v109 = vpack.c.bf16 %v81, %v77
    %v110 = vpack.c.bf16 %v82, %v78
    %v111 = vpack.c.bf16 %v83, %v79
    %v112 = vpack.c.bf16 %v84, %v80
    %v113 = vpack.c.bf16 %v89, %v85
    %v114 = vpack.c.bf16 %v90, %v86
    %v115 = vpack.c.bf16 %v91, %v87
    %v116 = vpack.c.bf16 %v92, %v88
    %v117 = vpack.c.bf16 %v97, %v93
    %v118 = vpack.c.bf16 %v98, %v94
    %v119 = vpack.c.bf16 %v99, %v95
    %v120 = vpack.c.bf16 %v100, %v96
    %v121 = vpack.c.bf16 %v105, %v101
    %v122 = vpack.c.bf16 %v106, %v102
    %v123 = vpack.c.bf16 %v107, %v103
    %v124 = vpack.c.bf16 %v108, %v104
    %v125 = vld [vmem:[%s1] sm:$0xf]
    %v126 = vld [vmem:[%s1 + $0x4] sm:$0xf]
    %v127 = vld [vmem:[%s1 + $0x8] sm:$0xf]
    %v128 = vld [vmem:[%s1 + $0xc] sm:$0xf]
    %v129 = vld [vmem:[%s1 + $0x14] sm:$0xf]
    %v130 = vld [vmem:[%s1 + $0x18] sm:$0xf]
    %v131 = vld [vmem:[%s1 + $0x1c] sm:$0xf]
    %v132 = vld [vmem:[%s1 + $0x20] sm:$0xf]
    %v133 = vld [vmem:[%s3] sm:$0xf]
    %v134 = vld [vmem:[%s3 + $0x4] sm:$0xf]
    %v135 = vld [vmem:[%s3 + $0x8] sm:$0xf]
    %v136 = vld [vmem:[%s3 + $0xc] sm:$0x7]
    %v141 = vunpack.c.l.b16 %v133
    %v142 = vunpack.c.l.b16 %v134
    %v143 = vunpack.c.l.b16 %v135
    %v144 = vunpack.c.l.b16 %v136
    %v145 = vpack.c.b16 %v142, %v141
    %v146 = vpack.c.b16 %v144, %v143
    %vm147 = vcmask 523264
    %v149 = vsel %vm147, %v145, 0
    %v152 = vsel %vm147, %v146, 0
    %154 = vmatprep.subr.bf16.mxu0 %v110
    %155 = vmatpush1.bf16.msra.mxu0 %v109
    %156 = vmatprep.subr.bf16.mxu0 %v114
    %157 = vmatpush1.bf16.msra.mxu0 %v113
    %158 = vmatprep.subr.bf16.mxu0 %v118
    %159 = vmatpush1.bf16.msra.mxu0 %v117
    %160 = vmatprep.subr.bf16.mxu0 %v122
    %161 = vmatpush1.bf16.msra.mxu0 %v121
    %162 = vmatprep.subr.bf16.mxu0 0
    %163 = vmatpush1.bf16.msra.mxu0 0
    %164 = vmatprep.subr.bf16.mxu0 0
    %165 = vmatpush1.bf16.msra.mxu0 0
    %166 = vmatprep.subr.bf16.mxu0 0
    %167 = vmatpush1.bf16.msra.mxu0 0
    %168 = vmatprep.subr.bf16.mxu0 0
    %169 = vmatpush1.bf16.msra.mxu0 0
    %170 = vmatprep.subr.bf16.mxu0 0
    %171 = vmatpush1.bf16.msra.mxu0 0
    %172 = vmatprep.subr.bf16.mxu0 0
    %173 = vmatpush1.bf16.msra.mxu0 0
    %174 = vmatprep.subr.bf16.mxu0 0
    %175 = vmatpush1.bf16.msra.mxu0 0
    %176 = vmatprep.subr.bf16.mxu0 0
    %177 = vmatpush1.bf16.msra.mxu0 0
    %178 = vmatprep.subr.bf16.mxu0 0
    %179 = vmatpush1.bf16.msra.mxu0 0
    %180 = vmatprep.subr.bf16.mxu0 0
    %181 = vmatpush1.bf16.msra.mxu0 0
    %182 = vmatprep.subr.bf16.mxu0 0
    %183 = vmatpush1.bf16.msra.mxu0 0
    %184 = vmatprep.subr.bf16.mxu0 0
    %185 = vmatpush1.bf16.msra.mxu0 0
    %186 = vmatprep.mubr.bf16.mxu0 0
    %187 = vmatmul.mubr.bf16.gmra.mrb[0].mxu0 %v149
    %v188 = vpop.f32.mrb[0].mxu0
    %v189 = vadd.f32 0.0, %v188
    %v190 = vpop.f32.mrb[0].mxu0
    %v191 = vadd.f32 0.0, %v190
    %v192 = vpop.f32.mrb[0].mxu0
    %v193 = vadd.f32 0.0, %v192
    %v194 = vpop.f32.mrb[0].mxu0
    %v195 = vadd.f32 0.0, %v194
    %196 = vmatprep.mubr.bf16.mxu0 0
    %197 = vmatmul.mubr.bf16.gmra.mrb[0].mxu0 %v152
    %v198 = vpop.f32.mrb[0].mxu0
    %v199 = vadd.f32 0.0, %v198
    %v200 = vpop.f32.mrb[0].mxu0
    %v201 = vadd.f32 0.0, %v200
    %v202 = vpop.f32.mrb[0].mxu0
    %v203 = vadd.f32 0.0, %v202
    %v204 = vpop.f32.mrb[0].mxu0
    %v205 = vadd.f32 0.0, %v204
    %206 = vdwg.mxu0
    %207 = vmatprep.subr.bf16.mxu0 %v112
    %208 = vmatpush1.bf16.msra.mxu0 %v111
    %209 = vmatprep.subr.bf16.mxu0 %v116
    %210 = vmatpush1.bf16.msra.mxu0 %v115
    %211 = vmatprep.subr.bf16.mxu0 %v120
    %212 = vmatpush1.bf16.msra.mxu0 %v119
    %213 = vmatprep.subr.bf16.mxu0 %v124
    %214 = vmatpush1.bf16.msra.mxu0 %v123
    %215 = vmatprep.subr.bf16.mxu0 0
    %216 = vmatpush1.bf16.msra.mxu0 0
    %217 = vmatprep.subr.bf16.mxu0 0
    %218 = vmatpush1.bf16.msra.mxu0 0
    %219 = vmatprep.subr.bf16.mxu0 0
    %220 = vmatpush1.bf16.msra.mxu0 0
    %221 = vmatprep.subr.bf16.mxu0 0
    %222 = vmatpush1.bf16.msra.mxu0 0
    %223 = vmatprep.subr.bf16.mxu0 0
    %224 = vmatpush1.bf16.msra.mxu0 0
    %225 = vmatprep.subr.bf16.mxu0 0
    %226 = vmatpush1.bf16.msra.mxu0 0
    %227 = vmatprep.subr.bf16.mxu0 0
    %228 = vmatpush1.bf16.msra.mxu0 0
    %229 = vmatprep.subr.bf16.mxu0 0
    %230 = vmatpush1.bf16.msra.mxu0 0
    %231 = vmatprep.subr.bf16.mxu0 0
    %232 = vmatpush1.bf16.msra.mxu0 0
    %233 = vmatprep.subr.bf16.mxu0 0
    %234 = vmatpush1.bf16.msra.mxu0 0
    %235 = vmatprep.subr.bf16.mxu0 0
    %236 = vmatpush1.bf16.msra.mxu0 0
    %237 = vmatprep.subr.bf16.mxu0 0
    %238 = vmatpush1.bf16.msra.mxu0 0
    %239 = vmatprep.mubr.bf16.mxu0 0
    %240 = vmatmul.mubr.bf16.gmra.mrb[0].mxu0 %v149
    %v241 = vpop.f32.mrb[0].mxu0
    %v242 = vadd.f32 0.0, %v241
    %v243 = vpop.f32.mrb[0].mxu0
    %v244 = vadd.f32 0.0, %v243
    %v245 = vpop.f32.mrb[0].mxu0
    %v246 = vadd.f32 0.0, %v245
    %v247 = vpop.f32.mrb[0].mxu0
    %v248 = vadd.f32 0.0, %v247
    %249 = vmatprep.mubr.bf16.mxu0 0
    %250 = vmatmul.mubr.bf16.gmra.mrb[0].mxu0 %v152
    %v251 = vpop.f32.mrb[0].mxu0
    %v252 = vadd.f32 0.0, %v251
    %v253 = vpop.f32.mrb[0].mxu0
    %v254 = vadd.f32 0.0, %v253
    %v255 = vpop.f32.mrb[0].mxu0
    %v256 = vadd.f32 0.0, %v255
    %v257 = vpop.f32.mrb[0].mxu0
    %v258 = vadd.f32 0.0, %v257
    %259 = vdwg.mxu0
    %v260 = vld [vmem:[%s4] sm:$0xff]
    %v261 = vld [vmem:[%s4 + $0x8] sm:$0xff]
    %v262 = vld [vmem:[%s4 + $0x10] sm:$0xff]
    %v263 = vld [vmem:[%s4 + $0x18] sm:$0x3f]
    %v264 = vld [vmem:[%s5] sm:$0xff]
    %v265 = vld [vmem:[%s5 + $0x8] sm:$0xff]
    %v266 = vld [vmem:[%s5 + $0x10] sm:$0xff]
    %v267 = vld [vmem:[%s5 + $0x18] sm:$0x3f]
    %v268 = vadd.f32 %v189, %v191
    %v269 = vadd.f32 %v268, %v242
    %v270 = vadd.f32 %v269, %v244
    %271 = vadd.xlane.f32.xlu0 %v270
    %v272 = vpop.xlane.xlu0 %271
    %v273 = vadd.f32 %v193, %v195
    %v274 = vadd.f32 %v273, %v246
    %v275 = vadd.f32 %v274, %v248
    %276 = vadd.xlane.f32.xlu0 %v275
    %v277 = vpop.xlane.xlu0 %276
    %v278 = vadd.f32 %v199, %v201
    %v279 = vadd.f32 %v278, %v252
    %v280 = vadd.f32 %v279, %v254
    %281 = vadd.xlane.f32.xlu0 %v280
    %v282 = vpop.xlane.xlu0 %281
    %vm283 = vcmask 1045504
    %v284 = vsel %vm283, %v203, 0.0
    %v285 = vsel %vm283, %v205, 0.0
    %v286 = vadd.f32 %v284, %v285
    %v287 = vsel %vm283, %v256, 0.0
    %v288 = vadd.f32 %v286, %v287
    %v289 = vsel %vm283, %v258, 0.0
    %v290 = vadd.f32 %v288, %v289
    %291 = vadd.xlane.f32.xlu0 %v290
    %v292 = vpop.xlane.xlu0 %291
    %v293 = vrcp.pop 512.0
    %v294 = vmul.f32 %v272, %v293
    %v295 = vmul.f32 %v277, %v293
    %v296 = vmul.f32 %v282, %v293
    %v297 = vmul.f32 %v292, %v293
    %v298 = vsub.f32 %v189, %v294
    %v299 = vsub.f32 %v191, %v294
    %v300 = vsub.f32 %v242, %v294
    %v301 = vsub.f32 %v244, %v294
    %v302 = vsub.f32 %v193, %v295
    %v303 = vsub.f32 %v195, %v295
    %v304 = vsub.f32 %v246, %v295
    %v305 = vsub.f32 %v248, %v295
    %v306 = vsub.f32 %v199, %v296
    %v307 = vsub.f32 %v201, %v296
    %v308 = vsub.f32 %v252, %v296
    %v309 = vsub.f32 %v254, %v296
    %v310 = vsub.f32 %v203, %v297
    %v311 = vsub.f32 %v205, %v297
    %v312 = vsub.f32 %v256, %v297
    %v313 = vsub.f32 %v258, %v297
    %v314 = vmul.f32 %v298, %v298
    %v315 = vmul.f32 %v299, %v299
    %v316 = vmul.f32 %v300, %v300
    %v317 = vmul.f32 %v301, %v301
    %v318 = vmul.f32 %v302, %v302
    %v319 = vmul.f32 %v303, %v303
    %v320 = vmul.f32 %v304, %v304
    %v321 = vmul.f32 %v305, %v305
    %v322 = vmul.f32 %v306, %v306
    %v323 = vmul.f32 %v307, %v307
    %v324 = vmul.f32 %v308, %v308
    %v325 = vmul.f32 %v309, %v309
    %v326 = vmul.f32 %v310, %v310
    %v327 = vmul.f32 %v311, %v311
    %v328 = vmul.f32 %v312, %v312
    %v329 = vmul.f32 %v313, %v313
    %v330 = vadd.f32 %v314, %v315
    %v331 = vadd.f32 %v330, %v316
    %v332 = vadd.f32 %v331, %v317
    %333 = vadd.xlane.f32.xlu0 %v332
    %v334 = vpop.xlane.xlu0 %333
    %v335 = vadd.f32 %v318, %v319
    %v336 = vadd.f32 %v335, %v320
    %v337 = vadd.f32 %v336, %v321
    %338 = vadd.xlane.f32.xlu0 %v337
    %v339 = vpop.xlane.xlu0 %338
    %v340 = vadd.f32 %v322, %v323
    %v341 = vadd.f32 %v340, %v324
    %v342 = vadd.f32 %v341, %v325
    %343 = vadd.xlane.f32.xlu0 %v342
    %v344 = vpop.xlane.xlu0 %343
    %v345 = vsel %vm283, %v326, 0.0
    %v346 = vsel %vm283, %v327, 0.0
    %v347 = vadd.f32 %v345, %v346
    %v348 = vsel %vm283, %v328, 0.0
    %v349 = vadd.f32 %v347, %v348
    %v350 = vsel %vm283, %v329, 0.0
    %v351 = vadd.f32 %v349, %v350
    %352 = vadd.xlane.f32.xlu0 %v351
    %v353 = vpop.xlane.xlu0 %352
    %v354 = vmul.f32 %v334, %v293
    %v355 = vmul.f32 %v339, %v293
    %v356 = vmul.f32 %v344, %v293
    %v357 = vmul.f32 %v353, %v293
    %v358 = vadd.f32 %v354, 1e-05
    %v359 = vadd.f32 %v355, 1e-05
    %v360 = vadd.f32 %v356, 1e-05
    %v361 = vadd.f32 %v357, 1e-05
    %v362 = vrsqrt.pop %v358
    %v363 = vrsqrt.pop %v359
    %v364 = vrsqrt.pop %v360
    %v365 = vrsqrt.pop %v361
    %v366 = vmul.f32 %v260, %v362
    %v367 = vmul.f32 %v261, %v363
    %v368 = vmul.f32 %v262, %v364
    %v369 = vmul.f32 %v263, %v365
    %371 = vset.pattern.permute.xlu0 0
    %372 = vperm.xlu0 %371, %v366
    %v373 = vpop.permute.xlu0 %372
    %376 = vset.pattern.permute.xlu0 0
    %377 = vperm.xlu0 %376, %v367
    %v378 = vpop.permute.xlu0 %377
    %381 = vset.pattern.permute.xlu0 0
    %382 = vperm.xlu0 %381, %v368
    %v383 = vpop.permute.xlu0 %382
    %386 = vset.pattern.permute.xlu0 0
    %387 = vperm.xlu0 %386, %v369
    %v388 = vpop.permute.xlu0 %387
    %v390 = vmul.f32 %v189, %v373
    %v391 = vmul.f32 %v191, %v373
    %v392 = vmul.f32 %v242, %v373
    %v393 = vmul.f32 %v244, %v373
    %v394 = vmul.f32 %v193, %v378
    %v395 = vmul.f32 %v195, %v378
    %v396 = vmul.f32 %v246, %v378
    %v397 = vmul.f32 %v248, %v378
    %v398 = vmul.f32 %v199, %v383
    %v399 = vmul.f32 %v201, %v383
    %v400 = vmul.f32 %v252, %v383
    %v401 = vmul.f32 %v254, %v383
    %v402 = vmul.f32 %v203, %v388
    %v403 = vmul.f32 %v205, %v388
    %v404 = vmul.f32 %v256, %v388
    %v405 = vmul.f32 %v258, %v388
    %v406 = vmul.f32 %v294, %v366
    %v407 = vmul.f32 %v295, %v367
    %v408 = vmul.f32 %v296, %v368
    %v409 = vmul.f32 %v297, %v369
    %v410 = vsub.f32 %v264, %v406
    %v411 = vsub.f32 %v265, %v407
    %v412 = vsub.f32 %v266, %v408
    %v413 = vsub.f32 %v267, %v409
    %415 = vset.pattern.permute.xlu0 0
    %416 = vperm.xlu0 %415, %v410
    %v417 = vpop.permute.xlu0 %416
    %420 = vset.pattern.permute.xlu0 0
    %421 = vperm.xlu0 %420, %v411
    %v422 = vpop.permute.xlu0 %421
    %425 = vset.pattern.permute.xlu0 0
    %426 = vperm.xlu0 %425, %v412
    %v427 = vpop.permute.xlu0 %426
    %430 = vset.pattern.permute.xlu0 0
    %431 = vperm.xlu0 %430, %v413
    %v432 = vpop.permute.xlu0 %431
    %v434 = vadd.f32 %v390, %v417
    %v435 = vadd.f32 %v391, %v417
    %v436 = vadd.f32 %v392, %v417
    %v437 = vadd.f32 %v393, %v417
    %v438 = vadd.f32 %v394, %v422
    %v439 = vadd.f32 %v395, %v422
    %v440 = vadd.f32 %v396, %v422
    %v441 = vadd.f32 %v397, %v422
    %v442 = vadd.f32 %v398, %v427
    %v443 = vadd.f32 %v399, %v427
    %v444 = vadd.f32 %v400, %v427
    %v445 = vadd.f32 %v401, %v427
    %v446 = vadd.f32 %v402, %v432
    %v447 = vadd.f32 %v403, %v432
    %v448 = vadd.f32 %v404, %v432
    %v449 = vadd.f32 %v405, %v432
    %v450 = vmax.f32 %v434, 0.0
    %v451 = vmax.f32 %v435, 0.0
    %v452 = vmax.f32 %v436, 0.0
    %v453 = vmax.f32 %v437, 0.0
    %v454 = vmax.f32 %v438, 0.0
    %v455 = vmax.f32 %v439, 0.0
    %v456 = vmax.f32 %v440, 0.0
    %v457 = vmax.f32 %v441, 0.0
    %v458 = vmax.f32 %v442, 0.0
    %v459 = vmax.f32 %v443, 0.0
    %v460 = vmax.f32 %v444, 0.0
    %v461 = vmax.f32 %v445, 0.0
    %v462 = vmax.f32 %v446, 0.0
    %v463 = vmax.f32 %v447, 0.0
    %v464 = vmax.f32 %v448, 0.0
    %v465 = vmax.f32 %v449, 0.0
    %v466 = vld [vmem:[%s6] sm:$0xf]
    %v467 = vld [vmem:[%s6 + $0x4] sm:$0xf]
    %v468 = vld [vmem:[%s6 + $0x8] sm:$0xf]
    %v469 = vld [vmem:[%s6 + $0xc] sm:$0x7]
    %v470 = vld [vmem:[%s6 + $0x10] sm:$0xf]
    %v471 = vld [vmem:[%s6 + $0x14] sm:$0xf]
    %v472 = vld [vmem:[%s6 + $0x18] sm:$0xf]
    %v473 = vld [vmem:[%s6 + $0x1c] sm:$0x7]
    %v474 = vld [vmem:[%s6 + $0x20] sm:$0xf]
    %v475 = vld [vmem:[%s6 + $0x24] sm:$0xf]
    %v476 = vld [vmem:[%s6 + $0x28] sm:$0xf]
    %v477 = vld [vmem:[%s6 + $0x2c] sm:$0x7]
    %v478 = vld [vmem:[%s6 + $0x30] sm:$0xf]
    %v479 = vld [vmem:[%s6 + $0x34] sm:$0xf]
    %v480 = vld [vmem:[%s6 + $0x38] sm:$0xf]
    %v481 = vld [vmem:[%s6 + $0x3c] sm:$0x7]
    %v482 = vld [vmem:[%s6 + $0x40] sm:$0xf]
    %v483 = vld [vmem:[%s6 + $0x44] sm:$0xf]
    %v484 = vld [vmem:[%s6 + $0x48] sm:$0xf]
    %v485 = vld [vmem:[%s6 + $0x4c] sm:$0x7]
    %v486 = vld [vmem:[%s6 + $0x50] sm:$0xf]
    %v487 = vld [vmem:[%s6 + $0x54] sm:$0xf]
    %v488 = vld [vmem:[%s6 + $0x58] sm:$0xf]
    %v489 = vld [vmem:[%s6 + $0x5c] sm:$0x7]
    %v490 = vld [vmem:[%s6 + $0x60] sm:$0xf]
    %v491 = vld [vmem:[%s6 + $0x64] sm:$0xf]
    %v492 = vld [vmem:[%s6 + $0x68] sm:$0xf]
    %v493 = vld [vmem:[%s6 + $0x6c] sm:$0x7]
    %v494 = vld [vmem:[%s6 + $0x70] sm:$0xf]
    %v495 = vld [vmem:[%s6 + $0x74] sm:$0xf]
    %v496 = vld [vmem:[%s6 + $0x78] sm:$0xf]
    %v497 = vld [vmem:[%s6 + $0x7c] sm:$0x7]
    %v498 = vld [vmem:[%s6 + $0x80] sm:$0xf]
    %v499 = vld [vmem:[%s6 + $0x84] sm:$0xf]
    %v500 = vld [vmem:[%s6 + $0x88] sm:$0xf]
    %v501 = vld [vmem:[%s6 + $0x8c] sm:$0x7]
    %v502 = vpack.c.bf16 %v454, %v450
    %v503 = vpack.c.bf16 %v455, %v451
    %v504 = vpack.c.bf16 %v456, %v452
    %v505 = vpack.c.bf16 %v457, %v453
    %v506 = vpack.c.bf16 %v462, %v458
    %v507 = vpack.c.bf16 %v463, %v459
    %v508 = vpack.c.bf16 %v464, %v460
    %v509 = vpack.c.bf16 %v465, %v461
    %510 = vrot.lane.b32.xlu0 %v450, 17
    %v511 = vpop.permute.xlu0 %510
    %512 = vrot.lane.b32.xlu0 %v454, 17
    %v513 = vpop.permute.xlu0 %512
    %514 = vrot.lane.b32.xlu0 %v458, 17
    %v515 = vpop.permute.xlu0 %514
    %516 = vrot.lane.b32.xlu0 %v462, 17
    %v517 = vpop.permute.xlu0 %516
    %518 = vrot.lane.b32.xlu0 %v451, 17
    %v519 = vpop.permute.xlu0 %518
    %520 = vrot.lane.b32.xlu0 %v455, 17
    %v521 = vpop.permute.xlu0 %520
    %522 = vrot.lane.b32.xlu0 %v459, 17
    %v523 = vpop.permute.xlu0 %522
    %524 = vrot.lane.b32.xlu0 %v463, 17
    %v525 = vpop.permute.xlu0 %524
    %526 = vrot.lane.b32.xlu0 %v452, 17
    %v527 = vpop.permute.xlu0 %526
    %528 = vrot.lane.b32.xlu0 %v456, 17
    %v529 = vpop.permute.xlu0 %528
    %530 = vrot.lane.b32.xlu0 %v460, 17
    %v531 = vpop.permute.xlu0 %530
    %532 = vrot.lane.b32.xlu0 %v464, 17
    %v533 = vpop.permute.xlu0 %532
    %534 = vrot.lane.b32.xlu0 %v453, 17
    %v535 = vpop.permute.xlu0 %534
    %536 = vrot.lane.b32.xlu0 %v457, 17
    %v537 = vpop.permute.xlu0 %536
    %538 = vrot.lane.b32.xlu0 %v461, 17
    %v539 = vpop.permute.xlu0 %538
    %540 = vrot.lane.b32.xlu0 %v465, 17
    %v541 = vpop.permute.xlu0 %540
    %v542 = vlaneseq
    %v543 = vand.u32 %v542, 127
    %vm544 = vcmp.lt.s32.totalorder %v543, 17
    %v545 = vsel %vm544, %v527, %v535
    %v546 = vsel %vm544, %v529, %v537
    %v547 = vsel %vm544, %v531, %v539
    %v548 = vsel %vm544, %v533, %v541
    %v549 = vsel %vm544, %v519, %v527
    %v550 = vsel %vm544, %v521, %v529
    %v551 = vsel %vm544, %v523, %v531
    %v552 = vsel %vm544, %v525, %v533
    %v553 = vsel %vm544, %v511, %v519
    %v554 = vsel %vm544, %v513, %v521
    %v555 = vsel %vm544, %v515, %v523
    %v556 = vsel %vm544, %v517, %v525
    %v557 = vsel %vm544, %v535, %v511
    %v558 = vsel %vm544, %v537, %v513
    %v559 = vsel %vm544, %v539, %v515
    %v560 = vsel %vm544, %v541, %v517
    %v562 = vlaneseq
    %v563 = vshrl.u32 %v562, 7
    %v564 = vsub.s32 0, %v563
    %v565 = vrot.slane %v125, %v564
    %v566 = vlaneseq
    %v567 = vshrl.u32 %v566, 7
    %v568 = vsub.s32 1, %v567
    %v569 = vrot.slane %v125, %v568
    %v570 = vlaneseq
    %v571 = vshrl.u32 %v570, 7
    %v572 = vsub.s32 2, %v571
    %v573 = vrot.slane %v125, %v572
    %v574 = vlaneseq
    %v575 = vshrl.u32 %v574, 7
    %v576 = vsub.s32 3, %v575
    %v577 = vrot.slane %v125, %v576
    %v582 = vmul.f32 %v557, %v565
    %v583 = vmul.f32 %v553, %v569
    %v584 = vmul.f32 %v549, %v573
    %v585 = vmul.f32 %v545, %v577
    %v586 = vmul.f32 %v558, %v565
    %v587 = vmul.f32 %v554, %v569
    %v588 = vmul.f32 %v550, %v573
    %v589 = vmul.f32 %v546, %v577
    %v590 = vmul.f32 %v559, %v565
    %v591 = vmul.f32 %v555, %v569
    %v592 = vmul.f32 %v551, %v573
    %v593 = vmul.f32 %v547, %v577
    %v594 = vmul.f32 %v560, %v565
    %v595 = vmul.f32 %v556, %v569
    %v596 = vmul.f32 %v552, %v573
    %v597 = vmul.f32 %v548, %v577
    %v598 = vpack.c.bf16 %v586, %v582
    %v599 = vpack.c.bf16 %v587, %v583
    %v600 = vpack.c.bf16 %v588, %v584
    %v601 = vpack.c.bf16 %v589, %v585
    %v602 = vpack.c.bf16 %v594, %v590
    %v603 = vpack.c.bf16 %v595, %v591
    %v604 = vpack.c.bf16 %v596, %v592
    %v605 = vpack.c.bf16 %v597, %v593
    %v610 = vunpack.c.l.b16 %v466
    %v611 = vunpack.c.l.b16 %v467
    %v612 = vunpack.c.l.b16 %v468
    %v613 = vunpack.c.l.b16 %v469
    %v614 = vpack.c.b16 %v611, %v610
    %v615 = vpack.c.b16 %v613, %v612
    %vm616 = vcmask 244736
    %v618 = vsel %vm616, %v614, 0
    %v621 = vsel %vm616, %v615, 0
    %vm623 = vcmask 1046528
    %v625 = vsel %vm623, %v602, 0
    %v628 = vsel %vm623, %v603, 0
    %v631 = vsel %vm623, %v604, 0
    %v634 = vsel %vm623, %v605, 0
    %636 = vmatprep.subr.bf16.mxu0 %v599
    %637 = vmatpush1.bf16.msra.mxu0 %v598
    %638 = vmatprep.subr.bf16.mxu0 %v628
    %639 = vmatpush1.bf16.msra.mxu0 %v625
    %640 = vmatprep.subr.bf16.mxu0 0
    %641 = vmatpush1.bf16.msra.mxu0 0
    %642 = vmatprep.subr.bf16.mxu0 0
    %643 = vmatpush1.bf16.msra.mxu0 0
    %644 = vmatprep.subr.bf16.mxu0 0
    %645 = vmatpush1.bf16.msra.mxu0 0
    %646 = vmatprep.subr.bf16.mxu0 0
    %647 = vmatpush1.bf16.msra.mxu0 0
    %648 = vmatprep.subr.bf16.mxu0 0
    %649 = vmatpush1.bf16.msra.mxu0 0
    %650 = vmatprep.subr.bf16.mxu0 0
    %651 = vmatpush1.bf16.msra.mxu0 0
    %652 = vmatprep.subr.bf16.mxu0 0
    %653 = vmatpush1.bf16.msra.mxu0 0
    %654 = vmatprep.subr.bf16.mxu0 0
    %655 = vmatpush1.bf16.msra.mxu0 0
    %656 = vmatprep.subr.bf16.mxu0 0
    %657 = vmatpush1.bf16.msra.mxu0 0
    %658 = vmatprep.subr.bf16.mxu0 0
    %659 = vmatpush1.bf16.msra.mxu0 0
    %660 = vmatprep.subr.bf16.mxu0 0
    %661 = vmatpush1.bf16.msra.mxu0 0
    %662 = vmatprep.subr.bf16.mxu0 0
    %663 = vmatpush1.bf16.msra.mxu0 0
    %664 = vmatprep.subr.bf16.mxu0 0
    %665 = vmatpush1.bf16.msra.mxu0 0
    %666 = vmatprep.subr.bf16.mxu0 0
    %667 = vmatpush1.bf16.msra.mxu0 0
    %668 = vmatprep.mubr.bf16.mxu0 0
    %669 = vmatmul.mubr.bf16.gmra.mrb[0].mxu0 %v618
    %v670 = vpop.f32.mrb[0].mxu0
    %v671 = vadd.f32 0.0, %v670
    %v672 = vpop.f32.mrb[0].mxu0
    %v673 = vadd.f32 0.0, %v672
    %v674 = vpop.f32.mrb[0].mxu0
    %v675 = vadd.f32 0.0, %v674
    %v676 = vpop.f32.mrb[0].mxu0
    %v677 = vadd.f32 0.0, %v676
    %678 = vmatprep.mubr.bf16.mxu0 0
    %679 = vmatmul.mubr.bf16.gmra.mrb[0].mxu0 %v621
    %v680 = vpop.f32.mrb[0].mxu0
    %v681 = vadd.f32 0.0, %v680
    %v682 = vpop.f32.mrb[0].mxu0
    %v683 = vadd.f32 0.0, %v682
    %v684 = vpop.f32.mrb[0].mxu0
    %v685 = vadd.f32 0.0, %v684
    %v686 = vpop.f32.mrb[0].mxu0
    %v687 = vadd.f32 0.0, %v686
    %688 = vdwg.mxu0
    %689 = vmatprep.subr.bf16.mxu0 %v601
    %690 = vmatpush1.bf16.msra.mxu0 %v600
    %691 = vmatprep.subr.bf16.mxu0 %v634
    %692 = vmatpush1.bf16.msra.mxu0 %v631
    %693 = vmatprep.subr.bf16.mxu0 0
    %694 = vmatpush1.bf16.msra.mxu0 0
    %695 = vmatprep.subr.bf16.mxu0 0
    %696 = vmatpush1.bf16.msra.mxu0 0
    %697 = vmatprep.subr.bf16.mxu0 0
    %698 = vmatpush1.bf16.msra.mxu0 0
    %699 = vmatprep.subr.bf16.mxu0 0
    %700 = vmatpush1.bf16.msra.mxu0 0
    %701 = vmatprep.subr.bf16.mxu0 0
    %702 = vmatpush1.bf16.msra.mxu0 0
    %703 = vmatprep.subr.bf16.mxu0 0
    %704 = vmatpush1.bf16.msra.mxu0 0
    %705 = vmatprep.subr.bf16.mxu0 0
    %706 = vmatpush1.bf16.msra.mxu0 0
    %707 = vmatprep.subr.bf16.mxu0 0
    %708 = vmatpush1.bf16.msra.mxu0 0
    %709 = vmatprep.subr.bf16.mxu0 0
    %710 = vmatpush1.bf16.msra.mxu0 0
    %711 = vmatprep.subr.bf16.mxu0 0
    %712 = vmatpush1.bf16.msra.mxu0 0
    %713 = vmatprep.subr.bf16.mxu0 0
    %714 = vmatpush1.bf16.msra.mxu0 0
    %715 = vmatprep.subr.bf16.mxu0 0
    %716 = vmatpush1.bf16.msra.mxu0 0
    %717 = vmatprep.subr.bf16.mxu0 0
    %718 = vmatpush1.bf16.msra.mxu0 0
    %719 = vmatprep.subr.bf16.mxu0 0
    %720 = vmatpush1.bf16.msra.mxu0 0
    %721 = vmatprep.mubr.bf16.mxu0 0
    %722 = vmatmul.mubr.bf16.gmra.mrb[0].mxu0 %v618
    %v723 = vpop.f32.mrb[0].mxu0
    %v724 = vadd.f32 0.0, %v723
    %v725 = vpop.f32.mrb[0].mxu0
    %v726 = vadd.f32 0.0, %v725
    %v727 = vpop.f32.mrb[0].mxu0
    %v728 = vadd.f32 0.0, %v727
    %v729 = vpop.f32.mrb[0].mxu0
    %v730 = vadd.f32 0.0, %v729
    %731 = vmatprep.mubr.bf16.mxu0 0
    %732 = vmatmul.mubr.bf16.gmra.mrb[0].mxu0 %v621
    %v733 = vpop.f32.mrb[0].mxu0
    %v734 = vadd.f32 0.0, %v733
    %v735 = vpop.f32.mrb[0].mxu0
    %v736 = vadd.f32 0.0, %v735
    %v737 = vpop.f32.mrb[0].mxu0
    %v738 = vadd.f32 0.0, %v737
    %v739 = vpop.f32.mrb[0].mxu0
    %v740 = vadd.f32 0.0, %v739
    %741 = vdwg.mxu0
    %v746 = vunpack.c.l.b16 %v482
    %v747 = vunpack.c.l.b16 %v483
    %v748 = vunpack.c.l.b16 %v484
    %v749 = vunpack.c.l.b16 %v485
    %v750 = vpack.c.b16 %v747, %v746
    %v751 = vpack.c.b16 %v749, %v748
    %v753 = vsel %vm616, %v750, 0
    %v756 = vsel %vm616, %v751, 0
    %v759 = vsel %vm623, %v506, 0
    %v762 = vsel %vm623, %v507, 0
    %v765 = vsel %vm623, %v508, 0
    %v768 = vsel %vm623, %v509, 0
    %770 = vmatprep.subr.bf16.mxu0 %v503
    %771 = vmatpush1.bf16.msra.mxu0 %v502
    %772 = vmatprep.subr.bf16.mxu0 %v762
    %773 = vmatpush1.bf16.msra.mxu0 %v759
    %774 = vmatprep.subr.bf16.mxu0 0
    %775 = vmatpush1.bf16.msra.mxu0 0
    %776 = vmatprep.subr.bf16.mxu0 0
    %777 = vmatpush1.bf16.msra.mxu0 0
    %778 = vmatprep.subr.bf16.mxu0 0
    %779 = vmatpush1.bf16.msra.mxu0 0
    %780 = vmatprep.subr.bf16.mxu0 0
    %781 = vmatpush1.bf16.msra.mxu0 0
    %782 = vmatprep.subr.bf16.mxu0 0
    %783 = vmatpush1.bf16.msra.mxu0 0
    %784 = vmatprep.subr.bf16.mxu0 0
    %785 = vmatpush1.bf16.msra.mxu0 0
    %786 = vmatprep.subr.bf16.mxu0 0
    %787 = vmatpush1.bf16.msra.mxu0 0
    %788 = vmatprep.subr.bf16.mxu0 0
    %789 = vmatpush1.bf16.msra.mxu0 0
    %790 = vmatprep.subr.bf16.mxu0 0
    %791 = vmatpush1.bf16.msra.mxu0 0
    %792 = vmatprep.subr.bf16.mxu0 0
    %793 = vmatpush1.bf16.msra.mxu0 0
    %794 = vmatprep.subr.bf16.mxu0 0
    %795 = vmatpush1.bf16.msra.mxu0 0
    %796 = vmatprep.subr.bf16.mxu0 0
    %797 = vmatpush1.bf16.msra.mxu0 0
    %798 = vmatprep.subr.bf16.mxu0 0
    %799 = vmatpush1.bf16.msra.mxu0 0
    %800 = vmatprep.subr.bf16.mxu0 0
    %801 = vmatpush1.bf16.msra.mxu0 0
    %802 = vmatprep.mubr.bf16.mxu0 0
    %803 = vmatmul.mubr.bf16.gmra.mrb[0].mxu0 %v753
    %v804 = vpop.f32.mrb[0].mxu0
    %v805 = vadd.f32 %v671, %v804
    %v806 = vpop.f32.mrb[0].mxu0
    %v807 = vadd.f32 %v673, %v806
    %v808 = vpop.f32.mrb[0].mxu0
    %v809 = vadd.f32 %v675, %v808
    %v810 = vpop.f32.mrb[0].mxu0
    %v811 = vadd.f32 %v677, %v810
    %812 = vmatprep.mubr.bf16.mxu0 0
    %813 = vmatmul.mubr.bf16.gmra.mrb[0].mxu0 %v756
    %v814 = vpop.f32.mrb[0].mxu0
    %v815 = vadd.f32 %v681, %v814
    %v816 = vpop.f32.mrb[0].mxu0
    %v817 = vadd.f32 %v683, %v816
    %v818 = vpop.f32.mrb[0].mxu0
    %v819 = vadd.f32 %v685, %v818
    %v820 = vpop.f32.mrb[0].mxu0
    %v821 = vadd.f32 %v687, %v820
    %822 = vdwg.mxu0
    %823 = vmatprep.subr.bf16.mxu0 %v505
    %824 = vmatpush1.bf16.msra.mxu0 %v504
    %825 = vmatprep.subr.bf16.mxu0 %v768
    %826 = vmatpush1.bf16.msra.mxu0 %v765
    %827 = vmatprep.subr.bf16.mxu0 0
    %828 = vmatpush1.bf16.msra.mxu0 0
    %829 = vmatprep.subr.bf16.mxu0 0
    %830 = vmatpush1.bf16.msra.mxu0 0
    %831 = vmatprep.subr.bf16.mxu0 0
    %832 = vmatpush1.bf16.msra.mxu0 0
    %833 = vmatprep.subr.bf16.mxu0 0
    %834 = vmatpush1.bf16.msra.mxu0 0
    %835 = vmatprep.subr.bf16.mxu0 0
    %836 = vmatpush1.bf16.msra.mxu0 0
    %837 = vmatprep.subr.bf16.mxu0 0
    %838 = vmatpush1.bf16.msra.mxu0 0
    %839 = vmatprep.subr.bf16.mxu0 0
    %840 = vmatpush1.bf16.msra.mxu0 0
    %841 = vmatprep.subr.bf16.mxu0 0
    %842 = vmatpush1.bf16.msra.mxu0 0
    %843 = vmatprep.subr.bf16.mxu0 0
    %844 = vmatpush1.bf16.msra.mxu0 0
    %845 = vmatprep.subr.bf16.mxu0 0
    %846 = vmatpush1.bf16.msra.mxu0 0
    %847 = vmatprep.subr.bf16.mxu0 0
    %848 = vmatpush1.bf16.msra.mxu0 0
    %849 = vmatprep.subr.bf16.mxu0 0
    %850 = vmatpush1.bf16.msra.mxu0 0
    %851 = vmatprep.subr.bf16.mxu0 0
    %852 = vmatpush1.bf16.msra.mxu0 0
    %853 = vmatprep.subr.bf16.mxu0 0
    %854 = vmatpush1.bf16.msra.mxu0 0
    %855 = vmatprep.mubr.bf16.mxu0 0
    %856 = vmatmul.mubr.bf16.gmra.mrb[0].mxu0 %v753
    %v857 = vpop.f32.mrb[0].mxu0
    %v858 = vadd.f32 %v724, %v857
    %v859 = vpop.f32.mrb[0].mxu0
    %v860 = vadd.f32 %v726, %v859
    %v861 = vpop.f32.mrb[0].mxu0
    %v862 = vadd.f32 %v728, %v861
    %v863 = vpop.f32.mrb[0].mxu0
    %v864 = vadd.f32 %v730, %v863
    %865 = vmatprep.mubr.bf16.mxu0 0
    %866 = vmatmul.mubr.bf16.gmra.mrb[0].mxu0 %v756
    %v867 = vpop.f32.mrb[0].mxu0
    %v868 = vadd.f32 %v734, %v867
    %v869 = vpop.f32.mrb[0].mxu0
    %v870 = vadd.f32 %v736, %v869
    %v871 = vpop.f32.mrb[0].mxu0
    %v872 = vadd.f32 %v738, %v871
    %v873 = vpop.f32.mrb[0].mxu0
    %v874 = vadd.f32 %v740, %v873
    %875 = vdwg.mxu0
    %876 = vrot.lane.b32.xlu0 %v450, 16
    %v877 = vpop.permute.xlu0 %876
    %878 = vrot.lane.b32.xlu0 %v454, 16
    %v879 = vpop.permute.xlu0 %878
    %880 = vrot.lane.b32.xlu0 %v458, 16
    %v881 = vpop.permute.xlu0 %880
    %882 = vrot.lane.b32.xlu0 %v462, 16
    %v883 = vpop.permute.xlu0 %882
    %884 = vrot.lane.b32.xlu0 %v451, 16
    %v885 = vpop.permute.xlu0 %884
    %886 = vrot.lane.b32.xlu0 %v455, 16
    %v887 = vpop.permute.xlu0 %886
    %888 = vrot.lane.b32.xlu0 %v459, 16
    %v889 = vpop.permute.xlu0 %888
    %890 = vrot.lane.b32.xlu0 %v463, 16
    %v891 = vpop.permute.xlu0 %890
    %892 = vrot.lane.b32.xlu0 %v452, 16
    %v893 = vpop.permute.xlu0 %892
    %894 = vrot.lane.b32.xlu0 %v456, 16
    %v895 = vpop.permute.xlu0 %894
    %896 = vrot.lane.b32.xlu0 %v460, 16
    %v897 = vpop.permute.xlu0 %896
    %898 = vrot.lane.b32.xlu0 %v464, 16
    %v899 = vpop.permute.xlu0 %898
    %900 = vrot.lane.b32.xlu0 %v453, 16
    %v901 = vpop.permute.xlu0 %900
    %902 = vrot.lane.b32.xlu0 %v457, 16
    %v903 = vpop.permute.xlu0 %902
    %904 = vrot.lane.b32.xlu0 %v461, 16
    %v905 = vpop.permute.xlu0 %904
    %906 = vrot.lane.b32.xlu0 %v465, 16
    %v907 = vpop.permute.xlu0 %906
    %vm908 = vcmp.lt.s32.totalorder %v543, 16
    %v909 = vsel %vm908, %v893, %v901
    %v910 = vsel %vm908, %v895, %v903
    %v911 = vsel %vm908, %v897, %v905
    %v912 = vsel %vm908, %v899, %v907
    %v913 = vsel %vm908, %v885, %v893
    %v914 = vsel %vm908, %v887, %v895
    %v915 = vsel %vm908, %v889, %v897
    %v916 = vsel %vm908, %v891, %v899
    %v917 = vsel %vm908, %v877, %v885
    %v918 = vsel %vm908, %v879, %v887
    %v919 = vsel %vm908, %v881, %v889
    %v920 = vsel %vm908, %v883, %v891
    %v921 = vsel %vm908, %v901, %v877
    %v922 = vsel %vm908, %v903, %v879
    %v923 = vsel %vm908, %v905, %v881
    %v924 = vsel %vm908, %v907, %v883
    %v926 = vlaneseq
    %v927 = vshrl.u32 %v926, 7
    %v928 = vsub.s32 0, %v927
    %v929 = vrot.slane %v126, %v928
    %v930 = vlaneseq
    %v931 = vshrl.u32 %v930, 7
    %v932 = vsub.s32 1, %v931
    %v933 = vrot.slane %v126, %v932
    %v934 = vlaneseq
    %v935 = vshrl.u32 %v934, 7
    %v936 = vsub.s32 2, %v935
    %v937 = vrot.slane %v126, %v936
    %v938 = vlaneseq
    %v939 = vshrl.u32 %v938, 7
    %v940 = vsub.s32 3, %v939
    %v941 = vrot.slane %v126, %v940
    %v946 = vmul.f32 %v921, %v929
    %v947 = vmul.f32 %v917, %v933
    %v948 = vmul.f32 %v913, %v937
    %v949 = vmul.f32 %v909, %v941
    %v950 = vmul.f32 %v922, %v929
    %v951 = vmul.f32 %v918, %v933
    %v952 = vmul.f32 %v914, %v937
    %v953 = vmul.f32 %v910, %v941
    %v954 = vmul.f32 %v923, %v929
    %v955 = vmul.f32 %v919, %v933
    %v956 = vmul.f32 %v915, %v937
    %v957 = vmul.f32 %v911, %v941
    %v958 = vmul.f32 %v924, %v929
    %v959 = vmul.f32 %v920, %v933
    %v960 = vmul.f32 %v916, %v937
    %v961 = vmul.f32 %v912, %v941
    %v962 = vpack.c.bf16 %v950, %v946
    %v963 = vpack.c.bf16 %v951, %v947
    %v964 = vpack.c.bf16 %v952, %v948
    %v965 = vpack.c.bf16 %v953, %v949
    %v966 = vpack.c.bf16 %v958, %v954
    %v967 = vpack.c.bf16 %v959, %v955
    %v968 = vpack.c.bf16 %v960, %v956
    %v969 = vpack.c.bf16 %v961, %v957
    %v974 = vunpack.c.l.b16 %v470
    %v975 = vunpack.c.l.b16 %v471
    %v976 = vunpack.c.l.b16 %v472
    %v977 = vunpack.c.l.b16 %v473
    %v978 = vpack.c.b16 %v975, %v974
    %v979 = vpack.c.b16 %v977, %v976
    %v981 = vsel %vm616, %v978, 0
    %v984 = vsel %vm616, %v979, 0
    %v987 = vsel %vm623, %v966, 0
    %v990 = vsel %vm623, %v967, 0
    %v993 = vsel %vm623, %v968, 0
    %v996 = vsel %vm623, %v969, 0
    %998 = vmatprep.subr.bf16.mxu0 %v963
    %999 = vmatpush1.bf16.msra.mxu0 %v962
    %1000 = vmatprep.subr.bf16.mxu0 %v990
    %1001 = vmatpush1.bf16.msra.mxu0 %v987
    %1002 = vmatprep.subr.bf16.mxu0 0
    %1003 = vmatpush1.bf16.msra.mxu0 0
    %1004 = vmatprep.subr.bf16.mxu0 0
    %1005 = vmatpush1.bf16.msra.mxu0 0
    %1006 = vmatprep.subr.bf16.mxu0 0
    %1007 = vmatpush1.bf16.msra.mxu0 0
    %1008 = vmatprep.subr.bf16.mxu0 0
    %1009 = vmatpush1.bf16.msra.mxu0 0
    %1010 = vmatprep.subr.bf16.mxu0 0
    %1011 = vmatpush1.bf16.msra.mxu0 0
    %1012 = vmatprep.subr.bf16.mxu0 0
    %1013 = vmatpush1.bf16.msra.mxu0 0
    %1014 = vmatprep.subr.bf16.mxu0 0
    %1015 = vmatpush1.bf16.msra.mxu0 0
    %1016 = vmatprep.subr.bf16.mxu0 0
    %1017 = vmatpush1.bf16.msra.mxu0 0
    %1018 = vmatprep.subr.bf16.mxu0 0
    %1019 = vmatpush1.bf16.msra.mxu0 0
    %1020 = vmatprep.subr.bf16.mxu0 0
    %1021 = vmatpush1.bf16.msra.mxu0 0
    %1022 = vmatprep.subr.bf16.mxu0 0
    %1023 = vmatpush1.bf16.msra.mxu0 0
    %1024 = vmatprep.subr.bf16.mxu0 0
    %1025 = vmatpush1.bf16.msra.mxu0 0
    %1026 = vmatprep.subr.bf16.mxu0 0
    %1027 = vmatpush1.bf16.msra.mxu0 0
    %1028 = vmatprep.subr.bf16.mxu0 0
    %1029 = vmatpush1.bf16.msra.mxu0 0
    %1030 = vmatprep.mubr.bf16.mxu0 0
    %1031 = vmatmul.mubr.bf16.gmra.mrb[0].mxu0 %v981
    %v1032 = vpop.f32.mrb[0].mxu0
    %v1033 = vadd.f32 0.0, %v1032
    %v1034 = vpop.f32.mrb[0].mxu0
    %v1035 = vadd.f32 0.0, %v1034
    %v1036 = vpop.f32.mrb[0].mxu0
    %v1037 = vadd.f32 0.0, %v1036
    %v1038 = vpop.f32.mrb[0].mxu0
    %v1039 = vadd.f32 0.0, %v1038
    %1040 = vmatprep.mubr.bf16.mxu0 0
    %1041 = vmatmul.mubr.bf16.gmra.mrb[0].mxu0 %v984
    %v1042 = vpop.f32.mrb[0].mxu0
    %v1043 = vadd.f32 0.0, %v1042
    %v1044 = vpop.f32.mrb[0].mxu0
    %v1045 = vadd.f32 0.0, %v1044
    %v1046 = vpop.f32.mrb[0].mxu0
    %v1047 = vadd.f32 0.0, %v1046
    %v1048 = vpop.f32.mrb[0].mxu0
    %v1049 = vadd.f32 0.0, %v1048
    %1050 = vdwg.mxu0
    %1051 = vmatprep.subr.bf16.mxu0 %v965
    %1052 = vmatpush1.bf16.msra.mxu0 %v964
    %1053 = vmatprep.subr.bf16.mxu0 %v996
    %1054 = vmatpush1.bf16.msra.mxu0 %v993
    %1055 = vmatprep.subr.bf16.mxu0 0
    %1056 = vmatpush1.bf16.msra.mxu0 0
    %1057 = vmatprep.subr.bf16.mxu0 0
    %1058 = vmatpush1.bf16.msra.mxu0 0
    %1059 = vmatprep.subr.bf16.mxu0 0
    %1060 = vmatpush1.bf16.msra.mxu0 0
    %1061 = vmatprep.subr.bf16.mxu0 0
    %1062 = vmatpush1.bf16.msra.mxu0 0
    %1063 = vmatprep.subr.bf16.mxu0 0
    %1064 = vmatpush1.bf16.msra.mxu0 0
    %1065 = vmatprep.subr.bf16.mxu0 0
    %1066 = vmatpush1.bf16.msra.mxu0 0
    %1067 = vmatprep.subr.bf16.mxu0 0
    %1068 = vmatpush1.bf16.msra.mxu0 0
    %1069 = vmatprep.subr.bf16.mxu0 0
    %1070 = vmatpush1.bf16.msra.mxu0 0
    %1071 = vmatprep.subr.bf16.mxu0 0
    %1072 = vmatpush1.bf16.msra.mxu0 0
    %1073 = vmatprep.subr.bf16.mxu0 0
    %1074 = vmatpush1.bf16.msra.mxu0 0
    %1075 = vmatprep.subr.bf16.mxu0 0
    %1076 = vmatpush1.bf16.msra.mxu0 0
    %1077 = vmatprep.subr.bf16.mxu0 0
    %1078 = vmatpush1.bf16.msra.mxu0 0
    %1079 = vmatprep.subr.bf16.mxu0 0
    %1080 = vmatpush1.bf16.msra.mxu0 0
    %1081 = vmatprep.subr.bf16.mxu0 0
    %1082 = vmatpush1.bf16.msra.mxu0 0
    %1083 = vmatprep.mubr.bf16.mxu0 0
    %1084 = vmatmul.mubr.bf16.gmra.mrb[0].mxu0 %v981
    %v1085 = vpop.f32.mrb[0].mxu0
    %v1086 = vadd.f32 0.0, %v1085
    %v1087 = vpop.f32.mrb[0].mxu0
    %v1088 = vadd.f32 0.0, %v1087
    %v1089 = vpop.f32.mrb[0].mxu0
    %v1090 = vadd.f32 0.0, %v1089
    %v1091 = vpop.f32.mrb[0].mxu0
    %v1092 = vadd.f32 0.0, %v1091
    %1093 = vmatprep.mubr.bf16.mxu0 0
    %1094 = vmatmul.mubr.bf16.gmra.mrb[0].mxu0 %v984
    %v1095 = vpop.f32.mrb[0].mxu0
    %v1096 = vadd.f32 0.0, %v1095
    %v1097 = vpop.f32.mrb[0].mxu0
    %v1098 = vadd.f32 0.0, %v1097
    %v1099 = vpop.f32.mrb[0].mxu0
    %v1100 = vadd.f32 0.0, %v1099
    %v1101 = vpop.f32.mrb[0].mxu0
    %v1102 = vadd.f32 0.0, %v1101
    %1103 = vdwg.mxu0
    %v1104 = vadd.f32 %v805, %v1033
    %v1105 = vadd.f32 %v807, %v1035
    %v1106 = vadd.f32 %v858, %v1086
    %v1107 = vadd.f32 %v860, %v1088
    %v1108 = vadd.f32 %v809, %v1037
    %v1109 = vadd.f32 %v811, %v1039
    %v1110 = vadd.f32 %v862, %v1090
    %v1111 = vadd.f32 %v864, %v1092
    %v1112 = vadd.f32 %v815, %v1043
    %v1113 = vadd.f32 %v817, %v1045
    %v1114 = vadd.f32 %v868, %v1096
    %v1115 = vadd.f32 %v870, %v1098
    %v1116 = vadd.f32 %v819, %v1047
    %v1117 = vadd.f32 %v821, %v1049
    %v1118 = vadd.f32 %v872, %v1100
    %v1119 = vadd.f32 %v874, %v1102
    %1120 = vrot.lane.b32.xlu0 %v450, 15
    %v1121 = vpop.permute.xlu0 %1120
    %1122 = vrot.lane.b32.xlu0 %v454, 15
    %v1123 = vpop.permute.xlu0 %1122
    %1124 = vrot.lane.b32.xlu0 %v458, 15
    %v1125 = vpop.permute.xlu0 %1124
    %1126 = vrot.lane.b32.xlu0 %v462, 15
    %v1127 = vpop.permute.xlu0 %1126
    %1128 = vrot.lane.b32.xlu0 %v451, 15
    %v1129 = vpop.permute.xlu0 %1128
    %1130 = vrot.lane.b32.xlu0 %v455, 15
    %v1131 = vpop.permute.xlu0 %1130
    %1132 = vrot.lane.b32.xlu0 %v459, 15
    %v1133 = vpop.permute.xlu0 %1132
    %1134 = vrot.lane.b32.xlu0 %v463, 15
    %v1135 = vpop.permute.xlu0 %1134
    %1136 = vrot.lane.b32.xlu0 %v452, 15
    %v1137 = vpop.permute.xlu0 %1136
    %1138 = vrot.lane.b32.xlu0 %v456, 15
    %v1139 = vpop.permute.xlu0 %1138
    %1140 = vrot.lane.b32.xlu0 %v460, 15
    %v1141 = vpop.permute.xlu0 %1140
    %1142 = vrot.lane.b32.xlu0 %v464, 15
    %v1143 = vpop.permute.xlu0 %1142
    %1144 = vrot.lane.b32.xlu0 %v453, 15
    %v1145 = vpop.permute.xlu0 %1144
    %1146 = vrot.lane.b32.xlu0 %v457, 15
    %v1147 = vpop.permute.xlu0 %1146
    %1148 = vrot.lane.b32.xlu0 %v461, 15
    %v1149 = vpop.permute.xlu0 %1148
    %1150 = vrot.lane.b32.xlu0 %v465, 15
    %v1151 = vpop.permute.xlu0 %1150
    %vm1152 = vcmp.lt.s32.totalorder %v543, 15
    %v1153 = vsel %vm1152, %v1137, %v1145
    %v1154 = vsel %vm1152, %v1139, %v1147
    %v1155 = vsel %vm1152, %v1141, %v1149
    %v1156 = vsel %vm1152, %v1143, %v1151
    %v1157 = vsel %vm1152, %v1129, %v1137
    %v1158 = vsel %vm1152, %v1131, %v1139
    %v1159 = vsel %vm1152, %v1133, %v1141
    %v1160 = vsel %vm1152, %v1135, %v1143
    %v1161 = vsel %vm1152, %v1121, %v1129
    %v1162 = vsel %vm1152, %v1123, %v1131
    %v1163 = vsel %vm1152, %v1125, %v1133
    %v1164 = vsel %vm1152, %v1127, %v1135
    %v1165 = vsel %vm1152, %v1145, %v1121
    %v1166 = vsel %vm1152, %v1147, %v1123
    %v1167 = vsel %vm1152, %v1149, %v1125
    %v1168 = vsel %vm1152, %v1151, %v1127
    %v1170 = vlaneseq
    %v1171 = vshrl.u32 %v1170, 7
    %v1172 = vsub.s32 0, %v1171
    %v1173 = vrot.slane %v127, %v1172
    %v1174 = vlaneseq
    %v1175 = vshrl.u32 %v1174, 7
    %v1176 = vsub.s32 1, %v1175
    %v1177 = vrot.slane %v127, %v1176
    %v1178 = vlaneseq
    %v1179 = vshrl.u32 %v1178, 7
    %v1180 = vsub.s32 2, %v1179
    %v1181 = vrot.slane %v127, %v1180
    %v1182 = vlaneseq
    %v1183 = vshrl.u32 %v1182, 7
    %v1184 = vsub.s32 3, %v1183
    %v1185 = vrot.slane %v127, %v1184
    %v1190 = vmul.f32 %v1165, %v1173
    %v1191 = vmul.f32 %v1161, %v1177
    %v1192 = vmul.f32 %v1157, %v1181
    %v1193 = vmul.f32 %v1153, %v1185
    %v1194 = vmul.f32 %v1166, %v1173
    %v1195 = vmul.f32 %v1162, %v1177
    %v1196 = vmul.f32 %v1158, %v1181
    %v1197 = vmul.f32 %v1154, %v1185
    %v1198 = vmul.f32 %v1167, %v1173
    %v1199 = vmul.f32 %v1163, %v1177
    %v1200 = vmul.f32 %v1159, %v1181
    %v1201 = vmul.f32 %v1155, %v1185
    %v1202 = vmul.f32 %v1168, %v1173
    %v1203 = vmul.f32 %v1164, %v1177
    %v1204 = vmul.f32 %v1160, %v1181
    %v1205 = vmul.f32 %v1156, %v1185
    %v1206 = vpack.c.bf16 %v1194, %v1190
    %v1207 = vpack.c.bf16 %v1195, %v1191
    %v1208 = vpack.c.bf16 %v1196, %v1192
    %v1209 = vpack.c.bf16 %v1197, %v1193
    %v1210 = vpack.c.bf16 %v1202, %v1198
    %v1211 = vpack.c.bf16 %v1203, %v1199
    %v1212 = vpack.c.bf16 %v1204, %v1200
    %v1213 = vpack.c.bf16 %v1205, %v1201
    %v1218 = vunpack.c.l.b16 %v474
    %v1219 = vunpack.c.l.b16 %v475
    %v1220 = vunpack.c.l.b16 %v476
    %v1221 = vunpack.c.l.b16 %v477
    %v1222 = vpack.c.b16 %v1219, %v1218
    %v1223 = vpack.c.b16 %v1221, %v1220
    %v1225 = vsel %vm616, %v1222, 0
    %v1228 = vsel %vm616, %v1223, 0
    %v1231 = vsel %vm623, %v1210, 0
    %v1234 = vsel %vm623, %v1211, 0
    %v1237 = vsel %vm623, %v1212, 0
    %v1240 = vsel %vm623, %v1213, 0
    %1242 = vmatprep.subr.bf16.mxu0 %v1207
    %1243 = vmatpush1.bf16.msra.mxu0 %v1206
    %1244 = vmatprep.subr.bf16.mxu0 %v1234
    %1245 = vmatpush1.bf16.msra.mxu0 %v1231
    %1246 = vmatprep.subr.bf16.mxu0 0
    %1247 = vmatpush1.bf16.msra.mxu0 0
    %1248 = vmatprep.subr.bf16.mxu0 0
    %1249 = vmatpush1.bf16.msra.mxu0 0
    %1250 = vmatprep.subr.bf16.mxu0 0
    %1251 = vmatpush1.bf16.msra.mxu0 0
    %1252 = vmatprep.subr.bf16.mxu0 0
    %1253 = vmatpush1.bf16.msra.mxu0 0
    %1254 = vmatprep.subr.bf16.mxu0 0
    %1255 = vmatpush1.bf16.msra.mxu0 0
    %1256 = vmatprep.subr.bf16.mxu0 0
    %1257 = vmatpush1.bf16.msra.mxu0 0
    %1258 = vmatprep.subr.bf16.mxu0 0
    %1259 = vmatpush1.bf16.msra.mxu0 0
    %1260 = vmatprep.subr.bf16.mxu0 0
    %1261 = vmatpush1.bf16.msra.mxu0 0
    %1262 = vmatprep.subr.bf16.mxu0 0
    %1263 = vmatpush1.bf16.msra.mxu0 0
    %1264 = vmatprep.subr.bf16.mxu0 0
    %1265 = vmatpush1.bf16.msra.mxu0 0
    %1266 = vmatprep.subr.bf16.mxu0 0
    %1267 = vmatpush1.bf16.msra.mxu0 0
    %1268 = vmatprep.subr.bf16.mxu0 0
    %1269 = vmatpush1.bf16.msra.mxu0 0
    %1270 = vmatprep.subr.bf16.mxu0 0
    %1271 = vmatpush1.bf16.msra.mxu0 0
    %1272 = vmatprep.subr.bf16.mxu0 0
    %1273 = vmatpush1.bf16.msra.mxu0 0
    %1274 = vmatprep.mubr.bf16.mxu0 0
    %1275 = vmatmul.mubr.bf16.gmra.mrb[0].mxu0 %v1225
    %v1276 = vpop.f32.mrb[0].mxu0
    %v1277 = vadd.f32 0.0, %v1276
    %v1278 = vpop.f32.mrb[0].mxu0
    %v1279 = vadd.f32 0.0, %v1278
    %v1280 = vpop.f32.mrb[0].mxu0
    %v1281 = vadd.f32 0.0, %v1280
    %v1282 = vpop.f32.mrb[0].mxu0
    %v1283 = vadd.f32 0.0, %v1282
    %1284 = vmatprep.mubr.bf16.mxu0 0
    %1285 = vmatmul.mubr.bf16.gmra.mrb[0].mxu0 %v1228
    %v1286 = vpop.f32.mrb[0].mxu0
    %v1287 = vadd.f32 0.0, %v1286
    %v1288 = vpop.f32.mrb[0].mxu0
    %v1289 = vadd.f32 0.0, %v1288
    %v1290 = vpop.f32.mrb[0].mxu0
    %v1291 = vadd.f32 0.0, %v1290
    %v1292 = vpop.f32.mrb[0].mxu0
    %v1293 = vadd.f32 0.0, %v1292
    %1294 = vdwg.mxu0
    %1295 = vmatprep.subr.bf16.mxu0 %v1209
    %1296 = vmatpush1.bf16.msra.mxu0 %v1208
    %1297 = vmatprep.subr.bf16.mxu0 %v1240
    %1298 = vmatpush1.bf16.msra.mxu0 %v1237
    %1299 = vmatprep.subr.bf16.mxu0 0
    %1300 = vmatpush1.bf16.msra.mxu0 0
    %1301 = vmatprep.subr.bf16.mxu0 0
    %1302 = vmatpush1.bf16.msra.mxu0 0
    %1303 = vmatprep.subr.bf16.mxu0 0
    %1304 = vmatpush1.bf16.msra.mxu0 0
    %1305 = vmatprep.subr.bf16.mxu0 0
    %1306 = vmatpush1.bf16.msra.mxu0 0
    %1307 = vmatprep.subr.bf16.mxu0 0
    %1308 = vmatpush1.bf16.msra.mxu0 0
    %1309 = vmatprep.subr.bf16.mxu0 0
    %1310 = vmatpush1.bf16.msra.mxu0 0
    %1311 = vmatprep.subr.bf16.mxu0 0
    %1312 = vmatpush1.bf16.msra.mxu0 0
    %1313 = vmatprep.subr.bf16.mxu0 0
    %1314 = vmatpush1.bf16.msra.mxu0 0
    %1315 = vmatprep.subr.bf16.mxu0 0
    %1316 = vmatpush1.bf16.msra.mxu0 0
    %1317 = vmatprep.subr.bf16.mxu0 0
    %1318 = vmatpush1.bf16.msra.mxu0 0
    %1319 = vmatprep.subr.bf16.mxu0 0
    %1320 = vmatpush1.bf16.msra.mxu0 0
    %1321 = vmatprep.subr.bf16.mxu0 0
    %1322 = vmatpush1.bf16.msra.mxu0 0
    %1323 = vmatprep.subr.bf16.mxu0 0
    %1324 = vmatpush1.bf16.msra.mxu0 0
    %1325 = vmatprep.subr.bf16.mxu0 0
    %1326 = vmatpush1.bf16.msra.mxu0 0
    %1327 = vmatprep.mubr.bf16.mxu0 0
    %1328 = vmatmul.mubr.bf16.gmra.mrb[0].mxu0 %v1225
    %v1329 = vpop.f32.mrb[0].mxu0
    %v1330 = vadd.f32 0.0, %v1329
    %v1331 = vpop.f32.mrb[0].mxu0
    %v1332 = vadd.f32 0.0, %v1331
    %v1333 = vpop.f32.mrb[0].mxu0
    %v1334 = vadd.f32 0.0, %v1333
    %v1335 = vpop.f32.mrb[0].mxu0
    %v1336 = vadd.f32 0.0, %v1335
    %1337 = vmatprep.mubr.bf16.mxu0 0
    %1338 = vmatmul.mubr.bf16.gmra.mrb[0].mxu0 %v1228
    %v1339 = vpop.f32.mrb[0].mxu0
    %v1340 = vadd.f32 0.0, %v1339
    %v1341 = vpop.f32.mrb[0].mxu0
    %v1342 = vadd.f32 0.0, %v1341
    %v1343 = vpop.f32.mrb[0].mxu0
    %v1344 = vadd.f32 0.0, %v1343
    %v1345 = vpop.f32.mrb[0].mxu0
    %v1346 = vadd.f32 0.0, %v1345
    %1347 = vdwg.mxu0
    %v1348 = vadd.f32 %v1104, %v1277
    %v1349 = vadd.f32 %v1105, %v1279
    %v1350 = vadd.f32 %v1106, %v1330
    %v1351 = vadd.f32 %v1107, %v1332
    %v1352 = vadd.f32 %v1108, %v1281
    %v1353 = vadd.f32 %v1109, %v1283
    %v1354 = vadd.f32 %v1110, %v1334
    %v1355 = vadd.f32 %v1111, %v1336
    %v1356 = vadd.f32 %v1112, %v1287
    %v1357 = vadd.f32 %v1113, %v1289
    %v1358 = vadd.f32 %v1114, %v1340
    %v1359 = vadd.f32 %v1115, %v1342
    %v1360 = vadd.f32 %v1116, %v1291
    %v1361 = vadd.f32 %v1117, %v1293
    %v1362 = vadd.f32 %v1118, %v1344
    %v1363 = vadd.f32 %v1119, %v1346
    %1364 = vrot.lane.b32.xlu0 %v450, 1
    %v1365 = vpop.permute.xlu0 %1364
    %1366 = vrot.lane.b32.xlu0 %v454, 1
    %v1367 = vpop.permute.xlu0 %1366
    %1368 = vrot.lane.b32.xlu0 %v458, 1
    %v1369 = vpop.permute.xlu0 %1368
    %1370 = vrot.lane.b32.xlu0 %v462, 1
    %v1371 = vpop.permute.xlu0 %1370
    %1372 = vrot.lane.b32.xlu0 %v451, 1
    %v1373 = vpop.permute.xlu0 %1372
    %1374 = vrot.lane.b32.xlu0 %v455, 1
    %v1375 = vpop.permute.xlu0 %1374
    %1376 = vrot.lane.b32.xlu0 %v459, 1
    %v1377 = vpop.permute.xlu0 %1376
    %1378 = vrot.lane.b32.xlu0 %v463, 1
    %v1379 = vpop.permute.xlu0 %1378
    %1380 = vrot.lane.b32.xlu0 %v452, 1
    %v1381 = vpop.permute.xlu0 %1380
    %1382 = vrot.lane.b32.xlu0 %v456, 1
    %v1383 = vpop.permute.xlu0 %1382
    %1384 = vrot.lane.b32.xlu0 %v460, 1
    %v1385 = vpop.permute.xlu0 %1384
    %1386 = vrot.lane.b32.xlu0 %v464, 1
    %v1387 = vpop.permute.xlu0 %1386
    %1388 = vrot.lane.b32.xlu0 %v453, 1
    %v1389 = vpop.permute.xlu0 %1388
    %1390 = vrot.lane.b32.xlu0 %v457, 1
    %v1391 = vpop.permute.xlu0 %1390
    %1392 = vrot.lane.b32.xlu0 %v461, 1
    %v1393 = vpop.permute.xlu0 %1392
    %1394 = vrot.lane.b32.xlu0 %v465, 1
    %v1395 = vpop.permute.xlu0 %1394
    %vm1396 = vcmp.lt.s32.totalorder %v543, 1
    %v1397 = vsel %vm1396, %v1381, %v1389
    %v1398 = vsel %vm1396, %v1383, %v1391
    %v1399 = vsel %vm1396, %v1385, %v1393
    %v1400 = vsel %vm1396, %v1387, %v1395
    %v1401 = vsel %vm1396, %v1373, %v1381
    %v1402 = vsel %vm1396, %v1375, %v1383
    %v1403 = vsel %vm1396, %v1377, %v1385
    %v1404 = vsel %vm1396, %v1379, %v1387
    %v1405 = vsel %vm1396, %v1365, %v1373
    %v1406 = vsel %vm1396, %v1367, %v1375
    %v1407 = vsel %vm1396, %v1369, %v1377
    %v1408 = vsel %vm1396, %v1371, %v1379
    %v1409 = vsel %vm1396, %v1389, %v1365
    %v1410 = vsel %vm1396, %v1391, %v1367
    %v1411 = vsel %vm1396, %v1393, %v1369
    %v1412 = vsel %vm1396, %v1395, %v1371
    %v1414 = vlaneseq
    %v1415 = vshrl.u32 %v1414, 7
    %v1416 = vsub.s32 0, %v1415
    %v1417 = vrot.slane %v128, %v1416
    %v1418 = vlaneseq
    %v1419 = vshrl.u32 %v1418, 7
    %v1420 = vsub.s32 1, %v1419
    %v1421 = vrot.slane %v128, %v1420
    %v1422 = vlaneseq
    %v1423 = vshrl.u32 %v1422, 7
    %v1424 = vsub.s32 2, %v1423
    %v1425 = vrot.slane %v128, %v1424
    %v1426 = vlaneseq
    %v1427 = vshrl.u32 %v1426, 7
    %v1428 = vsub.s32 3, %v1427
    %v1429 = vrot.slane %v128, %v1428
    %v1434 = vmul.f32 %v1409, %v1417
    %v1435 = vmul.f32 %v1405, %v1421
    %v1436 = vmul.f32 %v1401, %v1425
    %v1437 = vmul.f32 %v1397, %v1429
    %v1438 = vmul.f32 %v1410, %v1417
    %v1439 = vmul.f32 %v1406, %v1421
    %v1440 = vmul.f32 %v1402, %v1425
    %v1441 = vmul.f32 %v1398, %v1429
    %v1442 = vmul.f32 %v1411, %v1417
    %v1443 = vmul.f32 %v1407, %v1421
    %v1444 = vmul.f32 %v1403, %v1425
    %v1445 = vmul.f32 %v1399, %v1429
    %v1446 = vmul.f32 %v1412, %v1417
    %v1447 = vmul.f32 %v1408, %v1421
    %v1448 = vmul.f32 %v1404, %v1425
    %v1449 = vmul.f32 %v1400, %v1429
    %v1450 = vpack.c.bf16 %v1438, %v1434
    %v1451 = vpack.c.bf16 %v1439, %v1435
    %v1452 = vpack.c.bf16 %v1440, %v1436
    %v1453 = vpack.c.bf16 %v1441, %v1437
    %v1454 = vpack.c.bf16 %v1446, %v1442
    %v1455 = vpack.c.bf16 %v1447, %v1443
    %v1456 = vpack.c.bf16 %v1448, %v1444
    %v1457 = vpack.c.bf16 %v1449, %v1445
    %v1462 = vunpack.c.l.b16 %v478
    %v1463 = vunpack.c.l.b16 %v479
    %v1464 = vunpack.c.l.b16 %v480
    %v1465 = vunpack.c.l.b16 %v481
    %v1466 = vpack.c.b16 %v1463, %v1462
    %v1467 = vpack.c.b16 %v1465, %v1464
    %v1469 = vsel %vm616, %v1466, 0
    %v1472 = vsel %vm616, %v1467, 0
    %v1475 = vsel %vm623, %v1454, 0
    %v1478 = vsel %vm623, %v1455, 0
    %v1481 = vsel %vm623, %v1456, 0
    %v1484 = vsel %vm623, %v1457, 0
    %1486 = vmatprep.subr.bf16.mxu0 %v1451
    %1487 = vmatpush1.bf16.msra.mxu0 %v1450
    %1488 = vmatprep.subr.bf16.mxu0 %v1478
    %1489 = vmatpush1.bf16.msra.mxu0 %v1475
    %1490 = vmatprep.subr.bf16.mxu0 0
    %1491 = vmatpush1.bf16.msra.mxu0 0
    %1492 = vmatprep.subr.bf16.mxu0 0
    %1493 = vmatpush1.bf16.msra.mxu0 0
    %1494 = vmatprep.subr.bf16.mxu0 0
    %1495 = vmatpush1.bf16.msra.mxu0 0
    %1496 = vmatprep.subr.bf16.mxu0 0
    %1497 = vmatpush1.bf16.msra.mxu0 0
    %1498 = vmatprep.subr.bf16.mxu0 0
    %1499 = vmatpush1.bf16.msra.mxu0 0
    %1500 = vmatprep.subr.bf16.mxu0 0
    %1501 = vmatpush1.bf16.msra.mxu0 0
    %1502 = vmatprep.subr.bf16.mxu0 0
    %1503 = vmatpush1.bf16.msra.mxu0 0
    %1504 = vmatprep.subr.bf16.mxu0 0
    %1505 = vmatpush1.bf16.msra.mxu0 0
    %1506 = vmatprep.subr.bf16.mxu0 0
    %1507 = vmatpush1.bf16.msra.mxu0 0
    %1508 = vmatprep.subr.bf16.mxu0 0
    %1509 = vmatpush1.bf16.msra.mxu0 0
    %1510 = vmatprep.subr.bf16.mxu0 0
    %1511 = vmatpush1.bf16.msra.mxu0 0
    %1512 = vmatprep.subr.bf16.mxu0 0
    %1513 = vmatpush1.bf16.msra.mxu0 0
    %1514 = vmatprep.subr.bf16.mxu0 0
    %1515 = vmatpush1.bf16.msra.mxu0 0
    %1516 = vmatprep.subr.bf16.mxu0 0
    %1517 = vmatpush1.bf16.msra.mxu0 0
    %1518 = vmatprep.mubr.bf16.mxu0 0
    %1519 = vmatmul.mubr.bf16.gmra.mrb[0].mxu0 %v1469
    %v1520 = vpop.f32.mrb[0].mxu0
    %v1521 = vadd.f32 0.0, %v1520
    %v1522 = vpop.f32.mrb[0].mxu0
    %v1523 = vadd.f32 0.0, %v1522
    %v1524 = vpop.f32.mrb[0].mxu0
    %v1525 = vadd.f32 0.0, %v1524
    %v1526 = vpop.f32.mrb[0].mxu0
    %v1527 = vadd.f32 0.0, %v1526
    %1528 = vmatprep.mubr.bf16.mxu0 0
    %1529 = vmatmul.mubr.bf16.gmra.mrb[0].mxu0 %v1472
    %v1530 = vpop.f32.mrb[0].mxu0
    %v1531 = vadd.f32 0.0, %v1530
    %v1532 = vpop.f32.mrb[0].mxu0
    %v1533 = vadd.f32 0.0, %v1532
    %v1534 = vpop.f32.mrb[0].mxu0
    %v1535 = vadd.f32 0.0, %v1534
    %v1536 = vpop.f32.mrb[0].mxu0
    %v1537 = vadd.f32 0.0, %v1536
    %1538 = vdwg.mxu0
    %1539 = vmatprep.subr.bf16.mxu0 %v1453
    %1540 = vmatpush1.bf16.msra.mxu0 %v1452
    %1541 = vmatprep.subr.bf16.mxu0 %v1484
    %1542 = vmatpush1.bf16.msra.mxu0 %v1481
    %1543 = vmatprep.subr.bf16.mxu0 0
    %1544 = vmatpush1.bf16.msra.mxu0 0
    %1545 = vmatprep.subr.bf16.mxu0 0
    %1546 = vmatpush1.bf16.msra.mxu0 0
    %1547 = vmatprep.subr.bf16.mxu0 0
    %1548 = vmatpush1.bf16.msra.mxu0 0
    %1549 = vmatprep.subr.bf16.mxu0 0
    %1550 = vmatpush1.bf16.msra.mxu0 0
    %1551 = vmatprep.subr.bf16.mxu0 0
    %1552 = vmatpush1.bf16.msra.mxu0 0
    %1553 = vmatprep.subr.bf16.mxu0 0
    %1554 = vmatpush1.bf16.msra.mxu0 0
    %1555 = vmatprep.subr.bf16.mxu0 0
    %1556 = vmatpush1.bf16.msra.mxu0 0
    %1557 = vmatprep.subr.bf16.mxu0 0
    %1558 = vmatpush1.bf16.msra.mxu0 0
    %1559 = vmatprep.subr.bf16.mxu0 0
    %1560 = vmatpush1.bf16.msra.mxu0 0
    %1561 = vmatprep.subr.bf16.mxu0 0
    %1562 = vmatpush1.bf16.msra.mxu0 0
    %1563 = vmatprep.subr.bf16.mxu0 0
    %1564 = vmatpush1.bf16.msra.mxu0 0
    %1565 = vmatprep.subr.bf16.mxu0 0
    %1566 = vmatpush1.bf16.msra.mxu0 0
    %1567 = vmatprep.subr.bf16.mxu0 0
    %1568 = vmatpush1.bf16.msra.mxu0 0
    %1569 = vmatprep.subr.bf16.mxu0 0
    %1570 = vmatpush1.bf16.msra.mxu0 0
    %1571 = vmatprep.mubr.bf16.mxu0 0
    %1572 = vmatmul.mubr.bf16.gmra.mrb[0].mxu0 %v1469
    %v1573 = vpop.f32.mrb[0].mxu0
    %v1574 = vadd.f32 0.0, %v1573
    %v1575 = vpop.f32.mrb[0].mxu0
    %v1576 = vadd.f32 0.0, %v1575
    %v1577 = vpop.f32.mrb[0].mxu0
    %v1578 = vadd.f32 0.0, %v1577
    %v1579 = vpop.f32.mrb[0].mxu0
    %v1580 = vadd.f32 0.0, %v1579
    %1581 = vmatprep.mubr.bf16.mxu0 0
    %1582 = vmatmul.mubr.bf16.gmra.mrb[0].mxu0 %v1472
    %v1583 = vpop.f32.mrb[0].mxu0
    %v1584 = vadd.f32 0.0, %v1583
    %v1585 = vpop.f32.mrb[0].mxu0
    %v1586 = vadd.f32 0.0, %v1585
    %v1587 = vpop.f32.mrb[0].mxu0
    %v1588 = vadd.f32 0.0, %v1587
    %v1589 = vpop.f32.mrb[0].mxu0
    %v1590 = vadd.f32 0.0, %v1589
    %1591 = vdwg.mxu0
    %v1592 = vadd.f32 %v1348, %v1521
    %v1593 = vadd.f32 %v1349, %v1523
    %v1594 = vadd.f32 %v1350, %v1574
    %v1595 = vadd.f32 %v1351, %v1576
    %v1596 = vadd.f32 %v1352, %v1525
    %v1597 = vadd.f32 %v1353, %v1527
    %v1598 = vadd.f32 %v1354, %v1578
    %v1599 = vadd.f32 %v1355, %v1580
    %v1600 = vadd.f32 %v1356, %v1531
    %v1601 = vadd.f32 %v1357, %v1533
    %v1602 = vadd.f32 %v1358, %v1584
    %v1603 = vadd.f32 %v1359, %v1586
    %v1604 = vadd.f32 %v1360, %v1535
    %v1605 = vadd.f32 %v1361, %v1537
    %v1606 = vadd.f32 %v1362, %v1588
    %v1607 = vadd.f32 %v1363, %v1590
    %1608 = vrot.lane.b32.xlu0 %v450, 127
    %v1609 = vpop.permute.xlu0 %1608
    %1610 = vrot.lane.b32.xlu0 %v454, 127
    %v1611 = vpop.permute.xlu0 %1610
    %1612 = vrot.lane.b32.xlu0 %v458, 127
    %v1613 = vpop.permute.xlu0 %1612
    %1614 = vrot.lane.b32.xlu0 %v462, 127
    %v1615 = vpop.permute.xlu0 %1614
    %1616 = vrot.lane.b32.xlu0 %v451, 127
    %v1617 = vpop.permute.xlu0 %1616
    %1618 = vrot.lane.b32.xlu0 %v455, 127
    %v1619 = vpop.permute.xlu0 %1618
    %1620 = vrot.lane.b32.xlu0 %v459, 127
    %v1621 = vpop.permute.xlu0 %1620
    %1622 = vrot.lane.b32.xlu0 %v463, 127
    %v1623 = vpop.permute.xlu0 %1622
    %1624 = vrot.lane.b32.xlu0 %v452, 127
    %v1625 = vpop.permute.xlu0 %1624
    %1626 = vrot.lane.b32.xlu0 %v456, 127
    %v1627 = vpop.permute.xlu0 %1626
    %1628 = vrot.lane.b32.xlu0 %v460, 127
    %v1629 = vpop.permute.xlu0 %1628
    %1630 = vrot.lane.b32.xlu0 %v464, 127
    %v1631 = vpop.permute.xlu0 %1630
    %1632 = vrot.lane.b32.xlu0 %v453, 127
    %v1633 = vpop.permute.xlu0 %1632
    %1634 = vrot.lane.b32.xlu0 %v457, 127
    %v1635 = vpop.permute.xlu0 %1634
    %1636 = vrot.lane.b32.xlu0 %v461, 127
    %v1637 = vpop.permute.xlu0 %1636
    %1638 = vrot.lane.b32.xlu0 %v465, 127
    %v1639 = vpop.permute.xlu0 %1638
    %vm1640 = vcmp.lt.s32.totalorder %v543, 127
    %v1641 = vsel %vm1640, %v1625, %v1633
    %v1642 = vsel %vm1640, %v1627, %v1635
    %v1643 = vsel %vm1640, %v1629, %v1637
    %v1644 = vsel %vm1640, %v1631, %v1639
    %v1645 = vsel %vm1640, %v1617, %v1625
    %v1646 = vsel %vm1640, %v1619, %v1627
    %v1647 = vsel %vm1640, %v1621, %v1629
    %v1648 = vsel %vm1640, %v1623, %v1631
    %v1649 = vsel %vm1640, %v1609, %v1617
    %v1650 = vsel %vm1640, %v1611, %v1619
    %v1651 = vsel %vm1640, %v1613, %v1621
    %v1652 = vsel %vm1640, %v1615, %v1623
    %v1653 = vsel %vm1640, %v1633, %v1609
    %v1654 = vsel %vm1640, %v1635, %v1611
    %v1655 = vsel %vm1640, %v1637, %v1613
    %v1656 = vsel %vm1640, %v1639, %v1615
    %v1658 = vlaneseq
    %v1659 = vshrl.u32 %v1658, 7
    %v1660 = vsub.s32 0, %v1659
    %v1661 = vrot.slane %v129, %v1660
    %v1662 = vlaneseq
    %v1663 = vshrl.u32 %v1662, 7
    %v1664 = vsub.s32 1, %v1663
    %v1665 = vrot.slane %v129, %v1664
    %v1666 = vlaneseq
    %v1667 = vshrl.u32 %v1666, 7
    %v1668 = vsub.s32 2, %v1667
    %v1669 = vrot.slane %v129, %v1668
    %v1670 = vlaneseq
    %v1671 = vshrl.u32 %v1670, 7
    %v1672 = vsub.s32 3, %v1671
    %v1673 = vrot.slane %v129, %v1672
    %v1678 = vmul.f32 %v1649, %v1661
    %v1679 = vmul.f32 %v1645, %v1665
    %v1680 = vmul.f32 %v1641, %v1669
    %v1681 = vmul.f32 %v1653, %v1673
    %v1682 = vmul.f32 %v1650, %v1661
    %v1683 = vmul.f32 %v1646, %v1665
    %v1684 = vmul.f32 %v1642, %v1669
    %v1685 = vmul.f32 %v1654, %v1673
    %v1686 = vmul.f32 %v1651, %v1661
    %v1687 = vmul.f32 %v1647, %v1665
    %v1688 = vmul.f32 %v1643, %v1669
    %v1689 = vmul.f32 %v1655, %v1673
    %v1690 = vmul.f32 %v1652, %v1661
    %v1691 = vmul.f32 %v1648, %v1665
    %v1692 = vmul.f32 %v1644, %v1669
    %v1693 = vmul.f32 %v1656, %v1673
    %v1694 = vpack.c.bf16 %v1682, %v1678
    %v1695 = vpack.c.bf16 %v1683, %v1679
    %v1696 = vpack.c.bf16 %v1684, %v1680
    %v1697 = vpack.c.bf16 %v1685, %v1681
    %v1698 = vpack.c.bf16 %v1690, %v1686
    %v1699 = vpack.c.bf16 %v1691, %v1687
    %v1700 = vpack.c.bf16 %v1692, %v1688
    %v1701 = vpack.c.bf16 %v1693, %v1689
    %v1706 = vunpack.c.l.b16 %v486
    %v1707 = vunpack.c.l.b16 %v487
    %v1708 = vunpack.c.l.b16 %v488
    %v1709 = vunpack.c.l.b16 %v489
    %v1710 = vpack.c.b16 %v1707, %v1706
    %v1711 = vpack.c.b16 %v1709, %v1708
    %v1713 = vsel %vm616, %v1710, 0
    %v1716 = vsel %vm616, %v1711, 0
    %v1719 = vsel %vm623, %v1698, 0
    %v1722 = vsel %vm623, %v1699, 0
    %v1725 = vsel %vm623, %v1700, 0
    %v1728 = vsel %vm623, %v1701, 0
    %1730 = vmatprep.subr.bf16.mxu0 %v1695
    %1731 = vmatpush1.bf16.msra.mxu0 %v1694
    %1732 = vmatprep.subr.bf16.mxu0 %v1722
    %1733 = vmatpush1.bf16.msra.mxu0 %v1719
    %1734 = vmatprep.subr.bf16.mxu0 0
    %1735 = vmatpush1.bf16.msra.mxu0 0
    %1736 = vmatprep.subr.bf16.mxu0 0
    %1737 = vmatpush1.bf16.msra.mxu0 0
    %1738 = vmatprep.subr.bf16.mxu0 0
    %1739 = vmatpush1.bf16.msra.mxu0 0
    %1740 = vmatprep.subr.bf16.mxu0 0
    %1741 = vmatpush1.bf16.msra.mxu0 0
    %1742 = vmatprep.subr.bf16.mxu0 0
    %1743 = vmatpush1.bf16.msra.mxu0 0
    %1744 = vmatprep.subr.bf16.mxu0 0
    %1745 = vmatpush1.bf16.msra.mxu0 0
    %1746 = vmatprep.subr.bf16.mxu0 0
    %1747 = vmatpush1.bf16.msra.mxu0 0
    %1748 = vmatprep.subr.bf16.mxu0 0
    %1749 = vmatpush1.bf16.msra.mxu0 0
    %1750 = vmatprep.subr.bf16.mxu0 0
    %1751 = vmatpush1.bf16.msra.mxu0 0
    %1752 = vmatprep.subr.bf16.mxu0 0
    %1753 = vmatpush1.bf16.msra.mxu0 0
    %1754 = vmatprep.subr.bf16.mxu0 0
    %1755 = vmatpush1.bf16.msra.mxu0 0
    %1756 = vmatprep.subr.bf16.mxu0 0
    %1757 = vmatpush1.bf16.msra.mxu0 0
    %1758 = vmatprep.subr.bf16.mxu0 0
    %1759 = vmatpush1.bf16.msra.mxu0 0
    %1760 = vmatprep.subr.bf16.mxu0 0
    %1761 = vmatpush1.bf16.msra.mxu0 0
    %1762 = vmatprep.mubr.bf16.mxu0 0
    %1763 = vmatmul.mubr.bf16.gmra.mrb[0].mxu0 %v1713
    %v1764 = vpop.f32.mrb[0].mxu0
    %v1765 = vadd.f32 0.0, %v1764
    %v1766 = vpop.f32.mrb[0].mxu0
    %v1767 = vadd.f32 0.0, %v1766
    %v1768 = vpop.f32.mrb[0].mxu0
    %v1769 = vadd.f32 0.0, %v1768
    %v1770 = vpop.f32.mrb[0].mxu0
    %v1771 = vadd.f32 0.0, %v1770
    %1772 = vmatprep.mubr.bf16.mxu0 0
    %1773 = vmatmul.mubr.bf16.gmra.mrb[0].mxu0 %v1716
    %v1774 = vpop.f32.mrb[0].mxu0
    %v1775 = vadd.f32 0.0, %v1774
    %v1776 = vpop.f32.mrb[0].mxu0
    %v1777 = vadd.f32 0.0, %v1776
    %v1778 = vpop.f32.mrb[0].mxu0
    %v1779 = vadd.f32 0.0, %v1778
    %v1780 = vpop.f32.mrb[0].mxu0
    %v1781 = vadd.f32 0.0, %v1780
    %1782 = vdwg.mxu0
    %1783 = vmatprep.subr.bf16.mxu0 %v1697
    %1784 = vmatpush1.bf16.msra.mxu0 %v1696
    %1785 = vmatprep.subr.bf16.mxu0 %v1728
    %1786 = vmatpush1.bf16.msra.mxu0 %v1725
    %1787 = vmatprep.subr.bf16.mxu0 0
    %1788 = vmatpush1.bf16.msra.mxu0 0
    %1789 = vmatprep.subr.bf16.mxu0 0
    %1790 = vmatpush1.bf16.msra.mxu0 0
    %1791 = vmatprep.subr.bf16.mxu0 0
    %1792 = vmatpush1.bf16.msra.mxu0 0
    %1793 = vmatprep.subr.bf16.mxu0 0
    %1794 = vmatpush1.bf16.msra.mxu0 0
    %1795 = vmatprep.subr.bf16.mxu0 0
    %1796 = vmatpush1.bf16.msra.mxu0 0
    %1797 = vmatprep.subr.bf16.mxu0 0
    %1798 = vmatpush1.bf16.msra.mxu0 0
    %1799 = vmatprep.subr.bf16.mxu0 0
    %1800 = vmatpush1.bf16.msra.mxu0 0
    %1801 = vmatprep.subr.bf16.mxu0 0
    %1802 = vmatpush1.bf16.msra.mxu0 0
    %1803 = vmatprep.subr.bf16.mxu0 0
    %1804 = vmatpush1.bf16.msra.mxu0 0
    %1805 = vmatprep.subr.bf16.mxu0 0
    %1806 = vmatpush1.bf16.msra.mxu0 0
    %1807 = vmatprep.subr.bf16.mxu0 0
    %1808 = vmatpush1.bf16.msra.mxu0 0
    %1809 = vmatprep.subr.bf16.mxu0 0
    %1810 = vmatpush1.bf16.msra.mxu0 0
    %1811 = vmatprep.subr.bf16.mxu0 0
    %1812 = vmatpush1.bf16.msra.mxu0 0
    %1813 = vmatprep.subr.bf16.mxu0 0
    %1814 = vmatpush1.bf16.msra.mxu0 0
    %1815 = vmatprep.mubr.bf16.mxu0 0
    %1816 = vmatmul.mubr.bf16.gmra.mrb[0].mxu0 %v1713
    %v1817 = vpop.f32.mrb[0].mxu0
    %v1818 = vadd.f32 0.0, %v1817
    %v1819 = vpop.f32.mrb[0].mxu0
    %v1820 = vadd.f32 0.0, %v1819
    %v1821 = vpop.f32.mrb[0].mxu0
    %v1822 = vadd.f32 0.0, %v1821
    %v1823 = vpop.f32.mrb[0].mxu0
    %v1824 = vadd.f32 0.0, %v1823
    %1825 = vmatprep.mubr.bf16.mxu0 0
    %1826 = vmatmul.mubr.bf16.gmra.mrb[0].mxu0 %v1716
    %v1827 = vpop.f32.mrb[0].mxu0
    %v1828 = vadd.f32 0.0, %v1827
    %v1829 = vpop.f32.mrb[0].mxu0
    %v1830 = vadd.f32 0.0, %v1829
    %v1831 = vpop.f32.mrb[0].mxu0
    %v1832 = vadd.f32 0.0, %v1831
    %v1833 = vpop.f32.mrb[0].mxu0
    %v1834 = vadd.f32 0.0, %v1833
    %1835 = vdwg.mxu0
    %v1836 = vadd.f32 %v1592, %v1765
    %v1837 = vadd.f32 %v1593, %v1767
    %v1838 = vadd.f32 %v1594, %v1818
    %v1839 = vadd.f32 %v1595, %v1820
    %v1840 = vadd.f32 %v1596, %v1769
    %v1841 = vadd.f32 %v1597, %v1771
    %v1842 = vadd.f32 %v1598, %v1822
    %v1843 = vadd.f32 %v1599, %v1824
    %v1844 = vadd.f32 %v1600, %v1775
    %v1845 = vadd.f32 %v1601, %v1777
    %v1846 = vadd.f32 %v1602, %v1828
    %v1847 = vadd.f32 %v1603, %v1830
    %v1848 = vadd.f32 %v1604, %v1779
    %v1849 = vadd.f32 %v1605, %v1781
    %v1850 = vadd.f32 %v1606, %v1832
    %v1851 = vadd.f32 %v1607, %v1834
    %1852 = vrot.lane.b32.xlu0 %v450, 113
    %v1853 = vpop.permute.xlu0 %1852
    %1854 = vrot.lane.b32.xlu0 %v454, 113
    %v1855 = vpop.permute.xlu0 %1854
    %1856 = vrot.lane.b32.xlu0 %v458, 113
    %v1857 = vpop.permute.xlu0 %1856
    %1858 = vrot.lane.b32.xlu0 %v462, 113
    %v1859 = vpop.permute.xlu0 %1858
    %1860 = vrot.lane.b32.xlu0 %v451, 113
    %v1861 = vpop.permute.xlu0 %1860
    %1862 = vrot.lane.b32.xlu0 %v455, 113
    %v1863 = vpop.permute.xlu0 %1862
    %1864 = vrot.lane.b32.xlu0 %v459, 113
    %v1865 = vpop.permute.xlu0 %1864
    %1866 = vrot.lane.b32.xlu0 %v463, 113
    %v1867 = vpop.permute.xlu0 %1866
    %1868 = vrot.lane.b32.xlu0 %v452, 113
    %v1869 = vpop.permute.xlu0 %1868
    %1870 = vrot.lane.b32.xlu0 %v456, 113
    %v1871 = vpop.permute.xlu0 %1870
    %1872 = vrot.lane.b32.xlu0 %v460, 113
    %v1873 = vpop.permute.xlu0 %1872
    %1874 = vrot.lane.b32.xlu0 %v464, 113
    %v1875 = vpop.permute.xlu0 %1874
    %1876 = vrot.lane.b32.xlu0 %v453, 113
    %v1877 = vpop.permute.xlu0 %1876
    %1878 = vrot.lane.b32.xlu0 %v457, 113
    %v1879 = vpop.permute.xlu0 %1878
    %1880 = vrot.lane.b32.xlu0 %v461, 113
    %v1881 = vpop.permute.xlu0 %1880
    %1882 = vrot.lane.b32.xlu0 %v465, 113
    %v1883 = vpop.permute.xlu0 %1882
    %vm1884 = vcmp.lt.s32.totalorder %v543, 113
    %v1885 = vsel %vm1884, %v1869, %v1877
    %v1886 = vsel %vm1884, %v1871, %v1879
    %v1887 = vsel %vm1884, %v1873, %v1881
    %v1888 = vsel %vm1884, %v1875, %v1883
    %v1889 = vsel %vm1884, %v1861, %v1869
    %v1890 = vsel %vm1884, %v1863, %v1871
    %v1891 = vsel %vm1884, %v1865, %v1873
    %v1892 = vsel %vm1884, %v1867, %v1875
    %v1893 = vsel %vm1884, %v1853, %v1861
    %v1894 = vsel %vm1884, %v1855, %v1863
    %v1895 = vsel %vm1884, %v1857, %v1865
    %v1896 = vsel %vm1884, %v1859, %v1867
    %v1897 = vsel %vm1884, %v1877, %v1853
    %v1898 = vsel %vm1884, %v1879, %v1855
    %v1899 = vsel %vm1884, %v1881, %v1857
    %v1900 = vsel %vm1884, %v1883, %v1859
    %v1902 = vlaneseq
    %v1903 = vshrl.u32 %v1902, 7
    %v1904 = vsub.s32 0, %v1903
    %v1905 = vrot.slane %v130, %v1904
    %v1906 = vlaneseq
    %v1907 = vshrl.u32 %v1906, 7
    %v1908 = vsub.s32 1, %v1907
    %v1909 = vrot.slane %v130, %v1908
    %v1910 = vlaneseq
    %v1911 = vshrl.u32 %v1910, 7
    %v1912 = vsub.s32 2, %v1911
    %v1913 = vrot.slane %v130, %v1912
    %v1914 = vlaneseq
    %v1915 = vshrl.u32 %v1914, 7
    %v1916 = vsub.s32 3, %v1915
    %v1917 = vrot.slane %v130, %v1916
    %v1922 = vmul.f32 %v1893, %v1905
    %v1923 = vmul.f32 %v1889, %v1909
    %v1924 = vmul.f32 %v1885, %v1913
    %v1925 = vmul.f32 %v1897, %v1917
    %v1926 = vmul.f32 %v1894, %v1905
    %v1927 = vmul.f32 %v1890, %v1909
    %v1928 = vmul.f32 %v1886, %v1913
    %v1929 = vmul.f32 %v1898, %v1917
    %v1930 = vmul.f32 %v1895, %v1905
    %v1931 = vmul.f32 %v1891, %v1909
    %v1932 = vmul.f32 %v1887, %v1913
    %v1933 = vmul.f32 %v1899, %v1917
    %v1934 = vmul.f32 %v1896, %v1905
    %v1935 = vmul.f32 %v1892, %v1909
    %v1936 = vmul.f32 %v1888, %v1913
    %v1937 = vmul.f32 %v1900, %v1917
    %v1938 = vpack.c.bf16 %v1926, %v1922
    %v1939 = vpack.c.bf16 %v1927, %v1923
    %v1940 = vpack.c.bf16 %v1928, %v1924
    %v1941 = vpack.c.bf16 %v1929, %v1925
    %v1942 = vpack.c.bf16 %v1934, %v1930
    %v1943 = vpack.c.bf16 %v1935, %v1931
    %v1944 = vpack.c.bf16 %v1936, %v1932
    %v1945 = vpack.c.bf16 %v1937, %v1933
    %v1950 = vunpack.c.l.b16 %v490
    %v1951 = vunpack.c.l.b16 %v491
    %v1952 = vunpack.c.l.b16 %v492
    %v1953 = vunpack.c.l.b16 %v493
    %v1954 = vpack.c.b16 %v1951, %v1950
    %v1955 = vpack.c.b16 %v1953, %v1952
    %v1957 = vsel %vm616, %v1954, 0
    %v1960 = vsel %vm616, %v1955, 0
    %v1963 = vsel %vm623, %v1942, 0
    %v1966 = vsel %vm623, %v1943, 0
    %v1969 = vsel %vm623, %v1944, 0
    %v1972 = vsel %vm623, %v1945, 0
    %1974 = vmatprep.subr.bf16.mxu0 %v1939
    %1975 = vmatpush1.bf16.msra.mxu0 %v1938
    %1976 = vmatprep.subr.bf16.mxu0 %v1966
    %1977 = vmatpush1.bf16.msra.mxu0 %v1963
    %1978 = vmatprep.subr.bf16.mxu0 0
    %1979 = vmatpush1.bf16.msra.mxu0 0
    %1980 = vmatprep.subr.bf16.mxu0 0
    %1981 = vmatpush1.bf16.msra.mxu0 0
    %1982 = vmatprep.subr.bf16.mxu0 0
    %1983 = vmatpush1.bf16.msra.mxu0 0
    %1984 = vmatprep.subr.bf16.mxu0 0
    %1985 = vmatpush1.bf16.msra.mxu0 0
    %1986 = vmatprep.subr.bf16.mxu0 0
    %1987 = vmatpush1.bf16.msra.mxu0 0
    %1988 = vmatprep.subr.bf16.mxu0 0
    %1989 = vmatpush1.bf16.msra.mxu0 0
    %1990 = vmatprep.subr.bf16.mxu0 0
    %1991 = vmatpush1.bf16.msra.mxu0 0
    %1992 = vmatprep.subr.bf16.mxu0 0
    %1993 = vmatpush1.bf16.msra.mxu0 0
    %1994 = vmatprep.subr.bf16.mxu0 0
    %1995 = vmatpush1.bf16.msra.mxu0 0
    %1996 = vmatprep.subr.bf16.mxu0 0
    %1997 = vmatpush1.bf16.msra.mxu0 0
    %1998 = vmatprep.subr.bf16.mxu0 0
    %1999 = vmatpush1.bf16.msra.mxu0 0
    %2000 = vmatprep.subr.bf16.mxu0 0
    %2001 = vmatpush1.bf16.msra.mxu0 0
    %2002 = vmatprep.subr.bf16.mxu0 0
    %2003 = vmatpush1.bf16.msra.mxu0 0
    %2004 = vmatprep.subr.bf16.mxu0 0
    %2005 = vmatpush1.bf16.msra.mxu0 0
    %2006 = vmatprep.mubr.bf16.mxu0 0
    %2007 = vmatmul.mubr.bf16.gmra.mrb[0].mxu0 %v1957
    %v2008 = vpop.f32.mrb[0].mxu0
    %v2009 = vadd.f32 0.0, %v2008
    %v2010 = vpop.f32.mrb[0].mxu0
    %v2011 = vadd.f32 0.0, %v2010
    %v2012 = vpop.f32.mrb[0].mxu0
    %v2013 = vadd.f32 0.0, %v2012
    %v2014 = vpop.f32.mrb[0].mxu0
    %v2015 = vadd.f32 0.0, %v2014
    %2016 = vmatprep.mubr.bf16.mxu0 0
    %2017 = vmatmul.mubr.bf16.gmra.mrb[0].mxu0 %v1960
    %v2018 = vpop.f32.mrb[0].mxu0
    %v2019 = vadd.f32 0.0, %v2018
    %v2020 = vpop.f32.mrb[0].mxu0
    %v2021 = vadd.f32 0.0, %v2020
    %v2022 = vpop.f32.mrb[0].mxu0
    %v2023 = vadd.f32 0.0, %v2022
    %v2024 = vpop.f32.mrb[0].mxu0
    %v2025 = vadd.f32 0.0, %v2024
    %2026 = vdwg.mxu0
    %2027 = vmatprep.subr.bf16.mxu0 %v1941
    %2028 = vmatpush1.bf16.msra.mxu0 %v1940
    %2029 = vmatprep.subr.bf16.mxu0 %v1972
    %2030 = vmatpush1.bf16.msra.mxu0 %v1969
    %2031 = vmatprep.subr.bf16.mxu0 0
    %2032 = vmatpush1.bf16.msra.mxu0 0
    %2033 = vmatprep.subr.bf16.mxu0 0
    %2034 = vmatpush1.bf16.msra.mxu0 0
    %2035 = vmatprep.subr.bf16.mxu0 0
    %2036 = vmatpush1.bf16.msra.mxu0 0
    %2037 = vmatprep.subr.bf16.mxu0 0
    %2038 = vmatpush1.bf16.msra.mxu0 0
    %2039 = vmatprep.subr.bf16.mxu0 0
    %2040 = vmatpush1.bf16.msra.mxu0 0
    %2041 = vmatprep.subr.bf16.mxu0 0
    %2042 = vmatpush1.bf16.msra.mxu0 0
    %2043 = vmatprep.subr.bf16.mxu0 0
    %2044 = vmatpush1.bf16.msra.mxu0 0
    %2045 = vmatprep.subr.bf16.mxu0 0
    %2046 = vmatpush1.bf16.msra.mxu0 0
    %2047 = vmatprep.subr.bf16.mxu0 0
    %2048 = vmatpush1.bf16.msra.mxu0 0
    %2049 = vmatprep.subr.bf16.mxu0 0
    %2050 = vmatpush1.bf16.msra.mxu0 0
    %2051 = vmatprep.subr.bf16.mxu0 0
    %2052 = vmatpush1.bf16.msra.mxu0 0
    %2053 = vmatprep.subr.bf16.mxu0 0
    %2054 = vmatpush1.bf16.msra.mxu0 0
    %2055 = vmatprep.subr.bf16.mxu0 0
    %2056 = vmatpush1.bf16.msra.mxu0 0
    %2057 = vmatprep.subr.bf16.mxu0 0
    %2058 = vmatpush1.bf16.msra.mxu0 0
    %2059 = vmatprep.mubr.bf16.mxu0 0
    %2060 = vmatmul.mubr.bf16.gmra.mrb[0].mxu0 %v1957
    %v2061 = vpop.f32.mrb[0].mxu0
    %v2062 = vadd.f32 0.0, %v2061
    %v2063 = vpop.f32.mrb[0].mxu0
    %v2064 = vadd.f32 0.0, %v2063
    %v2065 = vpop.f32.mrb[0].mxu0
    %v2066 = vadd.f32 0.0, %v2065
    %v2067 = vpop.f32.mrb[0].mxu0
    %v2068 = vadd.f32 0.0, %v2067
    %2069 = vmatprep.mubr.bf16.mxu0 0
    %2070 = vmatmul.mubr.bf16.gmra.mrb[0].mxu0 %v1960
    %v2071 = vpop.f32.mrb[0].mxu0
    %v2072 = vadd.f32 0.0, %v2071
    %v2073 = vpop.f32.mrb[0].mxu0
    %v2074 = vadd.f32 0.0, %v2073
    %v2075 = vpop.f32.mrb[0].mxu0
    %v2076 = vadd.f32 0.0, %v2075
    %v2077 = vpop.f32.mrb[0].mxu0
    %v2078 = vadd.f32 0.0, %v2077
    %2079 = vdwg.mxu0
    %v2080 = vadd.f32 %v1836, %v2009
    %v2081 = vadd.f32 %v1837, %v2011
    %v2082 = vadd.f32 %v1838, %v2062
    %v2083 = vadd.f32 %v1839, %v2064
    %v2084 = vadd.f32 %v1840, %v2013
    %v2085 = vadd.f32 %v1841, %v2015
    %v2086 = vadd.f32 %v1842, %v2066
    %v2087 = vadd.f32 %v1843, %v2068
    %v2088 = vadd.f32 %v1844, %v2019
    %v2089 = vadd.f32 %v1845, %v2021
    %v2090 = vadd.f32 %v1846, %v2072
    %v2091 = vadd.f32 %v1847, %v2074
    %v2092 = vadd.f32 %v1848, %v2023
    %v2093 = vadd.f32 %v1849, %v2025
    %v2094 = vadd.f32 %v1850, %v2076
    %v2095 = vadd.f32 %v1851, %v2078
    %2096 = vrot.lane.b32.xlu0 %v450, 112
    %v2097 = vpop.permute.xlu0 %2096
    %2098 = vrot.lane.b32.xlu0 %v454, 112
    %v2099 = vpop.permute.xlu0 %2098
    %2100 = vrot.lane.b32.xlu0 %v458, 112
    %v2101 = vpop.permute.xlu0 %2100
    %2102 = vrot.lane.b32.xlu0 %v462, 112
    %v2103 = vpop.permute.xlu0 %2102
    %2104 = vrot.lane.b32.xlu0 %v451, 112
    %v2105 = vpop.permute.xlu0 %2104
    %2106 = vrot.lane.b32.xlu0 %v455, 112
    %v2107 = vpop.permute.xlu0 %2106
    %2108 = vrot.lane.b32.xlu0 %v459, 112
    %v2109 = vpop.permute.xlu0 %2108
    %2110 = vrot.lane.b32.xlu0 %v463, 112
    %v2111 = vpop.permute.xlu0 %2110
    %2112 = vrot.lane.b32.xlu0 %v452, 112
    %v2113 = vpop.permute.xlu0 %2112
    %2114 = vrot.lane.b32.xlu0 %v456, 112
    %v2115 = vpop.permute.xlu0 %2114
    %2116 = vrot.lane.b32.xlu0 %v460, 112
    %v2117 = vpop.permute.xlu0 %2116
    %2118 = vrot.lane.b32.xlu0 %v464, 112
    %v2119 = vpop.permute.xlu0 %2118
    %2120 = vrot.lane.b32.xlu0 %v453, 112
    %v2121 = vpop.permute.xlu0 %2120
    %2122 = vrot.lane.b32.xlu0 %v457, 112
    %v2123 = vpop.permute.xlu0 %2122
    %2124 = vrot.lane.b32.xlu0 %v461, 112
    %v2125 = vpop.permute.xlu0 %2124
    %2126 = vrot.lane.b32.xlu0 %v465, 112
    %v2127 = vpop.permute.xlu0 %2126
    %vm2128 = vcmp.lt.s32.totalorder %v543, 112
    %v2129 = vsel %vm2128, %v2113, %v2121
    %v2130 = vsel %vm2128, %v2115, %v2123
    %v2131 = vsel %vm2128, %v2117, %v2125
    %v2132 = vsel %vm2128, %v2119, %v2127
    %v2133 = vsel %vm2128, %v2105, %v2113
    %v2134 = vsel %vm2128, %v2107, %v2115
    %v2135 = vsel %vm2128, %v2109, %v2117
    %v2136 = vsel %vm2128, %v2111, %v2119
    %v2137 = vsel %vm2128, %v2097, %v2105
    %v2138 = vsel %vm2128, %v2099, %v2107
    %v2139 = vsel %vm2128, %v2101, %v2109
    %v2140 = vsel %vm2128, %v2103, %v2111
    %v2141 = vsel %vm2128, %v2121, %v2097
    %v2142 = vsel %vm2128, %v2123, %v2099
    %v2143 = vsel %vm2128, %v2125, %v2101
    %v2144 = vsel %vm2128, %v2127, %v2103
    %v2146 = vlaneseq
    %v2147 = vshrl.u32 %v2146, 7
    %v2148 = vsub.s32 0, %v2147
    %v2149 = vrot.slane %v131, %v2148
    %v2150 = vlaneseq
    %v2151 = vshrl.u32 %v2150, 7
    %v2152 = vsub.s32 1, %v2151
    %v2153 = vrot.slane %v131, %v2152
    %v2154 = vlaneseq
    %v2155 = vshrl.u32 %v2154, 7
    %v2156 = vsub.s32 2, %v2155
    %v2157 = vrot.slane %v131, %v2156
    %v2158 = vlaneseq
    %v2159 = vshrl.u32 %v2158, 7
    %v2160 = vsub.s32 3, %v2159
    %v2161 = vrot.slane %v131, %v2160
    %v2166 = vmul.f32 %v2137, %v2149
    %v2167 = vmul.f32 %v2133, %v2153
    %v2168 = vmul.f32 %v2129, %v2157
    %v2169 = vmul.f32 %v2141, %v2161
    %v2170 = vmul.f32 %v2138, %v2149
    %v2171 = vmul.f32 %v2134, %v2153
    %v2172 = vmul.f32 %v2130, %v2157
    %v2173 = vmul.f32 %v2142, %v2161
    %v2174 = vmul.f32 %v2139, %v2149
    %v2175 = vmul.f32 %v2135, %v2153
    %v2176 = vmul.f32 %v2131, %v2157
    %v2177 = vmul.f32 %v2143, %v2161
    %v2178 = vmul.f32 %v2140, %v2149
    %v2179 = vmul.f32 %v2136, %v2153
    %v2180 = vmul.f32 %v2132, %v2157
    %v2181 = vmul.f32 %v2144, %v2161
    %v2182 = vpack.c.bf16 %v2170, %v2166
    %v2183 = vpack.c.bf16 %v2171, %v2167
    %v2184 = vpack.c.bf16 %v2172, %v2168
    %v2185 = vpack.c.bf16 %v2173, %v2169
    %v2186 = vpack.c.bf16 %v2178, %v2174
    %v2187 = vpack.c.bf16 %v2179, %v2175
    %v2188 = vpack.c.bf16 %v2180, %v2176
    %v2189 = vpack.c.bf16 %v2181, %v2177
    %v2194 = vunpack.c.l.b16 %v494
    %v2195 = vunpack.c.l.b16 %v495
    %v2196 = vunpack.c.l.b16 %v496
    %v2197 = vunpack.c.l.b16 %v497
    %v2198 = vpack.c.b16 %v2195, %v2194
    %v2199 = vpack.c.b16 %v2197, %v2196
    %v2201 = vsel %vm616, %v2198, 0
    %v2204 = vsel %vm616, %v2199, 0
    %v2207 = vsel %vm623, %v2186, 0
    %v2210 = vsel %vm623, %v2187, 0
    %v2213 = vsel %vm623, %v2188, 0
    %v2216 = vsel %vm623, %v2189, 0
    %2218 = vmatprep.subr.bf16.mxu0 %v2183
    %2219 = vmatpush1.bf16.msra.mxu0 %v2182
    %2220 = vmatprep.subr.bf16.mxu0 %v2210
    %2221 = vmatpush1.bf16.msra.mxu0 %v2207
    %2222 = vmatprep.subr.bf16.mxu0 0
    %2223 = vmatpush1.bf16.msra.mxu0 0
    %2224 = vmatprep.subr.bf16.mxu0 0
    %2225 = vmatpush1.bf16.msra.mxu0 0
    %2226 = vmatprep.subr.bf16.mxu0 0
    %2227 = vmatpush1.bf16.msra.mxu0 0
    %2228 = vmatprep.subr.bf16.mxu0 0
    %2229 = vmatpush1.bf16.msra.mxu0 0
    %2230 = vmatprep.subr.bf16.mxu0 0
    %2231 = vmatpush1.bf16.msra.mxu0 0
    %2232 = vmatprep.subr.bf16.mxu0 0
    %2233 = vmatpush1.bf16.msra.mxu0 0
    %2234 = vmatprep.subr.bf16.mxu0 0
    %2235 = vmatpush1.bf16.msra.mxu0 0
    %2236 = vmatprep.subr.bf16.mxu0 0
    %2237 = vmatpush1.bf16.msra.mxu0 0
    %2238 = vmatprep.subr.bf16.mxu0 0
    %2239 = vmatpush1.bf16.msra.mxu0 0
    %2240 = vmatprep.subr.bf16.mxu0 0
    %2241 = vmatpush1.bf16.msra.mxu0 0
    %2242 = vmatprep.subr.bf16.mxu0 0
    %2243 = vmatpush1.bf16.msra.mxu0 0
    %2244 = vmatprep.subr.bf16.mxu0 0
    %2245 = vmatpush1.bf16.msra.mxu0 0
    %2246 = vmatprep.subr.bf16.mxu0 0
    %2247 = vmatpush1.bf16.msra.mxu0 0
    %2248 = vmatprep.subr.bf16.mxu0 0
    %2249 = vmatpush1.bf16.msra.mxu0 0
    %2250 = vmatprep.mubr.bf16.mxu0 0
    %2251 = vmatmul.mubr.bf16.gmra.mrb[0].mxu0 %v2201
    %v2252 = vpop.f32.mrb[0].mxu0
    %v2253 = vadd.f32 0.0, %v2252
    %v2254 = vpop.f32.mrb[0].mxu0
    %v2255 = vadd.f32 0.0, %v2254
    %v2256 = vpop.f32.mrb[0].mxu0
    %v2257 = vadd.f32 0.0, %v2256
    %v2258 = vpop.f32.mrb[0].mxu0
    %v2259 = vadd.f32 0.0, %v2258
    %2260 = vmatprep.mubr.bf16.mxu0 0
    %2261 = vmatmul.mubr.bf16.gmra.mrb[0].mxu0 %v2204
    %v2262 = vpop.f32.mrb[0].mxu0
    %v2263 = vadd.f32 0.0, %v2262
    %v2264 = vpop.f32.mrb[0].mxu0
    %v2265 = vadd.f32 0.0, %v2264
    %v2266 = vpop.f32.mrb[0].mxu0
    %v2267 = vadd.f32 0.0, %v2266
    %v2268 = vpop.f32.mrb[0].mxu0
    %v2269 = vadd.f32 0.0, %v2268
    %2270 = vdwg.mxu0
    %2271 = vmatprep.subr.bf16.mxu0 %v2185
    %2272 = vmatpush1.bf16.msra.mxu0 %v2184
    %2273 = vmatprep.subr.bf16.mxu0 %v2216
    %2274 = vmatpush1.bf16.msra.mxu0 %v2213
    %2275 = vmatprep.subr.bf16.mxu0 0
    %2276 = vmatpush1.bf16.msra.mxu0 0
    %2277 = vmatprep.subr.bf16.mxu0 0
    %2278 = vmatpush1.bf16.msra.mxu0 0
    %2279 = vmatprep.subr.bf16.mxu0 0
    %2280 = vmatpush1.bf16.msra.mxu0 0
    %2281 = vmatprep.subr.bf16.mxu0 0
    %2282 = vmatpush1.bf16.msra.mxu0 0
    %2283 = vmatprep.subr.bf16.mxu0 0
    %2284 = vmatpush1.bf16.msra.mxu0 0
    %2285 = vmatprep.subr.bf16.mxu0 0
    %2286 = vmatpush1.bf16.msra.mxu0 0
    %2287 = vmatprep.subr.bf16.mxu0 0
    %2288 = vmatpush1.bf16.msra.mxu0 0
    %2289 = vmatprep.subr.bf16.mxu0 0
    %2290 = vmatpush1.bf16.msra.mxu0 0
    %2291 = vmatprep.subr.bf16.mxu0 0
    %2292 = vmatpush1.bf16.msra.mxu0 0
    %2293 = vmatprep.subr.bf16.mxu0 0
    %2294 = vmatpush1.bf16.msra.mxu0 0
    %2295 = vmatprep.subr.bf16.mxu0 0
    %2296 = vmatpush1.bf16.msra.mxu0 0
    %2297 = vmatprep.subr.bf16.mxu0 0
    %2298 = vmatpush1.bf16.msra.mxu0 0
    %2299 = vmatprep.subr.bf16.mxu0 0
    %2300 = vmatpush1.bf16.msra.mxu0 0
    %2301 = vmatprep.subr.bf16.mxu0 0
    %2302 = vmatpush1.bf16.msra.mxu0 0
    %2303 = vmatprep.mubr.bf16.mxu0 0
    %2304 = vmatmul.mubr.bf16.gmra.mrb[0].mxu0 %v2201
    %v2305 = vpop.f32.mrb[0].mxu0
    %v2306 = vadd.f32 0.0, %v2305
    %v2307 = vpop.f32.mrb[0].mxu0
    %v2308 = vadd.f32 0.0, %v2307
    %v2309 = vpop.f32.mrb[0].mxu0
    %v2310 = vadd.f32 0.0, %v2309
    %v2311 = vpop.f32.mrb[0].mxu0
    %v2312 = vadd.f32 0.0, %v2311
    %2313 = vmatprep.mubr.bf16.mxu0 0
    %2314 = vmatmul.mubr.bf16.gmra.mrb[0].mxu0 %v2204
    %v2315 = vpop.f32.mrb[0].mxu0
    %v2316 = vadd.f32 0.0, %v2315
    %v2317 = vpop.f32.mrb[0].mxu0
    %v2318 = vadd.f32 0.0, %v2317
    %v2319 = vpop.f32.mrb[0].mxu0
    %v2320 = vadd.f32 0.0, %v2319
    %v2321 = vpop.f32.mrb[0].mxu0
    %v2322 = vadd.f32 0.0, %v2321
    %2323 = vdwg.mxu0
    %v2324 = vadd.f32 %v2080, %v2253
    %v2325 = vadd.f32 %v2081, %v2255
    %v2326 = vadd.f32 %v2082, %v2306
    %v2327 = vadd.f32 %v2083, %v2308
    %v2328 = vadd.f32 %v2084, %v2257
    %v2329 = vadd.f32 %v2085, %v2259
    %v2330 = vadd.f32 %v2086, %v2310
    %v2331 = vadd.f32 %v2087, %v2312
    %v2332 = vadd.f32 %v2088, %v2263
    %v2333 = vadd.f32 %v2089, %v2265
    %v2334 = vadd.f32 %v2090, %v2316
    %v2335 = vadd.f32 %v2091, %v2318
    %v2336 = vadd.f32 %v2092, %v2267
    %v2337 = vadd.f32 %v2093, %v2269
    %v2338 = vadd.f32 %v2094, %v2320
    %v2339 = vadd.f32 %v2095, %v2322
    %2340 = vrot.lane.b32.xlu0 %v450, 111
    %v2341 = vpop.permute.xlu0 %2340
    %2342 = vrot.lane.b32.xlu0 %v454, 111
    %v2343 = vpop.permute.xlu0 %2342
    %2344 = vrot.lane.b32.xlu0 %v458, 111
    %v2345 = vpop.permute.xlu0 %2344
    %2346 = vrot.lane.b32.xlu0 %v462, 111
    %v2347 = vpop.permute.xlu0 %2346
    %2348 = vrot.lane.b32.xlu0 %v451, 111
    %v2349 = vpop.permute.xlu0 %2348
    %2350 = vrot.lane.b32.xlu0 %v455, 111
    %v2351 = vpop.permute.xlu0 %2350
    %2352 = vrot.lane.b32.xlu0 %v459, 111
    %v2353 = vpop.permute.xlu0 %2352
    %2354 = vrot.lane.b32.xlu0 %v463, 111
    %v2355 = vpop.permute.xlu0 %2354
    %2356 = vrot.lane.b32.xlu0 %v452, 111
    %v2357 = vpop.permute.xlu0 %2356
    %2358 = vrot.lane.b32.xlu0 %v456, 111
    %v2359 = vpop.permute.xlu0 %2358
    %2360 = vrot.lane.b32.xlu0 %v460, 111
    %v2361 = vpop.permute.xlu0 %2360
    %2362 = vrot.lane.b32.xlu0 %v464, 111
    %v2363 = vpop.permute.xlu0 %2362
    %2364 = vrot.lane.b32.xlu0 %v453, 111
    %v2365 = vpop.permute.xlu0 %2364
    %2366 = vrot.lane.b32.xlu0 %v457, 111
    %v2367 = vpop.permute.xlu0 %2366
    %2368 = vrot.lane.b32.xlu0 %v461, 111
    %v2369 = vpop.permute.xlu0 %2368
    %2370 = vrot.lane.b32.xlu0 %v465, 111
    %v2371 = vpop.permute.xlu0 %2370
    %vm2372 = vcmp.lt.s32.totalorder %v543, 111
    %v2373 = vsel %vm2372, %v2357, %v2365
    %v2374 = vsel %vm2372, %v2359, %v2367
    %v2375 = vsel %vm2372, %v2361, %v2369
    %v2376 = vsel %vm2372, %v2363, %v2371
    %v2377 = vsel %vm2372, %v2349, %v2357
    %v2378 = vsel %vm2372, %v2351, %v2359
    %v2379 = vsel %vm2372, %v2353, %v2361
    %v2380 = vsel %vm2372, %v2355, %v2363
    %v2381 = vsel %vm2372, %v2341, %v2349
    %v2382 = vsel %vm2372, %v2343, %v2351
    %v2383 = vsel %vm2372, %v2345, %v2353
    %v2384 = vsel %vm2372, %v2347, %v2355
    %v2385 = vsel %vm2372, %v2365, %v2341
    %v2386 = vsel %vm2372, %v2367, %v2343
    %v2387 = vsel %vm2372, %v2369, %v2345
    %v2388 = vsel %vm2372, %v2371, %v2347
    %v2390 = vlaneseq
    %v2391 = vshrl.u32 %v2390, 7
    %v2392 = vsub.s32 0, %v2391
    %v2393 = vrot.slane %v132, %v2392
    %v2394 = vlaneseq
    %v2395 = vshrl.u32 %v2394, 7
    %v2396 = vsub.s32 1, %v2395
    %v2397 = vrot.slane %v132, %v2396
    %v2398 = vlaneseq
    %v2399 = vshrl.u32 %v2398, 7
    %v2400 = vsub.s32 2, %v2399
    %v2401 = vrot.slane %v132, %v2400
    %v2402 = vlaneseq
    %v2403 = vshrl.u32 %v2402, 7
    %v2404 = vsub.s32 3, %v2403
    %v2405 = vrot.slane %v132, %v2404
    %v2410 = vmul.f32 %v2381, %v2393
    %v2411 = vmul.f32 %v2377, %v2397
    %v2412 = vmul.f32 %v2373, %v2401
    %v2413 = vmul.f32 %v2385, %v2405
    %v2414 = vmul.f32 %v2382, %v2393
    %v2415 = vmul.f32 %v2378, %v2397
    %v2416 = vmul.f32 %v2374, %v2401
    %v2417 = vmul.f32 %v2386, %v2405
    %v2418 = vmul.f32 %v2383, %v2393
    %v2419 = vmul.f32 %v2379, %v2397
    %v2420 = vmul.f32 %v2375, %v2401
    %v2421 = vmul.f32 %v2387, %v2405
    %v2422 = vmul.f32 %v2384, %v2393
    %v2423 = vmul.f32 %v2380, %v2397
    %v2424 = vmul.f32 %v2376, %v2401
    %v2425 = vmul.f32 %v2388, %v2405
    %v2426 = vpack.c.bf16 %v2414, %v2410
    %v2427 = vpack.c.bf16 %v2415, %v2411
    %v2428 = vpack.c.bf16 %v2416, %v2412
    %v2429 = vpack.c.bf16 %v2417, %v2413
    %v2430 = vpack.c.bf16 %v2422, %v2418
    %v2431 = vpack.c.bf16 %v2423, %v2419
    %v2432 = vpack.c.bf16 %v2424, %v2420
    %v2433 = vpack.c.bf16 %v2425, %v2421
    %v2438 = vunpack.c.l.b16 %v498
    %v2439 = vunpack.c.l.b16 %v499
    %v2440 = vunpack.c.l.b16 %v500
    %v2441 = vunpack.c.l.b16 %v501
    %v2442 = vpack.c.b16 %v2439, %v2438
    %v2443 = vpack.c.b16 %v2441, %v2440
    %v2445 = vsel %vm616, %v2442, 0
    %v2448 = vsel %vm616, %v2443, 0
    %v2451 = vsel %vm623, %v2430, 0
    %v2454 = vsel %vm623, %v2431, 0
    %v2457 = vsel %vm623, %v2432, 0
    %v2460 = vsel %vm623, %v2433, 0
    %2462 = vmatprep.subr.bf16.mxu0 %v2427
    %2463 = vmatpush1.bf16.msra.mxu0 %v2426
    %2464 = vmatprep.subr.bf16.mxu0 %v2454
    %2465 = vmatpush1.bf16.msra.mxu0 %v2451
    %2466 = vmatprep.subr.bf16.mxu0 0
    %2467 = vmatpush1.bf16.msra.mxu0 0
    %2468 = vmatprep.subr.bf16.mxu0 0
    %2469 = vmatpush1.bf16.msra.mxu0 0
    %2470 = vmatprep.subr.bf16.mxu0 0
    %2471 = vmatpush1.bf16.msra.mxu0 0
    %2472 = vmatprep.subr.bf16.mxu0 0
    %2473 = vmatpush1.bf16.msra.mxu0 0
    %2474 = vmatprep.subr.bf16.mxu0 0
    %2475 = vmatpush1.bf16.msra.mxu0 0
    %2476 = vmatprep.subr.bf16.mxu0 0
    %2477 = vmatpush1.bf16.msra.mxu0 0
    %2478 = vmatprep.subr.bf16.mxu0 0
    %2479 = vmatpush1.bf16.msra.mxu0 0
    %2480 = vmatprep.subr.bf16.mxu0 0
    %2481 = vmatpush1.bf16.msra.mxu0 0
    %2482 = vmatprep.subr.bf16.mxu0 0
    %2483 = vmatpush1.bf16.msra.mxu0 0
    %2484 = vmatprep.subr.bf16.mxu0 0
    %2485 = vmatpush1.bf16.msra.mxu0 0
    %2486 = vmatprep.subr.bf16.mxu0 0
    %2487 = vmatpush1.bf16.msra.mxu0 0
    %2488 = vmatprep.subr.bf16.mxu0 0
    %2489 = vmatpush1.bf16.msra.mxu0 0
    %2490 = vmatprep.subr.bf16.mxu0 0
    %2491 = vmatpush1.bf16.msra.mxu0 0
    %2492 = vmatprep.subr.bf16.mxu0 0
    %2493 = vmatpush1.bf16.msra.mxu0 0
    %2494 = vmatprep.mubr.bf16.mxu0 0
    %2495 = vmatmul.mubr.bf16.gmra.mrb[0].mxu0 %v2445
    %v2496 = vpop.f32.mrb[0].mxu0
    %v2497 = vadd.f32 0.0, %v2496
    %v2498 = vpop.f32.mrb[0].mxu0
    %v2499 = vadd.f32 0.0, %v2498
    %v2500 = vpop.f32.mrb[0].mxu0
    %v2501 = vadd.f32 0.0, %v2500
    %v2502 = vpop.f32.mrb[0].mxu0
    %v2503 = vadd.f32 0.0, %v2502
    %2504 = vmatprep.mubr.bf16.mxu0 0
    %2505 = vmatmul.mubr.bf16.gmra.mrb[0].mxu0 %v2448
    %v2506 = vpop.f32.mrb[0].mxu0
    %v2507 = vadd.f32 0.0, %v2506
    %v2508 = vpop.f32.mrb[0].mxu0
    %v2509 = vadd.f32 0.0, %v2508
    %v2510 = vpop.f32.mrb[0].mxu0
    %v2511 = vadd.f32 0.0, %v2510
    %v2512 = vpop.f32.mrb[0].mxu0
    %v2513 = vadd.f32 0.0, %v2512
    %2514 = vdwg.mxu0
    %2515 = vmatprep.subr.bf16.mxu0 %v2429
    %2516 = vmatpush1.bf16.msra.mxu0 %v2428
    %2517 = vmatprep.subr.bf16.mxu0 %v2460
    %2518 = vmatpush1.bf16.msra.mxu0 %v2457
    %2519 = vmatprep.subr.bf16.mxu0 0
    %2520 = vmatpush1.bf16.msra.mxu0 0
    %2521 = vmatprep.subr.bf16.mxu0 0
    %2522 = vmatpush1.bf16.msra.mxu0 0
    %2523 = vmatprep.subr.bf16.mxu0 0
    %2524 = vmatpush1.bf16.msra.mxu0 0
    %2525 = vmatprep.subr.bf16.mxu0 0
    %2526 = vmatpush1.bf16.msra.mxu0 0
    %2527 = vmatprep.subr.bf16.mxu0 0
    %2528 = vmatpush1.bf16.msra.mxu0 0
    %2529 = vmatprep.subr.bf16.mxu0 0
    %2530 = vmatpush1.bf16.msra.mxu0 0
    %2531 = vmatprep.subr.bf16.mxu0 0
    %2532 = vmatpush1.bf16.msra.mxu0 0
    %2533 = vmatprep.subr.bf16.mxu0 0
    %2534 = vmatpush1.bf16.msra.mxu0 0
    %2535 = vmatprep.subr.bf16.mxu0 0
    %2536 = vmatpush1.bf16.msra.mxu0 0
    %2537 = vmatprep.subr.bf16.mxu0 0
    %2538 = vmatpush1.bf16.msra.mxu0 0
    %2539 = vmatprep.subr.bf16.mxu0 0
    %2540 = vmatpush1.bf16.msra.mxu0 0
    %2541 = vmatprep.subr.bf16.mxu0 0
    %2542 = vmatpush1.bf16.msra.mxu0 0
    %2543 = vmatprep.subr.bf16.mxu0 0
    %2544 = vmatpush1.bf16.msra.mxu0 0
    %2545 = vmatprep.subr.bf16.mxu0 0
    %2546 = vmatpush1.bf16.msra.mxu0 0
    %2547 = vmatprep.mubr.bf16.mxu0 0
    %2548 = vmatmul.mubr.bf16.gmra.mrb[0].mxu0 %v2445
    %v2549 = vpop.f32.mrb[0].mxu0
    %v2550 = vadd.f32 0.0, %v2549
    %v2551 = vpop.f32.mrb[0].mxu0
    %v2552 = vadd.f32 0.0, %v2551
    %v2553 = vpop.f32.mrb[0].mxu0
    %v2554 = vadd.f32 0.0, %v2553
    %v2555 = vpop.f32.mrb[0].mxu0
    %v2556 = vadd.f32 0.0, %v2555
    %2557 = vmatprep.mubr.bf16.mxu0 0
    %2558 = vmatmul.mubr.bf16.gmra.mrb[0].mxu0 %v2448
    %v2559 = vpop.f32.mrb[0].mxu0
    %v2560 = vadd.f32 0.0, %v2559
    %v2561 = vpop.f32.mrb[0].mxu0
    %v2562 = vadd.f32 0.0, %v2561
    %v2563 = vpop.f32.mrb[0].mxu0
    %v2564 = vadd.f32 0.0, %v2563
    %v2565 = vpop.f32.mrb[0].mxu0
    %v2566 = vadd.f32 0.0, %v2565
    %2567 = vdwg.mxu0
    %v2568 = vadd.f32 %v2324, %v2497
    %v2569 = vadd.f32 %v2325, %v2499
    %v2570 = vadd.f32 %v2326, %v2550
    %v2571 = vadd.f32 %v2327, %v2552
    %v2572 = vadd.f32 %v2328, %v2501
    %v2573 = vadd.f32 %v2329, %v2503
    %v2574 = vadd.f32 %v2330, %v2554
    %v2575 = vadd.f32 %v2331, %v2556
    %v2576 = vadd.f32 %v2332, %v2507
    %v2577 = vadd.f32 %v2333, %v2509
    %v2578 = vadd.f32 %v2334, %v2560
    %v2579 = vadd.f32 %v2335, %v2562
    %v2580 = vadd.f32 %v2336, %v2511
    %v2581 = vadd.f32 %v2337, %v2513
    %v2582 = vadd.f32 %v2338, %v2564
    %v2583 = vadd.f32 %v2339, %v2566
    %v2584 = vld [vmem:[%s7] sm:$0xff]
    %v2585 = vld [vmem:[%s7 + $0x8] sm:$0xff]
    %v2586 = vld [vmem:[%s7 + $0x10] sm:$0xff]
    %v2587 = vld [vmem:[%s7 + $0x18] sm:$0x3f]
    %v2588 = vld [vmem:[%s8] sm:$0xff]
    %v2589 = vld [vmem:[%s8 + $0x8] sm:$0xff]
    %v2590 = vld [vmem:[%s8 + $0x10] sm:$0xff]
    %v2591 = vld [vmem:[%s8 + $0x18] sm:$0x3f]
    %v2592 = vadd.f32 %v2568, %v2569
    %v2593 = vadd.f32 %v2592, %v2570
    %v2594 = vadd.f32 %v2593, %v2571
    %2595 = vadd.xlane.f32.xlu0 %v2594
    %v2596 = vpop.xlane.xlu0 %2595
    %v2597 = vadd.f32 %v2572, %v2573
    %v2598 = vadd.f32 %v2597, %v2574
    %v2599 = vadd.f32 %v2598, %v2575
    %2600 = vadd.xlane.f32.xlu0 %v2599
    %v2601 = vpop.xlane.xlu0 %2600
    %v2602 = vadd.f32 %v2576, %v2577
    %v2603 = vadd.f32 %v2602, %v2578
    %v2604 = vadd.f32 %v2603, %v2579
    %2605 = vadd.xlane.f32.xlu0 %v2604
    %v2606 = vpop.xlane.xlu0 %2605
    %v2607 = vsel %vm283, %v2580, 0.0
    %v2608 = vsel %vm283, %v2581, 0.0
    %v2609 = vadd.f32 %v2607, %v2608
    %v2610 = vsel %vm283, %v2582, 0.0
    %v2611 = vadd.f32 %v2609, %v2610
    %v2612 = vsel %vm283, %v2583, 0.0
    %v2613 = vadd.f32 %v2611, %v2612
    %2614 = vadd.xlane.f32.xlu0 %v2613
    %v2615 = vpop.xlane.xlu0 %2614
    %v2616 = vmul.f32 %v2596, %v293
    %v2617 = vmul.f32 %v2601, %v293
    %v2618 = vmul.f32 %v2606, %v293
    %v2619 = vmul.f32 %v2615, %v293
    %v2620 = vsub.f32 %v2568, %v2616
    %v2621 = vsub.f32 %v2569, %v2616
    %v2622 = vsub.f32 %v2570, %v2616
    %v2623 = vsub.f32 %v2571, %v2616
    %v2624 = vsub.f32 %v2572, %v2617
    %v2625 = vsub.f32 %v2573, %v2617
    %v2626 = vsub.f32 %v2574, %v2617
    %v2627 = vsub.f32 %v2575, %v2617
    %v2628 = vsub.f32 %v2576, %v2618
    %v2629 = vsub.f32 %v2577, %v2618
    %v2630 = vsub.f32 %v2578, %v2618
    %v2631 = vsub.f32 %v2579, %v2618
    %v2632 = vsub.f32 %v2580, %v2619
    %v2633 = vsub.f32 %v2581, %v2619
    %v2634 = vsub.f32 %v2582, %v2619
    %v2635 = vsub.f32 %v2583, %v2619
    %v2636 = vmul.f32 %v2620, %v2620
    %v2637 = vmul.f32 %v2621, %v2621
    %v2638 = vmul.f32 %v2622, %v2622
    %v2639 = vmul.f32 %v2623, %v2623
    %v2640 = vmul.f32 %v2624, %v2624
    %v2641 = vmul.f32 %v2625, %v2625
    %v2642 = vmul.f32 %v2626, %v2626
    %v2643 = vmul.f32 %v2627, %v2627
    %v2644 = vmul.f32 %v2628, %v2628
    %v2645 = vmul.f32 %v2629, %v2629
    %v2646 = vmul.f32 %v2630, %v2630
    %v2647 = vmul.f32 %v2631, %v2631
    %v2648 = vmul.f32 %v2632, %v2632
    %v2649 = vmul.f32 %v2633, %v2633
    %v2650 = vmul.f32 %v2634, %v2634
    %v2651 = vmul.f32 %v2635, %v2635
    %v2652 = vadd.f32 %v2636, %v2637
    %v2653 = vadd.f32 %v2652, %v2638
    %v2654 = vadd.f32 %v2653, %v2639
    %2655 = vadd.xlane.f32.xlu0 %v2654
    %v2656 = vpop.xlane.xlu0 %2655
    %v2657 = vadd.f32 %v2640, %v2641
    %v2658 = vadd.f32 %v2657, %v2642
    %v2659 = vadd.f32 %v2658, %v2643
    %2660 = vadd.xlane.f32.xlu0 %v2659
    %v2661 = vpop.xlane.xlu0 %2660
    %v2662 = vadd.f32 %v2644, %v2645
    %v2663 = vadd.f32 %v2662, %v2646
    %v2664 = vadd.f32 %v2663, %v2647
    %2665 = vadd.xlane.f32.xlu0 %v2664
    %v2666 = vpop.xlane.xlu0 %2665
    %v2667 = vsel %vm283, %v2648, 0.0
    %v2668 = vsel %vm283, %v2649, 0.0
    %v2669 = vadd.f32 %v2667, %v2668
    %v2670 = vsel %vm283, %v2650, 0.0
    %v2671 = vadd.f32 %v2669, %v2670
    %v2672 = vsel %vm283, %v2651, 0.0
    %v2673 = vadd.f32 %v2671, %v2672
    %2674 = vadd.xlane.f32.xlu0 %v2673
    %v2675 = vpop.xlane.xlu0 %2674
    %v2676 = vmul.f32 %v2656, %v293
    %v2677 = vmul.f32 %v2661, %v293
    %v2678 = vmul.f32 %v2666, %v293
    %v2679 = vmul.f32 %v2675, %v293
    %v2680 = vadd.f32 %v2676, 1e-05
    %v2681 = vadd.f32 %v2677, 1e-05
    %v2682 = vadd.f32 %v2678, 1e-05
    %v2683 = vadd.f32 %v2679, 1e-05
    %v2684 = vrsqrt.pop %v2680
    %v2685 = vrsqrt.pop %v2681
    %v2686 = vrsqrt.pop %v2682
    %v2687 = vrsqrt.pop %v2683
    %v2688 = vmul.f32 %v2584, %v2684
    %v2689 = vmul.f32 %v2585, %v2685
    %v2690 = vmul.f32 %v2586, %v2686
    %v2691 = vmul.f32 %v2587, %v2687
    %2693 = vset.pattern.permute.xlu0 0
    %2694 = vperm.xlu0 %2693, %v2688
    %v2695 = vpop.permute.xlu0 %2694
    %2698 = vset.pattern.permute.xlu0 0
    %2699 = vperm.xlu0 %2698, %v2689
    %v2700 = vpop.permute.xlu0 %2699
    %2703 = vset.pattern.permute.xlu0 0
    %2704 = vperm.xlu0 %2703, %v2690
    %v2705 = vpop.permute.xlu0 %2704
    %2708 = vset.pattern.permute.xlu0 0
    %2709 = vperm.xlu0 %2708, %v2691
    %v2710 = vpop.permute.xlu0 %2709
    %v2712 = vmul.f32 %v2568, %v2695
    %v2713 = vmul.f32 %v2569, %v2695
    %v2714 = vmul.f32 %v2570, %v2695
    %v2715 = vmul.f32 %v2571, %v2695
    %v2716 = vmul.f32 %v2572, %v2700
    %v2717 = vmul.f32 %v2573, %v2700
    %v2718 = vmul.f32 %v2574, %v2700
    %v2719 = vmul.f32 %v2575, %v2700
    %v2720 = vmul.f32 %v2576, %v2705
    %v2721 = vmul.f32 %v2577, %v2705
    %v2722 = vmul.f32 %v2578, %v2705
    %v2723 = vmul.f32 %v2579, %v2705
    %v2724 = vmul.f32 %v2580, %v2710
    %v2725 = vmul.f32 %v2581, %v2710
    %v2726 = vmul.f32 %v2582, %v2710
    %v2727 = vmul.f32 %v2583, %v2710
    %v2728 = vmul.f32 %v2616, %v2688
    %v2729 = vmul.f32 %v2617, %v2689
    %v2730 = vmul.f32 %v2618, %v2690
    %v2731 = vmul.f32 %v2619, %v2691
    %v2732 = vsub.f32 %v2588, %v2728
    %v2733 = vsub.f32 %v2589, %v2729
    %v2734 = vsub.f32 %v2590, %v2730
    %v2735 = vsub.f32 %v2591, %v2731
    %2737 = vset.pattern.permute.xlu0 0
    %2738 = vperm.xlu0 %2737, %v2732
    %v2739 = vpop.permute.xlu0 %2738
    %2742 = vset.pattern.permute.xlu0 0
    %2743 = vperm.xlu0 %2742, %v2733
    %v2744 = vpop.permute.xlu0 %2743
    %2747 = vset.pattern.permute.xlu0 0
    %2748 = vperm.xlu0 %2747, %v2734
    %v2749 = vpop.permute.xlu0 %2748
    %2752 = vset.pattern.permute.xlu0 0
    %2753 = vperm.xlu0 %2752, %v2735
    %v2754 = vpop.permute.xlu0 %2753
    %v2756 = vadd.f32 %v2712, %v2739
    %v2757 = vadd.f32 %v2713, %v2739
    %v2758 = vadd.f32 %v2714, %v2739
    %v2759 = vadd.f32 %v2715, %v2739
    %v2760 = vadd.f32 %v2716, %v2744
    %v2761 = vadd.f32 %v2717, %v2744
    %v2762 = vadd.f32 %v2718, %v2744
    %v2763 = vadd.f32 %v2719, %v2744
    %v2764 = vadd.f32 %v2720, %v2749
    %v2765 = vadd.f32 %v2721, %v2749
    %v2766 = vadd.f32 %v2722, %v2749
    %v2767 = vadd.f32 %v2723, %v2749
    %v2768 = vadd.f32 %v2724, %v2754
    %v2769 = vadd.f32 %v2725, %v2754
    %v2770 = vadd.f32 %v2726, %v2754
    %v2771 = vadd.f32 %v2727, %v2754
    %s2772 = scalar_lea.vmem %s3, 16
    %v2773 = vld [vmem:[%s2772] sm:$0xf]
    %v2774 = vld [vmem:[%s2772 + $0x4] sm:$0xf]
    %v2775 = vld [vmem:[%s2772 + $0x8] sm:$0xf]
    %v2776 = vld [vmem:[%s2772 + $0xc] sm:$0x7]
    %v2781 = vunpack.c.l.b16 %v2773
    %v2782 = vunpack.c.l.b16 %v2774
    %v2783 = vunpack.c.l.b16 %v2775
    %v2784 = vunpack.c.l.b16 %v2776
    %v2785 = vpack.c.b16 %v2782, %v2781
    %v2786 = vpack.c.b16 %v2784, %v2783
    %v2788 = vsel %vm147, %v2785, 0
    %v2791 = vsel %vm147, %v2786, 0
    %2793 = vmatprep.subr.bf16.mxu0 %v110
    %2794 = vmatpush1.bf16.msra.mxu0 %v109
    %2795 = vmatprep.subr.bf16.mxu0 %v114
    %2796 = vmatpush1.bf16.msra.mxu0 %v113
    %2797 = vmatprep.subr.bf16.mxu0 %v118
    %2798 = vmatpush1.bf16.msra.mxu0 %v117
    %2799 = vmatprep.subr.bf16.mxu0 %v122
    %2800 = vmatpush1.bf16.msra.mxu0 %v121
    %2801 = vmatprep.subr.bf16.mxu0 0
    %2802 = vmatpush1.bf16.msra.mxu0 0
    %2803 = vmatprep.subr.bf16.mxu0 0
    %2804 = vmatpush1.bf16.msra.mxu0 0
    %2805 = vmatprep.subr.bf16.mxu0 0
    %2806 = vmatpush1.bf16.msra.mxu0 0
    %2807 = vmatprep.subr.bf16.mxu0 0
    %2808 = vmatpush1.bf16.msra.mxu0 0
    %2809 = vmatprep.subr.bf16.mxu0 0
    %2810 = vmatpush1.bf16.msra.mxu0 0
    %2811 = vmatprep.subr.bf16.mxu0 0
    %2812 = vmatpush1.bf16.msra.mxu0 0
    %2813 = vmatprep.subr.bf16.mxu0 0
    %2814 = vmatpush1.bf16.msra.mxu0 0
    %2815 = vmatprep.subr.bf16.mxu0 0
    %2816 = vmatpush1.bf16.msra.mxu0 0
    %2817 = vmatprep.subr.bf16.mxu0 0
    %2818 = vmatpush1.bf16.msra.mxu0 0
    %2819 = vmatprep.subr.bf16.mxu0 0
    %2820 = vmatpush1.bf16.msra.mxu0 0
    %2821 = vmatprep.subr.bf16.mxu0 0
    %2822 = vmatpush1.bf16.msra.mxu0 0
    %2823 = vmatprep.subr.bf16.mxu0 0
    %2824 = vmatpush1.bf16.msra.mxu0 0
    %2825 = vmatprep.mubr.bf16.mxu0 0
    %2826 = vmatmul.mubr.bf16.gmra.mrb[0].mxu0 %v2788
    %v2827 = vpop.f32.mrb[0].mxu0
    %v2828 = vadd.f32 0.0, %v2827
    %v2829 = vpop.f32.mrb[0].mxu0
    %v2830 = vadd.f32 0.0, %v2829
    %v2831 = vpop.f32.mrb[0].mxu0
    %v2832 = vadd.f32 0.0, %v2831
    %v2833 = vpop.f32.mrb[0].mxu0
    %v2834 = vadd.f32 0.0, %v2833
    %2835 = vmatprep.mubr.bf16.mxu0 0
    %2836 = vmatmul.mubr.bf16.gmra.mrb[0].mxu0 %v2791
    %v2837 = vpop.f32.mrb[0].mxu0
    %v2838 = vadd.f32 0.0, %v2837
    %v2839 = vpop.f32.mrb[0].mxu0
    %v2840 = vadd.f32 0.0, %v2839
    %v2841 = vpop.f32.mrb[0].mxu0
    %v2842 = vadd.f32 0.0, %v2841
    %v2843 = vpop.f32.mrb[0].mxu0
    %v2844 = vadd.f32 0.0, %v2843
    %2845 = vdwg.mxu0
    %2846 = vmatprep.subr.bf16.mxu0 %v112
    %2847 = vmatpush1.bf16.msra.mxu0 %v111
    %2848 = vmatprep.subr.bf16.mxu0 %v116
    %2849 = vmatpush1.bf16.msra.mxu0 %v115
    %2850 = vmatprep.subr.bf16.mxu0 %v120
    %2851 = vmatpush1.bf16.msra.mxu0 %v119
    %2852 = vmatprep.subr.bf16.mxu0 %v124
    %2853 = vmatpush1.bf16.msra.mxu0 %v123
    %2854 = vmatprep.subr.bf16.mxu0 0
    %2855 = vmatpush1.bf16.msra.mxu0 0
    %2856 = vmatprep.subr.bf16.mxu0 0
    %2857 = vmatpush1.bf16.msra.mxu0 0
    %2858 = vmatprep.subr.bf16.mxu0 0
    %2859 = vmatpush1.bf16.msra.mxu0 0
    %2860 = vmatprep.subr.bf16.mxu0 0
    %2861 = vmatpush1.bf16.msra.mxu0 0
    %2862 = vmatprep.subr.bf16.mxu0 0
    %2863 = vmatpush1.bf16.msra.mxu0 0
    %2864 = vmatprep.subr.bf16.mxu0 0
    %2865 = vmatpush1.bf16.msra.mxu0 0
    %2866 = vmatprep.subr.bf16.mxu0 0
    %2867 = vmatpush1.bf16.msra.mxu0 0
    %2868 = vmatprep.subr.bf16.mxu0 0
    %2869 = vmatpush1.bf16.msra.mxu0 0
    %2870 = vmatprep.subr.bf16.mxu0 0
    %2871 = vmatpush1.bf16.msra.mxu0 0
    %2872 = vmatprep.subr.bf16.mxu0 0
    %2873 = vmatpush1.bf16.msra.mxu0 0
    %2874 = vmatprep.subr.bf16.mxu0 0
    %2875 = vmatpush1.bf16.msra.mxu0 0
    %2876 = vmatprep.subr.bf16.mxu0 0
    %2877 = vmatpush1.bf16.msra.mxu0 0
    %2878 = vmatprep.mubr.bf16.mxu0 0
    %2879 = vmatmul.mubr.bf16.gmra.mrb[0].mxu0 %v2788
    %v2880 = vpop.f32.mrb[0].mxu0
    %v2881 = vadd.f32 0.0, %v2880
    %v2882 = vpop.f32.mrb[0].mxu0
    %v2883 = vadd.f32 0.0, %v2882
    %v2884 = vpop.f32.mrb[0].mxu0
    %v2885 = vadd.f32 0.0, %v2884
    %v2886 = vpop.f32.mrb[0].mxu0
    %v2887 = vadd.f32 0.0, %v2886
    %2888 = vmatprep.mubr.bf16.mxu0 0
    %2889 = vmatmul.mubr.bf16.gmra.mrb[0].mxu0 %v2791
    %v2890 = vpop.f32.mrb[0].mxu0
    %v2891 = vadd.f32 0.0, %v2890
    %v2892 = vpop.f32.mrb[0].mxu0
    %v2893 = vadd.f32 0.0, %v2892
    %v2894 = vpop.f32.mrb[0].mxu0
    %v2895 = vadd.f32 0.0, %v2894
    %v2896 = vpop.f32.mrb[0].mxu0
    %v2897 = vadd.f32 0.0, %v2896
    %2898 = vdwg.mxu0
    %s2899 = scalar_lea.vmem %s4, 32
    %v2900 = vld [vmem:[%s2899] sm:$0xff]
    %v2901 = vld [vmem:[%s2899 + $0x8] sm:$0xff]
    %v2902 = vld [vmem:[%s2899 + $0x10] sm:$0xff]
    %v2903 = vld [vmem:[%s2899 + $0x18] sm:$0x3f]
    %s2904 = scalar_lea.vmem %s5, 32
    %v2905 = vld [vmem:[%s2904] sm:$0xff]
    %v2906 = vld [vmem:[%s2904 + $0x8] sm:$0xff]
    %v2907 = vld [vmem:[%s2904 + $0x10] sm:$0xff]
    %v2908 = vld [vmem:[%s2904 + $0x18] sm:$0x3f]
    %v2909 = vadd.f32 %v2828, %v2830
    %v2910 = vadd.f32 %v2909, %v2881
    %v2911 = vadd.f32 %v2910, %v2883
    %2912 = vadd.xlane.f32.xlu0 %v2911
    %v2913 = vpop.xlane.xlu0 %2912
    %v2914 = vadd.f32 %v2832, %v2834
    %v2915 = vadd.f32 %v2914, %v2885
    %v2916 = vadd.f32 %v2915, %v2887
    %2917 = vadd.xlane.f32.xlu0 %v2916
    %v2918 = vpop.xlane.xlu0 %2917
    %v2919 = vadd.f32 %v2838, %v2840
    %v2920 = vadd.f32 %v2919, %v2891
    %v2921 = vadd.f32 %v2920, %v2893
    %2922 = vadd.xlane.f32.xlu0 %v2921
    %v2923 = vpop.xlane.xlu0 %2922
    %v2924 = vsel %vm283, %v2842, 0.0
    %v2925 = vsel %vm283, %v2844, 0.0
    %v2926 = vadd.f32 %v2924, %v2925
    %v2927 = vsel %vm283, %v2895, 0.0
    %v2928 = vadd.f32 %v2926, %v2927
    %v2929 = vsel %vm283, %v2897, 0.0
    %v2930 = vadd.f32 %v2928, %v2929
    %2931 = vadd.xlane.f32.xlu0 %v2930
    %v2932 = vpop.xlane.xlu0 %2931
    %v2933 = vmul.f32 %v2913, %v293
    %v2934 = vmul.f32 %v2918, %v293
    %v2935 = vmul.f32 %v2923, %v293
    %v2936 = vmul.f32 %v2932, %v293
    %v2937 = vsub.f32 %v2828, %v2933
    %v2938 = vsub.f32 %v2830, %v2933
    %v2939 = vsub.f32 %v2881, %v2933
    %v2940 = vsub.f32 %v2883, %v2933
    %v2941 = vsub.f32 %v2832, %v2934
    %v2942 = vsub.f32 %v2834, %v2934
    %v2943 = vsub.f32 %v2885, %v2934
    %v2944 = vsub.f32 %v2887, %v2934
    %v2945 = vsub.f32 %v2838, %v2935
    %v2946 = vsub.f32 %v2840, %v2935
    %v2947 = vsub.f32 %v2891, %v2935
    %v2948 = vsub.f32 %v2893, %v2935
    %v2949 = vsub.f32 %v2842, %v2936
    %v2950 = vsub.f32 %v2844, %v2936
    %v2951 = vsub.f32 %v2895, %v2936
    %v2952 = vsub.f32 %v2897, %v2936
    %v2953 = vmul.f32 %v2937, %v2937
    %v2954 = vmul.f32 %v2938, %v2938
    %v2955 = vmul.f32 %v2939, %v2939
    %v2956 = vmul.f32 %v2940, %v2940
    %v2957 = vmul.f32 %v2941, %v2941
    %v2958 = vmul.f32 %v2942, %v2942
    %v2959 = vmul.f32 %v2943, %v2943
    %v2960 = vmul.f32 %v2944, %v2944
    %v2961 = vmul.f32 %v2945, %v2945
    %v2962 = vmul.f32 %v2946, %v2946
    %v2963 = vmul.f32 %v2947, %v2947
    %v2964 = vmul.f32 %v2948, %v2948
    %v2965 = vmul.f32 %v2949, %v2949
    %v2966 = vmul.f32 %v2950, %v2950
    %v2967 = vmul.f32 %v2951, %v2951
    %v2968 = vmul.f32 %v2952, %v2952
    %v2969 = vadd.f32 %v2953, %v2954
    %v2970 = vadd.f32 %v2969, %v2955
    %v2971 = vadd.f32 %v2970, %v2956
    %2972 = vadd.xlane.f32.xlu0 %v2971
    %v2973 = vpop.xlane.xlu0 %2972
    %v2974 = vadd.f32 %v2957, %v2958
    %v2975 = vadd.f32 %v2974, %v2959
    %v2976 = vadd.f32 %v2975, %v2960
    %2977 = vadd.xlane.f32.xlu0 %v2976
    %v2978 = vpop.xlane.xlu0 %2977
    %v2979 = vadd.f32 %v2961, %v2962
    %v2980 = vadd.f32 %v2979, %v2963
    %v2981 = vadd.f32 %v2980, %v2964
    %2982 = vadd.xlane.f32.xlu0 %v2981
    %v2983 = vpop.xlane.xlu0 %2982
    %v2984 = vsel %vm283, %v2965, 0.0
    %v2985 = vsel %vm283, %v2966, 0.0
    %v2986 = vadd.f32 %v2984, %v2985
    %v2987 = vsel %vm283, %v2967, 0.0
    %v2988 = vadd.f32 %v2986, %v2987
    %v2989 = vsel %vm283, %v2968, 0.0
    %v2990 = vadd.f32 %v2988, %v2989
    %2991 = vadd.xlane.f32.xlu0 %v2990
    %v2992 = vpop.xlane.xlu0 %2991
    %v2993 = vmul.f32 %v2973, %v293
    %v2994 = vmul.f32 %v2978, %v293
    %v2995 = vmul.f32 %v2983, %v293
    %v2996 = vmul.f32 %v2992, %v293
    %v2997 = vadd.f32 %v2993, 1e-05
    %v2998 = vadd.f32 %v2994, 1e-05
    %v2999 = vadd.f32 %v2995, 1e-05
    %v3000 = vadd.f32 %v2996, 1e-05
    %v3001 = vrsqrt.pop %v2997
    %v3002 = vrsqrt.pop %v2998
    %v3003 = vrsqrt.pop %v2999
    %v3004 = vrsqrt.pop %v3000
    %v3005 = vmul.f32 %v2900, %v3001
    %v3006 = vmul.f32 %v2901, %v3002
    %v3007 = vmul.f32 %v2902, %v3003
    %v3008 = vmul.f32 %v2903, %v3004
    %3010 = vset.pattern.permute.xlu0 0
    %3011 = vperm.xlu0 %3010, %v3005
    %v3012 = vpop.permute.xlu0 %3011
    %3015 = vset.pattern.permute.xlu0 0
    %3016 = vperm.xlu0 %3015, %v3006
    %v3017 = vpop.permute.xlu0 %3016
    %3020 = vset.pattern.permute.xlu0 0
    %3021 = vperm.xlu0 %3020, %v3007
    %v3022 = vpop.permute.xlu0 %3021
    %3025 = vset.pattern.permute.xlu0 0
    %3026 = vperm.xlu0 %3025, %v3008
    %v3027 = vpop.permute.xlu0 %3026
    %v3029 = vmul.f32 %v2828, %v3012
    %v3030 = vmul.f32 %v2830, %v3012
    %v3031 = vmul.f32 %v2881, %v3012
    %v3032 = vmul.f32 %v2883, %v3012
    %v3033 = vmul.f32 %v2832, %v3017
    %v3034 = vmul.f32 %v2834, %v3017
    %v3035 = vmul.f32 %v2885, %v3017
    %v3036 = vmul.f32 %v2887, %v3017
    %v3037 = vmul.f32 %v2838, %v3022
    %v3038 = vmul.f32 %v2840, %v3022
    %v3039 = vmul.f32 %v2891, %v3022
    %v3040 = vmul.f32 %v2893, %v3022
    %v3041 = vmul.f32 %v2842, %v3027
    %v3042 = vmul.f32 %v2844, %v3027
    %v3043 = vmul.f32 %v2895, %v3027
    %v3044 = vmul.f32 %v2897, %v3027
    %v3045 = vmul.f32 %v2933, %v3005
    %v3046 = vmul.f32 %v2934, %v3006
    %v3047 = vmul.f32 %v2935, %v3007
    %v3048 = vmul.f32 %v2936, %v3008
    %v3049 = vsub.f32 %v2905, %v3045
    %v3050 = vsub.f32 %v2906, %v3046
    %v3051 = vsub.f32 %v2907, %v3047
    %v3052 = vsub.f32 %v2908, %v3048
    %3054 = vset.pattern.permute.xlu0 0
    %3055 = vperm.xlu0 %3054, %v3049
    %v3056 = vpop.permute.xlu0 %3055
    %3059 = vset.pattern.permute.xlu0 0
    %3060 = vperm.xlu0 %3059, %v3050
    %v3061 = vpop.permute.xlu0 %3060
    %3064 = vset.pattern.permute.xlu0 0
    %3065 = vperm.xlu0 %3064, %v3051
    %v3066 = vpop.permute.xlu0 %3065
    %3069 = vset.pattern.permute.xlu0 0
    %3070 = vperm.xlu0 %3069, %v3052
    %v3071 = vpop.permute.xlu0 %3070
    %v3073 = vadd.f32 %v3029, %v3056
    %v3074 = vadd.f32 %v3030, %v3056
    %v3075 = vadd.f32 %v3031, %v3056
    %v3076 = vadd.f32 %v3032, %v3056
    %v3077 = vadd.f32 %v3033, %v3061
    %v3078 = vadd.f32 %v3034, %v3061
    %v3079 = vadd.f32 %v3035, %v3061
    %v3080 = vadd.f32 %v3036, %v3061
    %v3081 = vadd.f32 %v3037, %v3066
    %v3082 = vadd.f32 %v3038, %v3066
    %v3083 = vadd.f32 %v3039, %v3066
    %v3084 = vadd.f32 %v3040, %v3066
    %v3085 = vadd.f32 %v3041, %v3071
    %v3086 = vadd.f32 %v3042, %v3071
    %v3087 = vadd.f32 %v3043, %v3071
    %v3088 = vadd.f32 %v3044, %v3071
    %v3089 = vmax.f32 %v3073, 0.0
    %v3090 = vmax.f32 %v3074, 0.0
    %v3091 = vmax.f32 %v3075, 0.0
    %v3092 = vmax.f32 %v3076, 0.0
    %v3093 = vmax.f32 %v3077, 0.0
    %v3094 = vmax.f32 %v3078, 0.0
    %v3095 = vmax.f32 %v3079, 0.0
    %v3096 = vmax.f32 %v3080, 0.0
    %v3097 = vmax.f32 %v3081, 0.0
    %v3098 = vmax.f32 %v3082, 0.0
    %v3099 = vmax.f32 %v3083, 0.0
    %v3100 = vmax.f32 %v3084, 0.0
    %v3101 = vmax.f32 %v3085, 0.0
    %v3102 = vmax.f32 %v3086, 0.0
    %v3103 = vmax.f32 %v3087, 0.0
    %v3104 = vmax.f32 %v3088, 0.0
    %v3105 = vadd.f32 %v2756, %v3089
    %v3106 = vadd.f32 %v2757, %v3090
    %v3107 = vadd.f32 %v2758, %v3091
    %v3108 = vadd.f32 %v2759, %v3092
    %v3109 = vadd.f32 %v2760, %v3093
    %v3110 = vadd.f32 %v2761, %v3094
    %v3111 = vadd.f32 %v2762, %v3095
    %v3112 = vadd.f32 %v2763, %v3096
    %v3113 = vadd.f32 %v2764, %v3097
    %v3114 = vadd.f32 %v2765, %v3098
    %v3115 = vadd.f32 %v2766, %v3099
    %v3116 = vadd.f32 %v2767, %v3100
    %v3117 = vadd.f32 %v2768, %v3101
    %v3118 = vadd.f32 %v2769, %v3102
    %v3119 = vadd.f32 %v2770, %v3103
    %v3120 = vadd.f32 %v2771, %v3104
    %s3121 = scalar_lea.vmem %s6, 144
    %v3122 = vld [vmem:[%s3121] sm:$0xf]
    %v3123 = vld [vmem:[%s3121 + $0x4] sm:$0xf]
    %v3124 = vld [vmem:[%s3121 + $0x8] sm:$0xf]
    %v3125 = vld [vmem:[%s3121 + $0xc] sm:$0x7]
    %v3126 = vld [vmem:[%s3121 + $0x10] sm:$0xf]
    %v3127 = vld [vmem:[%s3121 + $0x14] sm:$0xf]
    %v3128 = vld [vmem:[%s3121 + $0x18] sm:$0xf]
    %v3129 = vld [vmem:[%s3121 + $0x1c] sm:$0x7]
    %v3130 = vld [vmem:[%s3121 + $0x20] sm:$0xf]
    %v3131 = vld [vmem:[%s3121 + $0x24] sm:$0xf]
    %v3132 = vld [vmem:[%s3121 + $0x28] sm:$0xf]
    %v3133 = vld [vmem:[%s3121 + $0x2c] sm:$0x7]
    %v3134 = vld [vmem:[%s3121 + $0x30] sm:$0xf]
    %v3135 = vld [vmem:[%s3121 + $0x34] sm:$0xf]
    %v3136 = vld [vmem:[%s3121 + $0x38] sm:$0xf]
    %v3137 = vld [vmem:[%s3121 + $0x3c] sm:$0x7]
    %v3138 = vld [vmem:[%s3121 + $0x40] sm:$0xf]
    %v3139 = vld [vmem:[%s3121 + $0x44] sm:$0xf]
    %v3140 = vld [vmem:[%s3121 + $0x48] sm:$0xf]
    %v3141 = vld [vmem:[%s3121 + $0x4c] sm:$0x7]
    %v3142 = vld [vmem:[%s3121 + $0x50] sm:$0xf]
    %v3143 = vld [vmem:[%s3121 + $0x54] sm:$0xf]
    %v3144 = vld [vmem:[%s3121 + $0x58] sm:$0xf]
    %v3145 = vld [vmem:[%s3121 + $0x5c] sm:$0x7]
    %v3146 = vld [vmem:[%s3121 + $0x60] sm:$0xf]
    %v3147 = vld [vmem:[%s3121 + $0x64] sm:$0xf]
    %v3148 = vld [vmem:[%s3121 + $0x68] sm:$0xf]
    %v3149 = vld [vmem:[%s3121 + $0x6c] sm:$0x7]
    %v3150 = vld [vmem:[%s3121 + $0x70] sm:$0xf]
    %v3151 = vld [vmem:[%s3121 + $0x74] sm:$0xf]
    %v3152 = vld [vmem:[%s3121 + $0x78] sm:$0xf]
    %v3153 = vld [vmem:[%s3121 + $0x7c] sm:$0x7]
    %v3154 = vld [vmem:[%s3121 + $0x80] sm:$0xf]
    %v3155 = vld [vmem:[%s3121 + $0x84] sm:$0xf]
    %v3156 = vld [vmem:[%s3121 + $0x88] sm:$0xf]
    %v3157 = vld [vmem:[%s3121 + $0x8c] sm:$0x7]
    %v3158 = vpack.c.bf16 %v3109, %v3105
    %v3159 = vpack.c.bf16 %v3110, %v3106
    %v3160 = vpack.c.bf16 %v3111, %v3107
    %v3161 = vpack.c.bf16 %v3112, %v3108
    %v3162 = vpack.c.bf16 %v3117, %v3113
    %v3163 = vpack.c.bf16 %v3118, %v3114
    %v3164 = vpack.c.bf16 %v3119, %v3115
    %v3165 = vpack.c.bf16 %v3120, %v3116
    %3166 = vrot.lane.b32.xlu0 %v3105, 17
    %v3167 = vpop.permute.xlu0 %3166
    %3168 = vrot.lane.b32.xlu0 %v3109, 17
    %v3169 = vpop.permute.xlu0 %3168
    %3170 = vrot.lane.b32.xlu0 %v3113, 17
    %v3171 = vpop.permute.xlu0 %3170
    %3172 = vrot.lane.b32.xlu0 %v3117, 17
    %v3173 = vpop.permute.xlu0 %3172
    %3174 = vrot.lane.b32.xlu0 %v3106, 17
    %v3175 = vpop.permute.xlu0 %3174
    %3176 = vrot.lane.b32.xlu0 %v3110, 17
    %v3177 = vpop.permute.xlu0 %3176
    %3178 = vrot.lane.b32.xlu0 %v3114, 17
    %v3179 = vpop.permute.xlu0 %3178
    %3180 = vrot.lane.b32.xlu0 %v3118, 17
    %v3181 = vpop.permute.xlu0 %3180
    %3182 = vrot.lane.b32.xlu0 %v3107, 17
    %v3183 = vpop.permute.xlu0 %3182
    %3184 = vrot.lane.b32.xlu0 %v3111, 17
    %v3185 = vpop.permute.xlu0 %3184
    %3186 = vrot.lane.b32.xlu0 %v3115, 17
    %v3187 = vpop.permute.xlu0 %3186
    %3188 = vrot.lane.b32.xlu0 %v3119, 17
    %v3189 = vpop.permute.xlu0 %3188
    %3190 = vrot.lane.b32.xlu0 %v3108, 17
    %v3191 = vpop.permute.xlu0 %3190
    %3192 = vrot.lane.b32.xlu0 %v3112, 17
    %v3193 = vpop.permute.xlu0 %3192
    %3194 = vrot.lane.b32.xlu0 %v3116, 17
    %v3195 = vpop.permute.xlu0 %3194
    %3196 = vrot.lane.b32.xlu0 %v3120, 17
    %v3197 = vpop.permute.xlu0 %3196
    %v3198 = vsel %vm544, %v3183, %v3191
    %v3199 = vsel %vm544, %v3185, %v3193
    %v3200 = vsel %vm544, %v3187, %v3195
    %v3201 = vsel %vm544, %v3189, %v3197
    %v3202 = vsel %vm544, %v3175, %v3183
    %v3203 = vsel %vm544, %v3177, %v3185
    %v3204 = vsel %vm544, %v3179, %v3187
    %v3205 = vsel %vm544, %v3181, %v3189
    %v3206 = vsel %vm544, %v3167, %v3175
    %v3207 = vsel %vm544, %v3169, %v3177
    %v3208 = vsel %vm544, %v3171, %v3179
    %v3209 = vsel %vm544, %v3173, %v3181
    %v3210 = vsel %vm544, %v3191, %v3167
    %v3211 = vsel %vm544, %v3193, %v3169
    %v3212 = vsel %vm544, %v3195, %v3171
    %v3213 = vsel %vm544, %v3197, %v3173
    %v3214 = vmul.f32 %v3210, %v565
    %v3215 = vmul.f32 %v3206, %v569
    %v3216 = vmul.f32 %v3202, %v573
    %v3217 = vmul.f32 %v3198, %v577
    %v3218 = vmul.f32 %v3211, %v565
    %v3219 = vmul.f32 %v3207, %v569
    %v3220 = vmul.f32 %v3203, %v573
    %v3221 = vmul.f32 %v3199, %v577
    %v3222 = vmul.f32 %v3212, %v565
    %v3223 = vmul.f32 %v3208, %v569
    %v3224 = vmul.f32 %v3204, %v573
    %v3225 = vmul.f32 %v3200, %v577
    %v3226 = vmul.f32 %v3213, %v565
    %v3227 = vmul.f32 %v3209, %v569
    %v3228 = vmul.f32 %v3205, %v573
    %v3229 = vmul.f32 %v3201, %v577
    %v3230 = vpack.c.bf16 %v3218, %v3214
    %v3231 = vpack.c.bf16 %v3219, %v3215
    %v3232 = vpack.c.bf16 %v3220, %v3216
    %v3233 = vpack.c.bf16 %v3221, %v3217
    %v3234 = vpack.c.bf16 %v3226, %v3222
    %v3235 = vpack.c.bf16 %v3227, %v3223
    %v3236 = vpack.c.bf16 %v3228, %v3224
    %v3237 = vpack.c.bf16 %v3229, %v3225
    %v3242 = vunpack.c.l.b16 %v3122
    %v3243 = vunpack.c.l.b16 %v3123
    %v3244 = vunpack.c.l.b16 %v3124
    %v3245 = vunpack.c.l.b16 %v3125
    %v3246 = vpack.c.b16 %v3243, %v3242
    %v3247 = vpack.c.b16 %v3245, %v3244
    %v3249 = vsel %vm616, %v3246, 0
    %v3252 = vsel %vm616, %v3247, 0
    %v3255 = vsel %vm623, %v3234, 0
    %v3258 = vsel %vm623, %v3235, 0
    %v3261 = vsel %vm623, %v3236, 0
    %v3264 = vsel %vm623, %v3237, 0
    %3266 = vmatprep.subr.bf16.mxu0 %v3231
    %3267 = vmatpush1.bf16.msra.mxu0 %v3230
    %3268 = vmatprep.subr.bf16.mxu0 %v3258
    %3269 = vmatpush1.bf16.msra.mxu0 %v3255
    %3270 = vmatprep.subr.bf16.mxu0 0
    %3271 = vmatpush1.bf16.msra.mxu0 0
    %3272 = vmatprep.subr.bf16.mxu0 0
    %3273 = vmatpush1.bf16.msra.mxu0 0
    %3274 = vmatprep.subr.bf16.mxu0 0
    %3275 = vmatpush1.bf16.msra.mxu0 0
    %3276 = vmatprep.subr.bf16.mxu0 0
    %3277 = vmatpush1.bf16.msra.mxu0 0
    %3278 = vmatprep.subr.bf16.mxu0 0
    %3279 = vmatpush1.bf16.msra.mxu0 0
    %3280 = vmatprep.subr.bf16.mxu0 0
    %3281 = vmatpush1.bf16.msra.mxu0 0
    %3282 = vmatprep.subr.bf16.mxu0 0
    %3283 = vmatpush1.bf16.msra.mxu0 0
    %3284 = vmatprep.subr.bf16.mxu0 0
    %3285 = vmatpush1.bf16.msra.mxu0 0
    %3286 = vmatprep.subr.bf16.mxu0 0
    %3287 = vmatpush1.bf16.msra.mxu0 0
    %3288 = vmatprep.subr.bf16.mxu0 0
    %3289 = vmatpush1.bf16.msra.mxu0 0
    %3290 = vmatprep.subr.bf16.mxu0 0
    %3291 = vmatpush1.bf16.msra.mxu0 0
    %3292 = vmatprep.subr.bf16.mxu0 0
    %3293 = vmatpush1.bf16.msra.mxu0 0
    %3294 = vmatprep.subr.bf16.mxu0 0
    %3295 = vmatpush1.bf16.msra.mxu0 0
    %3296 = vmatprep.subr.bf16.mxu0 0
    %3297 = vmatpush1.bf16.msra.mxu0 0
    %3298 = vmatprep.mubr.bf16.mxu0 0
    %3299 = vmatmul.mubr.bf16.gmra.mrb[0].mxu0 %v3249
    %v3300 = vpop.f32.mrb[0].mxu0
    %v3301 = vadd.f32 0.0, %v3300
    %v3302 = vpop.f32.mrb[0].mxu0
    %v3303 = vadd.f32 0.0, %v3302
    %v3304 = vpop.f32.mrb[0].mxu0
    %v3305 = vadd.f32 0.0, %v3304
    %v3306 = vpop.f32.mrb[0].mxu0
    %v3307 = vadd.f32 0.0, %v3306
    %3308 = vmatprep.mubr.bf16.mxu0 0
    %3309 = vmatmul.mubr.bf16.gmra.mrb[0].mxu0 %v3252
    %v3310 = vpop.f32.mrb[0].mxu0
    %v3311 = vadd.f32 0.0, %v3310
    %v3312 = vpop.f32.mrb[0].mxu0
    %v3313 = vadd.f32 0.0, %v3312
    %v3314 = vpop.f32.mrb[0].mxu0
    %v3315 = vadd.f32 0.0, %v3314
    %v3316 = vpop.f32.mrb[0].mxu0
    %v3317 = vadd.f32 0.0, %v3316
    %3318 = vdwg.mxu0
    %3319 = vmatprep.subr.bf16.mxu0 %v3233
    %3320 = vmatpush1.bf16.msra.mxu0 %v3232
    %3321 = vmatprep.subr.bf16.mxu0 %v3264
    %3322 = vmatpush1.bf16.msra.mxu0 %v3261
    %3323 = vmatprep.subr.bf16.mxu0 0
    %3324 = vmatpush1.bf16.msra.mxu0 0
    %3325 = vmatprep.subr.bf16.mxu0 0
    %3326 = vmatpush1.bf16.msra.mxu0 0
    %3327 = vmatprep.subr.bf16.mxu0 0
    %3328 = vmatpush1.bf16.msra.mxu0 0
    %3329 = vmatprep.subr.bf16.mxu0 0
    %3330 = vmatpush1.bf16.msra.mxu0 0
    %3331 = vmatprep.subr.bf16.mxu0 0
    %3332 = vmatpush1.bf16.msra.mxu0 0
    %3333 = vmatprep.subr.bf16.mxu0 0
    %3334 = vmatpush1.bf16.msra.mxu0 0
    %3335 = vmatprep.subr.bf16.mxu0 0
    %3336 = vmatpush1.bf16.msra.mxu0 0
    %3337 = vmatprep.subr.bf16.mxu0 0
    %3338 = vmatpush1.bf16.msra.mxu0 0
    %3339 = vmatprep.subr.bf16.mxu0 0
    %3340 = vmatpush1.bf16.msra.mxu0 0
    %3341 = vmatprep.subr.bf16.mxu0 0
    %3342 = vmatpush1.bf16.msra.mxu0 0
    %3343 = vmatprep.subr.bf16.mxu0 0
    %3344 = vmatpush1.bf16.msra.mxu0 0
    %3345 = vmatprep.subr.bf16.mxu0 0
    %3346 = vmatpush1.bf16.msra.mxu0 0
    %3347 = vmatprep.subr.bf16.mxu0 0
    %3348 = vmatpush1.bf16.msra.mxu0 0
    %3349 = vmatprep.subr.bf16.mxu0 0
    %3350 = vmatpush1.bf16.msra.mxu0 0
    %3351 = vmatprep.mubr.bf16.mxu0 0
    %3352 = vmatmul.mubr.bf16.gmra.mrb[0].mxu0 %v3249
    %v3353 = vpop.f32.mrb[0].mxu0
    %v3354 = vadd.f32 0.0, %v3353
    %v3355 = vpop.f32.mrb[0].mxu0
    %v3356 = vadd.f32 0.0, %v3355
    %v3357 = vpop.f32.mrb[0].mxu0
    %v3358 = vadd.f32 0.0, %v3357
    %v3359 = vpop.f32.mrb[0].mxu0
    %v3360 = vadd.f32 0.0, %v3359
    %3361 = vmatprep.mubr.bf16.mxu0 0
    %3362 = vmatmul.mubr.bf16.gmra.mrb[0].mxu0 %v3252
    %v3363 = vpop.f32.mrb[0].mxu0
    %v3364 = vadd.f32 0.0, %v3363
    %v3365 = vpop.f32.mrb[0].mxu0
    %v3366 = vadd.f32 0.0, %v3365
    %v3367 = vpop.f32.mrb[0].mxu0
    %v3368 = vadd.f32 0.0, %v3367
    %v3369 = vpop.f32.mrb[0].mxu0
    %v3370 = vadd.f32 0.0, %v3369
    %3371 = vdwg.mxu0
    %v3376 = vunpack.c.l.b16 %v3138
    %v3377 = vunpack.c.l.b16 %v3139
    %v3378 = vunpack.c.l.b16 %v3140
    %v3379 = vunpack.c.l.b16 %v3141
    %v3380 = vpack.c.b16 %v3377, %v3376
    %v3381 = vpack.c.b16 %v3379, %v3378
    %v3383 = vsel %vm616, %v3380, 0
    %v3386 = vsel %vm616, %v3381, 0
    %v3389 = vsel %vm623, %v3162, 0
    %v3392 = vsel %vm623, %v3163, 0
    %v3395 = vsel %vm623, %v3164, 0
    %v3398 = vsel %vm623, %v3165, 0
    %3400 = vmatprep.subr.bf16.mxu0 %v3159
    %3401 = vmatpush1.bf16.msra.mxu0 %v3158
    %3402 = vmatprep.subr.bf16.mxu0 %v3392
    %3403 = vmatpush1.bf16.msra.mxu0 %v3389
    %3404 = vmatprep.subr.bf16.mxu0 0
    %3405 = vmatpush1.bf16.msra.mxu0 0
    %3406 = vmatprep.subr.bf16.mxu0 0
    %3407 = vmatpush1.bf16.msra.mxu0 0
    %3408 = vmatprep.subr.bf16.mxu0 0
    %3409 = vmatpush1.bf16.msra.mxu0 0
    %3410 = vmatprep.subr.bf16.mxu0 0
    %3411 = vmatpush1.bf16.msra.mxu0 0
    %3412 = vmatprep.subr.bf16.mxu0 0
    %3413 = vmatpush1.bf16.msra.mxu0 0
    %3414 = vmatprep.subr.bf16.mxu0 0
    %3415 = vmatpush1.bf16.msra.mxu0 0
    %3416 = vmatprep.subr.bf16.mxu0 0
    %3417 = vmatpush1.bf16.msra.mxu0 0
    %3418 = vmatprep.subr.bf16.mxu0 0
    %3419 = vmatpush1.bf16.msra.mxu0 0
    %3420 = vmatprep.subr.bf16.mxu0 0
    %3421 = vmatpush1.bf16.msra.mxu0 0
    %3422 = vmatprep.subr.bf16.mxu0 0
    %3423 = vmatpush1.bf16.msra.mxu0 0
    %3424 = vmatprep.subr.bf16.mxu0 0
    %3425 = vmatpush1.bf16.msra.mxu0 0
    %3426 = vmatprep.subr.bf16.mxu0 0
    %3427 = vmatpush1.bf16.msra.mxu0 0
    %3428 = vmatprep.subr.bf16.mxu0 0
    %3429 = vmatpush1.bf16.msra.mxu0 0
    %3430 = vmatprep.subr.bf16.mxu0 0
    %3431 = vmatpush1.bf16.msra.mxu0 0
    %3432 = vmatprep.mubr.bf16.mxu0 0
    %3433 = vmatmul.mubr.bf16.gmra.mrb[0].mxu0 %v3383
    %v3434 = vpop.f32.mrb[0].mxu0
    %v3435 = vadd.f32 %v3301, %v3434
    %v3436 = vpop.f32.mrb[0].mxu0
    %v3437 = vadd.f32 %v3303, %v3436
    %v3438 = vpop.f32.mrb[0].mxu0
    %v3439 = vadd.f32 %v3305, %v3438
    %v3440 = vpop.f32.mrb[0].mxu0
    %v3441 = vadd.f32 %v3307, %v3440
    %3442 = vmatprep.mubr.bf16.mxu0 0
    %3443 = vmatmul.mubr.bf16.gmra.mrb[0].mxu0 %v3386
    %v3444 = vpop.f32.mrb[0].mxu0
    %v3445 = vadd.f32 %v3311, %v3444
    %v3446 = vpop.f32.mrb[0].mxu0
    %v3447 = vadd.f32 %v3313, %v3446
    %v3448 = vpop.f32.mrb[0].mxu0
    %v3449 = vadd.f32 %v3315, %v3448
    %v3450 = vpop.f32.mrb[0].mxu0
    %v3451 = vadd.f32 %v3317, %v3450
    %3452 = vdwg.mxu0
    %3453 = vmatprep.subr.bf16.mxu0 %v3161
    %3454 = vmatpush1.bf16.msra.mxu0 %v3160
    %3455 = vmatprep.subr.bf16.mxu0 %v3398
    %3456 = vmatpush1.bf16.msra.mxu0 %v3395
    %3457 = vmatprep.subr.bf16.mxu0 0
    %3458 = vmatpush1.bf16.msra.mxu0 0
    %3459 = vmatprep.subr.bf16.mxu0 0
    %3460 = vmatpush1.bf16.msra.mxu0 0
    %3461 = vmatprep.subr.bf16.mxu0 0
    %3462 = vmatpush1.bf16.msra.mxu0 0
    %3463 = vmatprep.subr.bf16.mxu0 0
    %3464 = vmatpush1.bf16.msra.mxu0 0
    %3465 = vmatprep.subr.bf16.mxu0 0
    %3466 = vmatpush1.bf16.msra.mxu0 0
    %3467 = vmatprep.subr.bf16.mxu0 0
    %3468 = vmatpush1.bf16.msra.mxu0 0
    %3469 = vmatprep.subr.bf16.mxu0 0
    %3470 = vmatpush1.bf16.msra.mxu0 0
    %3471 = vmatprep.subr.bf16.mxu0 0
    %3472 = vmatpush1.bf16.msra.mxu0 0
    %3473 = vmatprep.subr.bf16.mxu0 0
    %3474 = vmatpush1.bf16.msra.mxu0 0
    %3475 = vmatprep.subr.bf16.mxu0 0
    %3476 = vmatpush1.bf16.msra.mxu0 0
    %3477 = vmatprep.subr.bf16.mxu0 0
    %3478 = vmatpush1.bf16.msra.mxu0 0
    %3479 = vmatprep.subr.bf16.mxu0 0
    %3480 = vmatpush1.bf16.msra.mxu0 0
    %3481 = vmatprep.subr.bf16.mxu0 0
    %3482 = vmatpush1.bf16.msra.mxu0 0
    %3483 = vmatprep.subr.bf16.mxu0 0
    %3484 = vmatpush1.bf16.msra.mxu0 0
    %3485 = vmatprep.mubr.bf16.mxu0 0
    %3486 = vmatmul.mubr.bf16.gmra.mrb[0].mxu0 %v3383
    %v3487 = vpop.f32.mrb[0].mxu0
    %v3488 = vadd.f32 %v3354, %v3487
    %v3489 = vpop.f32.mrb[0].mxu0
    %v3490 = vadd.f32 %v3356, %v3489
    %v3491 = vpop.f32.mrb[0].mxu0
    %v3492 = vadd.f32 %v3358, %v3491
    %v3493 = vpop.f32.mrb[0].mxu0
    %v3494 = vadd.f32 %v3360, %v3493
    %3495 = vmatprep.mubr.bf16.mxu0 0
    %3496 = vmatmul.mubr.bf16.gmra.mrb[0].mxu0 %v3386
    %v3497 = vpop.f32.mrb[0].mxu0
    %v3498 = vadd.f32 %v3364, %v3497
    %v3499 = vpop.f32.mrb[0].mxu0
    %v3500 = vadd.f32 %v3366, %v3499
    %v3501 = vpop.f32.mrb[0].mxu0
    %v3502 = vadd.f32 %v3368, %v3501
    %v3503 = vpop.f32.mrb[0].mxu0
    %v3504 = vadd.f32 %v3370, %v3503
    %3505 = vdwg.mxu0
    %3506 = vrot.lane.b32.xlu0 %v3105, 16
    %v3507 = vpop.permute.xlu0 %3506
    %3508 = vrot.lane.b32.xlu0 %v3109, 16
    %v3509 = vpop.permute.xlu0 %3508
    %3510 = vrot.lane.b32.xlu0 %v3113, 16
    %v3511 = vpop.permute.xlu0 %3510
    %3512 = vrot.lane.b32.xlu0 %v3117, 16
    %v3513 = vpop.permute.xlu0 %3512
    %3514 = vrot.lane.b32.xlu0 %v3106, 16
    %v3515 = vpop.permute.xlu0 %3514
    %3516 = vrot.lane.b32.xlu0 %v3110, 16
    %v3517 = vpop.permute.xlu0 %3516
    %3518 = vrot.lane.b32.xlu0 %v3114, 16
    %v3519 = vpop.permute.xlu0 %3518
    %3520 = vrot.lane.b32.xlu0 %v3118, 16
    %v3521 = vpop.permute.xlu0 %3520
    %3522 = vrot.lane.b32.xlu0 %v3107, 16
    %v3523 = vpop.permute.xlu0 %3522
    %3524 = vrot.lane.b32.xlu0 %v3111, 16
    %v3525 = vpop.permute.xlu0 %3524
    %3526 = vrot.lane.b32.xlu0 %v3115, 16
    %v3527 = vpop.permute.xlu0 %3526
    %3528 = vrot.lane.b32.xlu0 %v3119, 16
    %v3529 = vpop.permute.xlu0 %3528
    %3530 = vrot.lane.b32.xlu0 %v3108, 16
    %v3531 = vpop.permute.xlu0 %3530
    %3532 = vrot.lane.b32.xlu0 %v3112, 16
    %v3533 = vpop.permute.xlu0 %3532
    %3534 = vrot.lane.b32.xlu0 %v3116, 16
    %v3535 = vpop.permute.xlu0 %3534
    %3536 = vrot.lane.b32.xlu0 %v3120, 16
    %v3537 = vpop.permute.xlu0 %3536
    %v3538 = vsel %vm908, %v3523, %v3531
    %v3539 = vsel %vm908, %v3525, %v3533
    %v3540 = vsel %vm908, %v3527, %v3535
    %v3541 = vsel %vm908, %v3529, %v3537
    %v3542 = vsel %vm908, %v3515, %v3523
    %v3543 = vsel %vm908, %v3517, %v3525
    %v3544 = vsel %vm908, %v3519, %v3527
    %v3545 = vsel %vm908, %v3521, %v3529
    %v3546 = vsel %vm908, %v3507, %v3515
    %v3547 = vsel %vm908, %v3509, %v3517
    %v3548 = vsel %vm908, %v3511, %v3519
    %v3549 = vsel %vm908, %v3513, %v3521
    %v3550 = vsel %vm908, %v3531, %v3507
    %v3551 = vsel %vm908, %v3533, %v3509
    %v3552 = vsel %vm908, %v3535, %v3511
    %v3553 = vsel %vm908, %v3537, %v3513
    %v3554 = vmul.f32 %v3550, %v929
    %v3555 = vmul.f32 %v3546, %v933
    %v3556 = vmul.f32 %v3542, %v937
    %v3557 = vmul.f32 %v3538, %v941
    %v3558 = vmul.f32 %v3551, %v929
    %v3559 = vmul.f32 %v3547, %v933
    %v3560 = vmul.f32 %v3543, %v937
    %v3561 = vmul.f32 %v3539, %v941
    %v3562 = vmul.f32 %v3552, %v929
    %v3563 = vmul.f32 %v3548, %v933
    %v3564 = vmul.f32 %v3544, %v937
    %v3565 = vmul.f32 %v3540, %v941
    %v3566 = vmul.f32 %v3553, %v929
    %v3567 = vmul.f32 %v3549, %v933
    %v3568 = vmul.f32 %v3545, %v937
    %v3569 = vmul.f32 %v3541, %v941
    %v3570 = vpack.c.bf16 %v3558, %v3554
    %v3571 = vpack.c.bf16 %v3559, %v3555
    %v3572 = vpack.c.bf16 %v3560, %v3556
    %v3573 = vpack.c.bf16 %v3561, %v3557
    %v3574 = vpack.c.bf16 %v3566, %v3562
    %v3575 = vpack.c.bf16 %v3567, %v3563
    %v3576 = vpack.c.bf16 %v3568, %v3564
    %v3577 = vpack.c.bf16 %v3569, %v3565
    %v3582 = vunpack.c.l.b16 %v3126
    %v3583 = vunpack.c.l.b16 %v3127
    %v3584 = vunpack.c.l.b16 %v3128
    %v3585 = vunpack.c.l.b16 %v3129
    %v3586 = vpack.c.b16 %v3583, %v3582
    %v3587 = vpack.c.b16 %v3585, %v3584
    %v3589 = vsel %vm616, %v3586, 0
    %v3592 = vsel %vm616, %v3587, 0
    %v3595 = vsel %vm623, %v3574, 0
    %v3598 = vsel %vm623, %v3575, 0
    %v3601 = vsel %vm623, %v3576, 0
    %v3604 = vsel %vm623, %v3577, 0
    %3606 = vmatprep.subr.bf16.mxu0 %v3571
    %3607 = vmatpush1.bf16.msra.mxu0 %v3570
    %3608 = vmatprep.subr.bf16.mxu0 %v3598
    %3609 = vmatpush1.bf16.msra.mxu0 %v3595
    %3610 = vmatprep.subr.bf16.mxu0 0
    %3611 = vmatpush1.bf16.msra.mxu0 0
    %3612 = vmatprep.subr.bf16.mxu0 0
    %3613 = vmatpush1.bf16.msra.mxu0 0
    %3614 = vmatprep.subr.bf16.mxu0 0
    %3615 = vmatpush1.bf16.msra.mxu0 0
    %3616 = vmatprep.subr.bf16.mxu0 0
    %3617 = vmatpush1.bf16.msra.mxu0 0
    %3618 = vmatprep.subr.bf16.mxu0 0
    %3619 = vmatpush1.bf16.msra.mxu0 0
    %3620 = vmatprep.subr.bf16.mxu0 0
    %3621 = vmatpush1.bf16.msra.mxu0 0
    %3622 = vmatprep.subr.bf16.mxu0 0
    %3623 = vmatpush1.bf16.msra.mxu0 0
    %3624 = vmatprep.subr.bf16.mxu0 0
    %3625 = vmatpush1.bf16.msra.mxu0 0
    %3626 = vmatprep.subr.bf16.mxu0 0
    %3627 = vmatpush1.bf16.msra.mxu0 0
    %3628 = vmatprep.subr.bf16.mxu0 0
    %3629 = vmatpush1.bf16.msra.mxu0 0
    %3630 = vmatprep.subr.bf16.mxu0 0
    %3631 = vmatpush1.bf16.msra.mxu0 0
    %3632 = vmatprep.subr.bf16.mxu0 0
    %3633 = vmatpush1.bf16.msra.mxu0 0
    %3634 = vmatprep.subr.bf16.mxu0 0
    %3635 = vmatpush1.bf16.msra.mxu0 0
    %3636 = vmatprep.subr.bf16.mxu0 0
    %3637 = vmatpush1.bf16.msra.mxu0 0
    %3638 = vmatprep.mubr.bf16.mxu0 0
    %3639 = vmatmul.mubr.bf16.gmra.mrb[0].mxu0 %v3589
    %v3640 = vpop.f32.mrb[0].mxu0
    %v3641 = vadd.f32 0.0, %v3640
    %v3642 = vpop.f32.mrb[0].mxu0
    %v3643 = vadd.f32 0.0, %v3642
    %v3644 = vpop.f32.mrb[0].mxu0
    %v3645 = vadd.f32 0.0, %v3644
    %v3646 = vpop.f32.mrb[0].mxu0
    %v3647 = vadd.f32 0.0, %v3646
    %3648 = vmatprep.mubr.bf16.mxu0 0
    %3649 = vmatmul.mubr.bf16.gmra.mrb[0].mxu0 %v3592
    %v3650 = vpop.f32.mrb[0].mxu0
    %v3651 = vadd.f32 0.0, %v3650
    %v3652 = vpop.f32.mrb[0].mxu0
    %v3653 = vadd.f32 0.0, %v3652
    %v3654 = vpop.f32.mrb[0].mxu0
    %v3655 = vadd.f32 0.0, %v3654
    %v3656 = vpop.f32.mrb[0].mxu0
    %v3657 = vadd.f32 0.0, %v3656
    %3658 = vdwg.mxu0
    %3659 = vmatprep.subr.bf16.mxu0 %v3573
    %3660 = vmatpush1.bf16.msra.mxu0 %v3572
    %3661 = vmatprep.subr.bf16.mxu0 %v3604
    %3662 = vmatpush1.bf16.msra.mxu0 %v3601
    %3663 = vmatprep.subr.bf16.mxu0 0
    %3664 = vmatpush1.bf16.msra.mxu0 0
    %3665 = vmatprep.subr.bf16.mxu0 0
    %3666 = vmatpush1.bf16.msra.mxu0 0
    %3667 = vmatprep.subr.bf16.mxu0 0
    %3668 = vmatpush1.bf16.msra.mxu0 0
    %3669 = vmatprep.subr.bf16.mxu0 0
    %3670 = vmatpush1.bf16.msra.mxu0 0
    %3671 = vmatprep.subr.bf16.mxu0 0
    %3672 = vmatpush1.bf16.msra.mxu0 0
    %3673 = vmatprep.subr.bf16.mxu0 0
    %3674 = vmatpush1.bf16.msra.mxu0 0
    %3675 = vmatprep.subr.bf16.mxu0 0
    %3676 = vmatpush1.bf16.msra.mxu0 0
    %3677 = vmatprep.subr.bf16.mxu0 0
    %3678 = vmatpush1.bf16.msra.mxu0 0
    %3679 = vmatprep.subr.bf16.mxu0 0
    %3680 = vmatpush1.bf16.msra.mxu0 0
    %3681 = vmatprep.subr.bf16.mxu0 0
    %3682 = vmatpush1.bf16.msra.mxu0 0
    %3683 = vmatprep.subr.bf16.mxu0 0
    %3684 = vmatpush1.bf16.msra.mxu0 0
    %3685 = vmatprep.subr.bf16.mxu0 0
    %3686 = vmatpush1.bf16.msra.mxu0 0
    %3687 = vmatprep.subr.bf16.mxu0 0
    %3688 = vmatpush1.bf16.msra.mxu0 0
    %3689 = vmatprep.subr.bf16.mxu0 0
    %3690 = vmatpush1.bf16.msra.mxu0 0
    %3691 = vmatprep.mubr.bf16.mxu0 0
    %3692 = vmatmul.mubr.bf16.gmra.mrb[0].mxu0 %v3589
    %v3693 = vpop.f32.mrb[0].mxu0
    %v3694 = vadd.f32 0.0, %v3693
    %v3695 = vpop.f32.mrb[0].mxu0
    %v3696 = vadd.f32 0.0, %v3695
    %v3697 = vpop.f32.mrb[0].mxu0
    %v3698 = vadd.f32 0.0, %v3697
    %v3699 = vpop.f32.mrb[0].mxu0
    %v3700 = vadd.f32 0.0, %v3699
    %3701 = vmatprep.mubr.bf16.mxu0 0
    %3702 = vmatmul.mubr.bf16.gmra.mrb[0].mxu0 %v3592
    %v3703 = vpop.f32.mrb[0].mxu0
    %v3704 = vadd.f32 0.0, %v3703
    %v3705 = vpop.f32.mrb[0].mxu0
    %v3706 = vadd.f32 0.0, %v3705
    %v3707 = vpop.f32.mrb[0].mxu0
    %v3708 = vadd.f32 0.0, %v3707
    %v3709 = vpop.f32.mrb[0].mxu0
    %v3710 = vadd.f32 0.0, %v3709
    %3711 = vdwg.mxu0
    %v3712 = vadd.f32 %v3435, %v3641
    %v3713 = vadd.f32 %v3437, %v3643
    %v3714 = vadd.f32 %v3488, %v3694
    %v3715 = vadd.f32 %v3490, %v3696
    %v3716 = vadd.f32 %v3439, %v3645
    %v3717 = vadd.f32 %v3441, %v3647
    %v3718 = vadd.f32 %v3492, %v3698
    %v3719 = vadd.f32 %v3494, %v3700
    %v3720 = vadd.f32 %v3445, %v3651
    %v3721 = vadd.f32 %v3447, %v3653
    %v3722 = vadd.f32 %v3498, %v3704
    %v3723 = vadd.f32 %v3500, %v3706
    %v3724 = vadd.f32 %v3449, %v3655
    %v3725 = vadd.f32 %v3451, %v3657
    %v3726 = vadd.f32 %v3502, %v3708
    %v3727 = vadd.f32 %v3504, %v3710
    %3728 = vrot.lane.b32.xlu0 %v3105, 15
    %v3729 = vpop.permute.xlu0 %3728
    %3730 = vrot.lane.b32.xlu0 %v3109, 15
    %v3731 = vpop.permute.xlu0 %3730
    %3732 = vrot.lane.b32.xlu0 %v3113, 15
    %v3733 = vpop.permute.xlu0 %3732
    %3734 = vrot.lane.b32.xlu0 %v3117, 15
    %v3735 = vpop.permute.xlu0 %3734
    %3736 = vrot.lane.b32.xlu0 %v3106, 15
    %v3737 = vpop.permute.xlu0 %3736
    %3738 = vrot.lane.b32.xlu0 %v3110, 15
    %v3739 = vpop.permute.xlu0 %3738
    %3740 = vrot.lane.b32.xlu0 %v3114, 15
    %v3741 = vpop.permute.xlu0 %3740
    %3742 = vrot.lane.b32.xlu0 %v3118, 15
    %v3743 = vpop.permute.xlu0 %3742
    %3744 = vrot.lane.b32.xlu0 %v3107, 15
    %v3745 = vpop.permute.xlu0 %3744
    %3746 = vrot.lane.b32.xlu0 %v3111, 15
    %v3747 = vpop.permute.xlu0 %3746
    %3748 = vrot.lane.b32.xlu0 %v3115, 15
    %v3749 = vpop.permute.xlu0 %3748
    %3750 = vrot.lane.b32.xlu0 %v3119, 15
    %v3751 = vpop.permute.xlu0 %3750
    %3752 = vrot.lane.b32.xlu0 %v3108, 15
    %v3753 = vpop.permute.xlu0 %3752
    %3754 = vrot.lane.b32.xlu0 %v3112, 15
    %v3755 = vpop.permute.xlu0 %3754
    %3756 = vrot.lane.b32.xlu0 %v3116, 15
    %v3757 = vpop.permute.xlu0 %3756
    %3758 = vrot.lane.b32.xlu0 %v3120, 15
    %v3759 = vpop.permute.xlu0 %3758
    %v3760 = vsel %vm1152, %v3745, %v3753
    %v3761 = vsel %vm1152, %v3747, %v3755
    %v3762 = vsel %vm1152, %v3749, %v3757
    %v3763 = vsel %vm1152, %v3751, %v3759
    %v3764 = vsel %vm1152, %v3737, %v3745
    %v3765 = vsel %vm1152, %v3739, %v3747
    %v3766 = vsel %vm1152, %v3741, %v3749
    %v3767 = vsel %vm1152, %v3743, %v3751
    %v3768 = vsel %vm1152, %v3729, %v3737
    %v3769 = vsel %vm1152, %v3731, %v3739
    %v3770 = vsel %vm1152, %v3733, %v3741
    %v3771 = vsel %vm1152, %v3735, %v3743
    %v3772 = vsel %vm1152, %v3753, %v3729
    %v3773 = vsel %vm1152, %v3755, %v3731
    %v3774 = vsel %vm1152, %v3757, %v3733
    %v3775 = vsel %vm1152, %v3759, %v3735
    %v3776 = vmul.f32 %v3772, %v1173
    %v3777 = vmul.f32 %v3768, %v1177
    %v3778 = vmul.f32 %v3764, %v1181
    %v3779 = vmul.f32 %v3760, %v1185
    %v3780 = vmul.f32 %v3773, %v1173
    %v3781 = vmul.f32 %v3769, %v1177
    %v3782 = vmul.f32 %v3765, %v1181
    %v3783 = vmul.f32 %v3761, %v1185
    %v3784 = vmul.f32 %v3774, %v1173
    %v3785 = vmul.f32 %v3770, %v1177
    %v3786 = vmul.f32 %v3766, %v1181
    %v3787 = vmul.f32 %v3762, %v1185
    %v3788 = vmul.f32 %v3775, %v1173
    %v3789 = vmul.f32 %v3771, %v1177
    %v3790 = vmul.f32 %v3767, %v1181
    %v3791 = vmul.f32 %v3763, %v1185
    %v3792 = vpack.c.bf16 %v3780, %v3776
    %v3793 = vpack.c.bf16 %v3781, %v3777
    %v3794 = vpack.c.bf16 %v3782, %v3778
    %v3795 = vpack.c.bf16 %v3783, %v3779
    %v3796 = vpack.c.bf16 %v3788, %v3784
    %v3797 = vpack.c.bf16 %v3789, %v3785
    %v3798 = vpack.c.bf16 %v3790, %v3786
    %v3799 = vpack.c.bf16 %v3791, %v3787
    %v3804 = vunpack.c.l.b16 %v3130
    %v3805 = vunpack.c.l.b16 %v3131
    %v3806 = vunpack.c.l.b16 %v3132
    %v3807 = vunpack.c.l.b16 %v3133
    %v3808 = vpack.c.b16 %v3805, %v3804
    %v3809 = vpack.c.b16 %v3807, %v3806
    %v3811 = vsel %vm616, %v3808, 0
    %v3814 = vsel %vm616, %v3809, 0
    %v3817 = vsel %vm623, %v3796, 0
    %v3820 = vsel %vm623, %v3797, 0
    %v3823 = vsel %vm623, %v3798, 0
    %v3826 = vsel %vm623, %v3799, 0
    %3828 = vmatprep.subr.bf16.mxu0 %v3793
    %3829 = vmatpush1.bf16.msra.mxu0 %v3792
    %3830 = vmatprep.subr.bf16.mxu0 %v3820
    %3831 = vmatpush1.bf16.msra.mxu0 %v3817
    %3832 = vmatprep.subr.bf16.mxu0 0
    %3833 = vmatpush1.bf16.msra.mxu0 0
    %3834 = vmatprep.subr.bf16.mxu0 0
    %3835 = vmatpush1.bf16.msra.mxu0 0
    %3836 = vmatprep.subr.bf16.mxu0 0
    %3837 = vmatpush1.bf16.msra.mxu0 0
    %3838 = vmatprep.subr.bf16.mxu0 0
    %3839 = vmatpush1.bf16.msra.mxu0 0
    %3840 = vmatprep.subr.bf16.mxu0 0
    %3841 = vmatpush1.bf16.msra.mxu0 0
    %3842 = vmatprep.subr.bf16.mxu0 0
    %3843 = vmatpush1.bf16.msra.mxu0 0
    %3844 = vmatprep.subr.bf16.mxu0 0
    %3845 = vmatpush1.bf16.msra.mxu0 0
    %3846 = vmatprep.subr.bf16.mxu0 0
    %3847 = vmatpush1.bf16.msra.mxu0 0
    %3848 = vmatprep.subr.bf16.mxu0 0
    %3849 = vmatpush1.bf16.msra.mxu0 0
    %3850 = vmatprep.subr.bf16.mxu0 0
    %3851 = vmatpush1.bf16.msra.mxu0 0
    %3852 = vmatprep.subr.bf16.mxu0 0
    %3853 = vmatpush1.bf16.msra.mxu0 0
    %3854 = vmatprep.subr.bf16.mxu0 0
    %3855 = vmatpush1.bf16.msra.mxu0 0
    %3856 = vmatprep.subr.bf16.mxu0 0
    %3857 = vmatpush1.bf16.msra.mxu0 0
    %3858 = vmatprep.subr.bf16.mxu0 0
    %3859 = vmatpush1.bf16.msra.mxu0 0
    %3860 = vmatprep.mubr.bf16.mxu0 0
    %3861 = vmatmul.mubr.bf16.gmra.mrb[0].mxu0 %v3811
    %v3862 = vpop.f32.mrb[0].mxu0
    %v3863 = vadd.f32 0.0, %v3862
    %v3864 = vpop.f32.mrb[0].mxu0
    %v3865 = vadd.f32 0.0, %v3864
    %v3866 = vpop.f32.mrb[0].mxu0
    %v3867 = vadd.f32 0.0, %v3866
    %v3868 = vpop.f32.mrb[0].mxu0
    %v3869 = vadd.f32 0.0, %v3868
    %3870 = vmatprep.mubr.bf16.mxu0 0
    %3871 = vmatmul.mubr.bf16.gmra.mrb[0].mxu0 %v3814
    %v3872 = vpop.f32.mrb[0].mxu0
    %v3873 = vadd.f32 0.0, %v3872
    %v3874 = vpop.f32.mrb[0].mxu0
    %v3875 = vadd.f32 0.0, %v3874
    %v3876 = vpop.f32.mrb[0].mxu0
    %v3877 = vadd.f32 0.0, %v3876
    %v3878 = vpop.f32.mrb[0].mxu0
    %v3879 = vadd.f32 0.0, %v3878
    %3880 = vdwg.mxu0
    %3881 = vmatprep.subr.bf16.mxu0 %v3795
    %3882 = vmatpush1.bf16.msra.mxu0 %v3794
    %3883 = vmatprep.subr.bf16.mxu0 %v3826
    %3884 = vmatpush1.bf16.msra.mxu0 %v3823
    %3885 = vmatprep.subr.bf16.mxu0 0
    %3886 = vmatpush1.bf16.msra.mxu0 0
    %3887 = vmatprep.subr.bf16.mxu0 0
    %3888 = vmatpush1.bf16.msra.mxu0 0
    %3889 = vmatprep.subr.bf16.mxu0 0
    %3890 = vmatpush1.bf16.msra.mxu0 0
    %3891 = vmatprep.subr.bf16.mxu0 0
    %3892 = vmatpush1.bf16.msra.mxu0 0
    %3893 = vmatprep.subr.bf16.mxu0 0
    %3894 = vmatpush1.bf16.msra.mxu0 0
    %3895 = vmatprep.subr.bf16.mxu0 0
    %3896 = vmatpush1.bf16.msra.mxu0 0
    %3897 = vmatprep.subr.bf16.mxu0 0
    %3898 = vmatpush1.bf16.msra.mxu0 0
    %3899 = vmatprep.subr.bf16.mxu0 0
    %3900 = vmatpush1.bf16.msra.mxu0 0
    %3901 = vmatprep.subr.bf16.mxu0 0
    %3902 = vmatpush1.bf16.msra.mxu0 0
    %3903 = vmatprep.subr.bf16.mxu0 0
    %3904 = vmatpush1.bf16.msra.mxu0 0
    %3905 = vmatprep.subr.bf16.mxu0 0
    %3906 = vmatpush1.bf16.msra.mxu0 0
    %3907 = vmatprep.subr.bf16.mxu0 0
    %3908 = vmatpush1.bf16.msra.mxu0 0
    %3909 = vmatprep.subr.bf16.mxu0 0
    %3910 = vmatpush1.bf16.msra.mxu0 0
    %3911 = vmatprep.subr.bf16.mxu0 0
    %3912 = vmatpush1.bf16.msra.mxu0 0
    %3913 = vmatprep.mubr.bf16.mxu0 0
    %3914 = vmatmul.mubr.bf16.gmra.mrb[0].mxu0 %v3811
    %v3915 = vpop.f32.mrb[0].mxu0
    %v3916 = vadd.f32 0.0, %v3915
    %v3917 = vpop.f32.mrb[0].mxu0
    %v3918 = vadd.f32 0.0, %v3917
    %v3919 = vpop.f32.mrb[0].mxu0
    %v3920 = vadd.f32 0.0, %v3919
    %v3921 = vpop.f32.mrb[0].mxu0
    %v3922 = vadd.f32 0.0, %v3921
    %3923 = vmatprep.mubr.bf16.mxu0 0
    %3924 = vmatmul.mubr.bf16.gmra.mrb[0].mxu0 %v3814
    %v3925 = vpop.f32.mrb[0].mxu0
    %v3926 = vadd.f32 0.0, %v3925
    %v3927 = vpop.f32.mrb[0].mxu0
    %v3928 = vadd.f32 0.0, %v3927
    %v3929 = vpop.f32.mrb[0].mxu0
    %v3930 = vadd.f32 0.0, %v3929
    %v3931 = vpop.f32.mrb[0].mxu0
    %v3932 = vadd.f32 0.0, %v3931
    %3933 = vdwg.mxu0
    %v3934 = vadd.f32 %v3712, %v3863
    %v3935 = vadd.f32 %v3713, %v3865
    %v3936 = vadd.f32 %v3714, %v3916
    %v3937 = vadd.f32 %v3715, %v3918
    %v3938 = vadd.f32 %v3716, %v3867
    %v3939 = vadd.f32 %v3717, %v3869
    %v3940 = vadd.f32 %v3718, %v3920
    %v3941 = vadd.f32 %v3719, %v3922
    %v3942 = vadd.f32 %v3720, %v3873
    %v3943 = vadd.f32 %v3721, %v3875
    %v3944 = vadd.f32 %v3722, %v3926
    %v3945 = vadd.f32 %v3723, %v3928
    %v3946 = vadd.f32 %v3724, %v3877
    %v3947 = vadd.f32 %v3725, %v3879
    %v3948 = vadd.f32 %v3726, %v3930
    %v3949 = vadd.f32 %v3727, %v3932
    %3950 = vrot.lane.b32.xlu0 %v3105, 1
    %v3951 = vpop.permute.xlu0 %3950
    %3952 = vrot.lane.b32.xlu0 %v3109, 1
    %v3953 = vpop.permute.xlu0 %3952
    %3954 = vrot.lane.b32.xlu0 %v3113, 1
    %v3955 = vpop.permute.xlu0 %3954
    %3956 = vrot.lane.b32.xlu0 %v3117, 1
    %v3957 = vpop.permute.xlu0 %3956
    %3958 = vrot.lane.b32.xlu0 %v3106, 1
    %v3959 = vpop.permute.xlu0 %3958
    %3960 = vrot.lane.b32.xlu0 %v3110, 1
    %v3961 = vpop.permute.xlu0 %3960
    %3962 = vrot.lane.b32.xlu0 %v3114, 1
    %v3963 = vpop.permute.xlu0 %3962
    %3964 = vrot.lane.b32.xlu0 %v3118, 1
    %v3965 = vpop.permute.xlu0 %3964
    %3966 = vrot.lane.b32.xlu0 %v3107, 1
    %v3967 = vpop.permute.xlu0 %3966
    %3968 = vrot.lane.b32.xlu0 %v3111, 1
    %v3969 = vpop.permute.xlu0 %3968
    %3970 = vrot.lane.b32.xlu0 %v3115, 1
    %v3971 = vpop.permute.xlu0 %3970
    %3972 = vrot.lane.b32.xlu0 %v3119, 1
    %v3973 = vpop.permute.xlu0 %3972
    %3974 = vrot.lane.b32.xlu0 %v3108, 1
    %v3975 = vpop.permute.xlu0 %3974
    %3976 = vrot.lane.b32.xlu0 %v3112, 1
    %v3977 = vpop.permute.xlu0 %3976
    %3978 = vrot.lane.b32.xlu0 %v3116, 1
    %v3979 = vpop.permute.xlu0 %3978
    %3980 = vrot.lane.b32.xlu0 %v3120, 1
    %v3981 = vpop.permute.xlu0 %3980
    %v3982 = vsel %vm1396, %v3967, %v3975
    %v3983 = vsel %vm1396, %v3969, %v3977
    %v3984 = vsel %vm1396, %v3971, %v3979
    %v3985 = vsel %vm1396, %v3973, %v3981
    %v3986 = vsel %vm1396, %v3959, %v3967
    %v3987 = vsel %vm1396, %v3961, %v3969
    %v3988 = vsel %vm1396, %v3963, %v3971
    %v3989 = vsel %vm1396, %v3965, %v3973
    %v3990 = vsel %vm1396, %v3951, %v3959
    %v3991 = vsel %vm1396, %v3953, %v3961
    %v3992 = vsel %vm1396, %v3955, %v3963
    %v3993 = vsel %vm1396, %v3957, %v3965
    %v3994 = vsel %vm1396, %v3975, %v3951
    %v3995 = vsel %vm1396, %v3977, %v3953
    %v3996 = vsel %vm1396, %v3979, %v3955
    %v3997 = vsel %vm1396, %v3981, %v3957
    %v3998 = vmul.f32 %v3994, %v1417
    %v3999 = vmul.f32 %v3990, %v1421
    %v4000 = vmul.f32 %v3986, %v1425
    %v4001 = vmul.f32 %v3982, %v1429
    %v4002 = vmul.f32 %v3995, %v1417
    %v4003 = vmul.f32 %v3991, %v1421
    %v4004 = vmul.f32 %v3987, %v1425
    %v4005 = vmul.f32 %v3983, %v1429
    %v4006 = vmul.f32 %v3996, %v1417
    %v4007 = vmul.f32 %v3992, %v1421
    %v4008 = vmul.f32 %v3988, %v1425
    %v4009 = vmul.f32 %v3984, %v1429
    %v4010 = vmul.f32 %v3997, %v1417
    %v4011 = vmul.f32 %v3993, %v1421
    %v4012 = vmul.f32 %v3989, %v1425
    %v4013 = vmul.f32 %v3985, %v1429
    %v4014 = vpack.c.bf16 %v4002, %v3998
    %v4015 = vpack.c.bf16 %v4003, %v3999
    %v4016 = vpack.c.bf16 %v4004, %v4000
    %v4017 = vpack.c.bf16 %v4005, %v4001
    %v4018 = vpack.c.bf16 %v4010, %v4006
    %v4019 = vpack.c.bf16 %v4011, %v4007
    %v4020 = vpack.c.bf16 %v4012, %v4008
    %v4021 = vpack.c.bf16 %v4013, %v4009
    %v4026 = vunpack.c.l.b16 %v3134
    %v4027 = vunpack.c.l.b16 %v3135
    %v4028 = vunpack.c.l.b16 %v3136
    %v4029 = vunpack.c.l.b16 %v3137
    %v4030 = vpack.c.b16 %v4027, %v4026
    %v4031 = vpack.c.b16 %v4029, %v4028
    %v4033 = vsel %vm616, %v4030, 0
    %v4036 = vsel %vm616, %v4031, 0
    %v4039 = vsel %vm623, %v4018, 0
    %v4042 = vsel %vm623, %v4019, 0
    %v4045 = vsel %vm623, %v4020, 0
    %v4048 = vsel %vm623, %v4021, 0
    %4050 = vmatprep.subr.bf16.mxu0 %v4015
    %4051 = vmatpush1.bf16.msra.mxu0 %v4014
    %4052 = vmatprep.subr.bf16.mxu0 %v4042
    %4053 = vmatpush1.bf16.msra.mxu0 %v4039
    %4054 = vmatprep.subr.bf16.mxu0 0
    %4055 = vmatpush1.bf16.msra.mxu0 0
    %4056 = vmatprep.subr.bf16.mxu0 0
    %4057 = vmatpush1.bf16.msra.mxu0 0
    %4058 = vmatprep.subr.bf16.mxu0 0
    %4059 = vmatpush1.bf16.msra.mxu0 0
    %4060 = vmatprep.subr.bf16.mxu0 0
    %4061 = vmatpush1.bf16.msra.mxu0 0
    %4062 = vmatprep.subr.bf16.mxu0 0
    %4063 = vmatpush1.bf16.msra.mxu0 0
    %4064 = vmatprep.subr.bf16.mxu0 0
    %4065 = vmatpush1.bf16.msra.mxu0 0
    %4066 = vmatprep.subr.bf16.mxu0 0
    %4067 = vmatpush1.bf16.msra.mxu0 0
    %4068 = vmatprep.subr.bf16.mxu0 0
    %4069 = vmatpush1.bf16.msra.mxu0 0
    %4070 = vmatprep.subr.bf16.mxu0 0
    %4071 = vmatpush1.bf16.msra.mxu0 0
    %4072 = vmatprep.subr.bf16.mxu0 0
    %4073 = vmatpush1.bf16.msra.mxu0 0
    %4074 = vmatprep.subr.bf16.mxu0 0
    %4075 = vmatpush1.bf16.msra.mxu0 0
    %4076 = vmatprep.subr.bf16.mxu0 0
    %4077 = vmatpush1.bf16.msra.mxu0 0
    %4078 = vmatprep.subr.bf16.mxu0 0
    %4079 = vmatpush1.bf16.msra.mxu0 0
    %4080 = vmatprep.subr.bf16.mxu0 0
    %4081 = vmatpush1.bf16.msra.mxu0 0
    %4082 = vmatprep.mubr.bf16.mxu0 0
    %4083 = vmatmul.mubr.bf16.gmra.mrb[0].mxu0 %v4033
    %v4084 = vpop.f32.mrb[0].mxu0
    %v4085 = vadd.f32 0.0, %v4084
    %v4086 = vpop.f32.mrb[0].mxu0
    %v4087 = vadd.f32 0.0, %v4086
    %v4088 = vpop.f32.mrb[0].mxu0
    %v4089 = vadd.f32 0.0, %v4088
    %v4090 = vpop.f32.mrb[0].mxu0
    %v4091 = vadd.f32 0.0, %v4090
    %4092 = vmatprep.mubr.bf16.mxu0 0
    %4093 = vmatmul.mubr.bf16.gmra.mrb[0].mxu0 %v4036
    %v4094 = vpop.f32.mrb[0].mxu0
    %v4095 = vadd.f32 0.0, %v4094
    %v4096 = vpop.f32.mrb[0].mxu0
    %v4097 = vadd.f32 0.0, %v4096
    %v4098 = vpop.f32.mrb[0].mxu0
    %v4099 = vadd.f32 0.0, %v4098
    %v4100 = vpop.f32.mrb[0].mxu0
    %v4101 = vadd.f32 0.0, %v4100
    %4102 = vdwg.mxu0
    %4103 = vmatprep.subr.bf16.mxu0 %v4017
    %4104 = vmatpush1.bf16.msra.mxu0 %v4016
    %4105 = vmatprep.subr.bf16.mxu0 %v4048
    %4106 = vmatpush1.bf16.msra.mxu0 %v4045
    %4107 = vmatprep.subr.bf16.mxu0 0
    %4108 = vmatpush1.bf16.msra.mxu0 0
    %4109 = vmatprep.subr.bf16.mxu0 0
    %4110 = vmatpush1.bf16.msra.mxu0 0
    %4111 = vmatprep.subr.bf16.mxu0 0
    %4112 = vmatpush1.bf16.msra.mxu0 0
    %4113 = vmatprep.subr.bf16.mxu0 0
    %4114 = vmatpush1.bf16.msra.mxu0 0
    %4115 = vmatprep.subr.bf16.mxu0 0
    %4116 = vmatpush1.bf16.msra.mxu0 0
    %4117 = vmatprep.subr.bf16.mxu0 0
    %4118 = vmatpush1.bf16.msra.mxu0 0
    %4119 = vmatprep.subr.bf16.mxu0 0
    %4120 = vmatpush1.bf16.msra.mxu0 0
    %4121 = vmatprep.subr.bf16.mxu0 0
    %4122 = vmatpush1.bf16.msra.mxu0 0
    %4123 = vmatprep.subr.bf16.mxu0 0
    %4124 = vmatpush1.bf16.msra.mxu0 0
    %4125 = vmatprep.subr.bf16.mxu0 0
    %4126 = vmatpush1.bf16.msra.mxu0 0
    %4127 = vmatprep.subr.bf16.mxu0 0
    %4128 = vmatpush1.bf16.msra.mxu0 0
    %4129 = vmatprep.subr.bf16.mxu0 0
    %4130 = vmatpush1.bf16.msra.mxu0 0
    %4131 = vmatprep.subr.bf16.mxu0 0
    %4132 = vmatpush1.bf16.msra.mxu0 0
    %4133 = vmatprep.subr.bf16.mxu0 0
    %4134 = vmatpush1.bf16.msra.mxu0 0
    %4135 = vmatprep.mubr.bf16.mxu0 0
    %4136 = vmatmul.mubr.bf16.gmra.mrb[0].mxu0 %v4033
    %v4137 = vpop.f32.mrb[0].mxu0
    %v4138 = vadd.f32 0.0, %v4137
    %v4139 = vpop.f32.mrb[0].mxu0
    %v4140 = vadd.f32 0.0, %v4139
    %v4141 = vpop.f32.mrb[0].mxu0
    %v4142 = vadd.f32 0.0, %v4141
    %v4143 = vpop.f32.mrb[0].mxu0
    %v4144 = vadd.f32 0.0, %v4143
    %4145 = vmatprep.mubr.bf16.mxu0 0
    %4146 = vmatmul.mubr.bf16.gmra.mrb[0].mxu0 %v4036
    %v4147 = vpop.f32.mrb[0].mxu0
    %v4148 = vadd.f32 0.0, %v4147
    %v4149 = vpop.f32.mrb[0].mxu0
    %v4150 = vadd.f32 0.0, %v4149
    %v4151 = vpop.f32.mrb[0].mxu0
    %v4152 = vadd.f32 0.0, %v4151
    %v4153 = vpop.f32.mrb[0].mxu0
    %v4154 = vadd.f32 0.0, %v4153
    %4155 = vdwg.mxu0
    %v4156 = vadd.f32 %v3934, %v4085
    %v4157 = vadd.f32 %v3935, %v4087
    %v4158 = vadd.f32 %v3936, %v4138
    %v4159 = vadd.f32 %v3937, %v4140
    %v4160 = vadd.f32 %v3938, %v4089
    %v4161 = vadd.f32 %v3939, %v4091
    %v4162 = vadd.f32 %v3940, %v4142
    %v4163 = vadd.f32 %v3941, %v4144
    %v4164 = vadd.f32 %v3942, %v4095
    %v4165 = vadd.f32 %v3943, %v4097
    %v4166 = vadd.f32 %v3944, %v4148
    %v4167 = vadd.f32 %v3945, %v4150
    %v4168 = vadd.f32 %v3946, %v4099
    %v4169 = vadd.f32 %v3947, %v4101
    %v4170 = vadd.f32 %v3948, %v4152
    %v4171 = vadd.f32 %v3949, %v4154
    %4172 = vrot.lane.b32.xlu0 %v3105, 127
    %v4173 = vpop.permute.xlu0 %4172
    %4174 = vrot.lane.b32.xlu0 %v3109, 127
    %v4175 = vpop.permute.xlu0 %4174
    %4176 = vrot.lane.b32.xlu0 %v3113, 127
    %v4177 = vpop.permute.xlu0 %4176
    %4178 = vrot.lane.b32.xlu0 %v3117, 127
    %v4179 = vpop.permute.xlu0 %4178
    %4180 = vrot.lane.b32.xlu0 %v3106, 127
    %v4181 = vpop.permute.xlu0 %4180
    %4182 = vrot.lane.b32.xlu0 %v3110, 127
    %v4183 = vpop.permute.xlu0 %4182
    %4184 = vrot.lane.b32.xlu0 %v3114, 127
    %v4185 = vpop.permute.xlu0 %4184
    %4186 = vrot.lane.b32.xlu0 %v3118, 127
    %v4187 = vpop.permute.xlu0 %4186
    %4188 = vrot.lane.b32.xlu0 %v3107, 127
    %v4189 = vpop.permute.xlu0 %4188
    %4190 = vrot.lane.b32.xlu0 %v3111, 127
    %v4191 = vpop.permute.xlu0 %4190
    %4192 = vrot.lane.b32.xlu0 %v3115, 127
    %v4193 = vpop.permute.xlu0 %4192
    %4194 = vrot.lane.b32.xlu0 %v3119, 127
    %v4195 = vpop.permute.xlu0 %4194
    %4196 = vrot.lane.b32.xlu0 %v3108, 127
    %v4197 = vpop.permute.xlu0 %4196
    %4198 = vrot.lane.b32.xlu0 %v3112, 127
    %v4199 = vpop.permute.xlu0 %4198
    %4200 = vrot.lane.b32.xlu0 %v3116, 127
    %v4201 = vpop.permute.xlu0 %4200
    %4202 = vrot.lane.b32.xlu0 %v3120, 127
    %v4203 = vpop.permute.xlu0 %4202
    %v4204 = vsel %vm1640, %v4189, %v4197
    %v4205 = vsel %vm1640, %v4191, %v4199
    %v4206 = vsel %vm1640, %v4193, %v4201
    %v4207 = vsel %vm1640, %v4195, %v4203
    %v4208 = vsel %vm1640, %v4181, %v4189
    %v4209 = vsel %vm1640, %v4183, %v4191
    %v4210 = vsel %vm1640, %v4185, %v4193
    %v4211 = vsel %vm1640, %v4187, %v4195
    %v4212 = vsel %vm1640, %v4173, %v4181
    %v4213 = vsel %vm1640, %v4175, %v4183
    %v4214 = vsel %vm1640, %v4177, %v4185
    %v4215 = vsel %vm1640, %v4179, %v4187
    %v4216 = vsel %vm1640, %v4197, %v4173
    %v4217 = vsel %vm1640, %v4199, %v4175
    %v4218 = vsel %vm1640, %v4201, %v4177
    %v4219 = vsel %vm1640, %v4203, %v4179
    %v4220 = vmul.f32 %v4212, %v1661
    %v4221 = vmul.f32 %v4208, %v1665
    %v4222 = vmul.f32 %v4204, %v1669
    %v4223 = vmul.f32 %v4216, %v1673
    %v4224 = vmul.f32 %v4213, %v1661
    %v4225 = vmul.f32 %v4209, %v1665
    %v4226 = vmul.f32 %v4205, %v1669
    %v4227 = vmul.f32 %v4217, %v1673
    %v4228 = vmul.f32 %v4214, %v1661
    %v4229 = vmul.f32 %v4210, %v1665
    %v4230 = vmul.f32 %v4206, %v1669
    %v4231 = vmul.f32 %v4218, %v1673
    %v4232 = vmul.f32 %v4215, %v1661
    %v4233 = vmul.f32 %v4211, %v1665
    %v4234 = vmul.f32 %v4207, %v1669
    %v4235 = vmul.f32 %v4219, %v1673
    %v4236 = vpack.c.bf16 %v4224, %v4220
    %v4237 = vpack.c.bf16 %v4225, %v4221
    %v4238 = vpack.c.bf16 %v4226, %v4222
    %v4239 = vpack.c.bf16 %v4227, %v4223
    %v4240 = vpack.c.bf16 %v4232, %v4228
    %v4241 = vpack.c.bf16 %v4233, %v4229
    %v4242 = vpack.c.bf16 %v4234, %v4230
    %v4243 = vpack.c.bf16 %v4235, %v4231
    %v4248 = vunpack.c.l.b16 %v3142
    %v4249 = vunpack.c.l.b16 %v3143
    %v4250 = vunpack.c.l.b16 %v3144
    %v4251 = vunpack.c.l.b16 %v3145
    %v4252 = vpack.c.b16 %v4249, %v4248
    %v4253 = vpack.c.b16 %v4251, %v4250
    %v4255 = vsel %vm616, %v4252, 0
    %v4258 = vsel %vm616, %v4253, 0
    %v4261 = vsel %vm623, %v4240, 0
    %v4264 = vsel %vm623, %v4241, 0
    %v4267 = vsel %vm623, %v4242, 0
    %v4270 = vsel %vm623, %v4243, 0
    %4272 = vmatprep.subr.bf16.mxu0 %v4237
    %4273 = vmatpush1.bf16.msra.mxu0 %v4236
    %4274 = vmatprep.subr.bf16.mxu0 %v4264
    %4275 = vmatpush1.bf16.msra.mxu0 %v4261
    %4276 = vmatprep.subr.bf16.mxu0 0
    %4277 = vmatpush1.bf16.msra.mxu0 0
    %4278 = vmatprep.subr.bf16.mxu0 0
    %4279 = vmatpush1.bf16.msra.mxu0 0
    %4280 = vmatprep.subr.bf16.mxu0 0
    %4281 = vmatpush1.bf16.msra.mxu0 0
    %4282 = vmatprep.subr.bf16.mxu0 0
    %4283 = vmatpush1.bf16.msra.mxu0 0
    %4284 = vmatprep.subr.bf16.mxu0 0
    %4285 = vmatpush1.bf16.msra.mxu0 0
    %4286 = vmatprep.subr.bf16.mxu0 0
    %4287 = vmatpush1.bf16.msra.mxu0 0
    %4288 = vmatprep.subr.bf16.mxu0 0
    %4289 = vmatpush1.bf16.msra.mxu0 0
    %4290 = vmatprep.subr.bf16.mxu0 0
    %4291 = vmatpush1.bf16.msra.mxu0 0
    %4292 = vmatprep.subr.bf16.mxu0 0
    %4293 = vmatpush1.bf16.msra.mxu0 0
    %4294 = vmatprep.subr.bf16.mxu0 0
    %4295 = vmatpush1.bf16.msra.mxu0 0
    %4296 = vmatprep.subr.bf16.mxu0 0
    %4297 = vmatpush1.bf16.msra.mxu0 0
    %4298 = vmatprep.subr.bf16.mxu0 0
    %4299 = vmatpush1.bf16.msra.mxu0 0
    %4300 = vmatprep.subr.bf16.mxu0 0
    %4301 = vmatpush1.bf16.msra.mxu0 0
    %4302 = vmatprep.subr.bf16.mxu0 0
    %4303 = vmatpush1.bf16.msra.mxu0 0
    %4304 = vmatprep.mubr.bf16.mxu0 0
    %4305 = vmatmul.mubr.bf16.gmra.mrb[0].mxu0 %v4255
    %v4306 = vpop.f32.mrb[0].mxu0
    %v4307 = vadd.f32 0.0, %v4306
    %v4308 = vpop.f32.mrb[0].mxu0
    %v4309 = vadd.f32 0.0, %v4308
    %v4310 = vpop.f32.mrb[0].mxu0
    %v4311 = vadd.f32 0.0, %v4310
    %v4312 = vpop.f32.mrb[0].mxu0
    %v4313 = vadd.f32 0.0, %v4312
    %4314 = vmatprep.mubr.bf16.mxu0 0
    %4315 = vmatmul.mubr.bf16.gmra.mrb[0].mxu0 %v4258
    %v4316 = vpop.f32.mrb[0].mxu0
    %v4317 = vadd.f32 0.0, %v4316
    %v4318 = vpop.f32.mrb[0].mxu0
    %v4319 = vadd.f32 0.0, %v4318
    %v4320 = vpop.f32.mrb[0].mxu0
    %v4321 = vadd.f32 0.0, %v4320
    %v4322 = vpop.f32.mrb[0].mxu0
    %v4323 = vadd.f32 0.0, %v4322
    %4324 = vdwg.mxu0
    %4325 = vmatprep.subr.bf16.mxu0 %v4239
    %4326 = vmatpush1.bf16.msra.mxu0 %v4238
    %4327 = vmatprep.subr.bf16.mxu0 %v4270
    %4328 = vmatpush1.bf16.msra.mxu0 %v4267
    %4329 = vmatprep.subr.bf16.mxu0 0
    %4330 = vmatpush1.bf16.msra.mxu0 0
    %4331 = vmatprep.subr.bf16.mxu0 0
    %4332 = vmatpush1.bf16.msra.mxu0 0
    %4333 = vmatprep.subr.bf16.mxu0 0
    %4334 = vmatpush1.bf16.msra.mxu0 0
    %4335 = vmatprep.subr.bf16.mxu0 0
    %4336 = vmatpush1.bf16.msra.mxu0 0
    %4337 = vmatprep.subr.bf16.mxu0 0
    %4338 = vmatpush1.bf16.msra.mxu0 0
    %4339 = vmatprep.subr.bf16.mxu0 0
    %4340 = vmatpush1.bf16.msra.mxu0 0
    %4341 = vmatprep.subr.bf16.mxu0 0
    %4342 = vmatpush1.bf16.msra.mxu0 0
    %4343 = vmatprep.subr.bf16.mxu0 0
    %4344 = vmatpush1.bf16.msra.mxu0 0
    %4345 = vmatprep.subr.bf16.mxu0 0
    %4346 = vmatpush1.bf16.msra.mxu0 0
    %4347 = vmatprep.subr.bf16.mxu0 0
    %4348 = vmatpush1.bf16.msra.mxu0 0
    %4349 = vmatprep.subr.bf16.mxu0 0
    %4350 = vmatpush1.bf16.msra.mxu0 0
    %4351 = vmatprep.subr.bf16.mxu0 0
    %4352 = vmatpush1.bf16.msra.mxu0 0
    %4353 = vmatprep.subr.bf16.mxu0 0
    %4354 = vmatpush1.bf16.msra.mxu0 0
    %4355 = vmatprep.subr.bf16.mxu0 0
    %4356 = vmatpush1.bf16.msra.mxu0 0
    %4357 = vmatprep.mubr.bf16.mxu0 0
    %4358 = vmatmul.mubr.bf16.gmra.mrb[0].mxu0 %v4255
    %v4359 = vpop.f32.mrb[0].mxu0
    %v4360 = vadd.f32 0.0, %v4359
    %v4361 = vpop.f32.mrb[0].mxu0
    %v4362 = vadd.f32 0.0, %v4361
    %v4363 = vpop.f32.mrb[0].mxu0
    %v4364 = vadd.f32 0.0, %v4363
    %v4365 = vpop.f32.mrb[0].mxu0
    %v4366 = vadd.f32 0.0, %v4365
    %4367 = vmatprep.mubr.bf16.mxu0 0
    %4368 = vmatmul.mubr.bf16.gmra.mrb[0].mxu0 %v4258
    %v4369 = vpop.f32.mrb[0].mxu0
    %v4370 = vadd.f32 0.0, %v4369
    %v4371 = vpop.f32.mrb[0].mxu0
    %v4372 = vadd.f32 0.0, %v4371
    %v4373 = vpop.f32.mrb[0].mxu0
    %v4374 = vadd.f32 0.0, %v4373
    %v4375 = vpop.f32.mrb[0].mxu0
    %v4376 = vadd.f32 0.0, %v4375
    %4377 = vdwg.mxu0
    %v4378 = vadd.f32 %v4156, %v4307
    %v4379 = vadd.f32 %v4157, %v4309
    %v4380 = vadd.f32 %v4158, %v4360
    %v4381 = vadd.f32 %v4159, %v4362
    %v4382 = vadd.f32 %v4160, %v4311
    %v4383 = vadd.f32 %v4161, %v4313
    %v4384 = vadd.f32 %v4162, %v4364
    %v4385 = vadd.f32 %v4163, %v4366
    %v4386 = vadd.f32 %v4164, %v4317
    %v4387 = vadd.f32 %v4165, %v4319
    %v4388 = vadd.f32 %v4166, %v4370
    %v4389 = vadd.f32 %v4167, %v4372
    %v4390 = vadd.f32 %v4168, %v4321
    %v4391 = vadd.f32 %v4169, %v4323
    %v4392 = vadd.f32 %v4170, %v4374
    %v4393 = vadd.f32 %v4171, %v4376
    %4394 = vrot.lane.b32.xlu0 %v3105, 113
    %v4395 = vpop.permute.xlu0 %4394
    %4396 = vrot.lane.b32.xlu0 %v3109, 113
    %v4397 = vpop.permute.xlu0 %4396
    %4398 = vrot.lane.b32.xlu0 %v3113, 113
    %v4399 = vpop.permute.xlu0 %4398
    %4400 = vrot.lane.b32.xlu0 %v3117, 113
    %v4401 = vpop.permute.xlu0 %4400
    %4402 = vrot.lane.b32.xlu0 %v3106, 113
    %v4403 = vpop.permute.xlu0 %4402
    %4404 = vrot.lane.b32.xlu0 %v3110, 113
    %v4405 = vpop.permute.xlu0 %4404
    %4406 = vrot.lane.b32.xlu0 %v3114, 113
    %v4407 = vpop.permute.xlu0 %4406
    %4408 = vrot.lane.b32.xlu0 %v3118, 113
    %v4409 = vpop.permute.xlu0 %4408
    %4410 = vrot.lane.b32.xlu0 %v3107, 113
    %v4411 = vpop.permute.xlu0 %4410
    %4412 = vrot.lane.b32.xlu0 %v3111, 113
    %v4413 = vpop.permute.xlu0 %4412
    %4414 = vrot.lane.b32.xlu0 %v3115, 113
    %v4415 = vpop.permute.xlu0 %4414
    %4416 = vrot.lane.b32.xlu0 %v3119, 113
    %v4417 = vpop.permute.xlu0 %4416
    %4418 = vrot.lane.b32.xlu0 %v3108, 113
    %v4419 = vpop.permute.xlu0 %4418
    %4420 = vrot.lane.b32.xlu0 %v3112, 113
    %v4421 = vpop.permute.xlu0 %4420
    %4422 = vrot.lane.b32.xlu0 %v3116, 113
    %v4423 = vpop.permute.xlu0 %4422
    %4424 = vrot.lane.b32.xlu0 %v3120, 113
    %v4425 = vpop.permute.xlu0 %4424
    %v4426 = vsel %vm1884, %v4411, %v4419
    %v4427 = vsel %vm1884, %v4413, %v4421
    %v4428 = vsel %vm1884, %v4415, %v4423
    %v4429 = vsel %vm1884, %v4417, %v4425
    %v4430 = vsel %vm1884, %v4403, %v4411
    %v4431 = vsel %vm1884, %v4405, %v4413
    %v4432 = vsel %vm1884, %v4407, %v4415
    %v4433 = vsel %vm1884, %v4409, %v4417
    %v4434 = vsel %vm1884, %v4395, %v4403
    %v4435 = vsel %vm1884, %v4397, %v4405
    %v4436 = vsel %vm1884, %v4399, %v4407
    %v4437 = vsel %vm1884, %v4401, %v4409
    %v4438 = vsel %vm1884, %v4419, %v4395
    %v4439 = vsel %vm1884, %v4421, %v4397
    %v4440 = vsel %vm1884, %v4423, %v4399
    %v4441 = vsel %vm1884, %v4425, %v4401
    %v4442 = vmul.f32 %v4434, %v1905
    %v4443 = vmul.f32 %v4430, %v1909
    %v4444 = vmul.f32 %v4426, %v1913
    %v4445 = vmul.f32 %v4438, %v1917
    %v4446 = vmul.f32 %v4435, %v1905
    %v4447 = vmul.f32 %v4431, %v1909
    %v4448 = vmul.f32 %v4427, %v1913
    %v4449 = vmul.f32 %v4439, %v1917
    %v4450 = vmul.f32 %v4436, %v1905
    %v4451 = vmul.f32 %v4432, %v1909
    %v4452 = vmul.f32 %v4428, %v1913
    %v4453 = vmul.f32 %v4440, %v1917
    %v4454 = vmul.f32 %v4437, %v1905
    %v4455 = vmul.f32 %v4433, %v1909
    %v4456 = vmul.f32 %v4429, %v1913
    %v4457 = vmul.f32 %v4441, %v1917
    %v4458 = vpack.c.bf16 %v4446, %v4442
    %v4459 = vpack.c.bf16 %v4447, %v4443
    %v4460 = vpack.c.bf16 %v4448, %v4444
    %v4461 = vpack.c.bf16 %v4449, %v4445
    %v4462 = vpack.c.bf16 %v4454, %v4450
    %v4463 = vpack.c.bf16 %v4455, %v4451
    %v4464 = vpack.c.bf16 %v4456, %v4452
    %v4465 = vpack.c.bf16 %v4457, %v4453
    %v4470 = vunpack.c.l.b16 %v3146
    %v4471 = vunpack.c.l.b16 %v3147
    %v4472 = vunpack.c.l.b16 %v3148
    %v4473 = vunpack.c.l.b16 %v3149
    %v4474 = vpack.c.b16 %v4471, %v4470
    %v4475 = vpack.c.b16 %v4473, %v4472
    %v4477 = vsel %vm616, %v4474, 0
    %v4480 = vsel %vm616, %v4475, 0
    %v4483 = vsel %vm623, %v4462, 0
    %v4486 = vsel %vm623, %v4463, 0
    %v4489 = vsel %vm623, %v4464, 0
    %v4492 = vsel %vm623, %v4465, 0
    %4494 = vmatprep.subr.bf16.mxu0 %v4459
    %4495 = vmatpush1.bf16.msra.mxu0 %v4458
    %4496 = vmatprep.subr.bf16.mxu0 %v4486
    %4497 = vmatpush1.bf16.msra.mxu0 %v4483
    %4498 = vmatprep.subr.bf16.mxu0 0
    %4499 = vmatpush1.bf16.msra.mxu0 0
    %4500 = vmatprep.subr.bf16.mxu0 0
    %4501 = vmatpush1.bf16.msra.mxu0 0
    %4502 = vmatprep.subr.bf16.mxu0 0
    %4503 = vmatpush1.bf16.msra.mxu0 0
    %4504 = vmatprep.subr.bf16.mxu0 0
    %4505 = vmatpush1.bf16.msra.mxu0 0
    %4506 = vmatprep.subr.bf16.mxu0 0
    %4507 = vmatpush1.bf16.msra.mxu0 0
    %4508 = vmatprep.subr.bf16.mxu0 0
    %4509 = vmatpush1.bf16.msra.mxu0 0
    %4510 = vmatprep.subr.bf16.mxu0 0
    %4511 = vmatpush1.bf16.msra.mxu0 0
    %4512 = vmatprep.subr.bf16.mxu0 0
    %4513 = vmatpush1.bf16.msra.mxu0 0
    %4514 = vmatprep.subr.bf16.mxu0 0
    %4515 = vmatpush1.bf16.msra.mxu0 0
    %4516 = vmatprep.subr.bf16.mxu0 0
    %4517 = vmatpush1.bf16.msra.mxu0 0
    %4518 = vmatprep.subr.bf16.mxu0 0
    %4519 = vmatpush1.bf16.msra.mxu0 0
    %4520 = vmatprep.subr.bf16.mxu0 0
    %4521 = vmatpush1.bf16.msra.mxu0 0
    %4522 = vmatprep.subr.bf16.mxu0 0
    %4523 = vmatpush1.bf16.msra.mxu0 0
    %4524 = vmatprep.subr.bf16.mxu0 0
    %4525 = vmatpush1.bf16.msra.mxu0 0
    %4526 = vmatprep.mubr.bf16.mxu0 0
    %4527 = vmatmul.mubr.bf16.gmra.mrb[0].mxu0 %v4477
    %v4528 = vpop.f32.mrb[0].mxu0
    %v4529 = vadd.f32 0.0, %v4528
    %v4530 = vpop.f32.mrb[0].mxu0
    %v4531 = vadd.f32 0.0, %v4530
    %v4532 = vpop.f32.mrb[0].mxu0
    %v4533 = vadd.f32 0.0, %v4532
    %v4534 = vpop.f32.mrb[0].mxu0
    %v4535 = vadd.f32 0.0, %v4534
    %4536 = vmatprep.mubr.bf16.mxu0 0
    %4537 = vmatmul.mubr.bf16.gmra.mrb[0].mxu0 %v4480
    %v4538 = vpop.f32.mrb[0].mxu0
    %v4539 = vadd.f32 0.0, %v4538
    %v4540 = vpop.f32.mrb[0].mxu0
    %v4541 = vadd.f32 0.0, %v4540
    %v4542 = vpop.f32.mrb[0].mxu0
    %v4543 = vadd.f32 0.0, %v4542
    %v4544 = vpop.f32.mrb[0].mxu0
    %v4545 = vadd.f32 0.0, %v4544
    %4546 = vdwg.mxu0
    %4547 = vmatprep.subr.bf16.mxu0 %v4461
    %4548 = vmatpush1.bf16.msra.mxu0 %v4460
    %4549 = vmatprep.subr.bf16.mxu0 %v4492
    %4550 = vmatpush1.bf16.msra.mxu0 %v4489
    %4551 = vmatprep.subr.bf16.mxu0 0
    %4552 = vmatpush1.bf16.msra.mxu0 0
    %4553 = vmatprep.subr.bf16.mxu0 0
    %4554 = vmatpush1.bf16.msra.mxu0 0
    %4555 = vmatprep.subr.bf16.mxu0 0
    %4556 = vmatpush1.bf16.msra.mxu0 0
    %4557 = vmatprep.subr.bf16.mxu0 0
    %4558 = vmatpush1.bf16.msra.mxu0 0
    %4559 = vmatprep.subr.bf16.mxu0 0
    %4560 = vmatpush1.bf16.msra.mxu0 0
    %4561 = vmatprep.subr.bf16.mxu0 0
    %4562 = vmatpush1.bf16.msra.mxu0 0
    %4563 = vmatprep.subr.bf16.mxu0 0
    %4564 = vmatpush1.bf16.msra.mxu0 0
    %4565 = vmatprep.subr.bf16.mxu0 0
    %4566 = vmatpush1.bf16.msra.mxu0 0
    %4567 = vmatprep.subr.bf16.mxu0 0
    %4568 = vmatpush1.bf16.msra.mxu0 0
    %4569 = vmatprep.subr.bf16.mxu0 0
    %4570 = vmatpush1.bf16.msra.mxu0 0
    %4571 = vmatprep.subr.bf16.mxu0 0
    %4572 = vmatpush1.bf16.msra.mxu0 0
    %4573 = vmatprep.subr.bf16.mxu0 0
    %4574 = vmatpush1.bf16.msra.mxu0 0
    %4575 = vmatprep.subr.bf16.mxu0 0
    %4576 = vmatpush1.bf16.msra.mxu0 0
    %4577 = vmatprep.subr.bf16.mxu0 0
    %4578 = vmatpush1.bf16.msra.mxu0 0
    %4579 = vmatprep.mubr.bf16.mxu0 0
    %4580 = vmatmul.mubr.bf16.gmra.mrb[0].mxu0 %v4477
    %v4581 = vpop.f32.mrb[0].mxu0
    %v4582 = vadd.f32 0.0, %v4581
    %v4583 = vpop.f32.mrb[0].mxu0
    %v4584 = vadd.f32 0.0, %v4583
    %v4585 = vpop.f32.mrb[0].mxu0
    %v4586 = vadd.f32 0.0, %v4585
    %v4587 = vpop.f32.mrb[0].mxu0
    %v4588 = vadd.f32 0.0, %v4587
    %4589 = vmatprep.mubr.bf16.mxu0 0
    %4590 = vmatmul.mubr.bf16.gmra.mrb[0].mxu0 %v4480
    %v4591 = vpop.f32.mrb[0].mxu0
    %v4592 = vadd.f32 0.0, %v4591
    %v4593 = vpop.f32.mrb[0].mxu0
    %v4594 = vadd.f32 0.0, %v4593
    %v4595 = vpop.f32.mrb[0].mxu0
    %v4596 = vadd.f32 0.0, %v4595
    %v4597 = vpop.f32.mrb[0].mxu0
    %v4598 = vadd.f32 0.0, %v4597
    %4599 = vdwg.mxu0
    %v4600 = vadd.f32 %v4378, %v4529
    %v4601 = vadd.f32 %v4379, %v4531
    %v4602 = vadd.f32 %v4380, %v4582
    %v4603 = vadd.f32 %v4381, %v4584
    %v4604 = vadd.f32 %v4382, %v4533
    %v4605 = vadd.f32 %v4383, %v4535
    %v4606 = vadd.f32 %v4384, %v4586
    %v4607 = vadd.f32 %v4385, %v4588
    %v4608 = vadd.f32 %v4386, %v4539
    %v4609 = vadd.f32 %v4387, %v4541
    %v4610 = vadd.f32 %v4388, %v4592
    %v4611 = vadd.f32 %v4389, %v4594
    %v4612 = vadd.f32 %v4390, %v4543
    %v4613 = vadd.f32 %v4391, %v4545
    %v4614 = vadd.f32 %v4392, %v4596
    %v4615 = vadd.f32 %v4393, %v4598
    %4616 = vrot.lane.b32.xlu0 %v3105, 112
    %v4617 = vpop.permute.xlu0 %4616
    %4618 = vrot.lane.b32.xlu0 %v3109, 112
    %v4619 = vpop.permute.xlu0 %4618
    %4620 = vrot.lane.b32.xlu0 %v3113, 112
    %v4621 = vpop.permute.xlu0 %4620
    %4622 = vrot.lane.b32.xlu0 %v3117, 112
    %v4623 = vpop.permute.xlu0 %4622
    %4624 = vrot.lane.b32.xlu0 %v3106, 112
    %v4625 = vpop.permute.xlu0 %4624
    %4626 = vrot.lane.b32.xlu0 %v3110, 112
    %v4627 = vpop.permute.xlu0 %4626
    %4628 = vrot.lane.b32.xlu0 %v3114, 112
    %v4629 = vpop.permute.xlu0 %4628
    %4630 = vrot.lane.b32.xlu0 %v3118, 112
    %v4631 = vpop.permute.xlu0 %4630
    %4632 = vrot.lane.b32.xlu0 %v3107, 112
    %v4633 = vpop.permute.xlu0 %4632
    %4634 = vrot.lane.b32.xlu0 %v3111, 112
    %v4635 = vpop.permute.xlu0 %4634
    %4636 = vrot.lane.b32.xlu0 %v3115, 112
    %v4637 = vpop.permute.xlu0 %4636
    %4638 = vrot.lane.b32.xlu0 %v3119, 112
    %v4639 = vpop.permute.xlu0 %4638
    %4640 = vrot.lane.b32.xlu0 %v3108, 112
    %v4641 = vpop.permute.xlu0 %4640
    %4642 = vrot.lane.b32.xlu0 %v3112, 112
    %v4643 = vpop.permute.xlu0 %4642
    %4644 = vrot.lane.b32.xlu0 %v3116, 112
    %v4645 = vpop.permute.xlu0 %4644
    %4646 = vrot.lane.b32.xlu0 %v3120, 112
    %v4647 = vpop.permute.xlu0 %4646
    %v4648 = vsel %vm2128, %v4633, %v4641
    %v4649 = vsel %vm2128, %v4635, %v4643
    %v4650 = vsel %vm2128, %v4637, %v4645
    %v4651 = vsel %vm2128, %v4639, %v4647
    %v4652 = vsel %vm2128, %v4625, %v4633
    %v4653 = vsel %vm2128, %v4627, %v4635
    %v4654 = vsel %vm2128, %v4629, %v4637
    %v4655 = vsel %vm2128, %v4631, %v4639
    %v4656 = vsel %vm2128, %v4617, %v4625
    %v4657 = vsel %vm2128, %v4619, %v4627
    %v4658 = vsel %vm2128, %v4621, %v4629
    %v4659 = vsel %vm2128, %v4623, %v4631
    %v4660 = vsel %vm2128, %v4641, %v4617
    %v4661 = vsel %vm2128, %v4643, %v4619
    %v4662 = vsel %vm2128, %v4645, %v4621
    %v4663 = vsel %vm2128, %v4647, %v4623
    %v4664 = vmul.f32 %v4656, %v2149
    %v4665 = vmul.f32 %v4652, %v2153
    %v4666 = vmul.f32 %v4648, %v2157
    %v4667 = vmul.f32 %v4660, %v2161
    %v4668 = vmul.f32 %v4657, %v2149
    %v4669 = vmul.f32 %v4653, %v2153
    %v4670 = vmul.f32 %v4649, %v2157
    %v4671 = vmul.f32 %v4661, %v2161
    %v4672 = vmul.f32 %v4658, %v2149
    %v4673 = vmul.f32 %v4654, %v2153
    %v4674 = vmul.f32 %v4650, %v2157
    %v4675 = vmul.f32 %v4662, %v2161
    %v4676 = vmul.f32 %v4659, %v2149
    %v4677 = vmul.f32 %v4655, %v2153
    %v4678 = vmul.f32 %v4651, %v2157
    %v4679 = vmul.f32 %v4663, %v2161
    %v4680 = vpack.c.bf16 %v4668, %v4664
    %v4681 = vpack.c.bf16 %v4669, %v4665
    %v4682 = vpack.c.bf16 %v4670, %v4666
    %v4683 = vpack.c.bf16 %v4671, %v4667
    %v4684 = vpack.c.bf16 %v4676, %v4672
    %v4685 = vpack.c.bf16 %v4677, %v4673
    %v4686 = vpack.c.bf16 %v4678, %v4674
    %v4687 = vpack.c.bf16 %v4679, %v4675
    %v4692 = vunpack.c.l.b16 %v3150
    %v4693 = vunpack.c.l.b16 %v3151
    %v4694 = vunpack.c.l.b16 %v3152
    %v4695 = vunpack.c.l.b16 %v3153
    %v4696 = vpack.c.b16 %v4693, %v4692
    %v4697 = vpack.c.b16 %v4695, %v4694
    %v4699 = vsel %vm616, %v4696, 0
    %v4702 = vsel %vm616, %v4697, 0
    %v4705 = vsel %vm623, %v4684, 0
    %v4708 = vsel %vm623, %v4685, 0
    %v4711 = vsel %vm623, %v4686, 0
    %v4714 = vsel %vm623, %v4687, 0
    %4716 = vmatprep.subr.bf16.mxu0 %v4681
    %4717 = vmatpush1.bf16.msra.mxu0 %v4680
    %4718 = vmatprep.subr.bf16.mxu0 %v4708
    %4719 = vmatpush1.bf16.msra.mxu0 %v4705
    %4720 = vmatprep.subr.bf16.mxu0 0
    %4721 = vmatpush1.bf16.msra.mxu0 0
    %4722 = vmatprep.subr.bf16.mxu0 0
    %4723 = vmatpush1.bf16.msra.mxu0 0
    %4724 = vmatprep.subr.bf16.mxu0 0
    %4725 = vmatpush1.bf16.msra.mxu0 0
    %4726 = vmatprep.subr.bf16.mxu0 0
    %4727 = vmatpush1.bf16.msra.mxu0 0
    %4728 = vmatprep.subr.bf16.mxu0 0
    %4729 = vmatpush1.bf16.msra.mxu0 0
    %4730 = vmatprep.subr.bf16.mxu0 0
    %4731 = vmatpush1.bf16.msra.mxu0 0
    %4732 = vmatprep.subr.bf16.mxu0 0
    %4733 = vmatpush1.bf16.msra.mxu0 0
    %4734 = vmatprep.subr.bf16.mxu0 0
    %4735 = vmatpush1.bf16.msra.mxu0 0
    %4736 = vmatprep.subr.bf16.mxu0 0
    %4737 = vmatpush1.bf16.msra.mxu0 0
    %4738 = vmatprep.subr.bf16.mxu0 0
    %4739 = vmatpush1.bf16.msra.mxu0 0
    %4740 = vmatprep.subr.bf16.mxu0 0
    %4741 = vmatpush1.bf16.msra.mxu0 0
    %4742 = vmatprep.subr.bf16.mxu0 0
    %4743 = vmatpush1.bf16.msra.mxu0 0
    %4744 = vmatprep.subr.bf16.mxu0 0
    %4745 = vmatpush1.bf16.msra.mxu0 0
    %4746 = vmatprep.subr.bf16.mxu0 0
    %4747 = vmatpush1.bf16.msra.mxu0 0
    %4748 = vmatprep.mubr.bf16.mxu0 0
    %4749 = vmatmul.mubr.bf16.gmra.mrb[0].mxu0 %v4699
    %v4750 = vpop.f32.mrb[0].mxu0
    %v4751 = vadd.f32 0.0, %v4750
    %v4752 = vpop.f32.mrb[0].mxu0
    %v4753 = vadd.f32 0.0, %v4752
    %v4754 = vpop.f32.mrb[0].mxu0
    %v4755 = vadd.f32 0.0, %v4754
    %v4756 = vpop.f32.mrb[0].mxu0
    %v4757 = vadd.f32 0.0, %v4756
    %4758 = vmatprep.mubr.bf16.mxu0 0
    %4759 = vmatmul.mubr.bf16.gmra.mrb[0].mxu0 %v4702
    %v4760 = vpop.f32.mrb[0].mxu0
    %v4761 = vadd.f32 0.0, %v4760
    %v4762 = vpop.f32.mrb[0].mxu0
    %v4763 = vadd.f32 0.0, %v4762
    %v4764 = vpop.f32.mrb[0].mxu0
    %v4765 = vadd.f32 0.0, %v4764
    %v4766 = vpop.f32.mrb[0].mxu0
    %v4767 = vadd.f32 0.0, %v4766
    %4768 = vdwg.mxu0
    %4769 = vmatprep.subr.bf16.mxu0 %v4683
    %4770 = vmatpush1.bf16.msra.mxu0 %v4682
    %4771 = vmatprep.subr.bf16.mxu0 %v4714
    %4772 = vmatpush1.bf16.msra.mxu0 %v4711
    %4773 = vmatprep.subr.bf16.mxu0 0
    %4774 = vmatpush1.bf16.msra.mxu0 0
    %4775 = vmatprep.subr.bf16.mxu0 0
    %4776 = vmatpush1.bf16.msra.mxu0 0
    %4777 = vmatprep.subr.bf16.mxu0 0
    %4778 = vmatpush1.bf16.msra.mxu0 0
    %4779 = vmatprep.subr.bf16.mxu0 0
    %4780 = vmatpush1.bf16.msra.mxu0 0
    %4781 = vmatprep.subr.bf16.mxu0 0
    %4782 = vmatpush1.bf16.msra.mxu0 0
    %4783 = vmatprep.subr.bf16.mxu0 0
    %4784 = vmatpush1.bf16.msra.mxu0 0
    %4785 = vmatprep.subr.bf16.mxu0 0
    %4786 = vmatpush1.bf16.msra.mxu0 0
    %4787 = vmatprep.subr.bf16.mxu0 0
    %4788 = vmatpush1.bf16.msra.mxu0 0
    %4789 = vmatprep.subr.bf16.mxu0 0
    %4790 = vmatpush1.bf16.msra.mxu0 0
    %4791 = vmatprep.subr.bf16.mxu0 0
    %4792 = vmatpush1.bf16.msra.mxu0 0
    %4793 = vmatprep.subr.bf16.mxu0 0
    %4794 = vmatpush1.bf16.msra.mxu0 0
    %4795 = vmatprep.subr.bf16.mxu0 0
    %4796 = vmatpush1.bf16.msra.mxu0 0
    %4797 = vmatprep.subr.bf16.mxu0 0
    %4798 = vmatpush1.bf16.msra.mxu0 0
    %4799 = vmatprep.subr.bf16.mxu0 0
    %4800 = vmatpush1.bf16.msra.mxu0 0
    %4801 = vmatprep.mubr.bf16.mxu0 0
    %4802 = vmatmul.mubr.bf16.gmra.mrb[0].mxu0 %v4699
    %v4803 = vpop.f32.mrb[0].mxu0
    %v4804 = vadd.f32 0.0, %v4803
    %v4805 = vpop.f32.mrb[0].mxu0
    %v4806 = vadd.f32 0.0, %v4805
    %v4807 = vpop.f32.mrb[0].mxu0
    %v4808 = vadd.f32 0.0, %v4807
    %v4809 = vpop.f32.mrb[0].mxu0
    %v4810 = vadd.f32 0.0, %v4809
    %4811 = vmatprep.mubr.bf16.mxu0 0
    %4812 = vmatmul.mubr.bf16.gmra.mrb[0].mxu0 %v4702
    %v4813 = vpop.f32.mrb[0].mxu0
    %v4814 = vadd.f32 0.0, %v4813
    %v4815 = vpop.f32.mrb[0].mxu0
    %v4816 = vadd.f32 0.0, %v4815
    %v4817 = vpop.f32.mrb[0].mxu0
    %v4818 = vadd.f32 0.0, %v4817
    %v4819 = vpop.f32.mrb[0].mxu0
    %v4820 = vadd.f32 0.0, %v4819
    %4821 = vdwg.mxu0
    %v4822 = vadd.f32 %v4600, %v4751
    %v4823 = vadd.f32 %v4601, %v4753
    %v4824 = vadd.f32 %v4602, %v4804
    %v4825 = vadd.f32 %v4603, %v4806
    %v4826 = vadd.f32 %v4604, %v4755
    %v4827 = vadd.f32 %v4605, %v4757
    %v4828 = vadd.f32 %v4606, %v4808
    %v4829 = vadd.f32 %v4607, %v4810
    %v4830 = vadd.f32 %v4608, %v4761
    %v4831 = vadd.f32 %v4609, %v4763
    %v4832 = vadd.f32 %v4610, %v4814
    %v4833 = vadd.f32 %v4611, %v4816
    %v4834 = vadd.f32 %v4612, %v4765
    %v4835 = vadd.f32 %v4613, %v4767
    %v4836 = vadd.f32 %v4614, %v4818
    %v4837 = vadd.f32 %v4615, %v4820
    %4838 = vrot.lane.b32.xlu0 %v3105, 111
    %v4839 = vpop.permute.xlu0 %4838
    %4840 = vrot.lane.b32.xlu0 %v3109, 111
    %v4841 = vpop.permute.xlu0 %4840
    %4842 = vrot.lane.b32.xlu0 %v3113, 111
    %v4843 = vpop.permute.xlu0 %4842
    %4844 = vrot.lane.b32.xlu0 %v3117, 111
    %v4845 = vpop.permute.xlu0 %4844
    %4846 = vrot.lane.b32.xlu0 %v3106, 111
    %v4847 = vpop.permute.xlu0 %4846
    %4848 = vrot.lane.b32.xlu0 %v3110, 111
    %v4849 = vpop.permute.xlu0 %4848
    %4850 = vrot.lane.b32.xlu0 %v3114, 111
    %v4851 = vpop.permute.xlu0 %4850
    %4852 = vrot.lane.b32.xlu0 %v3118, 111
    %v4853 = vpop.permute.xlu0 %4852
    %4854 = vrot.lane.b32.xlu0 %v3107, 111
    %v4855 = vpop.permute.xlu0 %4854
    %4856 = vrot.lane.b32.xlu0 %v3111, 111
    %v4857 = vpop.permute.xlu0 %4856
    %4858 = vrot.lane.b32.xlu0 %v3115, 111
    %v4859 = vpop.permute.xlu0 %4858
    %4860 = vrot.lane.b32.xlu0 %v3119, 111
    %v4861 = vpop.permute.xlu0 %4860
    %4862 = vrot.lane.b32.xlu0 %v3108, 111
    %v4863 = vpop.permute.xlu0 %4862
    %4864 = vrot.lane.b32.xlu0 %v3112, 111
    %v4865 = vpop.permute.xlu0 %4864
    %4866 = vrot.lane.b32.xlu0 %v3116, 111
    %v4867 = vpop.permute.xlu0 %4866
    %4868 = vrot.lane.b32.xlu0 %v3120, 111
    %v4869 = vpop.permute.xlu0 %4868
    %v4870 = vsel %vm2372, %v4855, %v4863
    %v4871 = vsel %vm2372, %v4857, %v4865
    %v4872 = vsel %vm2372, %v4859, %v4867
    %v4873 = vsel %vm2372, %v4861, %v4869
    %v4874 = vsel %vm2372, %v4847, %v4855
    %v4875 = vsel %vm2372, %v4849, %v4857
    %v4876 = vsel %vm2372, %v4851, %v4859
    %v4877 = vsel %vm2372, %v4853, %v4861
    %v4878 = vsel %vm2372, %v4839, %v4847
    %v4879 = vsel %vm2372, %v4841, %v4849
    %v4880 = vsel %vm2372, %v4843, %v4851
    %v4881 = vsel %vm2372, %v4845, %v4853
    %v4882 = vsel %vm2372, %v4863, %v4839
    %v4883 = vsel %vm2372, %v4865, %v4841
    %v4884 = vsel %vm2372, %v4867, %v4843
    %v4885 = vsel %vm2372, %v4869, %v4845
    %v4886 = vmul.f32 %v4878, %v2393
    %v4887 = vmul.f32 %v4874, %v2397
    %v4888 = vmul.f32 %v4870, %v2401
    %v4889 = vmul.f32 %v4882, %v2405
    %v4890 = vmul.f32 %v4879, %v2393
    %v4891 = vmul.f32 %v4875, %v2397
    %v4892 = vmul.f32 %v4871, %v2401
    %v4893 = vmul.f32 %v4883, %v2405
    %v4894 = vmul.f32 %v4880, %v2393
    %v4895 = vmul.f32 %v4876, %v2397
    %v4896 = vmul.f32 %v4872, %v2401
    %v4897 = vmul.f32 %v4884, %v2405
    %v4898 = vmul.f32 %v4881, %v2393
    %v4899 = vmul.f32 %v4877, %v2397
    %v4900 = vmul.f32 %v4873, %v2401
    %v4901 = vmul.f32 %v4885, %v2405
    %v4902 = vpack.c.bf16 %v4890, %v4886
    %v4903 = vpack.c.bf16 %v4891, %v4887
    %v4904 = vpack.c.bf16 %v4892, %v4888
    %v4905 = vpack.c.bf16 %v4893, %v4889
    %v4906 = vpack.c.bf16 %v4898, %v4894
    %v4907 = vpack.c.bf16 %v4899, %v4895
    %v4908 = vpack.c.bf16 %v4900, %v4896
    %v4909 = vpack.c.bf16 %v4901, %v4897
    %v4914 = vunpack.c.l.b16 %v3154
    %v4915 = vunpack.c.l.b16 %v3155
    %v4916 = vunpack.c.l.b16 %v3156
    %v4917 = vunpack.c.l.b16 %v3157
    %v4918 = vpack.c.b16 %v4915, %v4914
    %v4919 = vpack.c.b16 %v4917, %v4916
    %v4921 = vsel %vm616, %v4918, 0
    %v4924 = vsel %vm616, %v4919, 0
    %v4927 = vsel %vm623, %v4906, 0
    %v4930 = vsel %vm623, %v4907, 0
    %v4933 = vsel %vm623, %v4908, 0
    %v4936 = vsel %vm623, %v4909, 0
    %4938 = vmatprep.subr.bf16.mxu0 %v4903
    %4939 = vmatpush1.bf16.msra.mxu0 %v4902
    %4940 = vmatprep.subr.bf16.mxu0 %v4930
    %4941 = vmatpush1.bf16.msra.mxu0 %v4927
    %4942 = vmatprep.subr.bf16.mxu0 0
    %4943 = vmatpush1.bf16.msra.mxu0 0
    %4944 = vmatprep.subr.bf16.mxu0 0
    %4945 = vmatpush1.bf16.msra.mxu0 0
    %4946 = vmatprep.subr.bf16.mxu0 0
    %4947 = vmatpush1.bf16.msra.mxu0 0
    %4948 = vmatprep.subr.bf16.mxu0 0
    %4949 = vmatpush1.bf16.msra.mxu0 0
    %4950 = vmatprep.subr.bf16.mxu0 0
    %4951 = vmatpush1.bf16.msra.mxu0 0
    %4952 = vmatprep.subr.bf16.mxu0 0
    %4953 = vmatpush1.bf16.msra.mxu0 0
    %4954 = vmatprep.subr.bf16.mxu0 0
    %4955 = vmatpush1.bf16.msra.mxu0 0
    %4956 = vmatprep.subr.bf16.mxu0 0
    %4957 = vmatpush1.bf16.msra.mxu0 0
    %4958 = vmatprep.subr.bf16.mxu0 0
    %4959 = vmatpush1.bf16.msra.mxu0 0
    %4960 = vmatprep.subr.bf16.mxu0 0
    %4961 = vmatpush1.bf16.msra.mxu0 0
    %4962 = vmatprep.subr.bf16.mxu0 0
    %4963 = vmatpush1.bf16.msra.mxu0 0
    %4964 = vmatprep.subr.bf16.mxu0 0
    %4965 = vmatpush1.bf16.msra.mxu0 0
    %4966 = vmatprep.subr.bf16.mxu0 0
    %4967 = vmatpush1.bf16.msra.mxu0 0
    %4968 = vmatprep.subr.bf16.mxu0 0
    %4969 = vmatpush1.bf16.msra.mxu0 0
    %4970 = vmatprep.mubr.bf16.mxu0 0
    %4971 = vmatmul.mubr.bf16.gmra.mrb[0].mxu0 %v4921
    %v4972 = vpop.f32.mrb[0].mxu0
    %v4973 = vadd.f32 0.0, %v4972
    %v4974 = vpop.f32.mrb[0].mxu0
    %v4975 = vadd.f32 0.0, %v4974
    %v4976 = vpop.f32.mrb[0].mxu0
    %v4977 = vadd.f32 0.0, %v4976
    %v4978 = vpop.f32.mrb[0].mxu0
    %v4979 = vadd.f32 0.0, %v4978
    %4980 = vmatprep.mubr.bf16.mxu0 0
    %4981 = vmatmul.mubr.bf16.gmra.mrb[0].mxu0 %v4924
    %v4982 = vpop.f32.mrb[0].mxu0
    %v4983 = vadd.f32 0.0, %v4982
    %v4984 = vpop.f32.mrb[0].mxu0
    %v4985 = vadd.f32 0.0, %v4984
    %v4986 = vpop.f32.mrb[0].mxu0
    %v4987 = vadd.f32 0.0, %v4986
    %v4988 = vpop.f32.mrb[0].mxu0
    %v4989 = vadd.f32 0.0, %v4988
    %4990 = vdwg.mxu0
    %4991 = vmatprep.subr.bf16.mxu0 %v4905
    %4992 = vmatpush1.bf16.msra.mxu0 %v4904
    %4993 = vmatprep.subr.bf16.mxu0 %v4936
    %4994 = vmatpush1.bf16.msra.mxu0 %v4933
    %4995 = vmatprep.subr.bf16.mxu0 0
    %4996 = vmatpush1.bf16.msra.mxu0 0
    %4997 = vmatprep.subr.bf16.mxu0 0
    %4998 = vmatpush1.bf16.msra.mxu0 0
    %4999 = vmatprep.subr.bf16.mxu0 0
    %5000 = vmatpush1.bf16.msra.mxu0 0
    %5001 = vmatprep.subr.bf16.mxu0 0
    %5002 = vmatpush1.bf16.msra.mxu0 0
    %5003 = vmatprep.subr.bf16.mxu0 0
    %5004 = vmatpush1.bf16.msra.mxu0 0
    %5005 = vmatprep.subr.bf16.mxu0 0
    %5006 = vmatpush1.bf16.msra.mxu0 0
    %5007 = vmatprep.subr.bf16.mxu0 0
    %5008 = vmatpush1.bf16.msra.mxu0 0
    %5009 = vmatprep.subr.bf16.mxu0 0
    %5010 = vmatpush1.bf16.msra.mxu0 0
    %5011 = vmatprep.subr.bf16.mxu0 0
    %5012 = vmatpush1.bf16.msra.mxu0 0
    %5013 = vmatprep.subr.bf16.mxu0 0
    %5014 = vmatpush1.bf16.msra.mxu0 0
    %5015 = vmatprep.subr.bf16.mxu0 0
    %5016 = vmatpush1.bf16.msra.mxu0 0
    %5017 = vmatprep.subr.bf16.mxu0 0
    %5018 = vmatpush1.bf16.msra.mxu0 0
    %5019 = vmatprep.subr.bf16.mxu0 0
    %5020 = vmatpush1.bf16.msra.mxu0 0
    %5021 = vmatprep.subr.bf16.mxu0 0
    %5022 = vmatpush1.bf16.msra.mxu0 0
    %5023 = vmatprep.mubr.bf16.mxu0 0
    %5024 = vmatmul.mubr.bf16.gmra.mrb[0].mxu0 %v4921
    %v5025 = vpop.f32.mrb[0].mxu0
    %v5026 = vadd.f32 0.0, %v5025
    %v5027 = vpop.f32.mrb[0].mxu0
    %v5028 = vadd.f32 0.0, %v5027
    %v5029 = vpop.f32.mrb[0].mxu0
    %v5030 = vadd.f32 0.0, %v5029
    %v5031 = vpop.f32.mrb[0].mxu0
    %v5032 = vadd.f32 0.0, %v5031
    %5033 = vmatprep.mubr.bf16.mxu0 0
    %5034 = vmatmul.mubr.bf16.gmra.mrb[0].mxu0 %v4924
    %v5035 = vpop.f32.mrb[0].mxu0
    %v5036 = vadd.f32 0.0, %v5035
    %v5037 = vpop.f32.mrb[0].mxu0
    %v5038 = vadd.f32 0.0, %v5037
    %v5039 = vpop.f32.mrb[0].mxu0
    %v5040 = vadd.f32 0.0, %v5039
    %v5041 = vpop.f32.mrb[0].mxu0
    %v5042 = vadd.f32 0.0, %v5041
    %5043 = vdwg.mxu0
    %v5044 = vadd.f32 %v4822, %v4973
    %v5045 = vadd.f32 %v4823, %v4975
    %v5046 = vadd.f32 %v4824, %v5026
    %v5047 = vadd.f32 %v4825, %v5028
    %v5048 = vadd.f32 %v4826, %v4977
    %v5049 = vadd.f32 %v4827, %v4979
    %v5050 = vadd.f32 %v4828, %v5030
    %v5051 = vadd.f32 %v4829, %v5032
    %v5052 = vadd.f32 %v4830, %v4983
    %v5053 = vadd.f32 %v4831, %v4985
    %v5054 = vadd.f32 %v4832, %v5036
    %v5055 = vadd.f32 %v4833, %v5038
    %v5056 = vadd.f32 %v4834, %v4987
    %v5057 = vadd.f32 %v4835, %v4989
    %v5058 = vadd.f32 %v4836, %v5040
    %v5059 = vadd.f32 %v4837, %v5042
    %s5060 = scalar_lea.vmem %s7, 32
    %v5061 = vld [vmem:[%s5060] sm:$0xff]
    %v5062 = vld [vmem:[%s5060 + $0x8] sm:$0xff]
    %v5063 = vld [vmem:[%s5060 + $0x10] sm:$0xff]
    %v5064 = vld [vmem:[%s5060 + $0x18] sm:$0x3f]
    %s5065 = scalar_lea.vmem %s8, 32
    %v5066 = vld [vmem:[%s5065] sm:$0xff]
    %v5067 = vld [vmem:[%s5065 + $0x8] sm:$0xff]
    %v5068 = vld [vmem:[%s5065 + $0x10] sm:$0xff]
    %v5069 = vld [vmem:[%s5065 + $0x18] sm:$0x3f]
    %v5070 = vadd.f32 %v5044, %v5045
    %v5071 = vadd.f32 %v5070, %v5046
    %v5072 = vadd.f32 %v5071, %v5047
    %5073 = vadd.xlane.f32.xlu0 %v5072
    %v5074 = vpop.xlane.xlu0 %5073
    %v5075 = vadd.f32 %v5048, %v5049
    %v5076 = vadd.f32 %v5075, %v5050
    %v5077 = vadd.f32 %v5076, %v5051
    %5078 = vadd.xlane.f32.xlu0 %v5077
    %v5079 = vpop.xlane.xlu0 %5078
    %v5080 = vadd.f32 %v5052, %v5053
    %v5081 = vadd.f32 %v5080, %v5054
    %v5082 = vadd.f32 %v5081, %v5055
    %5083 = vadd.xlane.f32.xlu0 %v5082
    %v5084 = vpop.xlane.xlu0 %5083
    %v5085 = vsel %vm283, %v5056, 0.0
    %v5086 = vsel %vm283, %v5057, 0.0
    %v5087 = vadd.f32 %v5085, %v5086
    %v5088 = vsel %vm283, %v5058, 0.0
    %v5089 = vadd.f32 %v5087, %v5088
    %v5090 = vsel %vm283, %v5059, 0.0
    %v5091 = vadd.f32 %v5089, %v5090
    %5092 = vadd.xlane.f32.xlu0 %v5091
    %v5093 = vpop.xlane.xlu0 %5092
    %v5094 = vmul.f32 %v5074, %v293
    %v5095 = vmul.f32 %v5079, %v293
    %v5096 = vmul.f32 %v5084, %v293
    %v5097 = vmul.f32 %v5093, %v293
    %v5098 = vsub.f32 %v5044, %v5094
    %v5099 = vsub.f32 %v5045, %v5094
    %v5100 = vsub.f32 %v5046, %v5094
    %v5101 = vsub.f32 %v5047, %v5094
    %v5102 = vsub.f32 %v5048, %v5095
    %v5103 = vsub.f32 %v5049, %v5095
    %v5104 = vsub.f32 %v5050, %v5095
    %v5105 = vsub.f32 %v5051, %v5095
    %v5106 = vsub.f32 %v5052, %v5096
    %v5107 = vsub.f32 %v5053, %v5096
    %v5108 = vsub.f32 %v5054, %v5096
    %v5109 = vsub.f32 %v5055, %v5096
    %v5110 = vsub.f32 %v5056, %v5097
    %v5111 = vsub.f32 %v5057, %v5097
    %v5112 = vsub.f32 %v5058, %v5097
    %v5113 = vsub.f32 %v5059, %v5097
    %v5114 = vmul.f32 %v5098, %v5098
    %v5115 = vmul.f32 %v5099, %v5099
    %v5116 = vmul.f32 %v5100, %v5100
    %v5117 = vmul.f32 %v5101, %v5101
    %v5118 = vmul.f32 %v5102, %v5102
    %v5119 = vmul.f32 %v5103, %v5103
    %v5120 = vmul.f32 %v5104, %v5104
    %v5121 = vmul.f32 %v5105, %v5105
    %v5122 = vmul.f32 %v5106, %v5106
    %v5123 = vmul.f32 %v5107, %v5107
    %v5124 = vmul.f32 %v5108, %v5108
    %v5125 = vmul.f32 %v5109, %v5109
    %v5126 = vmul.f32 %v5110, %v5110
    %v5127 = vmul.f32 %v5111, %v5111
    %v5128 = vmul.f32 %v5112, %v5112
    %v5129 = vmul.f32 %v5113, %v5113
    %v5130 = vadd.f32 %v5114, %v5115
    %v5131 = vadd.f32 %v5130, %v5116
    %v5132 = vadd.f32 %v5131, %v5117
    %5133 = vadd.xlane.f32.xlu0 %v5132
    %v5134 = vpop.xlane.xlu0 %5133
    %v5135 = vadd.f32 %v5118, %v5119
    %v5136 = vadd.f32 %v5135, %v5120
    %v5137 = vadd.f32 %v5136, %v5121
    %5138 = vadd.xlane.f32.xlu0 %v5137
    %v5139 = vpop.xlane.xlu0 %5138
    %v5140 = vadd.f32 %v5122, %v5123
    %v5141 = vadd.f32 %v5140, %v5124
    %v5142 = vadd.f32 %v5141, %v5125
    %5143 = vadd.xlane.f32.xlu0 %v5142
    %v5144 = vpop.xlane.xlu0 %5143
    %v5145 = vsel %vm283, %v5126, 0.0
    %v5146 = vsel %vm283, %v5127, 0.0
    %v5147 = vadd.f32 %v5145, %v5146
    %v5148 = vsel %vm283, %v5128, 0.0
    %v5149 = vadd.f32 %v5147, %v5148
    %v5150 = vsel %vm283, %v5129, 0.0
    %v5151 = vadd.f32 %v5149, %v5150
    %5152 = vadd.xlane.f32.xlu0 %v5151
    %v5153 = vpop.xlane.xlu0 %5152
    %v5154 = vmul.f32 %v5134, %v293
    %v5155 = vmul.f32 %v5139, %v293
    %v5156 = vmul.f32 %v5144, %v293
    %v5157 = vmul.f32 %v5153, %v293
    %v5158 = vadd.f32 %v5154, 1e-05
    %v5159 = vadd.f32 %v5155, 1e-05
    %v5160 = vadd.f32 %v5156, 1e-05
    %v5161 = vadd.f32 %v5157, 1e-05
    %v5162 = vrsqrt.pop %v5158
    %v5163 = vrsqrt.pop %v5159
    %v5164 = vrsqrt.pop %v5160
    %v5165 = vrsqrt.pop %v5161
    %v5166 = vmul.f32 %v5061, %v5162
    %v5167 = vmul.f32 %v5062, %v5163
    %v5168 = vmul.f32 %v5063, %v5164
    %v5169 = vmul.f32 %v5064, %v5165
    %5171 = vset.pattern.permute.xlu0 0
    %5172 = vperm.xlu0 %5171, %v5166
    %v5173 = vpop.permute.xlu0 %5172
    %5176 = vset.pattern.permute.xlu0 0
    %5177 = vperm.xlu0 %5176, %v5167
    %v5178 = vpop.permute.xlu0 %5177
    %5181 = vset.pattern.permute.xlu0 0
    %5182 = vperm.xlu0 %5181, %v5168
    %v5183 = vpop.permute.xlu0 %5182
    %5186 = vset.pattern.permute.xlu0 0
    %5187 = vperm.xlu0 %5186, %v5169
    %v5188 = vpop.permute.xlu0 %5187
    %v5190 = vmul.f32 %v5044, %v5173
    %v5191 = vmul.f32 %v5045, %v5173
    %v5192 = vmul.f32 %v5046, %v5173
    %v5193 = vmul.f32 %v5047, %v5173
    %v5194 = vmul.f32 %v5048, %v5178
    %v5195 = vmul.f32 %v5049, %v5178
    %v5196 = vmul.f32 %v5050, %v5178
    %v5197 = vmul.f32 %v5051, %v5178
    %v5198 = vmul.f32 %v5052, %v5183
    %v5199 = vmul.f32 %v5053, %v5183
    %v5200 = vmul.f32 %v5054, %v5183
    %v5201 = vmul.f32 %v5055, %v5183
    %v5202 = vmul.f32 %v5056, %v5188
    %v5203 = vmul.f32 %v5057, %v5188
    %v5204 = vmul.f32 %v5058, %v5188
    %v5205 = vmul.f32 %v5059, %v5188
    %v5206 = vmul.f32 %v5094, %v5166
    %v5207 = vmul.f32 %v5095, %v5167
    %v5208 = vmul.f32 %v5096, %v5168
    %v5209 = vmul.f32 %v5097, %v5169
    %v5210 = vsub.f32 %v5066, %v5206
    %v5211 = vsub.f32 %v5067, %v5207
    %v5212 = vsub.f32 %v5068, %v5208
    %v5213 = vsub.f32 %v5069, %v5209
    %5215 = vset.pattern.permute.xlu0 0
    %5216 = vperm.xlu0 %5215, %v5210
    %v5217 = vpop.permute.xlu0 %5216
    %5220 = vset.pattern.permute.xlu0 0
    %5221 = vperm.xlu0 %5220, %v5211
    %v5222 = vpop.permute.xlu0 %5221
    %5225 = vset.pattern.permute.xlu0 0
    %5226 = vperm.xlu0 %5225, %v5212
    %v5227 = vpop.permute.xlu0 %5226
    %5230 = vset.pattern.permute.xlu0 0
    %5231 = vperm.xlu0 %5230, %v5213
    %v5232 = vpop.permute.xlu0 %5231
    %v5234 = vadd.f32 %v5190, %v5217
    %v5235 = vadd.f32 %v5191, %v5217
    %v5236 = vadd.f32 %v5192, %v5217
    %v5237 = vadd.f32 %v5193, %v5217
    %v5238 = vadd.f32 %v5194, %v5222
    %v5239 = vadd.f32 %v5195, %v5222
    %v5240 = vadd.f32 %v5196, %v5222
    %v5241 = vadd.f32 %v5197, %v5222
    %v5242 = vadd.f32 %v5198, %v5227
    %v5243 = vadd.f32 %v5199, %v5227
    %v5244 = vadd.f32 %v5200, %v5227
    %v5245 = vadd.f32 %v5201, %v5227
    %v5246 = vadd.f32 %v5202, %v5232
    %v5247 = vadd.f32 %v5203, %v5232
    %v5248 = vadd.f32 %v5204, %v5232
    %v5249 = vadd.f32 %v5205, %v5232
    %s5250 = scalar_lea.vmem %s3, 32
    %v5251 = vld [vmem:[%s5250] sm:$0xf]
    %v5252 = vld [vmem:[%s5250 + $0x4] sm:$0xf]
    %v5253 = vld [vmem:[%s5250 + $0x8] sm:$0xf]
    %v5254 = vld [vmem:[%s5250 + $0xc] sm:$0x7]
    %v5259 = vunpack.c.l.b16 %v5251
    %v5260 = vunpack.c.l.b16 %v5252
    %v5261 = vunpack.c.l.b16 %v5253
    %v5262 = vunpack.c.l.b16 %v5254
    %v5263 = vpack.c.b16 %v5260, %v5259
    %v5264 = vpack.c.b16 %v5262, %v5261
    %v5266 = vsel %vm147, %v5263, 0
    %v5269 = vsel %vm147, %v5264, 0
    %5271 = vmatprep.subr.bf16.mxu0 %v110
    %5272 = vmatpush1.bf16.msra.mxu0 %v109
    %5273 = vmatprep.subr.bf16.mxu0 %v114
    %5274 = vmatpush1.bf16.msra.mxu0 %v113
    %5275 = vmatprep.subr.bf16.mxu0 %v118
    %5276 = vmatpush1.bf16.msra.mxu0 %v117
    %5277 = vmatprep.subr.bf16.mxu0 %v122
    %5278 = vmatpush1.bf16.msra.mxu0 %v121
    %5279 = vmatprep.subr.bf16.mxu0 0
    %5280 = vmatpush1.bf16.msra.mxu0 0
    %5281 = vmatprep.subr.bf16.mxu0 0
    %5282 = vmatpush1.bf16.msra.mxu0 0
    %5283 = vmatprep.subr.bf16.mxu0 0
    %5284 = vmatpush1.bf16.msra.mxu0 0
    %5285 = vmatprep.subr.bf16.mxu0 0
    %5286 = vmatpush1.bf16.msra.mxu0 0
    %5287 = vmatprep.subr.bf16.mxu0 0
    %5288 = vmatpush1.bf16.msra.mxu0 0
    %5289 = vmatprep.subr.bf16.mxu0 0
    %5290 = vmatpush1.bf16.msra.mxu0 0
    %5291 = vmatprep.subr.bf16.mxu0 0
    %5292 = vmatpush1.bf16.msra.mxu0 0
    %5293 = vmatprep.subr.bf16.mxu0 0
    %5294 = vmatpush1.bf16.msra.mxu0 0
    %5295 = vmatprep.subr.bf16.mxu0 0
    %5296 = vmatpush1.bf16.msra.mxu0 0
    %5297 = vmatprep.subr.bf16.mxu0 0
    %5298 = vmatpush1.bf16.msra.mxu0 0
    %5299 = vmatprep.subr.bf16.mxu0 0
    %5300 = vmatpush1.bf16.msra.mxu0 0
    %5301 = vmatprep.subr.bf16.mxu0 0
    %5302 = vmatpush1.bf16.msra.mxu0 0
    %5303 = vmatprep.mubr.bf16.mxu0 0
    %5304 = vmatmul.mubr.bf16.gmra.mrb[0].mxu0 %v5266
    %v5305 = vpop.f32.mrb[0].mxu0
    %v5306 = vadd.f32 0.0, %v5305
    %v5307 = vpop.f32.mrb[0].mxu0
    %v5308 = vadd.f32 0.0, %v5307
    %v5309 = vpop.f32.mrb[0].mxu0
    %v5310 = vadd.f32 0.0, %v5309
    %v5311 = vpop.f32.mrb[0].mxu0
    %v5312 = vadd.f32 0.0, %v5311
    %5313 = vmatprep.mubr.bf16.mxu0 0
    %5314 = vmatmul.mubr.bf16.gmra.mrb[0].mxu0 %v5269
    %v5315 = vpop.f32.mrb[0].mxu0
    %v5316 = vadd.f32 0.0, %v5315
    %v5317 = vpop.f32.mrb[0].mxu0
    %v5318 = vadd.f32 0.0, %v5317
    %v5319 = vpop.f32.mrb[0].mxu0
    %v5320 = vadd.f32 0.0, %v5319
    %v5321 = vpop.f32.mrb[0].mxu0
    %v5322 = vadd.f32 0.0, %v5321
    %5323 = vdwg.mxu0
    %5324 = vmatprep.subr.bf16.mxu0 %v112
    %5325 = vmatpush1.bf16.msra.mxu0 %v111
    %5326 = vmatprep.subr.bf16.mxu0 %v116
    %5327 = vmatpush1.bf16.msra.mxu0 %v115
    %5328 = vmatprep.subr.bf16.mxu0 %v120
    %5329 = vmatpush1.bf16.msra.mxu0 %v119
    %5330 = vmatprep.subr.bf16.mxu0 %v124
    %5331 = vmatpush1.bf16.msra.mxu0 %v123
    %5332 = vmatprep.subr.bf16.mxu0 0
    %5333 = vmatpush1.bf16.msra.mxu0 0
    %5334 = vmatprep.subr.bf16.mxu0 0
    %5335 = vmatpush1.bf16.msra.mxu0 0
    %5336 = vmatprep.subr.bf16.mxu0 0
    %5337 = vmatpush1.bf16.msra.mxu0 0
    %5338 = vmatprep.subr.bf16.mxu0 0
    %5339 = vmatpush1.bf16.msra.mxu0 0
    %5340 = vmatprep.subr.bf16.mxu0 0
    %5341 = vmatpush1.bf16.msra.mxu0 0
    %5342 = vmatprep.subr.bf16.mxu0 0
    %5343 = vmatpush1.bf16.msra.mxu0 0
    %5344 = vmatprep.subr.bf16.mxu0 0
    %5345 = vmatpush1.bf16.msra.mxu0 0
    %5346 = vmatprep.subr.bf16.mxu0 0
    %5347 = vmatpush1.bf16.msra.mxu0 0
    %5348 = vmatprep.subr.bf16.mxu0 0
    %5349 = vmatpush1.bf16.msra.mxu0 0
    %5350 = vmatprep.subr.bf16.mxu0 0
    %5351 = vmatpush1.bf16.msra.mxu0 0
    %5352 = vmatprep.subr.bf16.mxu0 0
    %5353 = vmatpush1.bf16.msra.mxu0 0
    %5354 = vmatprep.subr.bf16.mxu0 0
    %5355 = vmatpush1.bf16.msra.mxu0 0
    %5356 = vmatprep.mubr.bf16.mxu0 0
    %5357 = vmatmul.mubr.bf16.gmra.mrb[0].mxu0 %v5266
    %v5358 = vpop.f32.mrb[0].mxu0
    %v5359 = vadd.f32 0.0, %v5358
    %v5360 = vpop.f32.mrb[0].mxu0
    %v5361 = vadd.f32 0.0, %v5360
    %v5362 = vpop.f32.mrb[0].mxu0
    %v5363 = vadd.f32 0.0, %v5362
    %v5364 = vpop.f32.mrb[0].mxu0
    %v5365 = vadd.f32 0.0, %v5364
    %5366 = vmatprep.mubr.bf16.mxu0 0
    %5367 = vmatmul.mubr.bf16.gmra.mrb[0].mxu0 %v5269
    %v5368 = vpop.f32.mrb[0].mxu0
    %v5369 = vadd.f32 0.0, %v5368
    %v5370 = vpop.f32.mrb[0].mxu0
    %v5371 = vadd.f32 0.0, %v5370
    %v5372 = vpop.f32.mrb[0].mxu0
    %v5373 = vadd.f32 0.0, %v5372
    %v5374 = vpop.f32.mrb[0].mxu0
    %v5375 = vadd.f32 0.0, %v5374
    %5376 = vdwg.mxu0
    %s5377 = scalar_lea.vmem %s4, 64
    %v5378 = vld [vmem:[%s5377] sm:$0xff]
    %v5379 = vld [vmem:[%s5377 + $0x8] sm:$0xff]
    %v5380 = vld [vmem:[%s5377 + $0x10] sm:$0xff]
    %v5381 = vld [vmem:[%s5377 + $0x18] sm:$0x3f]
    %s5382 = scalar_lea.vmem %s5, 64
    %v5383 = vld [vmem:[%s5382] sm:$0xff]
    %v5384 = vld [vmem:[%s5382 + $0x8] sm:$0xff]
    %v5385 = vld [vmem:[%s5382 + $0x10] sm:$0xff]
    %v5386 = vld [vmem:[%s5382 + $0x18] sm:$0x3f]
    %v5387 = vadd.f32 %v5306, %v5308
    %v5388 = vadd.f32 %v5387, %v5359
    %v5389 = vadd.f32 %v5388, %v5361
    %5390 = vadd.xlane.f32.xlu0 %v5389
    %v5391 = vpop.xlane.xlu0 %5390
    %v5392 = vadd.f32 %v5310, %v5312
    %v5393 = vadd.f32 %v5392, %v5363
    %v5394 = vadd.f32 %v5393, %v5365
    %5395 = vadd.xlane.f32.xlu0 %v5394
    %v5396 = vpop.xlane.xlu0 %5395
    %v5397 = vadd.f32 %v5316, %v5318
    %v5398 = vadd.f32 %v5397, %v5369
    %v5399 = vadd.f32 %v5398, %v5371
    %5400 = vadd.xlane.f32.xlu0 %v5399
    %v5401 = vpop.xlane.xlu0 %5400
    %v5402 = vsel %vm283, %v5320, 0.0
    %v5403 = vsel %vm283, %v5322, 0.0
    %v5404 = vadd.f32 %v5402, %v5403
    %v5405 = vsel %vm283, %v5373, 0.0
    %v5406 = vadd.f32 %v5404, %v5405
    %v5407 = vsel %vm283, %v5375, 0.0
    %v5408 = vadd.f32 %v5406, %v5407
    %5409 = vadd.xlane.f32.xlu0 %v5408
    %v5410 = vpop.xlane.xlu0 %5409
    %v5411 = vmul.f32 %v5391, %v293
    %v5412 = vmul.f32 %v5396, %v293
    %v5413 = vmul.f32 %v5401, %v293
    %v5414 = vmul.f32 %v5410, %v293
    %v5415 = vsub.f32 %v5306, %v5411
    %v5416 = vsub.f32 %v5308, %v5411
    %v5417 = vsub.f32 %v5359, %v5411
    %v5418 = vsub.f32 %v5361, %v5411
    %v5419 = vsub.f32 %v5310, %v5412
    %v5420 = vsub.f32 %v5312, %v5412
    %v5421 = vsub.f32 %v5363, %v5412
    %v5422 = vsub.f32 %v5365, %v5412
    %v5423 = vsub.f32 %v5316, %v5413
    %v5424 = vsub.f32 %v5318, %v5413
    %v5425 = vsub.f32 %v5369, %v5413
    %v5426 = vsub.f32 %v5371, %v5413
    %v5427 = vsub.f32 %v5320, %v5414
    %v5428 = vsub.f32 %v5322, %v5414
    %v5429 = vsub.f32 %v5373, %v5414
    %v5430 = vsub.f32 %v5375, %v5414
    %v5431 = vmul.f32 %v5415, %v5415
    %v5432 = vmul.f32 %v5416, %v5416
    %v5433 = vmul.f32 %v5417, %v5417
    %v5434 = vmul.f32 %v5418, %v5418
    %v5435 = vmul.f32 %v5419, %v5419
    %v5436 = vmul.f32 %v5420, %v5420
    %v5437 = vmul.f32 %v5421, %v5421
    %v5438 = vmul.f32 %v5422, %v5422
    %v5439 = vmul.f32 %v5423, %v5423
    %v5440 = vmul.f32 %v5424, %v5424
    %v5441 = vmul.f32 %v5425, %v5425
    %v5442 = vmul.f32 %v5426, %v5426
    %v5443 = vmul.f32 %v5427, %v5427
    %v5444 = vmul.f32 %v5428, %v5428
    %v5445 = vmul.f32 %v5429, %v5429
    %v5446 = vmul.f32 %v5430, %v5430
    %v5447 = vadd.f32 %v5431, %v5432
    %v5448 = vadd.f32 %v5447, %v5433
    %v5449 = vadd.f32 %v5448, %v5434
    %5450 = vadd.xlane.f32.xlu0 %v5449
    %v5451 = vpop.xlane.xlu0 %5450
    %v5452 = vadd.f32 %v5435, %v5436
    %v5453 = vadd.f32 %v5452, %v5437
    %v5454 = vadd.f32 %v5453, %v5438
    %5455 = vadd.xlane.f32.xlu0 %v5454
    %v5456 = vpop.xlane.xlu0 %5455
    %v5457 = vadd.f32 %v5439, %v5440
    %v5458 = vadd.f32 %v5457, %v5441
    %v5459 = vadd.f32 %v5458, %v5442
    %5460 = vadd.xlane.f32.xlu0 %v5459
    %v5461 = vpop.xlane.xlu0 %5460
    %v5462 = vsel %vm283, %v5443, 0.0
    %v5463 = vsel %vm283, %v5444, 0.0
    %v5464 = vadd.f32 %v5462, %v5463
    %v5465 = vsel %vm283, %v5445, 0.0
    %v5466 = vadd.f32 %v5464, %v5465
    %v5467 = vsel %vm283, %v5446, 0.0
    %v5468 = vadd.f32 %v5466, %v5467
    %5469 = vadd.xlane.f32.xlu0 %v5468
    %v5470 = vpop.xlane.xlu0 %5469
    %v5471 = vmul.f32 %v5451, %v293
    %v5472 = vmul.f32 %v5456, %v293
    %v5473 = vmul.f32 %v5461, %v293
    %v5474 = vmul.f32 %v5470, %v293
    %v5475 = vadd.f32 %v5471, 1e-05
    %v5476 = vadd.f32 %v5472, 1e-05
    %v5477 = vadd.f32 %v5473, 1e-05
    %v5478 = vadd.f32 %v5474, 1e-05
    %v5479 = vrsqrt.pop %v5475
    %v5480 = vrsqrt.pop %v5476
    %v5481 = vrsqrt.pop %v5477
    %v5482 = vrsqrt.pop %v5478
    %v5483 = vmul.f32 %v5378, %v5479
    %v5484 = vmul.f32 %v5379, %v5480
    %v5485 = vmul.f32 %v5380, %v5481
    %v5486 = vmul.f32 %v5381, %v5482
    %5488 = vset.pattern.permute.xlu0 0
    %5489 = vperm.xlu0 %5488, %v5483
    %v5490 = vpop.permute.xlu0 %5489
    %5493 = vset.pattern.permute.xlu0 0
    %5494 = vperm.xlu0 %5493, %v5484
    %v5495 = vpop.permute.xlu0 %5494
    %5498 = vset.pattern.permute.xlu0 0
    %5499 = vperm.xlu0 %5498, %v5485
    %v5500 = vpop.permute.xlu0 %5499
    %5503 = vset.pattern.permute.xlu0 0
    %5504 = vperm.xlu0 %5503, %v5486
    %v5505 = vpop.permute.xlu0 %5504
    %v5507 = vmul.f32 %v5306, %v5490
    %v5508 = vmul.f32 %v5308, %v5490
    %v5509 = vmul.f32 %v5359, %v5490
    %v5510 = vmul.f32 %v5361, %v5490
    %v5511 = vmul.f32 %v5310, %v5495
    %v5512 = vmul.f32 %v5312, %v5495
    %v5513 = vmul.f32 %v5363, %v5495
    %v5514 = vmul.f32 %v5365, %v5495
    %v5515 = vmul.f32 %v5316, %v5500
    %v5516 = vmul.f32 %v5318, %v5500
    %v5517 = vmul.f32 %v5369, %v5500
    %v5518 = vmul.f32 %v5371, %v5500
    %v5519 = vmul.f32 %v5320, %v5505
    %v5520 = vmul.f32 %v5322, %v5505
    %v5521 = vmul.f32 %v5373, %v5505
    %v5522 = vmul.f32 %v5375, %v5505
    %v5523 = vmul.f32 %v5411, %v5483
    %v5524 = vmul.f32 %v5412, %v5484
    %v5525 = vmul.f32 %v5413, %v5485
    %v5526 = vmul.f32 %v5414, %v5486
    %v5527 = vsub.f32 %v5383, %v5523
    %v5528 = vsub.f32 %v5384, %v5524
    %v5529 = vsub.f32 %v5385, %v5525
    %v5530 = vsub.f32 %v5386, %v5526
    %5532 = vset.pattern.permute.xlu0 0
    %5533 = vperm.xlu0 %5532, %v5527
    %v5534 = vpop.permute.xlu0 %5533
    %5537 = vset.pattern.permute.xlu0 0
    %5538 = vperm.xlu0 %5537, %v5528
    %v5539 = vpop.permute.xlu0 %5538
    %5542 = vset.pattern.permute.xlu0 0
    %5543 = vperm.xlu0 %5542, %v5529
    %v5544 = vpop.permute.xlu0 %5543
    %5547 = vset.pattern.permute.xlu0 0
    %5548 = vperm.xlu0 %5547, %v5530
    %v5549 = vpop.permute.xlu0 %5548
    %v5551 = vadd.f32 %v5507, %v5534
    %v5552 = vadd.f32 %v5508, %v5534
    %v5553 = vadd.f32 %v5509, %v5534
    %v5554 = vadd.f32 %v5510, %v5534
    %v5555 = vadd.f32 %v5511, %v5539
    %v5556 = vadd.f32 %v5512, %v5539
    %v5557 = vadd.f32 %v5513, %v5539
    %v5558 = vadd.f32 %v5514, %v5539
    %v5559 = vadd.f32 %v5515, %v5544
    %v5560 = vadd.f32 %v5516, %v5544
    %v5561 = vadd.f32 %v5517, %v5544
    %v5562 = vadd.f32 %v5518, %v5544
    %v5563 = vadd.f32 %v5519, %v5549
    %v5564 = vadd.f32 %v5520, %v5549
    %v5565 = vadd.f32 %v5521, %v5549
    %v5566 = vadd.f32 %v5522, %v5549
    %v5567 = vmax.f32 %v5551, 0.0
    %v5568 = vmax.f32 %v5552, 0.0
    %v5569 = vmax.f32 %v5553, 0.0
    %v5570 = vmax.f32 %v5554, 0.0
    %v5571 = vmax.f32 %v5555, 0.0
    %v5572 = vmax.f32 %v5556, 0.0
    %v5573 = vmax.f32 %v5557, 0.0
    %v5574 = vmax.f32 %v5558, 0.0
    %v5575 = vmax.f32 %v5559, 0.0
    %v5576 = vmax.f32 %v5560, 0.0
    %v5577 = vmax.f32 %v5561, 0.0
    %v5578 = vmax.f32 %v5562, 0.0
    %v5579 = vmax.f32 %v5563, 0.0
    %v5580 = vmax.f32 %v5564, 0.0
    %v5581 = vmax.f32 %v5565, 0.0
    %v5582 = vmax.f32 %v5566, 0.0
    %v5583 = vadd.f32 %v5234, %v5567
    %v5584 = vadd.f32 %v5235, %v5568
    %v5585 = vadd.f32 %v5236, %v5569
    %v5586 = vadd.f32 %v5237, %v5570
    %v5587 = vadd.f32 %v5238, %v5571
    %v5588 = vadd.f32 %v5239, %v5572
    %v5589 = vadd.f32 %v5240, %v5573
    %v5590 = vadd.f32 %v5241, %v5574
    %v5591 = vadd.f32 %v5242, %v5575
    %v5592 = vadd.f32 %v5243, %v5576
    %v5593 = vadd.f32 %v5244, %v5577
    %v5594 = vadd.f32 %v5245, %v5578
    %v5595 = vadd.f32 %v5246, %v5579
    %v5596 = vadd.f32 %v5247, %v5580
    %v5597 = vadd.f32 %v5248, %v5581
    %v5598 = vadd.f32 %v5249, %v5582
    %s5599 = scalar_lea.vmem %s6, 288
    %v5600 = vld [vmem:[%s5599] sm:$0xf]
    %v5601 = vld [vmem:[%s5599 + $0x4] sm:$0xf]
    %v5602 = vld [vmem:[%s5599 + $0x8] sm:$0xf]
    %v5603 = vld [vmem:[%s5599 + $0xc] sm:$0x7]
    %v5604 = vld [vmem:[%s5599 + $0x10] sm:$0xf]
    %v5605 = vld [vmem:[%s5599 + $0x14] sm:$0xf]
    %v5606 = vld [vmem:[%s5599 + $0x18] sm:$0xf]
    %v5607 = vld [vmem:[%s5599 + $0x1c] sm:$0x7]
    %v5608 = vld [vmem:[%s5599 + $0x20] sm:$0xf]
    %v5609 = vld [vmem:[%s5599 + $0x24] sm:$0xf]
    %v5610 = vld [vmem:[%s5599 + $0x28] sm:$0xf]
    %v5611 = vld [vmem:[%s5599 + $0x2c] sm:$0x7]
    %v5612 = vld [vmem:[%s5599 + $0x30] sm:$0xf]
    %v5613 = vld [vmem:[%s5599 + $0x34] sm:$0xf]
    %v5614 = vld [vmem:[%s5599 + $0x38] sm:$0xf]
    %v5615 = vld [vmem:[%s5599 + $0x3c] sm:$0x7]
    %v5616 = vld [vmem:[%s5599 + $0x40] sm:$0xf]
    %v5617 = vld [vmem:[%s5599 + $0x44] sm:$0xf]
    %v5618 = vld [vmem:[%s5599 + $0x48] sm:$0xf]
    %v5619 = vld [vmem:[%s5599 + $0x4c] sm:$0x7]
    %v5620 = vld [vmem:[%s5599 + $0x50] sm:$0xf]
    %v5621 = vld [vmem:[%s5599 + $0x54] sm:$0xf]
    %v5622 = vld [vmem:[%s5599 + $0x58] sm:$0xf]
    %v5623 = vld [vmem:[%s5599 + $0x5c] sm:$0x7]
    %v5624 = vld [vmem:[%s5599 + $0x60] sm:$0xf]
    %v5625 = vld [vmem:[%s5599 + $0x64] sm:$0xf]
    %v5626 = vld [vmem:[%s5599 + $0x68] sm:$0xf]
    %v5627 = vld [vmem:[%s5599 + $0x6c] sm:$0x7]
    %v5628 = vld [vmem:[%s5599 + $0x70] sm:$0xf]
    %v5629 = vld [vmem:[%s5599 + $0x74] sm:$0xf]
    %v5630 = vld [vmem:[%s5599 + $0x78] sm:$0xf]
    %v5631 = vld [vmem:[%s5599 + $0x7c] sm:$0x7]
    %v5632 = vld [vmem:[%s5599 + $0x80] sm:$0xf]
    %v5633 = vld [vmem:[%s5599 + $0x84] sm:$0xf]
    %v5634 = vld [vmem:[%s5599 + $0x88] sm:$0xf]
    %v5635 = vld [vmem:[%s5599 + $0x8c] sm:$0x7]
    %v5636 = vpack.c.bf16 %v5587, %v5583
    %v5637 = vpack.c.bf16 %v5588, %v5584
    %v5638 = vpack.c.bf16 %v5589, %v5585
    %v5639 = vpack.c.bf16 %v5590, %v5586
    %v5640 = vpack.c.bf16 %v5595, %v5591
    %v5641 = vpack.c.bf16 %v5596, %v5592
    %v5642 = vpack.c.bf16 %v5597, %v5593
    %v5643 = vpack.c.bf16 %v5598, %v5594
    %5644 = vrot.lane.b32.xlu0 %v5583, 17
    %v5645 = vpop.permute.xlu0 %5644
    %5646 = vrot.lane.b32.xlu0 %v5587, 17
    %v5647 = vpop.permute.xlu0 %5646
    %5648 = vrot.lane.b32.xlu0 %v5591, 17
    %v5649 = vpop.permute.xlu0 %5648
    %5650 = vrot.lane.b32.xlu0 %v5595, 17
    %v5651 = vpop.permute.xlu0 %5650
    %5652 = vrot.lane.b32.xlu0 %v5584, 17
    %v5653 = vpop.permute.xlu0 %5652
    %5654 = vrot.lane.b32.xlu0 %v5588, 17
    %v5655 = vpop.permute.xlu0 %5654
    %5656 = vrot.lane.b32.xlu0 %v5592, 17
    %v5657 = vpop.permute.xlu0 %5656
    %5658 = vrot.lane.b32.xlu0 %v5596, 17
    %v5659 = vpop.permute.xlu0 %5658
    %5660 = vrot.lane.b32.xlu0 %v5585, 17
    %v5661 = vpop.permute.xlu0 %5660
    %5662 = vrot.lane.b32.xlu0 %v5589, 17
    %v5663 = vpop.permute.xlu0 %5662
    %5664 = vrot.lane.b32.xlu0 %v5593, 17
    %v5665 = vpop.permute.xlu0 %5664
    %5666 = vrot.lane.b32.xlu0 %v5597, 17
    %v5667 = vpop.permute.xlu0 %5666
    %5668 = vrot.lane.b32.xlu0 %v5586, 17
    %v5669 = vpop.permute.xlu0 %5668
    %5670 = vrot.lane.b32.xlu0 %v5590, 17
    %v5671 = vpop.permute.xlu0 %5670
    %5672 = vrot.lane.b32.xlu0 %v5594, 17
    %v5673 = vpop.permute.xlu0 %5672
    %5674 = vrot.lane.b32.xlu0 %v5598, 17
    %v5675 = vpop.permute.xlu0 %5674
    %v5676 = vsel %vm544, %v5661, %v5669
    %v5677 = vsel %vm544, %v5663, %v5671
    %v5678 = vsel %vm544, %v5665, %v5673
    %v5679 = vsel %vm544, %v5667, %v5675
    %v5680 = vsel %vm544, %v5653, %v5661
    %v5681 = vsel %vm544, %v5655, %v5663
    %v5682 = vsel %vm544, %v5657, %v5665
    %v5683 = vsel %vm544, %v5659, %v5667
    %v5684 = vsel %vm544, %v5645, %v5653
    %v5685 = vsel %vm544, %v5647, %v5655
    %v5686 = vsel %vm544, %v5649, %v5657
    %v5687 = vsel %vm544, %v5651, %v5659
    %v5688 = vsel %vm544, %v5669, %v5645
    %v5689 = vsel %vm544, %v5671, %v5647
    %v5690 = vsel %vm544, %v5673, %v5649
    %v5691 = vsel %vm544, %v5675, %v5651
    %v5692 = vmul.f32 %v5688, %v565
    %v5693 = vmul.f32 %v5684, %v569
    %v5694 = vmul.f32 %v5680, %v573
    %v5695 = vmul.f32 %v5676, %v577
    %v5696 = vmul.f32 %v5689, %v565
    %v5697 = vmul.f32 %v5685, %v569
    %v5698 = vmul.f32 %v5681, %v573
    %v5699 = vmul.f32 %v5677, %v577
    %v5700 = vmul.f32 %v5690, %v565
    %v5701 = vmul.f32 %v5686, %v569
    %v5702 = vmul.f32 %v5682, %v573
    %v5703 = vmul.f32 %v5678, %v577
    %v5704 = vmul.f32 %v5691, %v565
    %v5705 = vmul.f32 %v5687, %v569
    %v5706 = vmul.f32 %v5683, %v573
    %v5707 = vmul.f32 %v5679, %v577
    %v5708 = vpack.c.bf16 %v5696, %v5692
    %v5709 = vpack.c.bf16 %v5697, %v5693
    %v5710 = vpack.c.bf16 %v5698, %v5694
    %v5711 = vpack.c.bf16 %v5699, %v5695
    %v5712 = vpack.c.bf16 %v5704, %v5700
    %v5713 = vpack.c.bf16 %v5705, %v5701
    %v5714 = vpack.c.bf16 %v5706, %v5702
    %v5715 = vpack.c.bf16 %v5707, %v5703
    %v5720 = vunpack.c.l.b16 %v5600
    %v5721 = vunpack.c.l.b16 %v5601
    %v5722 = vunpack.c.l.b16 %v5602
    %v5723 = vunpack.c.l.b16 %v5603
    %v5724 = vpack.c.b16 %v5721, %v5720
    %v5725 = vpack.c.b16 %v5723, %v5722
    %v5727 = vsel %vm616, %v5724, 0
    %v5730 = vsel %vm616, %v5725, 0
    %v5733 = vsel %vm623, %v5712, 0
    %v5736 = vsel %vm623, %v5713, 0
    %v5739 = vsel %vm623, %v5714, 0
    %v5742 = vsel %vm623, %v5715, 0
    %5744 = vmatprep.subr.bf16.mxu0 %v5709
    %5745 = vmatpush1.bf16.msra.mxu0 %v5708
    %5746 = vmatprep.subr.bf16.mxu0 %v5736
    %5747 = vmatpush1.bf16.msra.mxu0 %v5733
    %5748 = vmatprep.subr.bf16.mxu0 0
    %5749 = vmatpush1.bf16.msra.mxu0 0
    %5750 = vmatprep.subr.bf16.mxu0 0
    %5751 = vmatpush1.bf16.msra.mxu0 0
    %5752 = vmatprep.subr.bf16.mxu0 0
    %5753 = vmatpush1.bf16.msra.mxu0 0
    %5754 = vmatprep.subr.bf16.mxu0 0
    %5755 = vmatpush1.bf16.msra.mxu0 0
    %5756 = vmatprep.subr.bf16.mxu0 0
    %5757 = vmatpush1.bf16.msra.mxu0 0
    %5758 = vmatprep.subr.bf16.mxu0 0
    %5759 = vmatpush1.bf16.msra.mxu0 0
    %5760 = vmatprep.subr.bf16.mxu0 0
    %5761 = vmatpush1.bf16.msra.mxu0 0
    %5762 = vmatprep.subr.bf16.mxu0 0
    %5763 = vmatpush1.bf16.msra.mxu0 0
    %5764 = vmatprep.subr.bf16.mxu0 0
    %5765 = vmatpush1.bf16.msra.mxu0 0
    %5766 = vmatprep.subr.bf16.mxu0 0
    %5767 = vmatpush1.bf16.msra.mxu0 0
    %5768 = vmatprep.subr.bf16.mxu0 0
    %5769 = vmatpush1.bf16.msra.mxu0 0
    %5770 = vmatprep.subr.bf16.mxu0 0
    %5771 = vmatpush1.bf16.msra.mxu0 0
    %5772 = vmatprep.subr.bf16.mxu0 0
    %5773 = vmatpush1.bf16.msra.mxu0 0
    %5774 = vmatprep.subr.bf16.mxu0 0
    %5775 = vmatpush1.bf16.msra.mxu0 0
    %5776 = vmatprep.mubr.bf16.mxu0 0
    %5777 = vmatmul.mubr.bf16.gmra.mrb[0].mxu0 %v5727
    %v5778 = vpop.f32.mrb[0].mxu0
    %v5779 = vadd.f32 0.0, %v5778
    %v5780 = vpop.f32.mrb[0].mxu0
    %v5781 = vadd.f32 0.0, %v5780
    %v5782 = vpop.f32.mrb[0].mxu0
    %v5783 = vadd.f32 0.0, %v5782
    %v5784 = vpop.f32.mrb[0].mxu0
    %v5785 = vadd.f32 0.0, %v5784
    %5786 = vmatprep.mubr.bf16.mxu0 0
    %5787 = vmatmul.mubr.bf16.gmra.mrb[0].mxu0 %v5730
    %v5788 = vpop.f32.mrb[0].mxu0
    %v5789 = vadd.f32 0.0, %v5788
    %v5790 = vpop.f32.mrb[0].mxu0
    %v5791 = vadd.f32 0.0, %v5790
    %v5792 = vpop.f32.mrb[0].mxu0
    %v5793 = vadd.f32 0.0, %v5792
    %v5794 = vpop.f32.mrb[0].mxu0
    %v5795 = vadd.f32 0.0, %v5794
    %5796 = vdwg.mxu0
    %5797 = vmatprep.subr.bf16.mxu0 %v5711
    %5798 = vmatpush1.bf16.msra.mxu0 %v5710
    %5799 = vmatprep.subr.bf16.mxu0 %v5742
    %5800 = vmatpush1.bf16.msra.mxu0 %v5739
    %5801 = vmatprep.subr.bf16.mxu0 0
    %5802 = vmatpush1.bf16.msra.mxu0 0
    %5803 = vmatprep.subr.bf16.mxu0 0
    %5804 = vmatpush1.bf16.msra.mxu0 0
    %5805 = vmatprep.subr.bf16.mxu0 0
    %5806 = vmatpush1.bf16.msra.mxu0 0
    %5807 = vmatprep.subr.bf16.mxu0 0
    %5808 = vmatpush1.bf16.msra.mxu0 0
    %5809 = vmatprep.subr.bf16.mxu0 0
    %5810 = vmatpush1.bf16.msra.mxu0 0
    %5811 = vmatprep.subr.bf16.mxu0 0
    %5812 = vmatpush1.bf16.msra.mxu0 0
    %5813 = vmatprep.subr.bf16.mxu0 0
    %5814 = vmatpush1.bf16.msra.mxu0 0
    %5815 = vmatprep.subr.bf16.mxu0 0
    %5816 = vmatpush1.bf16.msra.mxu0 0
    %5817 = vmatprep.subr.bf16.mxu0 0
    %5818 = vmatpush1.bf16.msra.mxu0 0
    %5819 = vmatprep.subr.bf16.mxu0 0
    %5820 = vmatpush1.bf16.msra.mxu0 0
    %5821 = vmatprep.subr.bf16.mxu0 0
    %5822 = vmatpush1.bf16.msra.mxu0 0
    %5823 = vmatprep.subr.bf16.mxu0 0
    %5824 = vmatpush1.bf16.msra.mxu0 0
    %5825 = vmatprep.subr.bf16.mxu0 0
    %5826 = vmatpush1.bf16.msra.mxu0 0
    %5827 = vmatprep.subr.bf16.mxu0 0
    %5828 = vmatpush1.bf16.msra.mxu0 0
    %5829 = vmatprep.mubr.bf16.mxu0 0
    %5830 = vmatmul.mubr.bf16.gmra.mrb[0].mxu0 %v5727
    %v5831 = vpop.f32.mrb[0].mxu0
    %v5832 = vadd.f32 0.0, %v5831
    %v5833 = vpop.f32.mrb[0].mxu0
    %v5834 = vadd.f32 0.0, %v5833
    %v5835 = vpop.f32.mrb[0].mxu0
    %v5836 = vadd.f32 0.0, %v5835
    %v5837 = vpop.f32.mrb[0].mxu0
    %v5838 = vadd.f32 0.0, %v5837
    %5839 = vmatprep.mubr.bf16.mxu0 0
    %5840 = vmatmul.mubr.bf16.gmra.mrb[0].mxu0 %v5730
    %v5841 = vpop.f32.mrb[0].mxu0
    %v5842 = vadd.f32 0.0, %v5841
    %v5843 = vpop.f32.mrb[0].mxu0
    %v5844 = vadd.f32 0.0, %v5843
    %v5845 = vpop.f32.mrb[0].mxu0
    %v5846 = vadd.f32 0.0, %v5845
    %v5847 = vpop.f32.mrb[0].mxu0
    %v5848 = vadd.f32 0.0, %v5847
    %5849 = vdwg.mxu0
    %v5854 = vunpack.c.l.b16 %v5616
    %v5855 = vunpack.c.l.b16 %v5617
    %v5856 = vunpack.c.l.b16 %v5618
    %v5857 = vunpack.c.l.b16 %v5619
    %v5858 = vpack.c.b16 %v5855, %v5854
    %v5859 = vpack.c.b16 %v5857, %v5856
    %v5861 = vsel %vm616, %v5858, 0
    %v5864 = vsel %vm616, %v5859, 0
    %v5867 = vsel %vm623, %v5640, 0
    %v5870 = vsel %vm623, %v5641, 0
    %v5873 = vsel %vm623, %v5642, 0
    %v5876 = vsel %vm623, %v5643, 0
    %5878 = vmatprep.subr.bf16.mxu0 %v5637
    %5879 = vmatpush1.bf16.msra.mxu0 %v5636
    %5880 = vmatprep.subr.bf16.mxu0 %v5870
    %5881 = vmatpush1.bf16.msra.mxu0 %v5867
    %5882 = vmatprep.subr.bf16.mxu0 0
    %5883 = vmatpush1.bf16.msra.mxu0 0
    %5884 = vmatprep.subr.bf16.mxu0 0
    %5885 = vmatpush1.bf16.msra.mxu0 0
    %5886 = vmatprep.subr.bf16.mxu0 0
    %5887 = vmatpush1.bf16.msra.mxu0 0
    %5888 = vmatprep.subr.bf16.mxu0 0
    %5889 = vmatpush1.bf16.msra.mxu0 0
    %5890 = vmatprep.subr.bf16.mxu0 0
    %5891 = vmatpush1.bf16.msra.mxu0 0
    %5892 = vmatprep.subr.bf16.mxu0 0
    %5893 = vmatpush1.bf16.msra.mxu0 0
    %5894 = vmatprep.subr.bf16.mxu0 0
    %5895 = vmatpush1.bf16.msra.mxu0 0
    %5896 = vmatprep.subr.bf16.mxu0 0
    %5897 = vmatpush1.bf16.msra.mxu0 0
    %5898 = vmatprep.subr.bf16.mxu0 0
    %5899 = vmatpush1.bf16.msra.mxu0 0
    %5900 = vmatprep.subr.bf16.mxu0 0
    %5901 = vmatpush1.bf16.msra.mxu0 0
    %5902 = vmatprep.subr.bf16.mxu0 0
    %5903 = vmatpush1.bf16.msra.mxu0 0
    %5904 = vmatprep.subr.bf16.mxu0 0
    %5905 = vmatpush1.bf16.msra.mxu0 0
    %5906 = vmatprep.subr.bf16.mxu0 0
    %5907 = vmatpush1.bf16.msra.mxu0 0
    %5908 = vmatprep.subr.bf16.mxu0 0
    %5909 = vmatpush1.bf16.msra.mxu0 0
    %5910 = vmatprep.mubr.bf16.mxu0 0
    %5911 = vmatmul.mubr.bf16.gmra.mrb[0].mxu0 %v5861
    %v5912 = vpop.f32.mrb[0].mxu0
    %v5913 = vadd.f32 %v5779, %v5912
    %v5914 = vpop.f32.mrb[0].mxu0
    %v5915 = vadd.f32 %v5781, %v5914
    %v5916 = vpop.f32.mrb[0].mxu0
    %v5917 = vadd.f32 %v5783, %v5916
    %v5918 = vpop.f32.mrb[0].mxu0
    %v5919 = vadd.f32 %v5785, %v5918
    %5920 = vmatprep.mubr.bf16.mxu0 0
    %5921 = vmatmul.mubr.bf16.gmra.mrb[0].mxu0 %v5864
    %v5922 = vpop.f32.mrb[0].mxu0
    %v5923 = vadd.f32 %v5789, %v5922
    %v5924 = vpop.f32.mrb[0].mxu0
    %v5925 = vadd.f32 %v5791, %v5924
    %v5926 = vpop.f32.mrb[0].mxu0
    %v5927 = vadd.f32 %v5793, %v5926
    %v5928 = vpop.f32.mrb[0].mxu0
    %v5929 = vadd.f32 %v5795, %v5928
    %5930 = vdwg.mxu0
    %5931 = vmatprep.subr.bf16.mxu0 %v5639
    %5932 = vmatpush1.bf16.msra.mxu0 %v5638
    %5933 = vmatprep.subr.bf16.mxu0 %v5876
    %5934 = vmatpush1.bf16.msra.mxu0 %v5873
    %5935 = vmatprep.subr.bf16.mxu0 0
    %5936 = vmatpush1.bf16.msra.mxu0 0
    %5937 = vmatprep.subr.bf16.mxu0 0
    %5938 = vmatpush1.bf16.msra.mxu0 0
    %5939 = vmatprep.subr.bf16.mxu0 0
    %5940 = vmatpush1.bf16.msra.mxu0 0
    %5941 = vmatprep.subr.bf16.mxu0 0
    %5942 = vmatpush1.bf16.msra.mxu0 0
    %5943 = vmatprep.subr.bf16.mxu0 0
    %5944 = vmatpush1.bf16.msra.mxu0 0
    %5945 = vmatprep.subr.bf16.mxu0 0
    %5946 = vmatpush1.bf16.msra.mxu0 0
    %5947 = vmatprep.subr.bf16.mxu0 0
    %5948 = vmatpush1.bf16.msra.mxu0 0
    %5949 = vmatprep.subr.bf16.mxu0 0
    %5950 = vmatpush1.bf16.msra.mxu0 0
    %5951 = vmatprep.subr.bf16.mxu0 0
    %5952 = vmatpush1.bf16.msra.mxu0 0
    %5953 = vmatprep.subr.bf16.mxu0 0
    %5954 = vmatpush1.bf16.msra.mxu0 0
    %5955 = vmatprep.subr.bf16.mxu0 0
    %5956 = vmatpush1.bf16.msra.mxu0 0
    %5957 = vmatprep.subr.bf16.mxu0 0
    %5958 = vmatpush1.bf16.msra.mxu0 0
    %5959 = vmatprep.subr.bf16.mxu0 0
    %5960 = vmatpush1.bf16.msra.mxu0 0
    %5961 = vmatprep.subr.bf16.mxu0 0
    %5962 = vmatpush1.bf16.msra.mxu0 0
    %5963 = vmatprep.mubr.bf16.mxu0 0
    %5964 = vmatmul.mubr.bf16.gmra.mrb[0].mxu0 %v5861
    %v5965 = vpop.f32.mrb[0].mxu0
    %v5966 = vadd.f32 %v5832, %v5965
    %v5967 = vpop.f32.mrb[0].mxu0
    %v5968 = vadd.f32 %v5834, %v5967
    %v5969 = vpop.f32.mrb[0].mxu0
    %v5970 = vadd.f32 %v5836, %v5969
    %v5971 = vpop.f32.mrb[0].mxu0
    %v5972 = vadd.f32 %v5838, %v5971
    %5973 = vmatprep.mubr.bf16.mxu0 0
    %5974 = vmatmul.mubr.bf16.gmra.mrb[0].mxu0 %v5864
    %v5975 = vpop.f32.mrb[0].mxu0
    %v5976 = vadd.f32 %v5842, %v5975
    %v5977 = vpop.f32.mrb[0].mxu0
    %v5978 = vadd.f32 %v5844, %v5977
    %v5979 = vpop.f32.mrb[0].mxu0
    %v5980 = vadd.f32 %v5846, %v5979
    %v5981 = vpop.f32.mrb[0].mxu0
    %v5982 = vadd.f32 %v5848, %v5981
    %5983 = vdwg.mxu0
    %5984 = vrot.lane.b32.xlu0 %v5583, 16
    %v5985 = vpop.permute.xlu0 %5984
    %5986 = vrot.lane.b32.xlu0 %v5587, 16
    %v5987 = vpop.permute.xlu0 %5986
    %5988 = vrot.lane.b32.xlu0 %v5591, 16
    %v5989 = vpop.permute.xlu0 %5988
    %5990 = vrot.lane.b32.xlu0 %v5595, 16
    %v5991 = vpop.permute.xlu0 %5990
    %5992 = vrot.lane.b32.xlu0 %v5584, 16
    %v5993 = vpop.permute.xlu0 %5992
    %5994 = vrot.lane.b32.xlu0 %v5588, 16
    %v5995 = vpop.permute.xlu0 %5994
    %5996 = vrot.lane.b32.xlu0 %v5592, 16
    %v5997 = vpop.permute.xlu0 %5996
    %5998 = vrot.lane.b32.xlu0 %v5596, 16
    %v5999 = vpop.permute.xlu0 %5998
    %6000 = vrot.lane.b32.xlu0 %v5585, 16
    %v6001 = vpop.permute.xlu0 %6000
    %6002 = vrot.lane.b32.xlu0 %v5589, 16
    %v6003 = vpop.permute.xlu0 %6002
    %6004 = vrot.lane.b32.xlu0 %v5593, 16
    %v6005 = vpop.permute.xlu0 %6004
    %6006 = vrot.lane.b32.xlu0 %v5597, 16
    %v6007 = vpop.permute.xlu0 %6006
    %6008 = vrot.lane.b32.xlu0 %v5586, 16
    %v6009 = vpop.permute.xlu0 %6008
    %6010 = vrot.lane.b32.xlu0 %v5590, 16
    %v6011 = vpop.permute.xlu0 %6010
    %6012 = vrot.lane.b32.xlu0 %v5594, 16
    %v6013 = vpop.permute.xlu0 %6012
    %6014 = vrot.lane.b32.xlu0 %v5598, 16
    %v6015 = vpop.permute.xlu0 %6014
    %v6016 = vsel %vm908, %v6001, %v6009
    %v6017 = vsel %vm908, %v6003, %v6011
    %v6018 = vsel %vm908, %v6005, %v6013
    %v6019 = vsel %vm908, %v6007, %v6015
    %v6020 = vsel %vm908, %v5993, %v6001
    %v6021 = vsel %vm908, %v5995, %v6003
    %v6022 = vsel %vm908, %v5997, %v6005
    %v6023 = vsel %vm908, %v5999, %v6007
    %v6024 = vsel %vm908, %v5985, %v5993
    %v6025 = vsel %vm908, %v5987, %v5995
    %v6026 = vsel %vm908, %v5989, %v5997
    %v6027 = vsel %vm908, %v5991, %v5999
    %v6028 = vsel %vm908, %v6009, %v5985
    %v6029 = vsel %vm908, %v6011, %v5987
    %v6030 = vsel %vm908, %v6013, %v5989
    %v6031 = vsel %vm908, %v6015, %v5991
    %v6032 = vmul.f32 %v6028, %v929
    %v6033 = vmul.f32 %v6024, %v933
    %v6034 = vmul.f32 %v6020, %v937
    %v6035 = vmul.f32 %v6016, %v941
    %v6036 = vmul.f32 %v6029, %v929
    %v6037 = vmul.f32 %v6025, %v933
    %v6038 = vmul.f32 %v6021, %v937
    %v6039 = vmul.f32 %v6017, %v941
    %v6040 = vmul.f32 %v6030, %v929
    %v6041 = vmul.f32 %v6026, %v933
    %v6042 = vmul.f32 %v6022, %v937
    %v6043 = vmul.f32 %v6018, %v941
    %v6044 = vmul.f32 %v6031, %v929
    %v6045 = vmul.f32 %v6027, %v933
    %v6046 = vmul.f32 %v6023, %v937
    %v6047 = vmul.f32 %v6019, %v941
    %v6048 = vpack.c.bf16 %v6036, %v6032
    %v6049 = vpack.c.bf16 %v6037, %v6033
    %v6050 = vpack.c.bf16 %v6038, %v6034
    %v6051 = vpack.c.bf16 %v6039, %v6035
    %v6052 = vpack.c.bf16 %v6044, %v6040
    %v6053 = vpack.c.bf16 %v6045, %v6041
    %v6054 = vpack.c.bf16 %v6046, %v6042
    %v6055 = vpack.c.bf16 %v6047, %v6043
    %v6060 = vunpack.c.l.b16 %v5604
    %v6061 = vunpack.c.l.b16 %v5605
    %v6062 = vunpack.c.l.b16 %v5606
    %v6063 = vunpack.c.l.b16 %v5607
    %v6064 = vpack.c.b16 %v6061, %v6060
    %v6065 = vpack.c.b16 %v6063, %v6062
    %v6067 = vsel %vm616, %v6064, 0
    %v6070 = vsel %vm616, %v6065, 0
    %v6073 = vsel %vm623, %v6052, 0
    %v6076 = vsel %vm623, %v6053, 0
    %v6079 = vsel %vm623, %v6054, 0
    %v6082 = vsel %vm623, %v6055, 0
    %6084 = vmatprep.subr.bf16.mxu0 %v6049
    %6085 = vmatpush1.bf16.msra.mxu0 %v6048
    %6086 = vmatprep.subr.bf16.mxu0 %v6076
    %6087 = vmatpush1.bf16.msra.mxu0 %v6073
    %6088 = vmatprep.subr.bf16.mxu0 0
    %6089 = vmatpush1.bf16.msra.mxu0 0
    %6090 = vmatprep.subr.bf16.mxu0 0
    %6091 = vmatpush1.bf16.msra.mxu0 0
    %6092 = vmatprep.subr.bf16.mxu0 0
    %6093 = vmatpush1.bf16.msra.mxu0 0
    %6094 = vmatprep.subr.bf16.mxu0 0
    %6095 = vmatpush1.bf16.msra.mxu0 0
    %6096 = vmatprep.subr.bf16.mxu0 0
    %6097 = vmatpush1.bf16.msra.mxu0 0
    %6098 = vmatprep.subr.bf16.mxu0 0
    %6099 = vmatpush1.bf16.msra.mxu0 0
    %6100 = vmatprep.subr.bf16.mxu0 0
    %6101 = vmatpush1.bf16.msra.mxu0 0
    %6102 = vmatprep.subr.bf16.mxu0 0
    %6103 = vmatpush1.bf16.msra.mxu0 0
    %6104 = vmatprep.subr.bf16.mxu0 0
    %6105 = vmatpush1.bf16.msra.mxu0 0
    %6106 = vmatprep.subr.bf16.mxu0 0
    %6107 = vmatpush1.bf16.msra.mxu0 0
    %6108 = vmatprep.subr.bf16.mxu0 0
    %6109 = vmatpush1.bf16.msra.mxu0 0
    %6110 = vmatprep.subr.bf16.mxu0 0
    %6111 = vmatpush1.bf16.msra.mxu0 0
    %6112 = vmatprep.subr.bf16.mxu0 0
    %6113 = vmatpush1.bf16.msra.mxu0 0
    %6114 = vmatprep.subr.bf16.mxu0 0
    %6115 = vmatpush1.bf16.msra.mxu0 0
    %6116 = vmatprep.mubr.bf16.mxu0 0
    %6117 = vmatmul.mubr.bf16.gmra.mrb[0].mxu0 %v6067
    %v6118 = vpop.f32.mrb[0].mxu0
    %v6119 = vadd.f32 0.0, %v6118
    %v6120 = vpop.f32.mrb[0].mxu0
    %v6121 = vadd.f32 0.0, %v6120
    %v6122 = vpop.f32.mrb[0].mxu0
    %v6123 = vadd.f32 0.0, %v6122
    %v6124 = vpop.f32.mrb[0].mxu0
    %v6125 = vadd.f32 0.0, %v6124
    %6126 = vmatprep.mubr.bf16.mxu0 0
    %6127 = vmatmul.mubr.bf16.gmra.mrb[0].mxu0 %v6070
    %v6128 = vpop.f32.mrb[0].mxu0
    %v6129 = vadd.f32 0.0, %v6128
    %v6130 = vpop.f32.mrb[0].mxu0
    %v6131 = vadd.f32 0.0, %v6130
    %v6132 = vpop.f32.mrb[0].mxu0
    %v6133 = vadd.f32 0.0, %v6132
    %v6134 = vpop.f32.mrb[0].mxu0
    %v6135 = vadd.f32 0.0, %v6134
    %6136 = vdwg.mxu0
    %6137 = vmatprep.subr.bf16.mxu0 %v6051
    %6138 = vmatpush1.bf16.msra.mxu0 %v6050
    %6139 = vmatprep.subr.bf16.mxu0 %v6082
    %6140 = vmatpush1.bf16.msra.mxu0 %v6079
    %6141 = vmatprep.subr.bf16.mxu0 0
    %6142 = vmatpush1.bf16.msra.mxu0 0
    %6143 = vmatprep.subr.bf16.mxu0 0
    %6144 = vmatpush1.bf16.msra.mxu0 0
    %6145 = vmatprep.subr.bf16.mxu0 0
    %6146 = vmatpush1.bf16.msra.mxu0 0
    %6147 = vmatprep.subr.bf16.mxu0 0
    %6148 = vmatpush1.bf16.msra.mxu0 0
    %6149 = vmatprep.subr.bf16.mxu0 0
    %6150 = vmatpush1.bf16.msra.mxu0 0
    %6151 = vmatprep.subr.bf16.mxu0 0
    %6152 = vmatpush1.bf16.msra.mxu0 0
    %6153 = vmatprep.subr.bf16.mxu0 0
    %6154 = vmatpush1.bf16.msra.mxu0 0
    %6155 = vmatprep.subr.bf16.mxu0 0
    %6156 = vmatpush1.bf16.msra.mxu0 0
    %6157 = vmatprep.subr.bf16.mxu0 0
    %6158 = vmatpush1.bf16.msra.mxu0 0
    %6159 = vmatprep.subr.bf16.mxu0 0
    %6160 = vmatpush1.bf16.msra.mxu0 0
    %6161 = vmatprep.subr.bf16.mxu0 0
    %6162 = vmatpush1.bf16.msra.mxu0 0
    %6163 = vmatprep.subr.bf16.mxu0 0
    %6164 = vmatpush1.bf16.msra.mxu0 0
    %6165 = vmatprep.subr.bf16.mxu0 0
    %6166 = vmatpush1.bf16.msra.mxu0 0
    %6167 = vmatprep.subr.bf16.mxu0 0
    %6168 = vmatpush1.bf16.msra.mxu0 0
    %6169 = vmatprep.mubr.bf16.mxu0 0
    %6170 = vmatmul.mubr.bf16.gmra.mrb[0].mxu0 %v6067
    %v6171 = vpop.f32.mrb[0].mxu0
    %v6172 = vadd.f32 0.0, %v6171
    %v6173 = vpop.f32.mrb[0].mxu0
    %v6174 = vadd.f32 0.0, %v6173
    %v6175 = vpop.f32.mrb[0].mxu0
    %v6176 = vadd.f32 0.0, %v6175
    %v6177 = vpop.f32.mrb[0].mxu0
    %v6178 = vadd.f32 0.0, %v6177
    %6179 = vmatprep.mubr.bf16.mxu0 0
    %6180 = vmatmul.mubr.bf16.gmra.mrb[0].mxu0 %v6070
    %v6181 = vpop.f32.mrb[0].mxu0
    %v6182 = vadd.f32 0.0, %v6181
    %v6183 = vpop.f32.mrb[0].mxu0
    %v6184 = vadd.f32 0.0, %v6183
    %v6185 = vpop.f32.mrb[0].mxu0
    %v6186 = vadd.f32 0.0, %v6185
    %v6187 = vpop.f32.mrb[0].mxu0
    %v6188 = vadd.f32 0.0, %v6187
    %6189 = vdwg.mxu0
    %v6190 = vadd.f32 %v5913, %v6119
    %v6191 = vadd.f32 %v5915, %v6121
    %v6192 = vadd.f32 %v5966, %v6172
    %v6193 = vadd.f32 %v5968, %v6174
    %v6194 = vadd.f32 %v5917, %v6123
    %v6195 = vadd.f32 %v5919, %v6125
    %v6196 = vadd.f32 %v5970, %v6176
    %v6197 = vadd.f32 %v5972, %v6178
    %v6198 = vadd.f32 %v5923, %v6129
    %v6199 = vadd.f32 %v5925, %v6131
    %v6200 = vadd.f32 %v5976, %v6182
    %v6201 = vadd.f32 %v5978, %v6184
    %v6202 = vadd.f32 %v5927, %v6133
    %v6203 = vadd.f32 %v5929, %v6135
    %v6204 = vadd.f32 %v5980, %v6186
    %v6205 = vadd.f32 %v5982, %v6188
    %6206 = vrot.lane.b32.xlu0 %v5583, 15
    %v6207 = vpop.permute.xlu0 %6206
    %6208 = vrot.lane.b32.xlu0 %v5587, 15
    %v6209 = vpop.permute.xlu0 %6208
    %6210 = vrot.lane.b32.xlu0 %v5591, 15
    %v6211 = vpop.permute.xlu0 %6210
    %6212 = vrot.lane.b32.xlu0 %v5595, 15
    %v6213 = vpop.permute.xlu0 %6212
    %6214 = vrot.lane.b32.xlu0 %v5584, 15
    %v6215 = vpop.permute.xlu0 %6214
    %6216 = vrot.lane.b32.xlu0 %v5588, 15
    %v6217 = vpop.permute.xlu0 %6216
    %6218 = vrot.lane.b32.xlu0 %v5592, 15
    %v6219 = vpop.permute.xlu0 %6218
    %6220 = vrot.lane.b32.xlu0 %v5596, 15
    %v6221 = vpop.permute.xlu0 %6220
    %6222 = vrot.lane.b32.xlu0 %v5585, 15
    %v6223 = vpop.permute.xlu0 %6222
    %6224 = vrot.lane.b32.xlu0 %v5589, 15
    %v6225 = vpop.permute.xlu0 %6224
    %6226 = vrot.lane.b32.xlu0 %v5593, 15
    %v6227 = vpop.permute.xlu0 %6226
    %6228 = vrot.lane.b32.xlu0 %v5597, 15
    %v6229 = vpop.permute.xlu0 %6228
    %6230 = vrot.lane.b32.xlu0 %v5586, 15
    %v6231 = vpop.permute.xlu0 %6230
    %6232 = vrot.lane.b32.xlu0 %v5590, 15
    %v6233 = vpop.permute.xlu0 %6232
    %6234 = vrot.lane.b32.xlu0 %v5594, 15
    %v6235 = vpop.permute.xlu0 %6234
    %6236 = vrot.lane.b32.xlu0 %v5598, 15
    %v6237 = vpop.permute.xlu0 %6236
    %v6238 = vsel %vm1152, %v6223, %v6231
    %v6239 = vsel %vm1152, %v6225, %v6233
    %v6240 = vsel %vm1152, %v6227, %v6235
    %v6241 = vsel %vm1152, %v6229, %v6237
    %v6242 = vsel %vm1152, %v6215, %v6223
    %v6243 = vsel %vm1152, %v6217, %v6225
    %v6244 = vsel %vm1152, %v6219, %v6227
    %v6245 = vsel %vm1152, %v6221, %v6229
    %v6246 = vsel %vm1152, %v6207, %v6215
    %v6247 = vsel %vm1152, %v6209, %v6217
    %v6248 = vsel %vm1152, %v6211, %v6219
    %v6249 = vsel %vm1152, %v6213, %v6221
    %v6250 = vsel %vm1152, %v6231, %v6207
    %v6251 = vsel %vm1152, %v6233, %v6209
    %v6252 = vsel %vm1152, %v6235, %v6211
    %v6253 = vsel %vm1152, %v6237, %v6213
    %v6254 = vmul.f32 %v6250, %v1173
    %v6255 = vmul.f32 %v6246, %v1177
    %v6256 = vmul.f32 %v6242, %v1181
    %v6257 = vmul.f32 %v6238, %v1185
    %v6258 = vmul.f32 %v6251, %v1173
    %v6259 = vmul.f32 %v6247, %v1177
    %v6260 = vmul.f32 %v6243, %v1181
    %v6261 = vmul.f32 %v6239, %v1185
    %v6262 = vmul.f32 %v6252, %v1173
    %v6263 = vmul.f32 %v6248, %v1177
    %v6264 = vmul.f32 %v6244, %v1181
    %v6265 = vmul.f32 %v6240, %v1185
    %v6266 = vmul.f32 %v6253, %v1173
    %v6267 = vmul.f32 %v6249, %v1177
    %v6268 = vmul.f32 %v6245, %v1181
    %v6269 = vmul.f32 %v6241, %v1185
    %v6270 = vpack.c.bf16 %v6258, %v6254
    %v6271 = vpack.c.bf16 %v6259, %v6255
    %v6272 = vpack.c.bf16 %v6260, %v6256
    %v6273 = vpack.c.bf16 %v6261, %v6257
    %v6274 = vpack.c.bf16 %v6266, %v6262
    %v6275 = vpack.c.bf16 %v6267, %v6263
    %v6276 = vpack.c.bf16 %v6268, %v6264
    %v6277 = vpack.c.bf16 %v6269, %v6265
    %v6282 = vunpack.c.l.b16 %v5608
    %v6283 = vunpack.c.l.b16 %v5609
    %v6284 = vunpack.c.l.b16 %v5610
    %v6285 = vunpack.c.l.b16 %v5611
    %v6286 = vpack.c.b16 %v6283, %v6282
    %v6287 = vpack.c.b16 %v6285, %v6284
    %v6289 = vsel %vm616, %v6286, 0
    %v6292 = vsel %vm616, %v6287, 0
    %v6295 = vsel %vm623, %v6274, 0
    %v6298 = vsel %vm623, %v6275, 0
    %v6301 = vsel %vm623, %v6276, 0
    %v6304 = vsel %vm623, %v6277, 0
    %6306 = vmatprep.subr.bf16.mxu0 %v6271
    %6307 = vmatpush1.bf16.msra.mxu0 %v6270
    %6308 = vmatprep.subr.bf16.mxu0 %v6298
    %6309 = vmatpush1.bf16.msra.mxu0 %v6295
    %6310 = vmatprep.subr.bf16.mxu0 0
    %6311 = vmatpush1.bf16.msra.mxu0 0
    %6312 = vmatprep.subr.bf16.mxu0 0
    %6313 = vmatpush1.bf16.msra.mxu0 0
    %6314 = vmatprep.subr.bf16.mxu0 0
    %6315 = vmatpush1.bf16.msra.mxu0 0
    %6316 = vmatprep.subr.bf16.mxu0 0
    %6317 = vmatpush1.bf16.msra.mxu0 0
    %6318 = vmatprep.subr.bf16.mxu0 0
    %6319 = vmatpush1.bf16.msra.mxu0 0
    %6320 = vmatprep.subr.bf16.mxu0 0
    %6321 = vmatpush1.bf16.msra.mxu0 0
    %6322 = vmatprep.subr.bf16.mxu0 0
    %6323 = vmatpush1.bf16.msra.mxu0 0
    %6324 = vmatprep.subr.bf16.mxu0 0
    %6325 = vmatpush1.bf16.msra.mxu0 0
    %6326 = vmatprep.subr.bf16.mxu0 0
    %6327 = vmatpush1.bf16.msra.mxu0 0
    %6328 = vmatprep.subr.bf16.mxu0 0
    %6329 = vmatpush1.bf16.msra.mxu0 0
    %6330 = vmatprep.subr.bf16.mxu0 0
    %6331 = vmatpush1.bf16.msra.mxu0 0
    %6332 = vmatprep.subr.bf16.mxu0 0
    %6333 = vmatpush1.bf16.msra.mxu0 0
    %6334 = vmatprep.subr.bf16.mxu0 0
    %6335 = vmatpush1.bf16.msra.mxu0 0
    %6336 = vmatprep.subr.bf16.mxu0 0
    %6337 = vmatpush1.bf16.msra.mxu0 0
    %6338 = vmatprep.mubr.bf16.mxu0 0
    %6339 = vmatmul.mubr.bf16.gmra.mrb[0].mxu0 %v6289
    %v6340 = vpop.f32.mrb[0].mxu0
    %v6341 = vadd.f32 0.0, %v6340
    %v6342 = vpop.f32.mrb[0].mxu0
    %v6343 = vadd.f32 0.0, %v6342
    %v6344 = vpop.f32.mrb[0].mxu0
    %v6345 = vadd.f32 0.0, %v6344
    %v6346 = vpop.f32.mrb[0].mxu0
    %v6347 = vadd.f32 0.0, %v6346
    %6348 = vmatprep.mubr.bf16.mxu0 0
    %6349 = vmatmul.mubr.bf16.gmra.mrb[0].mxu0 %v6292
    %v6350 = vpop.f32.mrb[0].mxu0
    %v6351 = vadd.f32 0.0, %v6350
    %v6352 = vpop.f32.mrb[0].mxu0
    %v6353 = vadd.f32 0.0, %v6352
    %v6354 = vpop.f32.mrb[0].mxu0
    %v6355 = vadd.f32 0.0, %v6354
    %v6356 = vpop.f32.mrb[0].mxu0
    %v6357 = vadd.f32 0.0, %v6356
    %6358 = vdwg.mxu0
    %6359 = vmatprep.subr.bf16.mxu0 %v6273
    %6360 = vmatpush1.bf16.msra.mxu0 %v6272
    %6361 = vmatprep.subr.bf16.mxu0 %v6304
    %6362 = vmatpush1.bf16.msra.mxu0 %v6301
    %6363 = vmatprep.subr.bf16.mxu0 0
    %6364 = vmatpush1.bf16.msra.mxu0 0
    %6365 = vmatprep.subr.bf16.mxu0 0
    %6366 = vmatpush1.bf16.msra.mxu0 0
    %6367 = vmatprep.subr.bf16.mxu0 0
    %6368 = vmatpush1.bf16.msra.mxu0 0
    %6369 = vmatprep.subr.bf16.mxu0 0
    %6370 = vmatpush1.bf16.msra.mxu0 0
    %6371 = vmatprep.subr.bf16.mxu0 0
    %6372 = vmatpush1.bf16.msra.mxu0 0
    %6373 = vmatprep.subr.bf16.mxu0 0
    %6374 = vmatpush1.bf16.msra.mxu0 0
    %6375 = vmatprep.subr.bf16.mxu0 0
    %6376 = vmatpush1.bf16.msra.mxu0 0
    %6377 = vmatprep.subr.bf16.mxu0 0
    %6378 = vmatpush1.bf16.msra.mxu0 0
    %6379 = vmatprep.subr.bf16.mxu0 0
    %6380 = vmatpush1.bf16.msra.mxu0 0
    %6381 = vmatprep.subr.bf16.mxu0 0
    %6382 = vmatpush1.bf16.msra.mxu0 0
    %6383 = vmatprep.subr.bf16.mxu0 0
    %6384 = vmatpush1.bf16.msra.mxu0 0
    %6385 = vmatprep.subr.bf16.mxu0 0
    %6386 = vmatpush1.bf16.msra.mxu0 0
    %6387 = vmatprep.subr.bf16.mxu0 0
    %6388 = vmatpush1.bf16.msra.mxu0 0
    %6389 = vmatprep.subr.bf16.mxu0 0
    %6390 = vmatpush1.bf16.msra.mxu0 0
    %6391 = vmatprep.mubr.bf16.mxu0 0
    %6392 = vmatmul.mubr.bf16.gmra.mrb[0].mxu0 %v6289
    %v6393 = vpop.f32.mrb[0].mxu0
    %v6394 = vadd.f32 0.0, %v6393
    %v6395 = vpop.f32.mrb[0].mxu0
    %v6396 = vadd.f32 0.0, %v6395
    %v6397 = vpop.f32.mrb[0].mxu0
    %v6398 = vadd.f32 0.0, %v6397
    %v6399 = vpop.f32.mrb[0].mxu0
    %v6400 = vadd.f32 0.0, %v6399
    %6401 = vmatprep.mubr.bf16.mxu0 0
    %6402 = vmatmul.mubr.bf16.gmra.mrb[0].mxu0 %v6292
    %v6403 = vpop.f32.mrb[0].mxu0
    %v6404 = vadd.f32 0.0, %v6403
    %v6405 = vpop.f32.mrb[0].mxu0
    %v6406 = vadd.f32 0.0, %v6405
    %v6407 = vpop.f32.mrb[0].mxu0
    %v6408 = vadd.f32 0.0, %v6407
    %v6409 = vpop.f32.mrb[0].mxu0
    %v6410 = vadd.f32 0.0, %v6409
    %6411 = vdwg.mxu0
    %v6412 = vadd.f32 %v6190, %v6341
    %v6413 = vadd.f32 %v6191, %v6343
    %v6414 = vadd.f32 %v6192, %v6394
    %v6415 = vadd.f32 %v6193, %v6396
    %v6416 = vadd.f32 %v6194, %v6345
    %v6417 = vadd.f32 %v6195, %v6347
    %v6418 = vadd.f32 %v6196, %v6398
    %v6419 = vadd.f32 %v6197, %v6400
    %v6420 = vadd.f32 %v6198, %v6351
    %v6421 = vadd.f32 %v6199, %v6353
    %v6422 = vadd.f32 %v6200, %v6404
    %v6423 = vadd.f32 %v6201, %v6406
    %v6424 = vadd.f32 %v6202, %v6355
    %v6425 = vadd.f32 %v6203, %v6357
    %v6426 = vadd.f32 %v6204, %v6408
    %v6427 = vadd.f32 %v6205, %v6410
    %6428 = vrot.lane.b32.xlu0 %v5583, 1
    %v6429 = vpop.permute.xlu0 %6428
    %6430 = vrot.lane.b32.xlu0 %v5587, 1
    %v6431 = vpop.permute.xlu0 %6430
    %6432 = vrot.lane.b32.xlu0 %v5591, 1
    %v6433 = vpop.permute.xlu0 %6432
    %6434 = vrot.lane.b32.xlu0 %v5595, 1
    %v6435 = vpop.permute.xlu0 %6434
    %6436 = vrot.lane.b32.xlu0 %v5584, 1
    %v6437 = vpop.permute.xlu0 %6436
    %6438 = vrot.lane.b32.xlu0 %v5588, 1
    %v6439 = vpop.permute.xlu0 %6438
    %6440 = vrot.lane.b32.xlu0 %v5592, 1
    %v6441 = vpop.permute.xlu0 %6440
    %6442 = vrot.lane.b32.xlu0 %v5596, 1
    %v6443 = vpop.permute.xlu0 %6442
    %6444 = vrot.lane.b32.xlu0 %v5585, 1
    %v6445 = vpop.permute.xlu0 %6444
    %6446 = vrot.lane.b32.xlu0 %v5589, 1
    %v6447 = vpop.permute.xlu0 %6446
    %6448 = vrot.lane.b32.xlu0 %v5593, 1
    %v6449 = vpop.permute.xlu0 %6448
    %6450 = vrot.lane.b32.xlu0 %v5597, 1
    %v6451 = vpop.permute.xlu0 %6450
    %6452 = vrot.lane.b32.xlu0 %v5586, 1
    %v6453 = vpop.permute.xlu0 %6452
    %6454 = vrot.lane.b32.xlu0 %v5590, 1
    %v6455 = vpop.permute.xlu0 %6454
    %6456 = vrot.lane.b32.xlu0 %v5594, 1
    %v6457 = vpop.permute.xlu0 %6456
    %6458 = vrot.lane.b32.xlu0 %v5598, 1
    %v6459 = vpop.permute.xlu0 %6458
    %v6460 = vsel %vm1396, %v6445, %v6453
    %v6461 = vsel %vm1396, %v6447, %v6455
    %v6462 = vsel %vm1396, %v6449, %v6457
    %v6463 = vsel %vm1396, %v6451, %v6459
    %v6464 = vsel %vm1396, %v6437, %v6445
    %v6465 = vsel %vm1396, %v6439, %v6447
    %v6466 = vsel %vm1396, %v6441, %v6449
    %v6467 = vsel %vm1396, %v6443, %v6451
    %v6468 = vsel %vm1396, %v6429, %v6437
    %v6469 = vsel %vm1396, %v6431, %v6439
    %v6470 = vsel %vm1396, %v6433, %v6441
    %v6471 = vsel %vm1396, %v6435, %v6443
    %v6472 = vsel %vm1396, %v6453, %v6429
    %v6473 = vsel %vm1396, %v6455, %v6431
    %v6474 = vsel %vm1396, %v6457, %v6433
    %v6475 = vsel %vm1396, %v6459, %v6435
    %v6476 = vmul.f32 %v6472, %v1417
    %v6477 = vmul.f32 %v6468, %v1421
    %v6478 = vmul.f32 %v6464, %v1425
    %v6479 = vmul.f32 %v6460, %v1429
    %v6480 = vmul.f32 %v6473, %v1417
    %v6481 = vmul.f32 %v6469, %v1421
    %v6482 = vmul.f32 %v6465, %v1425
    %v6483 = vmul.f32 %v6461, %v1429
    %v6484 = vmul.f32 %v6474, %v1417
    %v6485 = vmul.f32 %v6470, %v1421
    %v6486 = vmul.f32 %v6466, %v1425
    %v6487 = vmul.f32 %v6462, %v1429
    %v6488 = vmul.f32 %v6475, %v1417
    %v6489 = vmul.f32 %v6471, %v1421
    %v6490 = vmul.f32 %v6467, %v1425
    %v6491 = vmul.f32 %v6463, %v1429
    %v6492 = vpack.c.bf16 %v6480, %v6476
    %v6493 = vpack.c.bf16 %v6481, %v6477
    %v6494 = vpack.c.bf16 %v6482, %v6478
    %v6495 = vpack.c.bf16 %v6483, %v6479
    %v6496 = vpack.c.bf16 %v6488, %v6484
    %v6497 = vpack.c.bf16 %v6489, %v6485
    %v6498 = vpack.c.bf16 %v6490, %v6486
    %v6499 = vpack.c.bf16 %v6491, %v6487
    %v6504 = vunpack.c.l.b16 %v5612
    %v6505 = vunpack.c.l.b16 %v5613
    %v6506 = vunpack.c.l.b16 %v5614
    %v6507 = vunpack.c.l.b16 %v5615
    %v6508 = vpack.c.b16 %v6505, %v6504
    %v6509 = vpack.c.b16 %v6507, %v6506
    %v6511 = vsel %vm616, %v6508, 0
    %v6514 = vsel %vm616, %v6509, 0
    %v6517 = vsel %vm623, %v6496, 0
    %v6520 = vsel %vm623, %v6497, 0
    %v6523 = vsel %vm623, %v6498, 0
    %v6526 = vsel %vm623, %v6499, 0
    %6528 = vmatprep.subr.bf16.mxu0 %v6493
    %6529 = vmatpush1.bf16.msra.mxu0 %v6492
    %6530 = vmatprep.subr.bf16.mxu0 %v6520
    %6531 = vmatpush1.bf16.msra.mxu0 %v6517
    %6532 = vmatprep.subr.bf16.mxu0 0
    %6533 = vmatpush1.bf16.msra.mxu0 0
    %6534 = vmatprep.subr.bf16.mxu0 0
    %6535 = vmatpush1.bf16.msra.mxu0 0
    %6536 = vmatprep.subr.bf16.mxu0 0
    %6537 = vmatpush1.bf16.msra.mxu0 0
    %6538 = vmatprep.subr.bf16.mxu0 0
    %6539 = vmatpush1.bf16.msra.mxu0 0
    %6540 = vmatprep.subr.bf16.mxu0 0
    %6541 = vmatpush1.bf16.msra.mxu0 0
    %6542 = vmatprep.subr.bf16.mxu0 0
    %6543 = vmatpush1.bf16.msra.mxu0 0
    %6544 = vmatprep.subr.bf16.mxu0 0
    %6545 = vmatpush1.bf16.msra.mxu0 0
    %6546 = vmatprep.subr.bf16.mxu0 0
    %6547 = vmatpush1.bf16.msra.mxu0 0
    %6548 = vmatprep.subr.bf16.mxu0 0
    %6549 = vmatpush1.bf16.msra.mxu0 0
    %6550 = vmatprep.subr.bf16.mxu0 0
    %6551 = vmatpush1.bf16.msra.mxu0 0
    %6552 = vmatprep.subr.bf16.mxu0 0
    %6553 = vmatpush1.bf16.msra.mxu0 0
    %6554 = vmatprep.subr.bf16.mxu0 0
    %6555 = vmatpush1.bf16.msra.mxu0 0
    %6556 = vmatprep.subr.bf16.mxu0 0
    %6557 = vmatpush1.bf16.msra.mxu0 0
    %6558 = vmatprep.subr.bf16.mxu0 0
    %6559 = vmatpush1.bf16.msra.mxu0 0
    %6560 = vmatprep.mubr.bf16.mxu0 0
    %6561 = vmatmul.mubr.bf16.gmra.mrb[0].mxu0 %v6511
    %v6562 = vpop.f32.mrb[0].mxu0
    %v6563 = vadd.f32 0.0, %v6562
    %v6564 = vpop.f32.mrb[0].mxu0
    %v6565 = vadd.f32 0.0, %v6564
    %v6566 = vpop.f32.mrb[0].mxu0
    %v6567 = vadd.f32 0.0, %v6566
    %v6568 = vpop.f32.mrb[0].mxu0
    %v6569 = vadd.f32 0.0, %v6568
    %6570 = vmatprep.mubr.bf16.mxu0 0
    %6571 = vmatmul.mubr.bf16.gmra.mrb[0].mxu0 %v6514
    %v6572 = vpop.f32.mrb[0].mxu0
    %v6573 = vadd.f32 0.0, %v6572
    %v6574 = vpop.f32.mrb[0].mxu0
    %v6575 = vadd.f32 0.0, %v6574
    %v6576 = vpop.f32.mrb[0].mxu0
    %v6577 = vadd.f32 0.0, %v6576
    %v6578 = vpop.f32.mrb[0].mxu0
    %v6579 = vadd.f32 0.0, %v6578
    %6580 = vdwg.mxu0
    %6581 = vmatprep.subr.bf16.mxu0 %v6495
    %6582 = vmatpush1.bf16.msra.mxu0 %v6494
    %6583 = vmatprep.subr.bf16.mxu0 %v6526
    %6584 = vmatpush1.bf16.msra.mxu0 %v6523
    %6585 = vmatprep.subr.bf16.mxu0 0
    %6586 = vmatpush1.bf16.msra.mxu0 0
    %6587 = vmatprep.subr.bf16.mxu0 0
    %6588 = vmatpush1.bf16.msra.mxu0 0
    %6589 = vmatprep.subr.bf16.mxu0 0
    %6590 = vmatpush1.bf16.msra.mxu0 0
    %6591 = vmatprep.subr.bf16.mxu0 0
    %6592 = vmatpush1.bf16.msra.mxu0 0
    %6593 = vmatprep.subr.bf16.mxu0 0
    %6594 = vmatpush1.bf16.msra.mxu0 0
    %6595 = vmatprep.subr.bf16.mxu0 0
    %6596 = vmatpush1.bf16.msra.mxu0 0
    %6597 = vmatprep.subr.bf16.mxu0 0
    %6598 = vmatpush1.bf16.msra.mxu0 0
    %6599 = vmatprep.subr.bf16.mxu0 0
    %6600 = vmatpush1.bf16.msra.mxu0 0
    %6601 = vmatprep.subr.bf16.mxu0 0
    %6602 = vmatpush1.bf16.msra.mxu0 0
    %6603 = vmatprep.subr.bf16.mxu0 0
    %6604 = vmatpush1.bf16.msra.mxu0 0
    %6605 = vmatprep.subr.bf16.mxu0 0
    %6606 = vmatpush1.bf16.msra.mxu0 0
    %6607 = vmatprep.subr.bf16.mxu0 0
    %6608 = vmatpush1.bf16.msra.mxu0 0
    %6609 = vmatprep.subr.bf16.mxu0 0
    %6610 = vmatpush1.bf16.msra.mxu0 0
    %6611 = vmatprep.subr.bf16.mxu0 0
    %6612 = vmatpush1.bf16.msra.mxu0 0
    %6613 = vmatprep.mubr.bf16.mxu0 0
    %6614 = vmatmul.mubr.bf16.gmra.mrb[0].mxu0 %v6511
    %v6615 = vpop.f32.mrb[0].mxu0
    %v6616 = vadd.f32 0.0, %v6615
    %v6617 = vpop.f32.mrb[0].mxu0
    %v6618 = vadd.f32 0.0, %v6617
    %v6619 = vpop.f32.mrb[0].mxu0
    %v6620 = vadd.f32 0.0, %v6619
    %v6621 = vpop.f32.mrb[0].mxu0
    %v6622 = vadd.f32 0.0, %v6621
    %6623 = vmatprep.mubr.bf16.mxu0 0
    %6624 = vmatmul.mubr.bf16.gmra.mrb[0].mxu0 %v6514
    %v6625 = vpop.f32.mrb[0].mxu0
    %v6626 = vadd.f32 0.0, %v6625
    %v6627 = vpop.f32.mrb[0].mxu0
    %v6628 = vadd.f32 0.0, %v6627
    %v6629 = vpop.f32.mrb[0].mxu0
    %v6630 = vadd.f32 0.0, %v6629
    %v6631 = vpop.f32.mrb[0].mxu0
    %v6632 = vadd.f32 0.0, %v6631
    %6633 = vdwg.mxu0
    %v6634 = vadd.f32 %v6412, %v6563
    %v6635 = vadd.f32 %v6413, %v6565
    %v6636 = vadd.f32 %v6414, %v6616
    %v6637 = vadd.f32 %v6415, %v6618
    %v6638 = vadd.f32 %v6416, %v6567
    %v6639 = vadd.f32 %v6417, %v6569
    %v6640 = vadd.f32 %v6418, %v6620
    %v6641 = vadd.f32 %v6419, %v6622
    %v6642 = vadd.f32 %v6420, %v6573
    %v6643 = vadd.f32 %v6421, %v6575
    %v6644 = vadd.f32 %v6422, %v6626
    %v6645 = vadd.f32 %v6423, %v6628
    %v6646 = vadd.f32 %v6424, %v6577
    %v6647 = vadd.f32 %v6425, %v6579
    %v6648 = vadd.f32 %v6426, %v6630
    %v6649 = vadd.f32 %v6427, %v6632
    %6650 = vrot.lane.b32.xlu0 %v5583, 127
    %v6651 = vpop.permute.xlu0 %6650
    %6652 = vrot.lane.b32.xlu0 %v5587, 127
    %v6653 = vpop.permute.xlu0 %6652
    %6654 = vrot.lane.b32.xlu0 %v5591, 127
    %v6655 = vpop.permute.xlu0 %6654
    %6656 = vrot.lane.b32.xlu0 %v5595, 127
    %v6657 = vpop.permute.xlu0 %6656
    %6658 = vrot.lane.b32.xlu0 %v5584, 127
    %v6659 = vpop.permute.xlu0 %6658
    %6660 = vrot.lane.b32.xlu0 %v5588, 127
    %v6661 = vpop.permute.xlu0 %6660
    %6662 = vrot.lane.b32.xlu0 %v5592, 127
    %v6663 = vpop.permute.xlu0 %6662
    %6664 = vrot.lane.b32.xlu0 %v5596, 127
    %v6665 = vpop.permute.xlu0 %6664
    %6666 = vrot.lane.b32.xlu0 %v5585, 127
    %v6667 = vpop.permute.xlu0 %6666
    %6668 = vrot.lane.b32.xlu0 %v5589, 127
    %v6669 = vpop.permute.xlu0 %6668
    %6670 = vrot.lane.b32.xlu0 %v5593, 127
    %v6671 = vpop.permute.xlu0 %6670
    %6672 = vrot.lane.b32.xlu0 %v5597, 127
    %v6673 = vpop.permute.xlu0 %6672
    %6674 = vrot.lane.b32.xlu0 %v5586, 127
    %v6675 = vpop.permute.xlu0 %6674
    %6676 = vrot.lane.b32.xlu0 %v5590, 127
    %v6677 = vpop.permute.xlu0 %6676
    %6678 = vrot.lane.b32.xlu0 %v5594, 127
    %v6679 = vpop.permute.xlu0 %6678
    %6680 = vrot.lane.b32.xlu0 %v5598, 127
    %v6681 = vpop.permute.xlu0 %6680
    %v6682 = vsel %vm1640, %v6667, %v6675
    %v6683 = vsel %vm1640, %v6669, %v6677
    %v6684 = vsel %vm1640, %v6671, %v6679
    %v6685 = vsel %vm1640, %v6673, %v6681
    %v6686 = vsel %vm1640, %v6659, %v6667
    %v6687 = vsel %vm1640, %v6661, %v6669
    %v6688 = vsel %vm1640, %v6663, %v6671
    %v6689 = vsel %vm1640, %v6665, %v6673
    %v6690 = vsel %vm1640, %v6651, %v6659
    %v6691 = vsel %vm1640, %v6653, %v6661
    %v6692 = vsel %vm1640, %v6655, %v6663
    %v6693 = vsel %vm1640, %v6657, %v6665
    %v6694 = vsel %vm1640, %v6675, %v6651
    %v6695 = vsel %vm1640, %v6677, %v6653
    %v6696 = vsel %vm1640, %v6679, %v6655
    %v6697 = vsel %vm1640, %v6681, %v6657
    %v6698 = vmul.f32 %v6690, %v1661
    %v6699 = vmul.f32 %v6686, %v1665
    %v6700 = vmul.f32 %v6682, %v1669
    %v6701 = vmul.f32 %v6694, %v1673
    %v6702 = vmul.f32 %v6691, %v1661
    %v6703 = vmul.f32 %v6687, %v1665
    %v6704 = vmul.f32 %v6683, %v1669
    %v6705 = vmul.f32 %v6695, %v1673
    %v6706 = vmul.f32 %v6692, %v1661
    %v6707 = vmul.f32 %v6688, %v1665
    %v6708 = vmul.f32 %v6684, %v1669
    %v6709 = vmul.f32 %v6696, %v1673
    %v6710 = vmul.f32 %v6693, %v1661
    %v6711 = vmul.f32 %v6689, %v1665
    %v6712 = vmul.f32 %v6685, %v1669
    %v6713 = vmul.f32 %v6697, %v1673
    %v6714 = vpack.c.bf16 %v6702, %v6698
    %v6715 = vpack.c.bf16 %v6703, %v6699
    %v6716 = vpack.c.bf16 %v6704, %v6700
    %v6717 = vpack.c.bf16 %v6705, %v6701
    %v6718 = vpack.c.bf16 %v6710, %v6706
    %v6719 = vpack.c.bf16 %v6711, %v6707
    %v6720 = vpack.c.bf16 %v6712, %v6708
    %v6721 = vpack.c.bf16 %v6713, %v6709
    %v6726 = vunpack.c.l.b16 %v5620
    %v6727 = vunpack.c.l.b16 %v5621
    %v6728 = vunpack.c.l.b16 %v5622
    %v6729 = vunpack.c.l.b16 %v5623
    %v6730 = vpack.c.b16 %v6727, %v6726
    %v6731 = vpack.c.b16 %v6729, %v6728
    %v6733 = vsel %vm616, %v6730, 0
    %v6736 = vsel %vm616, %v6731, 0
    %v6739 = vsel %vm623, %v6718, 0
    %v6742 = vsel %vm623, %v6719, 0
    %v6745 = vsel %vm623, %v6720, 0
    %v6748 = vsel %vm623, %v6721, 0
    %6750 = vmatprep.subr.bf16.mxu0 %v6715
    %6751 = vmatpush1.bf16.msra.mxu0 %v6714
    %6752 = vmatprep.subr.bf16.mxu0 %v6742
    %6753 = vmatpush1.bf16.msra.mxu0 %v6739
    %6754 = vmatprep.subr.bf16.mxu0 0
    %6755 = vmatpush1.bf16.msra.mxu0 0
    %6756 = vmatprep.subr.bf16.mxu0 0
    %6757 = vmatpush1.bf16.msra.mxu0 0
    %6758 = vmatprep.subr.bf16.mxu0 0
    %6759 = vmatpush1.bf16.msra.mxu0 0
    %6760 = vmatprep.subr.bf16.mxu0 0
    %6761 = vmatpush1.bf16.msra.mxu0 0
    %6762 = vmatprep.subr.bf16.mxu0 0
    %6763 = vmatpush1.bf16.msra.mxu0 0
    %6764 = vmatprep.subr.bf16.mxu0 0
    %6765 = vmatpush1.bf16.msra.mxu0 0
    %6766 = vmatprep.subr.bf16.mxu0 0
    %6767 = vmatpush1.bf16.msra.mxu0 0
    %6768 = vmatprep.subr.bf16.mxu0 0
    %6769 = vmatpush1.bf16.msra.mxu0 0
    %6770 = vmatprep.subr.bf16.mxu0 0
    %6771 = vmatpush1.bf16.msra.mxu0 0
    %6772 = vmatprep.subr.bf16.mxu0 0
    %6773 = vmatpush1.bf16.msra.mxu0 0
    %6774 = vmatprep.subr.bf16.mxu0 0
    %6775 = vmatpush1.bf16.msra.mxu0 0
    %6776 = vmatprep.subr.bf16.mxu0 0
    %6777 = vmatpush1.bf16.msra.mxu0 0
    %6778 = vmatprep.subr.bf16.mxu0 0
    %6779 = vmatpush1.bf16.msra.mxu0 0
    %6780 = vmatprep.subr.bf16.mxu0 0
    %6781 = vmatpush1.bf16.msra.mxu0 0
    %6782 = vmatprep.mubr.bf16.mxu0 0
    %6783 = vmatmul.mubr.bf16.gmra.mrb[0].mxu0 %v6733
    %v6784 = vpop.f32.mrb[0].mxu0
    %v6785 = vadd.f32 0.0, %v6784
    %v6786 = vpop.f32.mrb[0].mxu0
    %v6787 = vadd.f32 0.0, %v6786
    %v6788 = vpop.f32.mrb[0].mxu0
    %v6789 = vadd.f32 0.0, %v6788
    %v6790 = vpop.f32.mrb[0].mxu0
    %v6791 = vadd.f32 0.0, %v6790
    %6792 = vmatprep.mubr.bf16.mxu0 0
    %6793 = vmatmul.mubr.bf16.gmra.mrb[0].mxu0 %v6736
    %v6794 = vpop.f32.mrb[0].mxu0
    %v6795 = vadd.f32 0.0, %v6794
    %v6796 = vpop.f32.mrb[0].mxu0
    %v6797 = vadd.f32 0.0, %v6796
    %v6798 = vpop.f32.mrb[0].mxu0
    %v6799 = vadd.f32 0.0, %v6798
    %v6800 = vpop.f32.mrb[0].mxu0
    %v6801 = vadd.f32 0.0, %v6800
    %6802 = vdwg.mxu0
    %6803 = vmatprep.subr.bf16.mxu0 %v6717
    %6804 = vmatpush1.bf16.msra.mxu0 %v6716
    %6805 = vmatprep.subr.bf16.mxu0 %v6748
    %6806 = vmatpush1.bf16.msra.mxu0 %v6745
    %6807 = vmatprep.subr.bf16.mxu0 0
    %6808 = vmatpush1.bf16.msra.mxu0 0
    %6809 = vmatprep.subr.bf16.mxu0 0
    %6810 = vmatpush1.bf16.msra.mxu0 0
    %6811 = vmatprep.subr.bf16.mxu0 0
    %6812 = vmatpush1.bf16.msra.mxu0 0
    %6813 = vmatprep.subr.bf16.mxu0 0
    %6814 = vmatpush1.bf16.msra.mxu0 0
    %6815 = vmatprep.subr.bf16.mxu0 0
    %6816 = vmatpush1.bf16.msra.mxu0 0
    %6817 = vmatprep.subr.bf16.mxu0 0
    %6818 = vmatpush1.bf16.msra.mxu0 0
    %6819 = vmatprep.subr.bf16.mxu0 0
    %6820 = vmatpush1.bf16.msra.mxu0 0
    %6821 = vmatprep.subr.bf16.mxu0 0
    %6822 = vmatpush1.bf16.msra.mxu0 0
    %6823 = vmatprep.subr.bf16.mxu0 0
    %6824 = vmatpush1.bf16.msra.mxu0 0
    %6825 = vmatprep.subr.bf16.mxu0 0
    %6826 = vmatpush1.bf16.msra.mxu0 0
    %6827 = vmatprep.subr.bf16.mxu0 0
    %6828 = vmatpush1.bf16.msra.mxu0 0
    %6829 = vmatprep.subr.bf16.mxu0 0
    %6830 = vmatpush1.bf16.msra.mxu0 0
    %6831 = vmatprep.subr.bf16.mxu0 0
    %6832 = vmatpush1.bf16.msra.mxu0 0
    %6833 = vmatprep.subr.bf16.mxu0 0
    %6834 = vmatpush1.bf16.msra.mxu0 0
    %6835 = vmatprep.mubr.bf16.mxu0 0
    %6836 = vmatmul.mubr.bf16.gmra.mrb[0].mxu0 %v6733
    %v6837 = vpop.f32.mrb[0].mxu0
    %v6838 = vadd.f32 0.0, %v6837
    %v6839 = vpop.f32.mrb[0].mxu0
    %v6840 = vadd.f32 0.0, %v6839
    %v6841 = vpop.f32.mrb[0].mxu0
    %v6842 = vadd.f32 0.0, %v6841
    %v6843 = vpop.f32.mrb[0].mxu0
    %v6844 = vadd.f32 0.0, %v6843
    %6845 = vmatprep.mubr.bf16.mxu0 0
    %6846 = vmatmul.mubr.bf16.gmra.mrb[0].mxu0 %v6736
    %v6847 = vpop.f32.mrb[0].mxu0
    %v6848 = vadd.f32 0.0, %v6847
    %v6849 = vpop.f32.mrb[0].mxu0
    %v6850 = vadd.f32 0.0, %v6849
    %v6851 = vpop.f32.mrb[0].mxu0
    %v6852 = vadd.f32 0.0, %v6851
    %v6853 = vpop.f32.mrb[0].mxu0
    %v6854 = vadd.f32 0.0, %v6853
    %6855 = vdwg.mxu0
    %v6856 = vadd.f32 %v6634, %v6785
    %v6857 = vadd.f32 %v6635, %v6787
    %v6858 = vadd.f32 %v6636, %v6838
    %v6859 = vadd.f32 %v6637, %v6840
    %v6860 = vadd.f32 %v6638, %v6789
    %v6861 = vadd.f32 %v6639, %v6791
    %v6862 = vadd.f32 %v6640, %v6842
    %v6863 = vadd.f32 %v6641, %v6844
    %v6864 = vadd.f32 %v6642, %v6795
    %v6865 = vadd.f32 %v6643, %v6797
    %v6866 = vadd.f32 %v6644, %v6848
    %v6867 = vadd.f32 %v6645, %v6850
    %v6868 = vadd.f32 %v6646, %v6799
    %v6869 = vadd.f32 %v6647, %v6801
    %v6870 = vadd.f32 %v6648, %v6852
    %v6871 = vadd.f32 %v6649, %v6854
    %6872 = vrot.lane.b32.xlu0 %v5583, 113
    %v6873 = vpop.permute.xlu0 %6872
    %6874 = vrot.lane.b32.xlu0 %v5587, 113
    %v6875 = vpop.permute.xlu0 %6874
    %6876 = vrot.lane.b32.xlu0 %v5591, 113
    %v6877 = vpop.permute.xlu0 %6876
    %6878 = vrot.lane.b32.xlu0 %v5595, 113
    %v6879 = vpop.permute.xlu0 %6878
    %6880 = vrot.lane.b32.xlu0 %v5584, 113
    %v6881 = vpop.permute.xlu0 %6880
    %6882 = vrot.lane.b32.xlu0 %v5588, 113
    %v6883 = vpop.permute.xlu0 %6882
    %6884 = vrot.lane.b32.xlu0 %v5592, 113
    %v6885 = vpop.permute.xlu0 %6884
    %6886 = vrot.lane.b32.xlu0 %v5596, 113
    %v6887 = vpop.permute.xlu0 %6886
    %6888 = vrot.lane.b32.xlu0 %v5585, 113
    %v6889 = vpop.permute.xlu0 %6888
    %6890 = vrot.lane.b32.xlu0 %v5589, 113
    %v6891 = vpop.permute.xlu0 %6890
    %6892 = vrot.lane.b32.xlu0 %v5593, 113
    %v6893 = vpop.permute.xlu0 %6892
    %6894 = vrot.lane.b32.xlu0 %v5597, 113
    %v6895 = vpop.permute.xlu0 %6894
    %6896 = vrot.lane.b32.xlu0 %v5586, 113
    %v6897 = vpop.permute.xlu0 %6896
    %6898 = vrot.lane.b32.xlu0 %v5590, 113
    %v6899 = vpop.permute.xlu0 %6898
    %6900 = vrot.lane.b32.xlu0 %v5594, 113
    %v6901 = vpop.permute.xlu0 %6900
    %6902 = vrot.lane.b32.xlu0 %v5598, 113
    %v6903 = vpop.permute.xlu0 %6902
    %v6904 = vsel %vm1884, %v6889, %v6897
    %v6905 = vsel %vm1884, %v6891, %v6899
    %v6906 = vsel %vm1884, %v6893, %v6901
    %v6907 = vsel %vm1884, %v6895, %v6903
    %v6908 = vsel %vm1884, %v6881, %v6889
    %v6909 = vsel %vm1884, %v6883, %v6891
    %v6910 = vsel %vm1884, %v6885, %v6893
    %v6911 = vsel %vm1884, %v6887, %v6895
    %v6912 = vsel %vm1884, %v6873, %v6881
    %v6913 = vsel %vm1884, %v6875, %v6883
    %v6914 = vsel %vm1884, %v6877, %v6885
    %v6915 = vsel %vm1884, %v6879, %v6887
    %v6916 = vsel %vm1884, %v6897, %v6873
    %v6917 = vsel %vm1884, %v6899, %v6875
    %v6918 = vsel %vm1884, %v6901, %v6877
    %v6919 = vsel %vm1884, %v6903, %v6879
    %v6920 = vmul.f32 %v6912, %v1905
    %v6921 = vmul.f32 %v6908, %v1909
    %v6922 = vmul.f32 %v6904, %v1913
    %v6923 = vmul.f32 %v6916, %v1917
    %v6924 = vmul.f32 %v6913, %v1905
    %v6925 = vmul.f32 %v6909, %v1909
    %v6926 = vmul.f32 %v6905, %v1913
    %v6927 = vmul.f32 %v6917, %v1917
    %v6928 = vmul.f32 %v6914, %v1905
    %v6929 = vmul.f32 %v6910, %v1909
    %v6930 = vmul.f32 %v6906, %v1913
    %v6931 = vmul.f32 %v6918, %v1917
    %v6932 = vmul.f32 %v6915, %v1905
    %v6933 = vmul.f32 %v6911, %v1909
    %v6934 = vmul.f32 %v6907, %v1913
    %v6935 = vmul.f32 %v6919, %v1917
    %v6936 = vpack.c.bf16 %v6924, %v6920
    %v6937 = vpack.c.bf16 %v6925, %v6921
    %v6938 = vpack.c.bf16 %v6926, %v6922
    %v6939 = vpack.c.bf16 %v6927, %v6923
    %v6940 = vpack.c.bf16 %v6932, %v6928
    %v6941 = vpack.c.bf16 %v6933, %v6929
    %v6942 = vpack.c.bf16 %v6934, %v6930
    %v6943 = vpack.c.bf16 %v6935, %v6931
    %v6948 = vunpack.c.l.b16 %v5624
    %v6949 = vunpack.c.l.b16 %v5625
    %v6950 = vunpack.c.l.b16 %v5626
    %v6951 = vunpack.c.l.b16 %v5627
    %v6952 = vpack.c.b16 %v6949, %v6948
    %v6953 = vpack.c.b16 %v6951, %v6950
    %v6955 = vsel %vm616, %v6952, 0
    %v6958 = vsel %vm616, %v6953, 0
    %v6961 = vsel %vm623, %v6940, 0
    %v6964 = vsel %vm623, %v6941, 0
    %v6967 = vsel %vm623, %v6942, 0
    %v6970 = vsel %vm623, %v6943, 0
    %6972 = vmatprep.subr.bf16.mxu0 %v6937
    %6973 = vmatpush1.bf16.msra.mxu0 %v6936
    %6974 = vmatprep.subr.bf16.mxu0 %v6964
    %6975 = vmatpush1.bf16.msra.mxu0 %v6961
    %6976 = vmatprep.subr.bf16.mxu0 0
    %6977 = vmatpush1.bf16.msra.mxu0 0
    %6978 = vmatprep.subr.bf16.mxu0 0
    %6979 = vmatpush1.bf16.msra.mxu0 0
    %6980 = vmatprep.subr.bf16.mxu0 0
    %6981 = vmatpush1.bf16.msra.mxu0 0
    %6982 = vmatprep.subr.bf16.mxu0 0
    %6983 = vmatpush1.bf16.msra.mxu0 0
    %6984 = vmatprep.subr.bf16.mxu0 0
    %6985 = vmatpush1.bf16.msra.mxu0 0
    %6986 = vmatprep.subr.bf16.mxu0 0
    %6987 = vmatpush1.bf16.msra.mxu0 0
    %6988 = vmatprep.subr.bf16.mxu0 0
    %6989 = vmatpush1.bf16.msra.mxu0 0
    %6990 = vmatprep.subr.bf16.mxu0 0
    %6991 = vmatpush1.bf16.msra.mxu0 0
    %6992 = vmatprep.subr.bf16.mxu0 0
    %6993 = vmatpush1.bf16.msra.mxu0 0
    %6994 = vmatprep.subr.bf16.mxu0 0
    %6995 = vmatpush1.bf16.msra.mxu0 0
    %6996 = vmatprep.subr.bf16.mxu0 0
    %6997 = vmatpush1.bf16.msra.mxu0 0
    %6998 = vmatprep.subr.bf16.mxu0 0
    %6999 = vmatpush1.bf16.msra.mxu0 0
    %7000 = vmatprep.subr.bf16.mxu0 0
    %7001 = vmatpush1.bf16.msra.mxu0 0
    %7002 = vmatprep.subr.bf16.mxu0 0
    %7003 = vmatpush1.bf16.msra.mxu0 0
    %7004 = vmatprep.mubr.bf16.mxu0 0
    %7005 = vmatmul.mubr.bf16.gmra.mrb[0].mxu0 %v6955
    %v7006 = vpop.f32.mrb[0].mxu0
    %v7007 = vadd.f32 0.0, %v7006
    %v7008 = vpop.f32.mrb[0].mxu0
    %v7009 = vadd.f32 0.0, %v7008
    %v7010 = vpop.f32.mrb[0].mxu0
    %v7011 = vadd.f32 0.0, %v7010
    %v7012 = vpop.f32.mrb[0].mxu0
    %v7013 = vadd.f32 0.0, %v7012
    %7014 = vmatprep.mubr.bf16.mxu0 0
    %7015 = vmatmul.mubr.bf16.gmra.mrb[0].mxu0 %v6958
    %v7016 = vpop.f32.mrb[0].mxu0
    %v7017 = vadd.f32 0.0, %v7016
    %v7018 = vpop.f32.mrb[0].mxu0
    %v7019 = vadd.f32 0.0, %v7018
    %v7020 = vpop.f32.mrb[0].mxu0
    %v7021 = vadd.f32 0.0, %v7020
    %v7022 = vpop.f32.mrb[0].mxu0
    %v7023 = vadd.f32 0.0, %v7022
    %7024 = vdwg.mxu0
    %7025 = vmatprep.subr.bf16.mxu0 %v6939
    %7026 = vmatpush1.bf16.msra.mxu0 %v6938
    %7027 = vmatprep.subr.bf16.mxu0 %v6970
    %7028 = vmatpush1.bf16.msra.mxu0 %v6967
    %7029 = vmatprep.subr.bf16.mxu0 0
    %7030 = vmatpush1.bf16.msra.mxu0 0
    %7031 = vmatprep.subr.bf16.mxu0 0
    %7032 = vmatpush1.bf16.msra.mxu0 0
    %7033 = vmatprep.subr.bf16.mxu0 0
    %7034 = vmatpush1.bf16.msra.mxu0 0
    %7035 = vmatprep.subr.bf16.mxu0 0
    %7036 = vmatpush1.bf16.msra.mxu0 0
    %7037 = vmatprep.subr.bf16.mxu0 0
    %7038 = vmatpush1.bf16.msra.mxu0 0
    %7039 = vmatprep.subr.bf16.mxu0 0
    %7040 = vmatpush1.bf16.msra.mxu0 0
    %7041 = vmatprep.subr.bf16.mxu0 0
    %7042 = vmatpush1.bf16.msra.mxu0 0
    %7043 = vmatprep.subr.bf16.mxu0 0
    %7044 = vmatpush1.bf16.msra.mxu0 0
    %7045 = vmatprep.subr.bf16.mxu0 0
    %7046 = vmatpush1.bf16.msra.mxu0 0
    %7047 = vmatprep.subr.bf16.mxu0 0
    %7048 = vmatpush1.bf16.msra.mxu0 0
    %7049 = vmatprep.subr.bf16.mxu0 0
    %7050 = vmatpush1.bf16.msra.mxu0 0
    %7051 = vmatprep.subr.bf16.mxu0 0
    %7052 = vmatpush1.bf16.msra.mxu0 0
    %7053 = vmatprep.subr.bf16.mxu0 0
    %7054 = vmatpush1.bf16.msra.mxu0 0
    %7055 = vmatprep.subr.bf16.mxu0 0
    %7056 = vmatpush1.bf16.msra.mxu0 0
    %7057 = vmatprep.mubr.bf16.mxu0 0
    %7058 = vmatmul.mubr.bf16.gmra.mrb[0].mxu0 %v6955
    %v7059 = vpop.f32.mrb[0].mxu0
    %v7060 = vadd.f32 0.0, %v7059
    %v7061 = vpop.f32.mrb[0].mxu0
    %v7062 = vadd.f32 0.0, %v7061
    %v7063 = vpop.f32.mrb[0].mxu0
    %v7064 = vadd.f32 0.0, %v7063
    %v7065 = vpop.f32.mrb[0].mxu0
    %v7066 = vadd.f32 0.0, %v7065
    %7067 = vmatprep.mubr.bf16.mxu0 0
    %7068 = vmatmul.mubr.bf16.gmra.mrb[0].mxu0 %v6958
    %v7069 = vpop.f32.mrb[0].mxu0
    %v7070 = vadd.f32 0.0, %v7069
    %v7071 = vpop.f32.mrb[0].mxu0
    %v7072 = vadd.f32 0.0, %v7071
    %v7073 = vpop.f32.mrb[0].mxu0
    %v7074 = vadd.f32 0.0, %v7073
    %v7075 = vpop.f32.mrb[0].mxu0
    %v7076 = vadd.f32 0.0, %v7075
    %7077 = vdwg.mxu0
    %v7078 = vadd.f32 %v6856, %v7007
    %v7079 = vadd.f32 %v6857, %v7009
    %v7080 = vadd.f32 %v6858, %v7060
    %v7081 = vadd.f32 %v6859, %v7062
    %v7082 = vadd.f32 %v6860, %v7011
    %v7083 = vadd.f32 %v6861, %v7013
    %v7084 = vadd.f32 %v6862, %v7064
    %v7085 = vadd.f32 %v6863, %v7066
    %v7086 = vadd.f32 %v6864, %v7017
    %v7087 = vadd.f32 %v6865, %v7019
    %v7088 = vadd.f32 %v6866, %v7070
    %v7089 = vadd.f32 %v6867, %v7072
    %v7090 = vadd.f32 %v6868, %v7021
    %v7091 = vadd.f32 %v6869, %v7023
    %v7092 = vadd.f32 %v6870, %v7074
    %v7093 = vadd.f32 %v6871, %v7076
    %7094 = vrot.lane.b32.xlu0 %v5583, 112
    %v7095 = vpop.permute.xlu0 %7094
    %7096 = vrot.lane.b32.xlu0 %v5587, 112
    %v7097 = vpop.permute.xlu0 %7096
    %7098 = vrot.lane.b32.xlu0 %v5591, 112
    %v7099 = vpop.permute.xlu0 %7098
    %7100 = vrot.lane.b32.xlu0 %v5595, 112
    %v7101 = vpop.permute.xlu0 %7100
    %7102 = vrot.lane.b32.xlu0 %v5584, 112
    %v7103 = vpop.permute.xlu0 %7102
    %7104 = vrot.lane.b32.xlu0 %v5588, 112
    %v7105 = vpop.permute.xlu0 %7104
    %7106 = vrot.lane.b32.xlu0 %v5592, 112
    %v7107 = vpop.permute.xlu0 %7106
    %7108 = vrot.lane.b32.xlu0 %v5596, 112
    %v7109 = vpop.permute.xlu0 %7108
    %7110 = vrot.lane.b32.xlu0 %v5585, 112
    %v7111 = vpop.permute.xlu0 %7110
    %7112 = vrot.lane.b32.xlu0 %v5589, 112
    %v7113 = vpop.permute.xlu0 %7112
    %7114 = vrot.lane.b32.xlu0 %v5593, 112
    %v7115 = vpop.permute.xlu0 %7114
    %7116 = vrot.lane.b32.xlu0 %v5597, 112
    %v7117 = vpop.permute.xlu0 %7116
    %7118 = vrot.lane.b32.xlu0 %v5586, 112
    %v7119 = vpop.permute.xlu0 %7118
    %7120 = vrot.lane.b32.xlu0 %v5590, 112
    %v7121 = vpop.permute.xlu0 %7120
    %7122 = vrot.lane.b32.xlu0 %v5594, 112
    %v7123 = vpop.permute.xlu0 %7122
    %7124 = vrot.lane.b32.xlu0 %v5598, 112
    %v7125 = vpop.permute.xlu0 %7124
    %v7126 = vsel %vm2128, %v7111, %v7119
    %v7127 = vsel %vm2128, %v7113, %v7121
    %v7128 = vsel %vm2128, %v7115, %v7123
    %v7129 = vsel %vm2128, %v7117, %v7125
    %v7130 = vsel %vm2128, %v7103, %v7111
    %v7131 = vsel %vm2128, %v7105, %v7113
    %v7132 = vsel %vm2128, %v7107, %v7115
    %v7133 = vsel %vm2128, %v7109, %v7117
    %v7134 = vsel %vm2128, %v7095, %v7103
    %v7135 = vsel %vm2128, %v7097, %v7105
    %v7136 = vsel %vm2128, %v7099, %v7107
    %v7137 = vsel %vm2128, %v7101, %v7109
    %v7138 = vsel %vm2128, %v7119, %v7095
    %v7139 = vsel %vm2128, %v7121, %v7097
    %v7140 = vsel %vm2128, %v7123, %v7099
    %v7141 = vsel %vm2128, %v7125, %v7101
    %v7142 = vmul.f32 %v7134, %v2149
    %v7143 = vmul.f32 %v7130, %v2153
    %v7144 = vmul.f32 %v7126, %v2157
    %v7145 = vmul.f32 %v7138, %v2161
    %v7146 = vmul.f32 %v7135, %v2149
    %v7147 = vmul.f32 %v7131, %v2153
    %v7148 = vmul.f32 %v7127, %v2157
    %v7149 = vmul.f32 %v7139, %v2161
    %v7150 = vmul.f32 %v7136, %v2149
    %v7151 = vmul.f32 %v7132, %v2153
    %v7152 = vmul.f32 %v7128, %v2157
    %v7153 = vmul.f32 %v7140, %v2161
    %v7154 = vmul.f32 %v7137, %v2149
    %v7155 = vmul.f32 %v7133, %v2153
    %v7156 = vmul.f32 %v7129, %v2157
    %v7157 = vmul.f32 %v7141, %v2161
    %v7158 = vpack.c.bf16 %v7146, %v7142
    %v7159 = vpack.c.bf16 %v7147, %v7143
    %v7160 = vpack.c.bf16 %v7148, %v7144
    %v7161 = vpack.c.bf16 %v7149, %v7145
    %v7162 = vpack.c.bf16 %v7154, %v7150
    %v7163 = vpack.c.bf16 %v7155, %v7151
    %v7164 = vpack.c.bf16 %v7156, %v7152
    %v7165 = vpack.c.bf16 %v7157, %v7153
    %v7170 = vunpack.c.l.b16 %v5628
    %v7171 = vunpack.c.l.b16 %v5629
    %v7172 = vunpack.c.l.b16 %v5630
    %v7173 = vunpack.c.l.b16 %v5631
    %v7174 = vpack.c.b16 %v7171, %v7170
    %v7175 = vpack.c.b16 %v7173, %v7172
    %v7177 = vsel %vm616, %v7174, 0
    %v7180 = vsel %vm616, %v7175, 0
    %v7183 = vsel %vm623, %v7162, 0
    %v7186 = vsel %vm623, %v7163, 0
    %v7189 = vsel %vm623, %v7164, 0
    %v7192 = vsel %vm623, %v7165, 0
    %7194 = vmatprep.subr.bf16.mxu0 %v7159
    %7195 = vmatpush1.bf16.msra.mxu0 %v7158
    %7196 = vmatprep.subr.bf16.mxu0 %v7186
    %7197 = vmatpush1.bf16.msra.mxu0 %v7183
    %7198 = vmatprep.subr.bf16.mxu0 0
    %7199 = vmatpush1.bf16.msra.mxu0 0
    %7200 = vmatprep.subr.bf16.mxu0 0
    %7201 = vmatpush1.bf16.msra.mxu0 0
    %7202 = vmatprep.subr.bf16.mxu0 0
    %7203 = vmatpush1.bf16.msra.mxu0 0
    %7204 = vmatprep.subr.bf16.mxu0 0
    %7205 = vmatpush1.bf16.msra.mxu0 0
    %7206 = vmatprep.subr.bf16.mxu0 0
    %7207 = vmatpush1.bf16.msra.mxu0 0
    %7208 = vmatprep.subr.bf16.mxu0 0
    %7209 = vmatpush1.bf16.msra.mxu0 0
    %7210 = vmatprep.subr.bf16.mxu0 0
    %7211 = vmatpush1.bf16.msra.mxu0 0
    %7212 = vmatprep.subr.bf16.mxu0 0
    %7213 = vmatpush1.bf16.msra.mxu0 0
    %7214 = vmatprep.subr.bf16.mxu0 0
    %7215 = vmatpush1.bf16.msra.mxu0 0
    %7216 = vmatprep.subr.bf16.mxu0 0
    %7217 = vmatpush1.bf16.msra.mxu0 0
    %7218 = vmatprep.subr.bf16.mxu0 0
    %7219 = vmatpush1.bf16.msra.mxu0 0
    %7220 = vmatprep.subr.bf16.mxu0 0
    %7221 = vmatpush1.bf16.msra.mxu0 0
    %7222 = vmatprep.subr.bf16.mxu0 0
    %7223 = vmatpush1.bf16.msra.mxu0 0
    %7224 = vmatprep.subr.bf16.mxu0 0
    %7225 = vmatpush1.bf16.msra.mxu0 0
    %7226 = vmatprep.mubr.bf16.mxu0 0
    %7227 = vmatmul.mubr.bf16.gmra.mrb[0].mxu0 %v7177
    %v7228 = vpop.f32.mrb[0].mxu0
    %v7229 = vadd.f32 0.0, %v7228
    %v7230 = vpop.f32.mrb[0].mxu0
    %v7231 = vadd.f32 0.0, %v7230
    %v7232 = vpop.f32.mrb[0].mxu0
    %v7233 = vadd.f32 0.0, %v7232
    %v7234 = vpop.f32.mrb[0].mxu0
    %v7235 = vadd.f32 0.0, %v7234
    %7236 = vmatprep.mubr.bf16.mxu0 0
    %7237 = vmatmul.mubr.bf16.gmra.mrb[0].mxu0 %v7180
    %v7238 = vpop.f32.mrb[0].mxu0
    %v7239 = vadd.f32 0.0, %v7238
    %v7240 = vpop.f32.mrb[0].mxu0
    %v7241 = vadd.f32 0.0, %v7240
    %v7242 = vpop.f32.mrb[0].mxu0
    %v7243 = vadd.f32 0.0, %v7242
    %v7244 = vpop.f32.mrb[0].mxu0
    %v7245 = vadd.f32 0.0, %v7244
    %7246 = vdwg.mxu0
    %7247 = vmatprep.subr.bf16.mxu0 %v7161
    %7248 = vmatpush1.bf16.msra.mxu0 %v7160
    %7249 = vmatprep.subr.bf16.mxu0 %v7192
    %7250 = vmatpush1.bf16.msra.mxu0 %v7189
    %7251 = vmatprep.subr.bf16.mxu0 0
    %7252 = vmatpush1.bf16.msra.mxu0 0
    %7253 = vmatprep.subr.bf16.mxu0 0
    %7254 = vmatpush1.bf16.msra.mxu0 0
    %7255 = vmatprep.subr.bf16.mxu0 0
    %7256 = vmatpush1.bf16.msra.mxu0 0
    %7257 = vmatprep.subr.bf16.mxu0 0
    %7258 = vmatpush1.bf16.msra.mxu0 0
    %7259 = vmatprep.subr.bf16.mxu0 0
    %7260 = vmatpush1.bf16.msra.mxu0 0
    %7261 = vmatprep.subr.bf16.mxu0 0
    %7262 = vmatpush1.bf16.msra.mxu0 0
    %7263 = vmatprep.subr.bf16.mxu0 0
    %7264 = vmatpush1.bf16.msra.mxu0 0
    %7265 = vmatprep.subr.bf16.mxu0 0
    %7266 = vmatpush1.bf16.msra.mxu0 0
    %7267 = vmatprep.subr.bf16.mxu0 0
    %7268 = vmatpush1.bf16.msra.mxu0 0
    %7269 = vmatprep.subr.bf16.mxu0 0
    %7270 = vmatpush1.bf16.msra.mxu0 0
    %7271 = vmatprep.subr.bf16.mxu0 0
    %7272 = vmatpush1.bf16.msra.mxu0 0
    %7273 = vmatprep.subr.bf16.mxu0 0
    %7274 = vmatpush1.bf16.msra.mxu0 0
    %7275 = vmatprep.subr.bf16.mxu0 0
    %7276 = vmatpush1.bf16.msra.mxu0 0
    %7277 = vmatprep.subr.bf16.mxu0 0
    %7278 = vmatpush1.bf16.msra.mxu0 0
    %7279 = vmatprep.mubr.bf16.mxu0 0
    %7280 = vmatmul.mubr.bf16.gmra.mrb[0].mxu0 %v7177
    %v7281 = vpop.f32.mrb[0].mxu0
    %v7282 = vadd.f32 0.0, %v7281
    %v7283 = vpop.f32.mrb[0].mxu0
    %v7284 = vadd.f32 0.0, %v7283
    %v7285 = vpop.f32.mrb[0].mxu0
    %v7286 = vadd.f32 0.0, %v7285
    %v7287 = vpop.f32.mrb[0].mxu0
    %v7288 = vadd.f32 0.0, %v7287
    %7289 = vmatprep.mubr.bf16.mxu0 0
    %7290 = vmatmul.mubr.bf16.gmra.mrb[0].mxu0 %v7180
    %v7291 = vpop.f32.mrb[0].mxu0
    %v7292 = vadd.f32 0.0, %v7291
    %v7293 = vpop.f32.mrb[0].mxu0
    %v7294 = vadd.f32 0.0, %v7293
    %v7295 = vpop.f32.mrb[0].mxu0
    %v7296 = vadd.f32 0.0, %v7295
    %v7297 = vpop.f32.mrb[0].mxu0
    %v7298 = vadd.f32 0.0, %v7297
    %7299 = vdwg.mxu0
    %v7300 = vadd.f32 %v7078, %v7229
    %v7301 = vadd.f32 %v7079, %v7231
    %v7302 = vadd.f32 %v7080, %v7282
    %v7303 = vadd.f32 %v7081, %v7284
    %v7304 = vadd.f32 %v7082, %v7233
    %v7305 = vadd.f32 %v7083, %v7235
    %v7306 = vadd.f32 %v7084, %v7286
    %v7307 = vadd.f32 %v7085, %v7288
    %v7308 = vadd.f32 %v7086, %v7239
    %v7309 = vadd.f32 %v7087, %v7241
    %v7310 = vadd.f32 %v7088, %v7292
    %v7311 = vadd.f32 %v7089, %v7294
    %v7312 = vadd.f32 %v7090, %v7243
    %v7313 = vadd.f32 %v7091, %v7245
    %v7314 = vadd.f32 %v7092, %v7296
    %v7315 = vadd.f32 %v7093, %v7298
    %7316 = vrot.lane.b32.xlu0 %v5583, 111
    %v7317 = vpop.permute.xlu0 %7316
    %7318 = vrot.lane.b32.xlu0 %v5587, 111
    %v7319 = vpop.permute.xlu0 %7318
    %7320 = vrot.lane.b32.xlu0 %v5591, 111
    %v7321 = vpop.permute.xlu0 %7320
    %7322 = vrot.lane.b32.xlu0 %v5595, 111
    %v7323 = vpop.permute.xlu0 %7322
    %7324 = vrot.lane.b32.xlu0 %v5584, 111
    %v7325 = vpop.permute.xlu0 %7324
    %7326 = vrot.lane.b32.xlu0 %v5588, 111
    %v7327 = vpop.permute.xlu0 %7326
    %7328 = vrot.lane.b32.xlu0 %v5592, 111
    %v7329 = vpop.permute.xlu0 %7328
    %7330 = vrot.lane.b32.xlu0 %v5596, 111
    %v7331 = vpop.permute.xlu0 %7330
    %7332 = vrot.lane.b32.xlu0 %v5585, 111
    %v7333 = vpop.permute.xlu0 %7332
    %7334 = vrot.lane.b32.xlu0 %v5589, 111
    %v7335 = vpop.permute.xlu0 %7334
    %7336 = vrot.lane.b32.xlu0 %v5593, 111
    %v7337 = vpop.permute.xlu0 %7336
    %7338 = vrot.lane.b32.xlu0 %v5597, 111
    %v7339 = vpop.permute.xlu0 %7338
    %7340 = vrot.lane.b32.xlu0 %v5586, 111
    %v7341 = vpop.permute.xlu0 %7340
    %7342 = vrot.lane.b32.xlu0 %v5590, 111
    %v7343 = vpop.permute.xlu0 %7342
    %7344 = vrot.lane.b32.xlu0 %v5594, 111
    %v7345 = vpop.permute.xlu0 %7344
    %7346 = vrot.lane.b32.xlu0 %v5598, 111
    %v7347 = vpop.permute.xlu0 %7346
    %v7348 = vsel %vm2372, %v7333, %v7341
    %v7349 = vsel %vm2372, %v7335, %v7343
    %v7350 = vsel %vm2372, %v7337, %v7345
    %v7351 = vsel %vm2372, %v7339, %v7347
    %v7352 = vsel %vm2372, %v7325, %v7333
    %v7353 = vsel %vm2372, %v7327, %v7335
    %v7354 = vsel %vm2372, %v7329, %v7337
    %v7355 = vsel %vm2372, %v7331, %v7339
    %v7356 = vsel %vm2372, %v7317, %v7325
    %v7357 = vsel %vm2372, %v7319, %v7327
    %v7358 = vsel %vm2372, %v7321, %v7329
    %v7359 = vsel %vm2372, %v7323, %v7331
    %v7360 = vsel %vm2372, %v7341, %v7317
    %v7361 = vsel %vm2372, %v7343, %v7319
    %v7362 = vsel %vm2372, %v7345, %v7321
    %v7363 = vsel %vm2372, %v7347, %v7323
    %v7364 = vmul.f32 %v7356, %v2393
    %v7365 = vmul.f32 %v7352, %v2397
    %v7366 = vmul.f32 %v7348, %v2401
    %v7367 = vmul.f32 %v7360, %v2405
    %v7368 = vmul.f32 %v7357, %v2393
    %v7369 = vmul.f32 %v7353, %v2397
    %v7370 = vmul.f32 %v7349, %v2401
    %v7371 = vmul.f32 %v7361, %v2405
    %v7372 = vmul.f32 %v7358, %v2393
    %v7373 = vmul.f32 %v7354, %v2397
    %v7374 = vmul.f32 %v7350, %v2401
    %v7375 = vmul.f32 %v7362, %v2405
    %v7376 = vmul.f32 %v7359, %v2393
    %v7377 = vmul.f32 %v7355, %v2397
    %v7378 = vmul.f32 %v7351, %v2401
    %v7379 = vmul.f32 %v7363, %v2405
    %v7380 = vpack.c.bf16 %v7368, %v7364
    %v7381 = vpack.c.bf16 %v7369, %v7365
    %v7382 = vpack.c.bf16 %v7370, %v7366
    %v7383 = vpack.c.bf16 %v7371, %v7367
    %v7384 = vpack.c.bf16 %v7376, %v7372
    %v7385 = vpack.c.bf16 %v7377, %v7373
    %v7386 = vpack.c.bf16 %v7378, %v7374
    %v7387 = vpack.c.bf16 %v7379, %v7375
    %v7392 = vunpack.c.l.b16 %v5632
    %v7393 = vunpack.c.l.b16 %v5633
    %v7394 = vunpack.c.l.b16 %v5634
    %v7395 = vunpack.c.l.b16 %v5635
    %v7396 = vpack.c.b16 %v7393, %v7392
    %v7397 = vpack.c.b16 %v7395, %v7394
    %v7399 = vsel %vm616, %v7396, 0
    %v7402 = vsel %vm616, %v7397, 0
    %v7405 = vsel %vm623, %v7384, 0
    %v7408 = vsel %vm623, %v7385, 0
    %v7411 = vsel %vm623, %v7386, 0
    %v7414 = vsel %vm623, %v7387, 0
    %7416 = vmatprep.subr.bf16.mxu0 %v7381
    %7417 = vmatpush1.bf16.msra.mxu0 %v7380
    %7418 = vmatprep.subr.bf16.mxu0 %v7408
    %7419 = vmatpush1.bf16.msra.mxu0 %v7405
    %7420 = vmatprep.subr.bf16.mxu0 0
    %7421 = vmatpush1.bf16.msra.mxu0 0
    %7422 = vmatprep.subr.bf16.mxu0 0
    %7423 = vmatpush1.bf16.msra.mxu0 0
    %7424 = vmatprep.subr.bf16.mxu0 0
    %7425 = vmatpush1.bf16.msra.mxu0 0
    %7426 = vmatprep.subr.bf16.mxu0 0
    %7427 = vmatpush1.bf16.msra.mxu0 0
    %7428 = vmatprep.subr.bf16.mxu0 0
    %7429 = vmatpush1.bf16.msra.mxu0 0
    %7430 = vmatprep.subr.bf16.mxu0 0
    %7431 = vmatpush1.bf16.msra.mxu0 0
    %7432 = vmatprep.subr.bf16.mxu0 0
    %7433 = vmatpush1.bf16.msra.mxu0 0
    %7434 = vmatprep.subr.bf16.mxu0 0
    %7435 = vmatpush1.bf16.msra.mxu0 0
    %7436 = vmatprep.subr.bf16.mxu0 0
    %7437 = vmatpush1.bf16.msra.mxu0 0
    %7438 = vmatprep.subr.bf16.mxu0 0
    %7439 = vmatpush1.bf16.msra.mxu0 0
    %7440 = vmatprep.subr.bf16.mxu0 0
    %7441 = vmatpush1.bf16.msra.mxu0 0
    %7442 = vmatprep.subr.bf16.mxu0 0
    %7443 = vmatpush1.bf16.msra.mxu0 0
    %7444 = vmatprep.subr.bf16.mxu0 0
    %7445 = vmatpush1.bf16.msra.mxu0 0
    %7446 = vmatprep.subr.bf16.mxu0 0
    %7447 = vmatpush1.bf16.msra.mxu0 0
    %7448 = vmatprep.mubr.bf16.mxu0 0
    %7449 = vmatmul.mubr.bf16.gmra.mrb[0].mxu0 %v7399
    %v7450 = vpop.f32.mrb[0].mxu0
    %v7451 = vadd.f32 0.0, %v7450
    %v7452 = vpop.f32.mrb[0].mxu0
    %v7453 = vadd.f32 0.0, %v7452
    %v7454 = vpop.f32.mrb[0].mxu0
    %v7455 = vadd.f32 0.0, %v7454
    %v7456 = vpop.f32.mrb[0].mxu0
    %v7457 = vadd.f32 0.0, %v7456
    %7458 = vmatprep.mubr.bf16.mxu0 0
    %7459 = vmatmul.mubr.bf16.gmra.mrb[0].mxu0 %v7402
    %v7460 = vpop.f32.mrb[0].mxu0
    %v7461 = vadd.f32 0.0, %v7460
    %v7462 = vpop.f32.mrb[0].mxu0
    %v7463 = vadd.f32 0.0, %v7462
    %v7464 = vpop.f32.mrb[0].mxu0
    %v7465 = vadd.f32 0.0, %v7464
    %v7466 = vpop.f32.mrb[0].mxu0
    %v7467 = vadd.f32 0.0, %v7466
    %7468 = vdwg.mxu0
    %7469 = vmatprep.subr.bf16.mxu0 %v7383
    %7470 = vmatpush1.bf16.msra.mxu0 %v7382
    %7471 = vmatprep.subr.bf16.mxu0 %v7414
    %7472 = vmatpush1.bf16.msra.mxu0 %v7411
    %7473 = vmatprep.subr.bf16.mxu0 0
    %7474 = vmatpush1.bf16.msra.mxu0 0
    %7475 = vmatprep.subr.bf16.mxu0 0
    %7476 = vmatpush1.bf16.msra.mxu0 0
    %7477 = vmatprep.subr.bf16.mxu0 0
    %7478 = vmatpush1.bf16.msra.mxu0 0
    %7479 = vmatprep.subr.bf16.mxu0 0
    %7480 = vmatpush1.bf16.msra.mxu0 0
    %7481 = vmatprep.subr.bf16.mxu0 0
    %7482 = vmatpush1.bf16.msra.mxu0 0
    %7483 = vmatprep.subr.bf16.mxu0 0
    %7484 = vmatpush1.bf16.msra.mxu0 0
    %7485 = vmatprep.subr.bf16.mxu0 0
    %7486 = vmatpush1.bf16.msra.mxu0 0
    %7487 = vmatprep.subr.bf16.mxu0 0
    %7488 = vmatpush1.bf16.msra.mxu0 0
    %7489 = vmatprep.subr.bf16.mxu0 0
    %7490 = vmatpush1.bf16.msra.mxu0 0
    %7491 = vmatprep.subr.bf16.mxu0 0
    %7492 = vmatpush1.bf16.msra.mxu0 0
    %7493 = vmatprep.subr.bf16.mxu0 0
    %7494 = vmatpush1.bf16.msra.mxu0 0
    %7495 = vmatprep.subr.bf16.mxu0 0
    %7496 = vmatpush1.bf16.msra.mxu0 0
    %7497 = vmatprep.subr.bf16.mxu0 0
    %7498 = vmatpush1.bf16.msra.mxu0 0
    %7499 = vmatprep.subr.bf16.mxu0 0
    %7500 = vmatpush1.bf16.msra.mxu0 0
    %7501 = vmatprep.mubr.bf16.mxu0 0
    %7502 = vmatmul.mubr.bf16.gmra.mrb[0].mxu0 %v7399
    %v7503 = vpop.f32.mrb[0].mxu0
    %v7504 = vadd.f32 0.0, %v7503
    %v7505 = vpop.f32.mrb[0].mxu0
    %v7506 = vadd.f32 0.0, %v7505
    %v7507 = vpop.f32.mrb[0].mxu0
    %v7508 = vadd.f32 0.0, %v7507
    %v7509 = vpop.f32.mrb[0].mxu0
    %v7510 = vadd.f32 0.0, %v7509
    %7511 = vmatprep.mubr.bf16.mxu0 0
    %7512 = vmatmul.mubr.bf16.gmra.mrb[0].mxu0 %v7402
    %v7513 = vpop.f32.mrb[0].mxu0
    %v7514 = vadd.f32 0.0, %v7513
    %v7515 = vpop.f32.mrb[0].mxu0
    %v7516 = vadd.f32 0.0, %v7515
    %v7517 = vpop.f32.mrb[0].mxu0
    %v7518 = vadd.f32 0.0, %v7517
    %v7519 = vpop.f32.mrb[0].mxu0
    %v7520 = vadd.f32 0.0, %v7519
    %7521 = vdwg.mxu0
    %v7522 = vadd.f32 %v7300, %v7451
    %v7523 = vadd.f32 %v7301, %v7453
    %v7524 = vadd.f32 %v7302, %v7504
    %v7525 = vadd.f32 %v7303, %v7506
    %v7526 = vadd.f32 %v7304, %v7455
    %v7527 = vadd.f32 %v7305, %v7457
    %v7528 = vadd.f32 %v7306, %v7508
    %v7529 = vadd.f32 %v7307, %v7510
    %v7530 = vadd.f32 %v7308, %v7461
    %v7531 = vadd.f32 %v7309, %v7463
    %v7532 = vadd.f32 %v7310, %v7514
    %v7533 = vadd.f32 %v7311, %v7516
    %v7534 = vadd.f32 %v7312, %v7465
    %v7535 = vadd.f32 %v7313, %v7467
    %v7536 = vadd.f32 %v7314, %v7518
    %v7537 = vadd.f32 %v7315, %v7520
    %s7538 = scalar_lea.vmem %s7, 64
    %v7539 = vld [vmem:[%s7538] sm:$0xff]
    %v7540 = vld [vmem:[%s7538 + $0x8] sm:$0xff]
    %v7541 = vld [vmem:[%s7538 + $0x10] sm:$0xff]
    %v7542 = vld [vmem:[%s7538 + $0x18] sm:$0x3f]
    %s7543 = scalar_lea.vmem %s8, 64
    %v7544 = vld [vmem:[%s7543] sm:$0xff]
    %v7545 = vld [vmem:[%s7543 + $0x8] sm:$0xff]
    %v7546 = vld [vmem:[%s7543 + $0x10] sm:$0xff]
    %v7547 = vld [vmem:[%s7543 + $0x18] sm:$0x3f]
    %v7548 = vadd.f32 %v7522, %v7523
    %v7549 = vadd.f32 %v7548, %v7524
    %v7550 = vadd.f32 %v7549, %v7525
    %7551 = vadd.xlane.f32.xlu0 %v7550
    %v7552 = vpop.xlane.xlu0 %7551
    %v7553 = vadd.f32 %v7526, %v7527
    %v7554 = vadd.f32 %v7553, %v7528
    %v7555 = vadd.f32 %v7554, %v7529
    %7556 = vadd.xlane.f32.xlu0 %v7555
    %v7557 = vpop.xlane.xlu0 %7556
    %v7558 = vadd.f32 %v7530, %v7531
    %v7559 = vadd.f32 %v7558, %v7532
    %v7560 = vadd.f32 %v7559, %v7533
    %7561 = vadd.xlane.f32.xlu0 %v7560
    %v7562 = vpop.xlane.xlu0 %7561
    %v7563 = vsel %vm283, %v7534, 0.0
    %v7564 = vsel %vm283, %v7535, 0.0
    %v7565 = vadd.f32 %v7563, %v7564
    %v7566 = vsel %vm283, %v7536, 0.0
    %v7567 = vadd.f32 %v7565, %v7566
    %v7568 = vsel %vm283, %v7537, 0.0
    %v7569 = vadd.f32 %v7567, %v7568
    %7570 = vadd.xlane.f32.xlu0 %v7569
    %v7571 = vpop.xlane.xlu0 %7570
    %v7572 = vmul.f32 %v7552, %v293
    %v7573 = vmul.f32 %v7557, %v293
    %v7574 = vmul.f32 %v7562, %v293
    %v7575 = vmul.f32 %v7571, %v293
    %v7576 = vsub.f32 %v7522, %v7572
    %v7577 = vsub.f32 %v7523, %v7572
    %v7578 = vsub.f32 %v7524, %v7572
    %v7579 = vsub.f32 %v7525, %v7572
    %v7580 = vsub.f32 %v7526, %v7573
    %v7581 = vsub.f32 %v7527, %v7573
    %v7582 = vsub.f32 %v7528, %v7573
    %v7583 = vsub.f32 %v7529, %v7573
    %v7584 = vsub.f32 %v7530, %v7574
    %v7585 = vsub.f32 %v7531, %v7574
    %v7586 = vsub.f32 %v7532, %v7574
    %v7587 = vsub.f32 %v7533, %v7574
    %v7588 = vsub.f32 %v7534, %v7575
    %v7589 = vsub.f32 %v7535, %v7575
    %v7590 = vsub.f32 %v7536, %v7575
    %v7591 = vsub.f32 %v7537, %v7575
    %v7592 = vmul.f32 %v7576, %v7576
    %v7593 = vmul.f32 %v7577, %v7577
    %v7594 = vmul.f32 %v7578, %v7578
    %v7595 = vmul.f32 %v7579, %v7579
    %v7596 = vmul.f32 %v7580, %v7580
    %v7597 = vmul.f32 %v7581, %v7581
    %v7598 = vmul.f32 %v7582, %v7582
    %v7599 = vmul.f32 %v7583, %v7583
    %v7600 = vmul.f32 %v7584, %v7584
    %v7601 = vmul.f32 %v7585, %v7585
    %v7602 = vmul.f32 %v7586, %v7586
    %v7603 = vmul.f32 %v7587, %v7587
    %v7604 = vmul.f32 %v7588, %v7588
    %v7605 = vmul.f32 %v7589, %v7589
    %v7606 = vmul.f32 %v7590, %v7590
    %v7607 = vmul.f32 %v7591, %v7591
    %v7608 = vadd.f32 %v7592, %v7593
    %v7609 = vadd.f32 %v7608, %v7594
    %v7610 = vadd.f32 %v7609, %v7595
    %7611 = vadd.xlane.f32.xlu0 %v7610
    %v7612 = vpop.xlane.xlu0 %7611
    %v7613 = vadd.f32 %v7596, %v7597
    %v7614 = vadd.f32 %v7613, %v7598
    %v7615 = vadd.f32 %v7614, %v7599
    %7616 = vadd.xlane.f32.xlu0 %v7615
    %v7617 = vpop.xlane.xlu0 %7616
    %v7618 = vadd.f32 %v7600, %v7601
    %v7619 = vadd.f32 %v7618, %v7602
    %v7620 = vadd.f32 %v7619, %v7603
    %7621 = vadd.xlane.f32.xlu0 %v7620
    %v7622 = vpop.xlane.xlu0 %7621
    %v7623 = vsel %vm283, %v7604, 0.0
    %v7624 = vsel %vm283, %v7605, 0.0
    %v7625 = vadd.f32 %v7623, %v7624
    %v7626 = vsel %vm283, %v7606, 0.0
    %v7627 = vadd.f32 %v7625, %v7626
    %v7628 = vsel %vm283, %v7607, 0.0
    %v7629 = vadd.f32 %v7627, %v7628
    %7630 = vadd.xlane.f32.xlu0 %v7629
    %v7631 = vpop.xlane.xlu0 %7630
    %v7632 = vmul.f32 %v7612, %v293
    %v7633 = vmul.f32 %v7617, %v293
    %v7634 = vmul.f32 %v7622, %v293
    %v7635 = vmul.f32 %v7631, %v293
    %v7636 = vadd.f32 %v7632, 1e-05
    %v7637 = vadd.f32 %v7633, 1e-05
    %v7638 = vadd.f32 %v7634, 1e-05
    %v7639 = vadd.f32 %v7635, 1e-05
    %v7640 = vrsqrt.pop %v7636
    %v7641 = vrsqrt.pop %v7637
    %v7642 = vrsqrt.pop %v7638
    %v7643 = vrsqrt.pop %v7639
    %v7644 = vmul.f32 %v7539, %v7640
    %v7645 = vmul.f32 %v7540, %v7641
    %v7646 = vmul.f32 %v7541, %v7642
    %v7647 = vmul.f32 %v7542, %v7643
    %7649 = vset.pattern.permute.xlu0 0
    %7650 = vperm.xlu0 %7649, %v7644
    %v7651 = vpop.permute.xlu0 %7650
    %7654 = vset.pattern.permute.xlu0 0
    %7655 = vperm.xlu0 %7654, %v7645
    %v7656 = vpop.permute.xlu0 %7655
    %7659 = vset.pattern.permute.xlu0 0
    %7660 = vperm.xlu0 %7659, %v7646
    %v7661 = vpop.permute.xlu0 %7660
    %7664 = vset.pattern.permute.xlu0 0
    %7665 = vperm.xlu0 %7664, %v7647
    %v7666 = vpop.permute.xlu0 %7665
    %v7668 = vmul.f32 %v7522, %v7651
    %v7669 = vmul.f32 %v7523, %v7651
    %v7670 = vmul.f32 %v7524, %v7651
    %v7671 = vmul.f32 %v7525, %v7651
    %v7672 = vmul.f32 %v7526, %v7656
    %v7673 = vmul.f32 %v7527, %v7656
    %v7674 = vmul.f32 %v7528, %v7656
    %v7675 = vmul.f32 %v7529, %v7656
    %v7676 = vmul.f32 %v7530, %v7661
    %v7677 = vmul.f32 %v7531, %v7661
    %v7678 = vmul.f32 %v7532, %v7661
    %v7679 = vmul.f32 %v7533, %v7661
    %v7680 = vmul.f32 %v7534, %v7666
    %v7681 = vmul.f32 %v7535, %v7666
    %v7682 = vmul.f32 %v7536, %v7666
    %v7683 = vmul.f32 %v7537, %v7666
    %v7684 = vmul.f32 %v7572, %v7644
    %v7685 = vmul.f32 %v7573, %v7645
    %v7686 = vmul.f32 %v7574, %v7646
    %v7687 = vmul.f32 %v7575, %v7647
    %v7688 = vsub.f32 %v7544, %v7684
    %v7689 = vsub.f32 %v7545, %v7685
    %v7690 = vsub.f32 %v7546, %v7686
    %v7691 = vsub.f32 %v7547, %v7687
    %7693 = vset.pattern.permute.xlu0 0
    %7694 = vperm.xlu0 %7693, %v7688
    %v7695 = vpop.permute.xlu0 %7694
    %7698 = vset.pattern.permute.xlu0 0
    %7699 = vperm.xlu0 %7698, %v7689
    %v7700 = vpop.permute.xlu0 %7699
    %7703 = vset.pattern.permute.xlu0 0
    %7704 = vperm.xlu0 %7703, %v7690
    %v7705 = vpop.permute.xlu0 %7704
    %7708 = vset.pattern.permute.xlu0 0
    %7709 = vperm.xlu0 %7708, %v7691
    %v7710 = vpop.permute.xlu0 %7709
    %v7712 = vadd.f32 %v7668, %v7695
    %v7713 = vadd.f32 %v7669, %v7695
    %v7714 = vadd.f32 %v7670, %v7695
    %v7715 = vadd.f32 %v7671, %v7695
    %v7716 = vadd.f32 %v7672, %v7700
    %v7717 = vadd.f32 %v7673, %v7700
    %v7718 = vadd.f32 %v7674, %v7700
    %v7719 = vadd.f32 %v7675, %v7700
    %v7720 = vadd.f32 %v7676, %v7705
    %v7721 = vadd.f32 %v7677, %v7705
    %v7722 = vadd.f32 %v7678, %v7705
    %v7723 = vadd.f32 %v7679, %v7705
    %v7724 = vadd.f32 %v7680, %v7710
    %v7725 = vadd.f32 %v7681, %v7710
    %v7726 = vadd.f32 %v7682, %v7710
    %v7727 = vadd.f32 %v7683, %v7710
    %v7728 = vld [vmem:[%s2] sm:$0xf]
    %v7729 = vld [vmem:[%s2 + $0x4] sm:$0xf]
    %v7730 = vld [vmem:[%s2 + $0x8] sm:$0xf]
    %v7731 = vld [vmem:[%s2 + $0xc] sm:$0xf]
    %v7732 = vld [vmem:[%s2 + $0x10] sm:$0xf]
    %v7733 = vld [vmem:[%s2 + $0x14] sm:$0xf]
    %v7734 = vld [vmem:[%s2 + $0x18] sm:$0xf]
    %v7735 = vld [vmem:[%s2 + $0x1c] sm:$0xf]
    %v7736 = vld [vmem:[%s2 + $0x20] sm:$0xf]
    %v7737 = vld [vmem:[%s2 + $0x24] sm:$0xf]
    %v7738 = vld [vmem:[%s2 + $0x28] sm:$0xf]
    %v7739 = vld [vmem:[%s2 + $0x2c] sm:$0xf]
    %v7740 = vld [vmem:[%s2 + $0x30] sm:$0xf]
    %v7741 = vld [vmem:[%s2 + $0x34] sm:$0xf]
    %v7742 = vld [vmem:[%s2 + $0x38] sm:$0xf]
    %v7743 = vld [vmem:[%s2 + $0x3c] sm:$0xf]
    %v7744 = vld [vmem:[%s2 + $0x40] sm:$0xf]
    %v7745 = vld [vmem:[%s2 + $0x44] sm:$0xf]
    %v7746 = vld [vmem:[%s2 + $0x48] sm:$0xf]
    %v7747 = vld [vmem:[%s2 + $0x4c] sm:$0xf]
    %v7748 = vld [vmem:[%s2 + $0x50] sm:$0xf]
    %v7749 = vld [vmem:[%s2 + $0x54] sm:$0xf]
    %v7750 = vld [vmem:[%s2 + $0x58] sm:$0xf]
    %v7751 = vld [vmem:[%s2 + $0x5c] sm:$0xf]
    %v7752 = vld [vmem:[%s2 + $0x60] sm:$0xf]
    %v7753 = vld [vmem:[%s2 + $0x64] sm:$0xf]
    %v7754 = vld [vmem:[%s2 + $0x68] sm:$0xf]
    %v7755 = vld [vmem:[%s2 + $0x6c] sm:$0xf]
    %v7756 = vld [vmem:[%s2 + $0x70] sm:$0xf]
    %v7757 = vld [vmem:[%s2 + $0x74] sm:$0xf]
    %v7758 = vld [vmem:[%s2 + $0x78] sm:$0xf]
    %v7759 = vld [vmem:[%s2 + $0x7c] sm:$0xf]
    %v7760 = vld [vmem:[%s2 + $0x80] sm:$0xf]
    %v7761 = vld [vmem:[%s2 + $0x84] sm:$0xf]
    %v7762 = vld [vmem:[%s2 + $0x88] sm:$0xf]
    %v7763 = vld [vmem:[%s2 + $0x8c] sm:$0xf]
    %v7764 = vld [vmem:[%s2 + $0x90] sm:$0xf]
    %v7765 = vld [vmem:[%s2 + $0x94] sm:$0xf]
    %v7766 = vld [vmem:[%s2 + $0x98] sm:$0xf]
    %v7767 = vld [vmem:[%s2 + $0x9c] sm:$0xf]
    %v7768 = vld [vmem:[%s2 + $0xa0] sm:$0xf]
    %v7769 = vld [vmem:[%s2 + $0xa4] sm:$0xf]
    %v7770 = vld [vmem:[%s2 + $0xa8] sm:$0xf]
    %v7771 = vld [vmem:[%s2 + $0xac] sm:$0xf]
    %v7772 = vld [vmem:[%s2 + $0xb0] sm:$0xf]
    %v7773 = vld [vmem:[%s2 + $0xb4] sm:$0xf]
    %v7774 = vld [vmem:[%s2 + $0xb8] sm:$0xf]
    %v7775 = vld [vmem:[%s2 + $0xbc] sm:$0xf]
    %v7776 = vld [vmem:[%s2 + $0xc0] sm:$0xf]
    %v7777 = vld [vmem:[%s2 + $0xc4] sm:$0xf]
    %v7778 = vld [vmem:[%s2 + $0xc8] sm:$0xf]
    %v7779 = vld [vmem:[%s2 + $0xcc] sm:$0xf]
    %v7780 = vld [vmem:[%s2 + $0xd0] sm:$0xf]
    %v7781 = vld [vmem:[%s2 + $0xd4] sm:$0xf]
    %v7782 = vld [vmem:[%s2 + $0xd8] sm:$0xf]
    %v7783 = vld [vmem:[%s2 + $0xdc] sm:$0xf]
    %v7784 = vld [vmem:[%s2 + $0xe0] sm:$0xf]
    %v7785 = vld [vmem:[%s2 + $0xe4] sm:$0xf]
    %v7786 = vld [vmem:[%s2 + $0xe8] sm:$0xf]
    %v7787 = vld [vmem:[%s2 + $0xec] sm:$0xf]
    %v7788 = vld [vmem:[%s2 + $0xf0] sm:$0xf]
    %v7789 = vld [vmem:[%s2 + $0xf4] sm:$0xf]
    %v7790 = vld [vmem:[%s2 + $0xf8] sm:$0xf]
    %v7791 = vld [vmem:[%s2 + $0xfc] sm:$0xf]
    %v7792 = vld [vmem:[%s12] sm:$0xff]
    %v7793 = vld [vmem:[%s12 + $0x8] sm:$0xff]
    %v7794 = vld [vmem:[%s12 + $0x10] sm:$0xff]
    %v7795 = vld [vmem:[%s12 + $0x18] sm:$0x3f]
    %v7796 = vpack.c.bf16 %v2760, %v2756
    %v7797 = vpack.c.bf16 %v2761, %v2757
    %v7798 = vpack.c.bf16 %v2762, %v2758
    %v7799 = vpack.c.bf16 %v2763, %v2759
    %v7800 = vpack.c.bf16 %v2768, %v2764
    %v7801 = vpack.c.bf16 %v2769, %v2765
    %v7802 = vpack.c.bf16 %v2770, %v2766
    %v7803 = vpack.c.bf16 %v2771, %v2767
    %v7868 = vunpack.c.l.b16 %v7728
    %v7869 = vunpack.c.l.b16 %v7729
    %v7870 = vunpack.c.l.b16 %v7730
    %v7871 = vunpack.c.l.b16 %v7731
    %v7872 = vunpack.c.l.b16 %v7732
    %v7873 = vunpack.c.l.b16 %v7733
    %v7874 = vunpack.c.l.b16 %v7734
    %v7875 = vunpack.c.l.b16 %v7735
    %v7876 = vunpack.c.l.b16 %v7736
    %v7877 = vunpack.c.l.b16 %v7737
    %v7878 = vunpack.c.l.b16 %v7738
    %v7879 = vunpack.c.l.b16 %v7739
    %v7880 = vunpack.c.l.b16 %v7740
    %v7881 = vunpack.c.l.b16 %v7741
    %v7882 = vunpack.c.l.b16 %v7742
    %v7883 = vunpack.c.l.b16 %v7743
    %v7884 = vunpack.c.l.b16 %v7744
    %v7885 = vunpack.c.l.b16 %v7745
    %v7886 = vunpack.c.l.b16 %v7746
    %v7887 = vunpack.c.l.b16 %v7747
    %v7888 = vunpack.c.l.b16 %v7748
    %v7889 = vunpack.c.l.b16 %v7749
    %v7890 = vunpack.c.l.b16 %v7750
    %v7891 = vunpack.c.l.b16 %v7751
    %v7892 = vunpack.c.l.b16 %v7752
    %v7893 = vunpack.c.l.b16 %v7753
    %v7894 = vunpack.c.l.b16 %v7754
    %v7895 = vunpack.c.l.b16 %v7755
    %v7896 = vunpack.c.l.b16 %v7756
    %v7897 = vunpack.c.l.b16 %v7757
    %v7898 = vunpack.c.l.b16 %v7758
    %v7899 = vunpack.c.l.b16 %v7759
    %v7900 = vunpack.c.l.b16 %v7760
    %v7901 = vunpack.c.l.b16 %v7761
    %v7902 = vunpack.c.l.b16 %v7762
    %v7903 = vunpack.c.l.b16 %v7763
    %v7904 = vunpack.c.l.b16 %v7764
    %v7905 = vunpack.c.l.b16 %v7765
    %v7906 = vunpack.c.l.b16 %v7766
    %v7907 = vunpack.c.l.b16 %v7767
    %v7908 = vunpack.c.l.b16 %v7768
    %v7909 = vunpack.c.l.b16 %v7769
    %v7910 = vunpack.c.l.b16 %v7770
    %v7911 = vunpack.c.l.b16 %v7771
    %v7912 = vunpack.c.l.b16 %v7772
    %v7913 = vunpack.c.l.b16 %v7773
    %v7914 = vunpack.c.l.b16 %v7774
    %v7915 = vunpack.c.l.b16 %v7775
    %v7916 = vunpack.c.l.b16 %v7776
    %v7917 = vunpack.c.l.b16 %v7777
    %v7918 = vunpack.c.l.b16 %v7778
    %v7919 = vunpack.c.l.b16 %v7779
    %v7920 = vunpack.c.l.b16 %v7780
    %v7921 = vunpack.c.l.b16 %v7781
    %v7922 = vunpack.c.l.b16 %v7782
    %v7923 = vunpack.c.l.b16 %v7783
    %v7924 = vunpack.c.l.b16 %v7784
    %v7925 = vunpack.c.l.b16 %v7785
    %v7926 = vunpack.c.l.b16 %v7786
    %v7927 = vunpack.c.l.b16 %v7787
    %v7928 = vunpack.c.l.b16 %v7788
    %v7929 = vunpack.c.l.b16 %v7789
    %v7930 = vunpack.c.l.b16 %v7790
    %v7931 = vunpack.c.l.b16 %v7791
    %v7932 = vpack.c.b16 %v7869, %v7868
    %v7933 = vpack.c.b16 %v7871, %v7870
    %v7934 = vpack.c.b16 %v7873, %v7872
    %v7935 = vpack.c.b16 %v7875, %v7874
    %v7936 = vpack.c.b16 %v7877, %v7876
    %v7937 = vpack.c.b16 %v7879, %v7878
    %v7938 = vpack.c.b16 %v7881, %v7880
    %v7939 = vpack.c.b16 %v7883, %v7882
    %v7940 = vpack.c.b16 %v7885, %v7884
    %v7941 = vpack.c.b16 %v7887, %v7886
    %v7942 = vpack.c.b16 %v7889, %v7888
    %v7943 = vpack.c.b16 %v7891, %v7890
    %v7944 = vpack.c.b16 %v7893, %v7892
    %v7945 = vpack.c.b16 %v7895, %v7894
    %v7946 = vpack.c.b16 %v7897, %v7896
    %v7947 = vpack.c.b16 %v7899, %v7898
    %v7948 = vpack.c.b16 %v7901, %v7900
    %v7949 = vpack.c.b16 %v7903, %v7902
    %v7950 = vpack.c.b16 %v7905, %v7904
    %v7951 = vpack.c.b16 %v7907, %v7906
    %v7952 = vpack.c.b16 %v7909, %v7908
    %v7953 = vpack.c.b16 %v7911, %v7910
    %v7954 = vpack.c.b16 %v7913, %v7912
    %v7955 = vpack.c.b16 %v7915, %v7914
    %v7956 = vpack.c.b16 %v7917, %v7916
    %v7957 = vpack.c.b16 %v7919, %v7918
    %v7958 = vpack.c.b16 %v7921, %v7920
    %v7959 = vpack.c.b16 %v7923, %v7922
    %v7960 = vpack.c.b16 %v7925, %v7924
    %v7961 = vpack.c.b16 %v7927, %v7926
    %v7962 = vpack.c.b16 %v7929, %v7928
    %v7963 = vpack.c.b16 %v7931, %v7930
    %7996 = vmatprep.subr.bf16.mxu0 0
    %7997 = vmatpush1.bf16.msra.mxu0 %v7932
    %7998 = vmatprep.subr.bf16.mxu0 0
    %7999 = vmatpush1.bf16.msra.mxu0 %v7933
    %8000 = vmatprep.subr.bf16.mxu0 0
    %8001 = vmatpush1.bf16.msra.mxu0 %v7934
    %8002 = vmatprep.subr.bf16.mxu0 0
    %8003 = vmatpush1.bf16.msra.mxu0 %v7935
    %8004 = vmatprep.subr.bf16.mxu0 0
    %8005 = vmatpush1.bf16.msra.mxu0 %v7936
    %8006 = vmatprep.subr.bf16.mxu0 0
    %8007 = vmatpush1.bf16.msra.mxu0 %v7937
    %8008 = vmatprep.subr.bf16.mxu0 0
    %8009 = vmatpush1.bf16.msra.mxu0 %v7938
    %8010 = vmatprep.subr.bf16.mxu0 0
    %8011 = vmatpush1.bf16.msra.mxu0 %v7939
    %8012 = vmatprep.subr.bf16.mxu0 0
    %8013 = vmatpush1.bf16.msra.mxu0 %v7940
    %8014 = vmatprep.subr.bf16.mxu0 0
    %8015 = vmatpush1.bf16.msra.mxu0 %v7941
    %8016 = vmatprep.subr.bf16.mxu0 0
    %8017 = vmatpush1.bf16.msra.mxu0 %v7942
    %8018 = vmatprep.subr.bf16.mxu0 0
    %8019 = vmatpush1.bf16.msra.mxu0 %v7943
    %8020 = vmatprep.subr.bf16.mxu0 0
    %8021 = vmatpush1.bf16.msra.mxu0 %v7944
    %8022 = vmatprep.subr.bf16.mxu0 0
    %8023 = vmatpush1.bf16.msra.mxu0 %v7945
    %8024 = vmatprep.subr.bf16.mxu0 0
    %8025 = vmatpush1.bf16.msra.mxu0 %v7946
    %8026 = vmatprep.subr.bf16.mxu0 0
    %8027 = vmatpush1.bf16.msra.mxu0 %v7947
    %8028 = vmatprep.mubr.bf16.mxu0 %v7797
    %8029 = vmatmul.mubr.bf16.gmra.mrb[0].mxu0 %v7796
    %v8030 = vpop.f32.mrb[0].mxu0
    %v8031 = vadd.f32 0.0, %v8030
    %v8032 = vpop.f32.mrb[0].mxu0
    %v8033 = vpop.f32.mrb[0].mxu0
    %v8034 = vadd.f32 0.0, %v8033
    %v8035 = vpop.f32.mrb[0].mxu0
    %8036 = vmatprep.mubr.bf16.mxu0 %v7801
    %8037 = vmatmul.mubr.bf16.gmra.mrb[0].mxu0 %v7800
    %v8038 = vpop.f32.mrb[0].mxu0
    %v8039 = vadd.f32 0.0, %v8038
    %v8040 = vpop.f32.mrb[0].mxu0
    %v8041 = vpop.f32.mrb[0].mxu0
    %v8042 = vadd.f32 0.0, %v8041
    %v8043 = vpop.f32.mrb[0].mxu0
    %8044 = vdwg.mxu0
    %8045 = vmatprep.subr.bf16.mxu0 0
    %8046 = vmatpush1.bf16.msra.mxu0 %v7948
    %8047 = vmatprep.subr.bf16.mxu0 0
    %8048 = vmatpush1.bf16.msra.mxu0 %v7949
    %8049 = vmatprep.subr.bf16.mxu0 0
    %8050 = vmatpush1.bf16.msra.mxu0 %v7950
    %8051 = vmatprep.subr.bf16.mxu0 0
    %8052 = vmatpush1.bf16.msra.mxu0 %v7951
    %8053 = vmatprep.subr.bf16.mxu0 0
    %8054 = vmatpush1.bf16.msra.mxu0 %v7952
    %8055 = vmatprep.subr.bf16.mxu0 0
    %8056 = vmatpush1.bf16.msra.mxu0 %v7953
    %8057 = vmatprep.subr.bf16.mxu0 0
    %8058 = vmatpush1.bf16.msra.mxu0 %v7954
    %8059 = vmatprep.subr.bf16.mxu0 0
    %8060 = vmatpush1.bf16.msra.mxu0 %v7955
    %8061 = vmatprep.subr.bf16.mxu0 0
    %8062 = vmatpush1.bf16.msra.mxu0 %v7956
    %8063 = vmatprep.subr.bf16.mxu0 0
    %8064 = vmatpush1.bf16.msra.mxu0 %v7957
    %8065 = vmatprep.subr.bf16.mxu0 0
    %8066 = vmatpush1.bf16.msra.mxu0 %v7958
    %8067 = vmatprep.subr.bf16.mxu0 0
    %8068 = vmatpush1.bf16.msra.mxu0 %v7959
    %8069 = vmatprep.subr.bf16.mxu0 0
    %8070 = vmatpush1.bf16.msra.mxu0 %v7960
    %8071 = vmatprep.subr.bf16.mxu0 0
    %8072 = vmatpush1.bf16.msra.mxu0 %v7961
    %8073 = vmatprep.subr.bf16.mxu0 0
    %8074 = vmatpush1.bf16.msra.mxu0 %v7962
    %8075 = vmatprep.subr.bf16.mxu0 0
    %8076 = vmatpush1.bf16.msra.mxu0 %v7963
    %8077 = vmatprep.mubr.bf16.mxu0 %v7799
    %8078 = vmatmul.mubr.bf16.gmra.mrb[0].mxu0 %v7798
    %v8079 = vpop.f32.mrb[0].mxu0
    %v8080 = vadd.f32 %v8031, %v8079
    %v8081 = vpop.f32.mrb[0].mxu0
    %v8082 = vpop.f32.mrb[0].mxu0
    %v8083 = vadd.f32 %v8034, %v8082
    %v8084 = vpop.f32.mrb[0].mxu0
    %8085 = vmatprep.mubr.bf16.mxu0 %v7803
    %8086 = vmatmul.mubr.bf16.gmra.mrb[0].mxu0 %v7802
    %v8087 = vpop.f32.mrb[0].mxu0
    %v8088 = vadd.f32 %v8039, %v8087
    %v8089 = vpop.f32.mrb[0].mxu0
    %v8090 = vpop.f32.mrb[0].mxu0
    %v8091 = vadd.f32 %v8042, %v8090
    %v8092 = vpop.f32.mrb[0].mxu0
    %8093 = vdwg.mxu0
    %v8094 = vld [vmem:[%s9] sm:$0xff]
    %v8095 = vld [vmem:[%s9 + $0x8] sm:$0xff]
    %v8096 = vld [vmem:[%s9 + $0x10] sm:$0xff]
    %v8097 = vld [vmem:[%s9 + $0x18] sm:$0x3f]
    %v8098 = vmul.f32 %v8080, %v8094
    %v8099 = vmul.f32 %v8083, %v8095
    %v8100 = vmul.f32 %v8088, %v8096
    %v8101 = vmul.f32 %v8091, %v8097
    %vm8102 = vcmask 80896
    %v8103 = vsel %vm8102, %v8098, 0.0
    %v8104 = vsel %vm8102, %v8099, 0.0
    %v8105 = vadd.f32 %v8103, %v8104
    %v8106 = vsel %vm8102, %v8100, 0.0
    %v8107 = vadd.f32 %v8105, %v8106
    %vm8108 = vcmask 78848
    %v8109 = vsel %vm8108, %v8101, 0.0
    %v8110 = vadd.f32 %v8107, %v8109
    %v8111 = vrot.slane %v8110, 4
    %v8112 = vadd.f32 %v8110, %v8111
    %v8113 = vrot.slane %v8112, 2
    %v8114 = vadd.f32 %v8112, %v8113
    %v8115 = vrot.slane %v8114, 1
    %v8116 = vadd.f32 %v8114, %v8115
    %8118 = vrot.lane.b32.xlu0 %v8116, 126
    %v8119 = vpop.permute.xlu0 %8118
    %v8121 = vadd.f32 %v8116, %v8119
    %8122 = vrot.lane.b32.xlu0 %v8116, 124
    %v8123 = vpop.permute.xlu0 %8122
    %v8125 = vadd.f32 %v8121, %v8123
    %8126 = vrot.lane.b32.xlu0 %v8116, 122
    %v8127 = vpop.permute.xlu0 %8126
    %v8129 = vadd.f32 %v8125, %v8127
    %8130 = vrot.lane.b32.xlu0 %v8116, 120
    %v8131 = vpop.permute.xlu0 %8130
    %v8133 = vadd.f32 %v8129, %v8131
    %v8134 = vld [vmem:[#allocation2] sm:$0x1]
    %8136 = vset.pattern.permute.xlu0 0
    %8137 = vperm.xlu0 %8136, %v8134
    %v8138 = vpop.permute.xlu0 %8137
    %v8140 = vlaneseq
    %v8141 = vshrl.u32 %v8140, 7
    %v8142 = vsub.s32 0, %v8141
    %v8143 = vrot.slane %v8138, %v8142
    %v8144 = vadd.f32 %v8133, %v8143
    %v8145 = vmax.f32 %v8144, 0.0
    %v8146 = vld [vmem:[%s11] sm:$0xff]
    %v8147 = vld [vmem:[%s11 + $0x8] sm:$0xff]
    %v8148 = vld [vmem:[%s11 + $0x10] sm:$0xff]
    %v8149 = vld [vmem:[%s11 + $0x18] sm:$0x3f]
    %v8150 = vlaneseq
    %v8151 = vshrl.u32 %v8150, 7
    %v8152 = vsub.s32 0, %v8151
    %v8153 = vrot.slane %v8145, %v8152
    %v8154 = vmul.f32 %v8153, %v8146
    %v8155 = vmul.f32 %v8153, %v8147
    %v8156 = vmul.f32 %v8153, %v8148
    %v8157 = vmul.f32 %v8153, %v8149
    %v8158 = vadd.f32 %v7792, %v8154
    %v8159 = vadd.f32 %v7793, %v8155
    %v8160 = vadd.f32 %v7794, %v8156
    %v8161 = vadd.f32 %v7795, %v8157
    %v8162 = vsub.f32 0.0, %v8158
    %v8163 = vsub.f32 0.0, %v8159
    %v8164 = vsub.f32 0.0, %v8160
    %v8165 = vsub.f32 0.0, %v8161
    %v8166 = vmul.f32 %v8162, 1.442695
    %v8167 = vpow.pop %v8166
    %v8168 = vmul.f32 %v8163, 1.442695
    %v8169 = vpow.pop %v8168
    %v8170 = vmul.f32 %v8164, 1.442695
    %v8171 = vpow.pop %v8170
    %v8172 = vmul.f32 %v8165, 1.442695
    %v8173 = vpow.pop %v8172
    %v8174 = vadd.f32 %v8167, 1.0
    %v8175 = vadd.f32 %v8169, 1.0
    %v8176 = vadd.f32 %v8171, 1.0
    %v8177 = vadd.f32 %v8173, 1.0
    %v8178 = vrcp.pop %v8174
    %v8179 = vrcp.pop %v8175
    %v8180 = vrcp.pop %v8176
    %v8181 = vrcp.pop %v8177
    %8186 = vrot.lane.b32.xlu0 %v8146, 1
    %v8187 = vpop.permute.xlu0 %8186
    %8188 = vrot.lane.b32.xlu0 %v8147, 1
    %v8189 = vpop.permute.xlu0 %8188
    %8190 = vrot.lane.b32.xlu0 %v8148, 1
    %v8191 = vpop.permute.xlu0 %8190
    %8192 = vrot.lane.b32.xlu0 %v8149, 1
    %v8193 = vpop.permute.xlu0 %8192
    %v8198 = vmul.f32 %v8153, %v8187
    %v8199 = vmul.f32 %v8153, %v8189
    %v8200 = vmul.f32 %v8153, %v8191
    %v8201 = vmul.f32 %v8153, %v8193
    %8206 = vrot.lane.b32.xlu0 %v8198, 127
    %v8207 = vpop.permute.xlu0 %8206
    %8208 = vrot.lane.b32.xlu0 %v8199, 127
    %v8209 = vpop.permute.xlu0 %8208
    %8210 = vrot.lane.b32.xlu0 %v8200, 127
    %v8211 = vpop.permute.xlu0 %8210
    %8212 = vrot.lane.b32.xlu0 %v8201, 127
    %v8213 = vpop.permute.xlu0 %8212
    %v8218 = vadd.f32 %v7792, %v8207
    %v8219 = vadd.f32 %v7793, %v8209
    %v8220 = vadd.f32 %v7794, %v8211
    %v8221 = vadd.f32 %v7795, %v8213
    %v8222 = vsub.f32 0.0, %v8218
    %v8223 = vsub.f32 0.0, %v8219
    %v8224 = vsub.f32 0.0, %v8220
    %v8225 = vsub.f32 0.0, %v8221
    %v8226 = vmul.f32 %v8222, 1.442695
    %v8227 = vpow.pop %v8226
    %v8228 = vmul.f32 %v8223, 1.442695
    %v8229 = vpow.pop %v8228
    %v8230 = vmul.f32 %v8224, 1.442695
    %v8231 = vpow.pop %v8230
    %v8232 = vmul.f32 %v8225, 1.442695
    %v8233 = vpow.pop %v8232
    %v8234 = vadd.f32 %v8227, 1.0
    %v8235 = vadd.f32 %v8229, 1.0
    %v8236 = vadd.f32 %v8231, 1.0
    %v8237 = vadd.f32 %v8233, 1.0
    %v8238 = vrcp.pop %v8234
    %v8239 = vrcp.pop %v8235
    %v8240 = vrcp.pop %v8236
    %v8241 = vrcp.pop %v8237
    %v8242 = vpack.c.bf16 %v5238, %v5234
    %v8243 = vpack.c.bf16 %v5239, %v5235
    %v8244 = vpack.c.bf16 %v5240, %v5236
    %v8245 = vpack.c.bf16 %v5241, %v5237
    %v8246 = vpack.c.bf16 %v5246, %v5242
    %v8247 = vpack.c.bf16 %v5247, %v5243
    %v8248 = vpack.c.bf16 %v5248, %v5244
    %v8249 = vpack.c.bf16 %v5249, %v5245
    %8250 = vmatprep.subr.bf16.mxu0 0
    %8251 = vmatpush1.bf16.msra.mxu0 %v7932
    %8252 = vmatprep.subr.bf16.mxu0 0
    %8253 = vmatpush1.bf16.msra.mxu0 %v7933
    %8254 = vmatprep.subr.bf16.mxu0 0
    %8255 = vmatpush1.bf16.msra.mxu0 %v7934
    %8256 = vmatprep.subr.bf16.mxu0 0
    %8257 = vmatpush1.bf16.msra.mxu0 %v7935
    %8258 = vmatprep.subr.bf16.mxu0 0
    %8259 = vmatpush1.bf16.msra.mxu0 %v7936
    %8260 = vmatprep.subr.bf16.mxu0 0
    %8261 = vmatpush1.bf16.msra.mxu0 %v7937
    %8262 = vmatprep.subr.bf16.mxu0 0
    %8263 = vmatpush1.bf16.msra.mxu0 %v7938
    %8264 = vmatprep.subr.bf16.mxu0 0
    %8265 = vmatpush1.bf16.msra.mxu0 %v7939
    %8266 = vmatprep.subr.bf16.mxu0 0
    %8267 = vmatpush1.bf16.msra.mxu0 %v7940
    %8268 = vmatprep.subr.bf16.mxu0 0
    %8269 = vmatpush1.bf16.msra.mxu0 %v7941
    %8270 = vmatprep.subr.bf16.mxu0 0
    %8271 = vmatpush1.bf16.msra.mxu0 %v7942
    %8272 = vmatprep.subr.bf16.mxu0 0
    %8273 = vmatpush1.bf16.msra.mxu0 %v7943
    %8274 = vmatprep.subr.bf16.mxu0 0
    %8275 = vmatpush1.bf16.msra.mxu0 %v7944
    %8276 = vmatprep.subr.bf16.mxu0 0
    %8277 = vmatpush1.bf16.msra.mxu0 %v7945
    %8278 = vmatprep.subr.bf16.mxu0 0
    %8279 = vmatpush1.bf16.msra.mxu0 %v7946
    %8280 = vmatprep.subr.bf16.mxu0 0
    %8281 = vmatpush1.bf16.msra.mxu0 %v7947
    %8282 = vmatprep.mubr.bf16.mxu0 %v8243
    %8283 = vmatmul.mubr.bf16.gmra.mrb[0].mxu0 %v8242
    %v8284 = vpop.f32.mrb[0].mxu0
    %v8285 = vadd.f32 0.0, %v8284
    %v8286 = vpop.f32.mrb[0].mxu0
    %v8287 = vpop.f32.mrb[0].mxu0
    %v8288 = vadd.f32 0.0, %v8287
    %v8289 = vpop.f32.mrb[0].mxu0
    %8290 = vmatprep.mubr.bf16.mxu0 %v8247
    %8291 = vmatmul.mubr.bf16.gmra.mrb[0].mxu0 %v8246
    %v8292 = vpop.f32.mrb[0].mxu0
    %v8293 = vadd.f32 0.0, %v8292
    %v8294 = vpop.f32.mrb[0].mxu0
    %v8295 = vpop.f32.mrb[0].mxu0
    %v8296 = vadd.f32 0.0, %v8295
    %v8297 = vpop.f32.mrb[0].mxu0
    %8298 = vdwg.mxu0
    %8299 = vmatprep.subr.bf16.mxu0 0
    %8300 = vmatpush1.bf16.msra.mxu0 %v7948
    %8301 = vmatprep.subr.bf16.mxu0 0
    %8302 = vmatpush1.bf16.msra.mxu0 %v7949
    %8303 = vmatprep.subr.bf16.mxu0 0
    %8304 = vmatpush1.bf16.msra.mxu0 %v7950
    %8305 = vmatprep.subr.bf16.mxu0 0
    %8306 = vmatpush1.bf16.msra.mxu0 %v7951
    %8307 = vmatprep.subr.bf16.mxu0 0
    %8308 = vmatpush1.bf16.msra.mxu0 %v7952
    %8309 = vmatprep.subr.bf16.mxu0 0
    %8310 = vmatpush1.bf16.msra.mxu0 %v7953
    %8311 = vmatprep.subr.bf16.mxu0 0
    %8312 = vmatpush1.bf16.msra.mxu0 %v7954
    %8313 = vmatprep.subr.bf16.mxu0 0
    %8314 = vmatpush1.bf16.msra.mxu0 %v7955
    %8315 = vmatprep.subr.bf16.mxu0 0
    %8316 = vmatpush1.bf16.msra.mxu0 %v7956
    %8317 = vmatprep.subr.bf16.mxu0 0
    %8318 = vmatpush1.bf16.msra.mxu0 %v7957
    %8319 = vmatprep.subr.bf16.mxu0 0
    %8320 = vmatpush1.bf16.msra.mxu0 %v7958
    %8321 = vmatprep.subr.bf16.mxu0 0
    %8322 = vmatpush1.bf16.msra.mxu0 %v7959
    %8323 = vmatprep.subr.bf16.mxu0 0
    %8324 = vmatpush1.bf16.msra.mxu0 %v7960
    %8325 = vmatprep.subr.bf16.mxu0 0
    %8326 = vmatpush1.bf16.msra.mxu0 %v7961
    %8327 = vmatprep.subr.bf16.mxu0 0
    %8328 = vmatpush1.bf16.msra.mxu0 %v7962
    %8329 = vmatprep.subr.bf16.mxu0 0
    %8330 = vmatpush1.bf16.msra.mxu0 %v7963
    %8331 = vmatprep.mubr.bf16.mxu0 %v8245
    %8332 = vmatmul.mubr.bf16.gmra.mrb[0].mxu0 %v8244
    %v8333 = vpop.f32.mrb[0].mxu0
    %v8334 = vadd.f32 %v8285, %v8333
    %v8335 = vpop.f32.mrb[0].mxu0
    %v8336 = vpop.f32.mrb[0].mxu0
    %v8337 = vadd.f32 %v8288, %v8336
    %v8338 = vpop.f32.mrb[0].mxu0
    %8339 = vmatprep.mubr.bf16.mxu0 %v8249
    %8340 = vmatmul.mubr.bf16.gmra.mrb[0].mxu0 %v8248
    %v8341 = vpop.f32.mrb[0].mxu0
    %v8342 = vadd.f32 %v8293, %v8341
    %v8343 = vpop.f32.mrb[0].mxu0
    %v8344 = vpop.f32.mrb[0].mxu0
    %v8345 = vadd.f32 %v8296, %v8344
    %v8346 = vpop.f32.mrb[0].mxu0
    %8347 = vdwg.mxu0
    %v8348 = vmul.f32 %v8334, %v8094
    %v8349 = vmul.f32 %v8337, %v8095
    %v8350 = vmul.f32 %v8342, %v8096
    %v8351 = vmul.f32 %v8345, %v8097
    %v8352 = vsel %vm8102, %v8348, 0.0
    %v8353 = vsel %vm8102, %v8349, 0.0
    %v8354 = vadd.f32 %v8352, %v8353
    %v8355 = vsel %vm8102, %v8350, 0.0
    %v8356 = vadd.f32 %v8354, %v8355
    %v8357 = vsel %vm8108, %v8351, 0.0
    %v8358 = vadd.f32 %v8356, %v8357
    %v8359 = vrot.slane %v8358, 4
    %v8360 = vadd.f32 %v8358, %v8359
    %v8361 = vrot.slane %v8360, 2
    %v8362 = vadd.f32 %v8360, %v8361
    %v8363 = vrot.slane %v8362, 1
    %v8364 = vadd.f32 %v8362, %v8363
    %8366 = vrot.lane.b32.xlu0 %v8364, 126
    %v8367 = vpop.permute.xlu0 %8366
    %v8369 = vadd.f32 %v8364, %v8367
    %8370 = vrot.lane.b32.xlu0 %v8364, 124
    %v8371 = vpop.permute.xlu0 %8370
    %v8373 = vadd.f32 %v8369, %v8371
    %8374 = vrot.lane.b32.xlu0 %v8364, 122
    %v8375 = vpop.permute.xlu0 %8374
    %v8377 = vadd.f32 %v8373, %v8375
    %8378 = vrot.lane.b32.xlu0 %v8364, 120
    %v8379 = vpop.permute.xlu0 %8378
    %v8381 = vadd.f32 %v8377, %v8379
    %v8382 = vadd.f32 %v8381, %v8143
    %v8383 = vmax.f32 %v8382, 0.0
    %v8384 = vlaneseq
    %v8385 = vshrl.u32 %v8384, 7
    %v8386 = vsub.s32 0, %v8385
    %v8387 = vrot.slane %v8383, %v8386
    %v8388 = vmul.f32 %v8387, %v8146
    %v8389 = vmul.f32 %v8387, %v8147
    %v8390 = vmul.f32 %v8387, %v8148
    %v8391 = vmul.f32 %v8387, %v8149
    %v8392 = vadd.f32 %v7792, %v8388
    %v8393 = vadd.f32 %v7793, %v8389
    %v8394 = vadd.f32 %v7794, %v8390
    %v8395 = vadd.f32 %v7795, %v8391
    %v8396 = vsub.f32 0.0, %v8392
    %v8397 = vsub.f32 0.0, %v8393
    %v8398 = vsub.f32 0.0, %v8394
    %v8399 = vsub.f32 0.0, %v8395
    %v8400 = vmul.f32 %v8396, 1.442695
    %v8401 = vpow.pop %v8400
    %v8402 = vmul.f32 %v8397, 1.442695
    %v8403 = vpow.pop %v8402
    %v8404 = vmul.f32 %v8398, 1.442695
    %v8405 = vpow.pop %v8404
    %v8406 = vmul.f32 %v8399, 1.442695
    %v8407 = vpow.pop %v8406
    %v8408 = vadd.f32 %v8401, 1.0
    %v8409 = vadd.f32 %v8403, 1.0
    %v8410 = vadd.f32 %v8405, 1.0
    %v8411 = vadd.f32 %v8407, 1.0
    %v8412 = vrcp.pop %v8408
    %v8413 = vrcp.pop %v8409
    %v8414 = vrcp.pop %v8410
    %v8415 = vrcp.pop %v8411
    %v8416 = vmul.f32 %v8387, %v8187
    %v8417 = vmul.f32 %v8387, %v8189
    %v8418 = vmul.f32 %v8387, %v8191
    %v8419 = vmul.f32 %v8387, %v8193
    %8424 = vrot.lane.b32.xlu0 %v8416, 127
    %v8425 = vpop.permute.xlu0 %8424
    %8426 = vrot.lane.b32.xlu0 %v8417, 127
    %v8427 = vpop.permute.xlu0 %8426
    %8428 = vrot.lane.b32.xlu0 %v8418, 127
    %v8429 = vpop.permute.xlu0 %8428
    %8430 = vrot.lane.b32.xlu0 %v8419, 127
    %v8431 = vpop.permute.xlu0 %8430
    %v8436 = vadd.f32 %v7792, %v8425
    %v8437 = vadd.f32 %v7793, %v8427
    %v8438 = vadd.f32 %v7794, %v8429
    %v8439 = vadd.f32 %v7795, %v8431
    %v8440 = vsub.f32 0.0, %v8436
    %v8441 = vsub.f32 0.0, %v8437
    %v8442 = vsub.f32 0.0, %v8438
    %v8443 = vsub.f32 0.0, %v8439
    %v8444 = vmul.f32 %v8440, 1.442695
    %v8445 = vpow.pop %v8444
    %v8446 = vmul.f32 %v8441, 1.442695
    %v8447 = vpow.pop %v8446
    %v8448 = vmul.f32 %v8442, 1.442695
    %v8449 = vpow.pop %v8448
    %v8450 = vmul.f32 %v8443, 1.442695
    %v8451 = vpow.pop %v8450
    %v8452 = vadd.f32 %v8445, 1.0
    %v8453 = vadd.f32 %v8447, 1.0
    %v8454 = vadd.f32 %v8449, 1.0
    %v8455 = vadd.f32 %v8451, 1.0
    %v8456 = vrcp.pop %v8452
    %v8457 = vrcp.pop %v8453
    %v8458 = vrcp.pop %v8454
    %v8459 = vrcp.pop %v8455
    %v8460 = vpack.c.bf16 %v7716, %v7712
    %v8461 = vpack.c.bf16 %v7717, %v7713
    %v8462 = vpack.c.bf16 %v7718, %v7714
    %v8463 = vpack.c.bf16 %v7719, %v7715
    %v8464 = vpack.c.bf16 %v7724, %v7720
    %v8465 = vpack.c.bf16 %v7725, %v7721
    %v8466 = vpack.c.bf16 %v7726, %v7722
    %v8467 = vpack.c.bf16 %v7727, %v7723
    %8468 = vmatprep.subr.bf16.mxu0 0
    %8469 = vmatpush1.bf16.msra.mxu0 %v7932
    %8470 = vmatprep.subr.bf16.mxu0 0
    %8471 = vmatpush1.bf16.msra.mxu0 %v7933
    %8472 = vmatprep.subr.bf16.mxu0 0
    %8473 = vmatpush1.bf16.msra.mxu0 %v7934
    %8474 = vmatprep.subr.bf16.mxu0 0
    %8475 = vmatpush1.bf16.msra.mxu0 %v7935
    %8476 = vmatprep.subr.bf16.mxu0 0
    %8477 = vmatpush1.bf16.msra.mxu0 %v7936
    %8478 = vmatprep.subr.bf16.mxu0 0
    %8479 = vmatpush1.bf16.msra.mxu0 %v7937
    %8480 = vmatprep.subr.bf16.mxu0 0
    %8481 = vmatpush1.bf16.msra.mxu0 %v7938
    %8482 = vmatprep.subr.bf16.mxu0 0
    %8483 = vmatpush1.bf16.msra.mxu0 %v7939
    %8484 = vmatprep.subr.bf16.mxu0 0
    %8485 = vmatpush1.bf16.msra.mxu0 %v7940
    %8486 = vmatprep.subr.bf16.mxu0 0
    %8487 = vmatpush1.bf16.msra.mxu0 %v7941
    %8488 = vmatprep.subr.bf16.mxu0 0
    %8489 = vmatpush1.bf16.msra.mxu0 %v7942
    %8490 = vmatprep.subr.bf16.mxu0 0
    %8491 = vmatpush1.bf16.msra.mxu0 %v7943
    %8492 = vmatprep.subr.bf16.mxu0 0
    %8493 = vmatpush1.bf16.msra.mxu0 %v7944
    %8494 = vmatprep.subr.bf16.mxu0 0
    %8495 = vmatpush1.bf16.msra.mxu0 %v7945
    %8496 = vmatprep.subr.bf16.mxu0 0
    %8497 = vmatpush1.bf16.msra.mxu0 %v7946
    %8498 = vmatprep.subr.bf16.mxu0 0
    %8499 = vmatpush1.bf16.msra.mxu0 %v7947
    %8500 = vmatprep.mubr.bf16.mxu0 %v8461
    %8501 = vmatmul.mubr.bf16.gmra.mrb[0].mxu0 %v8460
    %v8502 = vpop.f32.mrb[0].mxu0
    %v8503 = vadd.f32 0.0, %v8502
    %v8504 = vpop.f32.mrb[0].mxu0
    %v8505 = vpop.f32.mrb[0].mxu0
    %v8506 = vadd.f32 0.0, %v8505
    %v8507 = vpop.f32.mrb[0].mxu0
    %8508 = vmatprep.mubr.bf16.mxu0 %v8465
    %8509 = vmatmul.mubr.bf16.gmra.mrb[0].mxu0 %v8464
    %v8510 = vpop.f32.mrb[0].mxu0
    %v8511 = vadd.f32 0.0, %v8510
    %v8512 = vpop.f32.mrb[0].mxu0
    %v8513 = vpop.f32.mrb[0].mxu0
    %v8514 = vadd.f32 0.0, %v8513
    %v8515 = vpop.f32.mrb[0].mxu0
    %8516 = vdwg.mxu0
    %8517 = vmatprep.subr.bf16.mxu0 0
    %8518 = vmatpush1.bf16.msra.mxu0 %v7948
    %8519 = vmatprep.subr.bf16.mxu0 0
    %8520 = vmatpush1.bf16.msra.mxu0 %v7949
    %8521 = vmatprep.subr.bf16.mxu0 0
    %8522 = vmatpush1.bf16.msra.mxu0 %v7950
    %8523 = vmatprep.subr.bf16.mxu0 0
    %8524 = vmatpush1.bf16.msra.mxu0 %v7951
    %8525 = vmatprep.subr.bf16.mxu0 0
    %8526 = vmatpush1.bf16.msra.mxu0 %v7952
    %8527 = vmatprep.subr.bf16.mxu0 0
    %8528 = vmatpush1.bf16.msra.mxu0 %v7953
    %8529 = vmatprep.subr.bf16.mxu0 0
    %8530 = vmatpush1.bf16.msra.mxu0 %v7954
    %8531 = vmatprep.subr.bf16.mxu0 0
    %8532 = vmatpush1.bf16.msra.mxu0 %v7955
    %8533 = vmatprep.subr.bf16.mxu0 0
    %8534 = vmatpush1.bf16.msra.mxu0 %v7956
    %8535 = vmatprep.subr.bf16.mxu0 0
    %8536 = vmatpush1.bf16.msra.mxu0 %v7957
    %8537 = vmatprep.subr.bf16.mxu0 0
    %8538 = vmatpush1.bf16.msra.mxu0 %v7958
    %8539 = vmatprep.subr.bf16.mxu0 0
    %8540 = vmatpush1.bf16.msra.mxu0 %v7959
    %8541 = vmatprep.subr.bf16.mxu0 0
    %8542 = vmatpush1.bf16.msra.mxu0 %v7960
    %8543 = vmatprep.subr.bf16.mxu0 0
    %8544 = vmatpush1.bf16.msra.mxu0 %v7961
    %8545 = vmatprep.subr.bf16.mxu0 0
    %8546 = vmatpush1.bf16.msra.mxu0 %v7962
    %8547 = vmatprep.subr.bf16.mxu0 0
    %8548 = vmatpush1.bf16.msra.mxu0 %v7963
    %8549 = vmatprep.mubr.bf16.mxu0 %v8463
    %8550 = vmatmul.mubr.bf16.gmra.mrb[0].mxu0 %v8462
    %v8551 = vpop.f32.mrb[0].mxu0
    %v8552 = vadd.f32 %v8503, %v8551
    %v8553 = vpop.f32.mrb[0].mxu0
    %v8554 = vpop.f32.mrb[0].mxu0
    %v8555 = vadd.f32 %v8506, %v8554
    %v8556 = vpop.f32.mrb[0].mxu0
    %8557 = vmatprep.mubr.bf16.mxu0 %v8467
    %8558 = vmatmul.mubr.bf16.gmra.mrb[0].mxu0 %v8466
    %v8559 = vpop.f32.mrb[0].mxu0
    %v8560 = vadd.f32 %v8511, %v8559
    %v8561 = vpop.f32.mrb[0].mxu0
    %v8562 = vpop.f32.mrb[0].mxu0
    %v8563 = vadd.f32 %v8514, %v8562
    %v8564 = vpop.f32.mrb[0].mxu0
    %8565 = vdwg.mxu0
    %v8566 = vmul.f32 %v8552, %v8094
    %v8567 = vmul.f32 %v8555, %v8095
    %v8568 = vmul.f32 %v8560, %v8096
    %v8569 = vmul.f32 %v8563, %v8097
    %v8570 = vsel %vm8102, %v8566, 0.0
    %v8571 = vsel %vm8102, %v8567, 0.0
    %v8572 = vadd.f32 %v8570, %v8571
    %v8573 = vsel %vm8102, %v8568, 0.0
    %v8574 = vadd.f32 %v8572, %v8573
    %v8575 = vsel %vm8108, %v8569, 0.0
    %v8576 = vadd.f32 %v8574, %v8575
    %v8577 = vrot.slane %v8576, 4
    %v8578 = vadd.f32 %v8576, %v8577
    %v8579 = vrot.slane %v8578, 2
    %v8580 = vadd.f32 %v8578, %v8579
    %v8581 = vrot.slane %v8580, 1
    %v8582 = vadd.f32 %v8580, %v8581
    %8584 = vrot.lane.b32.xlu0 %v8582, 126
    %v8585 = vpop.permute.xlu0 %8584
    %v8587 = vadd.f32 %v8582, %v8585
    %8588 = vrot.lane.b32.xlu0 %v8582, 124
    %v8589 = vpop.permute.xlu0 %8588
    %v8591 = vadd.f32 %v8587, %v8589
    %8592 = vrot.lane.b32.xlu0 %v8582, 122
    %v8593 = vpop.permute.xlu0 %8592
    %v8595 = vadd.f32 %v8591, %v8593
    %8596 = vrot.lane.b32.xlu0 %v8582, 120
    %v8597 = vpop.permute.xlu0 %8596
    %v8599 = vadd.f32 %v8595, %v8597
    %v8600 = vadd.f32 %v8599, %v8143
    %v8601 = vmax.f32 %v8600, 0.0
    %v8602 = vlaneseq
    %v8603 = vshrl.u32 %v8602, 7
    %v8604 = vsub.s32 0, %v8603
    %v8605 = vrot.slane %v8601, %v8604
    %v8606 = vmul.f32 %v8605, %v8146
    %v8607 = vmul.f32 %v8605, %v8147
    %v8608 = vmul.f32 %v8605, %v8148
    %v8609 = vmul.f32 %v8605, %v8149
    %v8610 = vadd.f32 %v7792, %v8606
    %v8611 = vadd.f32 %v7793, %v8607
    %v8612 = vadd.f32 %v7794, %v8608
    %v8613 = vadd.f32 %v7795, %v8609
    %v8614 = vsub.f32 0.0, %v8610
    %v8615 = vsub.f32 0.0, %v8611
    %v8616 = vsub.f32 0.0, %v8612
    %v8617 = vsub.f32 0.0, %v8613
    %v8618 = vmul.f32 %v8614, 1.442695
    %v8619 = vpow.pop %v8618
    %v8620 = vmul.f32 %v8615, 1.442695
    %v8621 = vpow.pop %v8620
    %v8622 = vmul.f32 %v8616, 1.442695
    %v8623 = vpow.pop %v8622
    %v8624 = vmul.f32 %v8617, 1.442695
    %v8625 = vpow.pop %v8624
    %v8626 = vadd.f32 %v8619, 1.0
    %v8627 = vadd.f32 %v8621, 1.0
    %v8628 = vadd.f32 %v8623, 1.0
    %v8629 = vadd.f32 %v8625, 1.0
    %v8630 = vrcp.pop %v8626
    %v8631 = vrcp.pop %v8627
    %v8632 = vrcp.pop %v8628
    %v8633 = vrcp.pop %v8629
    %v8634 = vmul.f32 %v8605, %v8187
    %v8635 = vmul.f32 %v8605, %v8189
    %v8636 = vmul.f32 %v8605, %v8191
    %v8637 = vmul.f32 %v8605, %v8193
    %8642 = vrot.lane.b32.xlu0 %v8634, 127
    %v8643 = vpop.permute.xlu0 %8642
    %8644 = vrot.lane.b32.xlu0 %v8635, 127
    %v8645 = vpop.permute.xlu0 %8644
    %8646 = vrot.lane.b32.xlu0 %v8636, 127
    %v8647 = vpop.permute.xlu0 %8646
    %8648 = vrot.lane.b32.xlu0 %v8637, 127
    %v8649 = vpop.permute.xlu0 %8648
    %v8654 = vadd.f32 %v7792, %v8643
    %v8655 = vadd.f32 %v7793, %v8645
    %v8656 = vadd.f32 %v7794, %v8647
    %v8657 = vadd.f32 %v7795, %v8649
    %v8658 = vsub.f32 0.0, %v8654
    %v8659 = vsub.f32 0.0, %v8655
    %v8660 = vsub.f32 0.0, %v8656
    %v8661 = vsub.f32 0.0, %v8657
    %v8662 = vmul.f32 %v8658, 1.442695
    %v8663 = vpow.pop %v8662
    %v8664 = vmul.f32 %v8659, 1.442695
    %v8665 = vpow.pop %v8664
    %v8666 = vmul.f32 %v8660, 1.442695
    %v8667 = vpow.pop %v8666
    %v8668 = vmul.f32 %v8661, 1.442695
    %v8669 = vpow.pop %v8668
    %v8670 = vadd.f32 %v8663, 1.0
    %v8671 = vadd.f32 %v8665, 1.0
    %v8672 = vadd.f32 %v8667, 1.0
    %v8673 = vadd.f32 %v8669, 1.0
    %v8674 = vrcp.pop %v8670
    %v8675 = vrcp.pop %v8671
    %v8676 = vrcp.pop %v8672
    %v8677 = vrcp.pop %v8673
    %v8678 = vmax.f32 %v8178, %v8412
    %v8679 = vmax.f32 %v8179, %v8413
    %v8680 = vmax.f32 %v8180, %v8414
    %v8681 = vmax.f32 %v8181, %v8415
    %v8682 = vmax.f32 %v8678, %v8630
    %v8683 = vmax.f32 %v8679, %v8631
    %v8684 = vmax.f32 %v8680, %v8632
    %v8685 = vmax.f32 %v8681, %v8633
    %v8686 = vsub.f32 %v8178, %v8682
    %v8687 = vsub.f32 %v8179, %v8683
    %v8688 = vsub.f32 %v8180, %v8684
    %v8689 = vsub.f32 %v8181, %v8685
    %v8690 = vmul.f32 %v8686, 1.442695
    %v8691 = vpow.pop %v8690
    %v8692 = vmul.f32 %v8687, 1.442695
    %v8693 = vpow.pop %v8692
    %v8694 = vmul.f32 %v8688, 1.442695
    %v8695 = vpow.pop %v8694
    %v8696 = vmul.f32 %v8689, 1.442695
    %v8697 = vpow.pop %v8696
    %v8698 = vsub.f32 %v8412, %v8682
    %v8699 = vsub.f32 %v8413, %v8683
    %v8700 = vsub.f32 %v8414, %v8684
    %v8701 = vsub.f32 %v8415, %v8685
    %v8702 = vmul.f32 %v8698, 1.442695
    %v8703 = vpow.pop %v8702
    %v8704 = vmul.f32 %v8699, 1.442695
    %v8705 = vpow.pop %v8704
    %v8706 = vmul.f32 %v8700, 1.442695
    %v8707 = vpow.pop %v8706
    %v8708 = vmul.f32 %v8701, 1.442695
    %v8709 = vpow.pop %v8708
    %v8710 = vsub.f32 %v8630, %v8682
    %v8711 = vsub.f32 %v8631, %v8683
    %v8712 = vsub.f32 %v8632, %v8684
    %v8713 = vsub.f32 %v8633, %v8685
    %v8714 = vmul.f32 %v8710, 1.442695
    %v8715 = vpow.pop %v8714
    %v8716 = vmul.f32 %v8711, 1.442695
    %v8717 = vpow.pop %v8716
    %v8718 = vmul.f32 %v8712, 1.442695
    %v8719 = vpow.pop %v8718
    %v8720 = vmul.f32 %v8713, 1.442695
    %v8721 = vpow.pop %v8720
    %v8722 = vadd.f32 %v8691, %v8703
    %v8723 = vadd.f32 %v8693, %v8705
    %v8724 = vadd.f32 %v8695, %v8707
    %v8725 = vadd.f32 %v8697, %v8709
    %v8726 = vadd.f32 %v8722, %v8715
    %v8727 = vadd.f32 %v8723, %v8717
    %v8728 = vadd.f32 %v8724, %v8719
    %v8729 = vadd.f32 %v8725, %v8721
    %v8730 = vrcp.pop %v8726
    %v8731 = vrcp.pop %v8727
    %v8732 = vrcp.pop %v8728
    %v8733 = vrcp.pop %v8729
    %v8734 = vmul.f32 %v8691, %v8730
    %v8735 = vmul.f32 %v8693, %v8731
    %v8736 = vmul.f32 %v8695, %v8732
    %v8737 = vmul.f32 %v8697, %v8733
    %v8738 = vmul.f32 %v8703, %v8730
    %v8739 = vmul.f32 %v8705, %v8731
    %v8740 = vmul.f32 %v8707, %v8732
    %v8741 = vmul.f32 %v8709, %v8733
    %v8742 = vmul.f32 %v8715, %v8730
    %v8743 = vmul.f32 %v8717, %v8731
    %v8744 = vmul.f32 %v8719, %v8732
    %v8745 = vmul.f32 %v8721, %v8733
    %v8746 = vmax.f32 %v8238, %v8456
    %v8747 = vmax.f32 %v8239, %v8457
    %v8748 = vmax.f32 %v8240, %v8458
    %v8749 = vmax.f32 %v8241, %v8459
    %v8750 = vmax.f32 %v8746, %v8674
    %v8751 = vmax.f32 %v8747, %v8675
    %v8752 = vmax.f32 %v8748, %v8676
    %v8753 = vmax.f32 %v8749, %v8677
    %v8754 = vsub.f32 %v8238, %v8750
    %v8755 = vsub.f32 %v8239, %v8751
    %v8756 = vsub.f32 %v8240, %v8752
    %v8757 = vsub.f32 %v8241, %v8753
    %v8758 = vmul.f32 %v8754, 1.442695
    %v8759 = vpow.pop %v8758
    %v8760 = vmul.f32 %v8755, 1.442695
    %v8761 = vpow.pop %v8760
    %v8762 = vmul.f32 %v8756, 1.442695
    %v8763 = vpow.pop %v8762
    %v8764 = vmul.f32 %v8757, 1.442695
    %v8765 = vpow.pop %v8764
    %v8766 = vsub.f32 %v8456, %v8750
    %v8767 = vsub.f32 %v8457, %v8751
    %v8768 = vsub.f32 %v8458, %v8752
    %v8769 = vsub.f32 %v8459, %v8753
    %v8770 = vmul.f32 %v8766, 1.442695
    %v8771 = vpow.pop %v8770
    %v8772 = vmul.f32 %v8767, 1.442695
    %v8773 = vpow.pop %v8772
    %v8774 = vmul.f32 %v8768, 1.442695
    %v8775 = vpow.pop %v8774
    %v8776 = vmul.f32 %v8769, 1.442695
    %v8777 = vpow.pop %v8776
    %v8778 = vsub.f32 %v8674, %v8750
    %v8779 = vsub.f32 %v8675, %v8751
    %v8780 = vsub.f32 %v8676, %v8752
    %v8781 = vsub.f32 %v8677, %v8753
    %v8782 = vmul.f32 %v8778, 1.442695
    %v8783 = vpow.pop %v8782
    %v8784 = vmul.f32 %v8779, 1.442695
    %v8785 = vpow.pop %v8784
    %v8786 = vmul.f32 %v8780, 1.442695
    %v8787 = vpow.pop %v8786
    %v8788 = vmul.f32 %v8781, 1.442695
    %v8789 = vpow.pop %v8788
    %v8790 = vadd.f32 %v8759, %v8771
    %v8791 = vadd.f32 %v8761, %v8773
    %v8792 = vadd.f32 %v8763, %v8775
    %v8793 = vadd.f32 %v8765, %v8777
    %v8794 = vadd.f32 %v8790, %v8783
    %v8795 = vadd.f32 %v8791, %v8785
    %v8796 = vadd.f32 %v8792, %v8787
    %v8797 = vadd.f32 %v8793, %v8789
    %v8798 = vrcp.pop %v8794
    %v8799 = vrcp.pop %v8795
    %v8800 = vrcp.pop %v8796
    %v8801 = vrcp.pop %v8797
    %v8802 = vmul.f32 %v8759, %v8798
    %v8803 = vmul.f32 %v8761, %v8799
    %v8804 = vmul.f32 %v8763, %v8800
    %v8805 = vmul.f32 %v8765, %v8801
    %v8806 = vmul.f32 %v8771, %v8798
    %v8807 = vmul.f32 %v8773, %v8799
    %v8808 = vmul.f32 %v8775, %v8800
    %v8809 = vmul.f32 %v8777, %v8801
    %v8810 = vmul.f32 %v8783, %v8798
    %v8811 = vmul.f32 %v8785, %v8799
    %v8812 = vmul.f32 %v8787, %v8800
    %v8813 = vmul.f32 %v8789, %v8801
    %8815 = vset.pattern.permute.xlu0 0
    %8816 = vperm.xlu0 %8815, %v8734
    %v8817 = vpop.permute.xlu0 %8816
    %8820 = vset.pattern.permute.xlu0 0
    %8821 = vperm.xlu0 %8820, %v8735
    %v8822 = vpop.permute.xlu0 %8821
    %8825 = vset.pattern.permute.xlu0 0
    %8826 = vperm.xlu0 %8825, %v8736
    %v8827 = vpop.permute.xlu0 %8826
    %8830 = vset.pattern.permute.xlu0 0
    %8831 = vperm.xlu0 %8830, %v8737
    %v8832 = vpop.permute.xlu0 %8831
    %v8834 = vmul.f32 %v2756, %v8817
    %v8835 = vmul.f32 %v2757, %v8817
    %v8836 = vmul.f32 %v2760, %v8822
    %v8837 = vmul.f32 %v2761, %v8822
    %v8838 = vmul.f32 %v2764, %v8827
    %v8839 = vmul.f32 %v2765, %v8827
    %v8840 = vmul.f32 %v2768, %v8832
    %v8841 = vmul.f32 %v2769, %v8832
    %8843 = vset.pattern.permute.xlu0 0
    %8844 = vperm.xlu0 %8843, %v8802
    %v8845 = vpop.permute.xlu0 %8844
    %8848 = vset.pattern.permute.xlu0 0
    %8849 = vperm.xlu0 %8848, %v8803
    %v8850 = vpop.permute.xlu0 %8849
    %8853 = vset.pattern.permute.xlu0 0
    %8854 = vperm.xlu0 %8853, %v8804
    %v8855 = vpop.permute.xlu0 %8854
    %8858 = vset.pattern.permute.xlu0 0
    %8859 = vperm.xlu0 %8858, %v8805
    %v8860 = vpop.permute.xlu0 %8859
    %v8862 = vmul.f32 %v2758, %v8845
    %v8863 = vmul.f32 %v2759, %v8845
    %v8864 = vmul.f32 %v2762, %v8850
    %v8865 = vmul.f32 %v2763, %v8850
    %v8866 = vmul.f32 %v2766, %v8855
    %v8867 = vmul.f32 %v2767, %v8855
    %v8868 = vmul.f32 %v2770, %v8860
    %v8869 = vmul.f32 %v2771, %v8860
    %v8870 = vld [vmem:[%s13] sm:$0xff]
    %v8871 = vld [vmem:[%s13 + $0x8] sm:$0xff]
    %v8872 = vld [vmem:[%s13 + $0x10] sm:$0xff]
    %v8873 = vld [vmem:[%s13 + $0x18] sm:$0x3f]
    %v8874 = vld [vmem:[%s14] sm:$0xff]
    %v8875 = vld [vmem:[%s14 + $0x8] sm:$0xff]
    %v8876 = vld [vmem:[%s14 + $0x10] sm:$0xff]
    %v8877 = vld [vmem:[%s14 + $0x18] sm:$0x3f]
    %v8878 = vadd.f32 %v8834, %v8835
    %v8879 = vadd.f32 %v8878, %v8862
    %v8880 = vadd.f32 %v8879, %v8863
    %8881 = vadd.xlane.f32.xlu0 %v8880
    %v8882 = vpop.xlane.xlu0 %8881
    %v8883 = vadd.f32 %v8836, %v8837
    %v8884 = vadd.f32 %v8883, %v8864
    %v8885 = vadd.f32 %v8884, %v8865
    %8886 = vadd.xlane.f32.xlu0 %v8885
    %v8887 = vpop.xlane.xlu0 %8886
    %v8888 = vadd.f32 %v8838, %v8839
    %v8889 = vadd.f32 %v8888, %v8866
    %v8890 = vadd.f32 %v8889, %v8867
    %8891 = vadd.xlane.f32.xlu0 %v8890
    %v8892 = vpop.xlane.xlu0 %8891
    %v8893 = vsel %vm283, %v8840, 0.0
    %v8894 = vsel %vm283, %v8841, 0.0
    %v8895 = vadd.f32 %v8893, %v8894
    %v8896 = vsel %vm283, %v8868, 0.0
    %v8897 = vadd.f32 %v8895, %v8896
    %v8898 = vsel %vm283, %v8869, 0.0
    %v8899 = vadd.f32 %v8897, %v8898
    %8900 = vadd.xlane.f32.xlu0 %v8899
    %v8901 = vpop.xlane.xlu0 %8900
    %v8902 = vmul.f32 %v8882, %v293
    %v8903 = vmul.f32 %v8887, %v293
    %v8904 = vmul.f32 %v8892, %v293
    %v8905 = vmul.f32 %v8901, %v293
    %v8906 = vsub.f32 %v8834, %v8902
    %v8907 = vsub.f32 %v8835, %v8902
    %v8908 = vsub.f32 %v8862, %v8902
    %v8909 = vsub.f32 %v8863, %v8902
    %v8910 = vsub.f32 %v8836, %v8903
    %v8911 = vsub.f32 %v8837, %v8903
    %v8912 = vsub.f32 %v8864, %v8903
    %v8913 = vsub.f32 %v8865, %v8903
    %v8914 = vsub.f32 %v8838, %v8904
    %v8915 = vsub.f32 %v8839, %v8904
    %v8916 = vsub.f32 %v8866, %v8904
    %v8917 = vsub.f32 %v8867, %v8904
    %v8918 = vsub.f32 %v8840, %v8905
    %v8919 = vsub.f32 %v8841, %v8905
    %v8920 = vsub.f32 %v8868, %v8905
    %v8921 = vsub.f32 %v8869, %v8905
    %v8922 = vmul.f32 %v8906, %v8906
    %v8923 = vmul.f32 %v8907, %v8907
    %v8924 = vmul.f32 %v8908, %v8908
    %v8925 = vmul.f32 %v8909, %v8909
    %v8926 = vmul.f32 %v8910, %v8910
    %v8927 = vmul.f32 %v8911, %v8911
    %v8928 = vmul.f32 %v8912, %v8912
    %v8929 = vmul.f32 %v8913, %v8913
    %v8930 = vmul.f32 %v8914, %v8914
    %v8931 = vmul.f32 %v8915, %v8915
    %v8932 = vmul.f32 %v8916, %v8916
    %v8933 = vmul.f32 %v8917, %v8917
    %v8934 = vmul.f32 %v8918, %v8918
    %v8935 = vmul.f32 %v8919, %v8919
    %v8936 = vmul.f32 %v8920, %v8920
    %v8937 = vmul.f32 %v8921, %v8921
    %v8938 = vadd.f32 %v8922, %v8923
    %v8939 = vadd.f32 %v8938, %v8924
    %v8940 = vadd.f32 %v8939, %v8925
    %8941 = vadd.xlane.f32.xlu0 %v8940
    %v8942 = vpop.xlane.xlu0 %8941
    %v8943 = vadd.f32 %v8926, %v8927
    %v8944 = vadd.f32 %v8943, %v8928
    %v8945 = vadd.f32 %v8944, %v8929
    %8946 = vadd.xlane.f32.xlu0 %v8945
    %v8947 = vpop.xlane.xlu0 %8946
    %v8948 = vadd.f32 %v8930, %v8931
    %v8949 = vadd.f32 %v8948, %v8932
    %v8950 = vadd.f32 %v8949, %v8933
    %8951 = vadd.xlane.f32.xlu0 %v8950
    %v8952 = vpop.xlane.xlu0 %8951
    %v8953 = vsel %vm283, %v8934, 0.0
    %v8954 = vsel %vm283, %v8935, 0.0
    %v8955 = vadd.f32 %v8953, %v8954
    %v8956 = vsel %vm283, %v8936, 0.0
    %v8957 = vadd.f32 %v8955, %v8956
    %v8958 = vsel %vm283, %v8937, 0.0
    %v8959 = vadd.f32 %v8957, %v8958
    %8960 = vadd.xlane.f32.xlu0 %v8959
    %v8961 = vpop.xlane.xlu0 %8960
    %v8962 = vmul.f32 %v8942, %v293
    %v8963 = vmul.f32 %v8947, %v293
    %v8964 = vmul.f32 %v8952, %v293
    %v8965 = vmul.f32 %v8961, %v293
    %v8966 = vadd.f32 %v8962, 1e-05
    %v8967 = vadd.f32 %v8963, 1e-05
    %v8968 = vadd.f32 %v8964, 1e-05
    %v8969 = vadd.f32 %v8965, 1e-05
    %v8970 = vrsqrt.pop %v8966
    %v8971 = vrsqrt.pop %v8967
    %v8972 = vrsqrt.pop %v8968
    %v8973 = vrsqrt.pop %v8969
    %v8974 = vmul.f32 %v8870, %v8970
    %v8975 = vmul.f32 %v8871, %v8971
    %v8976 = vmul.f32 %v8872, %v8972
    %v8977 = vmul.f32 %v8873, %v8973
    %8979 = vset.pattern.permute.xlu0 0
    %8980 = vperm.xlu0 %8979, %v8974
    %v8981 = vpop.permute.xlu0 %8980
    %8984 = vset.pattern.permute.xlu0 0
    %8985 = vperm.xlu0 %8984, %v8975
    %v8986 = vpop.permute.xlu0 %8985
    %8989 = vset.pattern.permute.xlu0 0
    %8990 = vperm.xlu0 %8989, %v8976
    %v8991 = vpop.permute.xlu0 %8990
    %8994 = vset.pattern.permute.xlu0 0
    %8995 = vperm.xlu0 %8994, %v8977
    %v8996 = vpop.permute.xlu0 %8995
    %v8998 = vmul.f32 %v8834, %v8981
    %v8999 = vmul.f32 %v8835, %v8981
    %v9000 = vmul.f32 %v8862, %v8981
    %v9001 = vmul.f32 %v8863, %v8981
    %v9002 = vmul.f32 %v8836, %v8986
    %v9003 = vmul.f32 %v8837, %v8986
    %v9004 = vmul.f32 %v8864, %v8986
    %v9005 = vmul.f32 %v8865, %v8986
    %v9006 = vmul.f32 %v8838, %v8991
    %v9007 = vmul.f32 %v8839, %v8991
    %v9008 = vmul.f32 %v8866, %v8991
    %v9009 = vmul.f32 %v8867, %v8991
    %v9010 = vmul.f32 %v8840, %v8996
    %v9011 = vmul.f32 %v8841, %v8996
    %v9012 = vmul.f32 %v8868, %v8996
    %v9013 = vmul.f32 %v8869, %v8996
    %v9014 = vmul.f32 %v8902, %v8974
    %v9015 = vmul.f32 %v8903, %v8975
    %v9016 = vmul.f32 %v8904, %v8976
    %v9017 = vmul.f32 %v8905, %v8977
    %v9018 = vsub.f32 %v8874, %v9014
    %v9019 = vsub.f32 %v8875, %v9015
    %v9020 = vsub.f32 %v8876, %v9016
    %v9021 = vsub.f32 %v8877, %v9017
    %9023 = vset.pattern.permute.xlu0 0
    %9024 = vperm.xlu0 %9023, %v9018
    %v9025 = vpop.permute.xlu0 %9024
    %9028 = vset.pattern.permute.xlu0 0
    %9029 = vperm.xlu0 %9028, %v9019
    %v9030 = vpop.permute.xlu0 %9029
    %9033 = vset.pattern.permute.xlu0 0
    %9034 = vperm.xlu0 %9033, %v9020
    %v9035 = vpop.permute.xlu0 %9034
    %9038 = vset.pattern.permute.xlu0 0
    %9039 = vperm.xlu0 %9038, %v9021
    %v9040 = vpop.permute.xlu0 %9039
    %v9042 = vadd.f32 %v8998, %v9025
    %v9043 = vadd.f32 %v8999, %v9025
    %v9044 = vadd.f32 %v9000, %v9025
    %v9045 = vadd.f32 %v9001, %v9025
    %v9046 = vadd.f32 %v9002, %v9030
    %v9047 = vadd.f32 %v9003, %v9030
    %v9048 = vadd.f32 %v9004, %v9030
    %v9049 = vadd.f32 %v9005, %v9030
    %v9050 = vadd.f32 %v9006, %v9035
    %v9051 = vadd.f32 %v9007, %v9035
    %v9052 = vadd.f32 %v9008, %v9035
    %v9053 = vadd.f32 %v9009, %v9035
    %v9054 = vadd.f32 %v9010, %v9040
    %v9055 = vadd.f32 %v9011, %v9040
    %v9056 = vadd.f32 %v9012, %v9040
    %v9057 = vadd.f32 %v9013, %v9040
    %v9058 = vmax.f32 %v9042, 0.0
    %v9059 = vmax.f32 %v9043, 0.0
    %v9060 = vmax.f32 %v9044, 0.0
    %v9061 = vmax.f32 %v9045, 0.0
    %v9062 = vmax.f32 %v9046, 0.0
    %v9063 = vmax.f32 %v9047, 0.0
    %v9064 = vmax.f32 %v9048, 0.0
    %v9065 = vmax.f32 %v9049, 0.0
    %v9066 = vmax.f32 %v9050, 0.0
    %v9067 = vmax.f32 %v9051, 0.0
    %v9068 = vmax.f32 %v9052, 0.0
    %v9069 = vmax.f32 %v9053, 0.0
    %v9070 = vmax.f32 %v9054, 0.0
    %v9071 = vmax.f32 %v9055, 0.0
    %v9072 = vmax.f32 %v9056, 0.0
    %v9073 = vmax.f32 %v9057, 0.0
    %v9074 = vld [vmem:[%s15] sm:$0xf]
    %v9075 = vld [vmem:[%s15 + $0x4] sm:$0xf]
    %v9076 = vld [vmem:[%s15 + $0x8] sm:$0xf]
    %v9077 = vld [vmem:[%s15 + $0xc] sm:$0xf]
    %v9078 = vld [vmem:[%s15 + $0x10] sm:$0xf]
    %v9079 = vld [vmem:[%s15 + $0x14] sm:$0xf]
    %v9080 = vld [vmem:[%s15 + $0x18] sm:$0xf]
    %v9081 = vld [vmem:[%s15 + $0x1c] sm:$0xf]
    %v9082 = vpack.c.bf16 %v9062, %v9058
    %v9083 = vpack.c.bf16 %v9063, %v9059
    %v9084 = vpack.c.bf16 %v9064, %v9060
    %v9085 = vpack.c.bf16 %v9065, %v9061
    %v9086 = vpack.c.bf16 %v9070, %v9066
    %v9087 = vpack.c.bf16 %v9071, %v9067
    %v9088 = vpack.c.bf16 %v9072, %v9068
    %v9089 = vpack.c.bf16 %v9073, %v9069
    %9091 = vset.pattern.permute.xlu0 0
    %9092 = vperm.xlu0 %9091, %v8738
    %v9093 = vpop.permute.xlu0 %9092
    %9096 = vset.pattern.permute.xlu0 0
    %9097 = vperm.xlu0 %9096, %v8739
    %v9098 = vpop.permute.xlu0 %9097
    %9101 = vset.pattern.permute.xlu0 0
    %9102 = vperm.xlu0 %9101, %v8740
    %v9103 = vpop.permute.xlu0 %9102
    %9106 = vset.pattern.permute.xlu0 0
    %9107 = vperm.xlu0 %9106, %v8741
    %v9108 = vpop.permute.xlu0 %9107
    %v9110 = vmul.f32 %v5234, %v9093
    %v9111 = vmul.f32 %v5235, %v9093
    %v9112 = vmul.f32 %v5238, %v9098
    %v9113 = vmul.f32 %v5239, %v9098
    %v9114 = vmul.f32 %v5242, %v9103
    %v9115 = vmul.f32 %v5243, %v9103
    %v9116 = vmul.f32 %v5246, %v9108
    %v9117 = vmul.f32 %v5247, %v9108
    %9119 = vset.pattern.permute.xlu0 0
    %9120 = vperm.xlu0 %9119, %v8806
    %v9121 = vpop.permute.xlu0 %9120
    %9124 = vset.pattern.permute.xlu0 0
    %9125 = vperm.xlu0 %9124, %v8807
    %v9126 = vpop.permute.xlu0 %9125
    %9129 = vset.pattern.permute.xlu0 0
    %9130 = vperm.xlu0 %9129, %v8808
    %v9131 = vpop.permute.xlu0 %9130
    %9134 = vset.pattern.permute.xlu0 0
    %9135 = vperm.xlu0 %9134, %v8809
    %v9136 = vpop.permute.xlu0 %9135
    %v9138 = vmul.f32 %v5236, %v9121
    %v9139 = vmul.f32 %v5237, %v9121
    %v9140 = vmul.f32 %v5240, %v9126
    %v9141 = vmul.f32 %v5241, %v9126
    %v9142 = vmul.f32 %v5244, %v9131
    %v9143 = vmul.f32 %v5245, %v9131
    %v9144 = vmul.f32 %v5248, %v9136
    %v9145 = vmul.f32 %v5249, %v9136
    %s9146 = scalar_lea.vmem %s13, 32
    %v9147 = vld [vmem:[%s9146] sm:$0xff]
    %v9148 = vld [vmem:[%s9146 + $0x8] sm:$0xff]
    %v9149 = vld [vmem:[%s9146 + $0x10] sm:$0xff]
    %v9150 = vld [vmem:[%s9146 + $0x18] sm:$0x3f]
    %s9151 = scalar_lea.vmem %s14, 32
    %v9152 = vld [vmem:[%s9151] sm:$0xff]
    %v9153 = vld [vmem:[%s9151 + $0x8] sm:$0xff]
    %v9154 = vld [vmem:[%s9151 + $0x10] sm:$0xff]
    %v9155 = vld [vmem:[%s9151 + $0x18] sm:$0x3f]
    %v9156 = vadd.f32 %v9110, %v9111
    %v9157 = vadd.f32 %v9156, %v9138
    %v9158 = vadd.f32 %v9157, %v9139
    %9159 = vadd.xlane.f32.xlu0 %v9158
    %v9160 = vpop.xlane.xlu0 %9159
    %v9161 = vadd.f32 %v9112, %v9113
    %v9162 = vadd.f32 %v9161, %v9140
    %v9163 = vadd.f32 %v9162, %v9141
    %9164 = vadd.xlane.f32.xlu0 %v9163
    %v9165 = vpop.xlane.xlu0 %9164
    %v9166 = vadd.f32 %v9114, %v9115
    %v9167 = vadd.f32 %v9166, %v9142
    %v9168 = vadd.f32 %v9167, %v9143
    %9169 = vadd.xlane.f32.xlu0 %v9168
    %v9170 = vpop.xlane.xlu0 %9169
    %v9171 = vsel %vm283, %v9116, 0.0
    %v9172 = vsel %vm283, %v9117, 0.0
    %v9173 = vadd.f32 %v9171, %v9172
    %v9174 = vsel %vm283, %v9144, 0.0
    %v9175 = vadd.f32 %v9173, %v9174
    %v9176 = vsel %vm283, %v9145, 0.0
    %v9177 = vadd.f32 %v9175, %v9176
    %9178 = vadd.xlane.f32.xlu0 %v9177
    %v9179 = vpop.xlane.xlu0 %9178
    %v9180 = vmul.f32 %v9160, %v293
    %v9181 = vmul.f32 %v9165, %v293
    %v9182 = vmul.f32 %v9170, %v293
    %v9183 = vmul.f32 %v9179, %v293
    %v9184 = vsub.f32 %v9110, %v9180
    %v9185 = vsub.f32 %v9111, %v9180
    %v9186 = vsub.f32 %v9138, %v9180
    %v9187 = vsub.f32 %v9139, %v9180
    %v9188 = vsub.f32 %v9112, %v9181
    %v9189 = vsub.f32 %v9113, %v9181
    %v9190 = vsub.f32 %v9140, %v9181
    %v9191 = vsub.f32 %v9141, %v9181
    %v9192 = vsub.f32 %v9114, %v9182
    %v9193 = vsub.f32 %v9115, %v9182
    %v9194 = vsub.f32 %v9142, %v9182
    %v9195 = vsub.f32 %v9143, %v9182
    %v9196 = vsub.f32 %v9116, %v9183
    %v9197 = vsub.f32 %v9117, %v9183
    %v9198 = vsub.f32 %v9144, %v9183
    %v9199 = vsub.f32 %v9145, %v9183
    %v9200 = vmul.f32 %v9184, %v9184
    %v9201 = vmul.f32 %v9185, %v9185
    %v9202 = vmul.f32 %v9186, %v9186
    %v9203 = vmul.f32 %v9187, %v9187
    %v9204 = vmul.f32 %v9188, %v9188
    %v9205 = vmul.f32 %v9189, %v9189
    %v9206 = vmul.f32 %v9190, %v9190
    %v9207 = vmul.f32 %v9191, %v9191
    %v9208 = vmul.f32 %v9192, %v9192
    %v9209 = vmul.f32 %v9193, %v9193
    %v9210 = vmul.f32 %v9194, %v9194
    %v9211 = vmul.f32 %v9195, %v9195
    %v9212 = vmul.f32 %v9196, %v9196
    %v9213 = vmul.f32 %v9197, %v9197
    %v9214 = vmul.f32 %v9198, %v9198
    %v9215 = vmul.f32 %v9199, %v9199
    %v9216 = vadd.f32 %v9200, %v9201
    %v9217 = vadd.f32 %v9216, %v9202
    %v9218 = vadd.f32 %v9217, %v9203
    %9219 = vadd.xlane.f32.xlu0 %v9218
    %v9220 = vpop.xlane.xlu0 %9219
    %v9221 = vadd.f32 %v9204, %v9205
    %v9222 = vadd.f32 %v9221, %v9206
    %v9223 = vadd.f32 %v9222, %v9207
    %9224 = vadd.xlane.f32.xlu0 %v9223
    %v9225 = vpop.xlane.xlu0 %9224
    %v9226 = vadd.f32 %v9208, %v9209
    %v9227 = vadd.f32 %v9226, %v9210
    %v9228 = vadd.f32 %v9227, %v9211
    %9229 = vadd.xlane.f32.xlu0 %v9228
    %v9230 = vpop.xlane.xlu0 %9229
    %v9231 = vsel %vm283, %v9212, 0.0
    %v9232 = vsel %vm283, %v9213, 0.0
    %v9233 = vadd.f32 %v9231, %v9232
    %v9234 = vsel %vm283, %v9214, 0.0
    %v9235 = vadd.f32 %v9233, %v9234
    %v9236 = vsel %vm283, %v9215, 0.0
    %v9237 = vadd.f32 %v9235, %v9236
    %9238 = vadd.xlane.f32.xlu0 %v9237
    %v9239 = vpop.xlane.xlu0 %9238
    %v9240 = vmul.f32 %v9220, %v293
    %v9241 = vmul.f32 %v9225, %v293
    %v9242 = vmul.f32 %v9230, %v293
    %v9243 = vmul.f32 %v9239, %v293
    %v9244 = vadd.f32 %v9240, 1e-05
    %v9245 = vadd.f32 %v9241, 1e-05
    %v9246 = vadd.f32 %v9242, 1e-05
    %v9247 = vadd.f32 %v9243, 1e-05
    %v9248 = vrsqrt.pop %v9244
    %v9249 = vrsqrt.pop %v9245
    %v9250 = vrsqrt.pop %v9246
    %v9251 = vrsqrt.pop %v9247
    %v9252 = vmul.f32 %v9147, %v9248
    %v9253 = vmul.f32 %v9148, %v9249
    %v9254 = vmul.f32 %v9149, %v9250
    %v9255 = vmul.f32 %v9150, %v9251
    %9257 = vset.pattern.permute.xlu0 0
    %9258 = vperm.xlu0 %9257, %v9252
    %v9259 = vpop.permute.xlu0 %9258
    %9262 = vset.pattern.permute.xlu0 0
    %9263 = vperm.xlu0 %9262, %v9253
    %v9264 = vpop.permute.xlu0 %9263
    %9267 = vset.pattern.permute.xlu0 0
    %9268 = vperm.xlu0 %9267, %v9254
    %v9269 = vpop.permute.xlu0 %9268
    %9272 = vset.pattern.permute.xlu0 0
    %9273 = vperm.xlu0 %9272, %v9255
    %v9274 = vpop.permute.xlu0 %9273
    %v9276 = vmul.f32 %v9110, %v9259
    %v9277 = vmul.f32 %v9111, %v9259
    %v9278 = vmul.f32 %v9138, %v9259
    %v9279 = vmul.f32 %v9139, %v9259
    %v9280 = vmul.f32 %v9112, %v9264
    %v9281 = vmul.f32 %v9113, %v9264
    %v9282 = vmul.f32 %v9140, %v9264
    %v9283 = vmul.f32 %v9141, %v9264
    %v9284 = vmul.f32 %v9114, %v9269
    %v9285 = vmul.f32 %v9115, %v9269
    %v9286 = vmul.f32 %v9142, %v9269
    %v9287 = vmul.f32 %v9143, %v9269
    %v9288 = vmul.f32 %v9116, %v9274
    %v9289 = vmul.f32 %v9117, %v9274
    %v9290 = vmul.f32 %v9144, %v9274
    %v9291 = vmul.f32 %v9145, %v9274
    %v9292 = vmul.f32 %v9180, %v9252
    %v9293 = vmul.f32 %v9181, %v9253
    %v9294 = vmul.f32 %v9182, %v9254
    %v9295 = vmul.f32 %v9183, %v9255
    %v9296 = vsub.f32 %v9152, %v9292
    %v9297 = vsub.f32 %v9153, %v9293
    %v9298 = vsub.f32 %v9154, %v9294
    %v9299 = vsub.f32 %v9155, %v9295
    %9301 = vset.pattern.permute.xlu0 0
    %9302 = vperm.xlu0 %9301, %v9296
    %v9303 = vpop.permute.xlu0 %9302
    %9306 = vset.pattern.permute.xlu0 0
    %9307 = vperm.xlu0 %9306, %v9297
    %v9308 = vpop.permute.xlu0 %9307
    %9311 = vset.pattern.permute.xlu0 0
    %9312 = vperm.xlu0 %9311, %v9298
    %v9313 = vpop.permute.xlu0 %9312
    %9316 = vset.pattern.permute.xlu0 0
    %9317 = vperm.xlu0 %9316, %v9299
    %v9318 = vpop.permute.xlu0 %9317
    %v9320 = vadd.f32 %v9276, %v9303
    %v9321 = vadd.f32 %v9277, %v9303
    %v9322 = vadd.f32 %v9278, %v9303
    %v9323 = vadd.f32 %v9279, %v9303
    %v9324 = vadd.f32 %v9280, %v9308
    %v9325 = vadd.f32 %v9281, %v9308
    %v9326 = vadd.f32 %v9282, %v9308
    %v9327 = vadd.f32 %v9283, %v9308
    %v9328 = vadd.f32 %v9284, %v9313
    %v9329 = vadd.f32 %v9285, %v9313
    %v9330 = vadd.f32 %v9286, %v9313
    %v9331 = vadd.f32 %v9287, %v9313
    %v9332 = vadd.f32 %v9288, %v9318
    %v9333 = vadd.f32 %v9289, %v9318
    %v9334 = vadd.f32 %v9290, %v9318
    %v9335 = vadd.f32 %v9291, %v9318
    %v9336 = vmax.f32 %v9320, 0.0
    %v9337 = vmax.f32 %v9321, 0.0
    %v9338 = vmax.f32 %v9322, 0.0
    %v9339 = vmax.f32 %v9323, 0.0
    %v9340 = vmax.f32 %v9324, 0.0
    %v9341 = vmax.f32 %v9325, 0.0
    %v9342 = vmax.f32 %v9326, 0.0
    %v9343 = vmax.f32 %v9327, 0.0
    %v9344 = vmax.f32 %v9328, 0.0
    %v9345 = vmax.f32 %v9329, 0.0
    %v9346 = vmax.f32 %v9330, 0.0
    %v9347 = vmax.f32 %v9331, 0.0
    %v9348 = vmax.f32 %v9332, 0.0
    %v9349 = vmax.f32 %v9333, 0.0
    %v9350 = vmax.f32 %v9334, 0.0
    %v9351 = vmax.f32 %v9335, 0.0
    %s9352 = scalar_lea.vmem %s15, 32
    %v9353 = vld [vmem:[%s9352] sm:$0xf]
    %v9354 = vld [vmem:[%s9352 + $0x4] sm:$0xf]
    %v9355 = vld [vmem:[%s9352 + $0x8] sm:$0xf]
    %v9356 = vld [vmem:[%s9352 + $0xc] sm:$0xf]
    %v9357 = vld [vmem:[%s9352 + $0x10] sm:$0xf]
    %v9358 = vld [vmem:[%s9352 + $0x14] sm:$0xf]
    %v9359 = vld [vmem:[%s9352 + $0x18] sm:$0xf]
    %v9360 = vld [vmem:[%s9352 + $0x1c] sm:$0xf]
    %v9361 = vpack.c.bf16 %v9340, %v9336
    %v9362 = vpack.c.bf16 %v9341, %v9337
    %v9363 = vpack.c.bf16 %v9342, %v9338
    %v9364 = vpack.c.bf16 %v9343, %v9339
    %v9365 = vpack.c.bf16 %v9348, %v9344
    %v9366 = vpack.c.bf16 %v9349, %v9345
    %v9367 = vpack.c.bf16 %v9350, %v9346
    %v9368 = vpack.c.bf16 %v9351, %v9347
    %v9377 = vunpack.c.l.b16 %v9353
    %v9378 = vunpack.c.l.b16 %v9354
    %v9379 = vunpack.c.l.b16 %v9355
    %v9380 = vunpack.c.l.b16 %v9356
    %v9381 = vunpack.c.l.b16 %v9357
    %v9382 = vunpack.c.l.b16 %v9358
    %v9383 = vunpack.c.l.b16 %v9359
    %v9384 = vunpack.c.l.b16 %v9360
    %v9385 = vpack.c.b16 %v9378, %v9377
    %v9386 = vpack.c.b16 %v9380, %v9379
    %v9387 = vpack.c.b16 %v9382, %v9381
    %v9388 = vpack.c.b16 %v9384, %v9383
    %v9390 = vsel %vm616, %v9385, 0
    %v9393 = vsel %vm616, %v9386, 0
    %v9396 = vsel %vm616, %v9387, 0
    %v9399 = vsel %vm616, %v9388, 0
    %v9402 = vsel %vm623, %v9365, 0
    %v9405 = vsel %vm623, %v9366, 0
    %v9408 = vsel %vm623, %v9367, 0
    %v9411 = vsel %vm623, %v9368, 0
    %9413 = vmatprep.subr.bf16.mxu0 %v9362
    %9414 = vmatpush1.bf16.msra.mxu0 %v9361
    %9415 = vmatprep.subr.bf16.mxu0 %v9405
    %9416 = vmatpush1.bf16.msra.mxu0 %v9402
    %9417 = vmatprep.subr.bf16.mxu0 0
    %9418 = vmatpush1.bf16.msra.mxu0 0
    %9419 = vmatprep.subr.bf16.mxu0 0
    %9420 = vmatpush1.bf16.msra.mxu0 0
    %9421 = vmatprep.subr.bf16.mxu0 0
    %9422 = vmatpush1.bf16.msra.mxu0 0
    %9423 = vmatprep.subr.bf16.mxu0 0
    %9424 = vmatpush1.bf16.msra.mxu0 0
    %9425 = vmatprep.subr.bf16.mxu0 0
    %9426 = vmatpush1.bf16.msra.mxu0 0
    %9427 = vmatprep.subr.bf16.mxu0 0
    %9428 = vmatpush1.bf16.msra.mxu0 0
    %9429 = vmatprep.subr.bf16.mxu0 0
    %9430 = vmatpush1.bf16.msra.mxu0 0
    %9431 = vmatprep.subr.bf16.mxu0 0
    %9432 = vmatpush1.bf16.msra.mxu0 0
    %9433 = vmatprep.subr.bf16.mxu0 0
    %9434 = vmatpush1.bf16.msra.mxu0 0
    %9435 = vmatprep.subr.bf16.mxu0 0
    %9436 = vmatpush1.bf16.msra.mxu0 0
    %9437 = vmatprep.subr.bf16.mxu0 0
    %9438 = vmatpush1.bf16.msra.mxu0 0
    %9439 = vmatprep.subr.bf16.mxu0 0
    %9440 = vmatpush1.bf16.msra.mxu0 0
    %9441 = vmatprep.subr.bf16.mxu0 0
    %9442 = vmatpush1.bf16.msra.mxu0 0
    %9443 = vmatprep.subr.bf16.mxu0 0
    %9444 = vmatpush1.bf16.msra.mxu0 0
    %9445 = vmatprep.mubr.bf16.mxu0 0
    %9446 = vmatmul.mubr.bf16.gmra.mrb[0].mxu0 %v9390
    %v9447 = vpop.f32.mrb[0].mxu0
    %v9448 = vadd.f32 0.0, %v9447
    %v9449 = vpop.f32.mrb[0].mxu0
    %v9450 = vadd.f32 0.0, %v9449
    %v9451 = vpop.f32.mrb[0].mxu0
    %v9452 = vadd.f32 0.0, %v9451
    %v9453 = vpop.f32.mrb[0].mxu0
    %v9454 = vadd.f32 0.0, %v9453
    %9455 = vmatprep.mubr.bf16.mxu0 0
    %9456 = vmatmul.mubr.bf16.gmra.mrb[0].mxu0 %v9393
    %v9457 = vpop.f32.mrb[0].mxu0
    %v9458 = vadd.f32 0.0, %v9457
    %v9459 = vpop.f32.mrb[0].mxu0
    %v9460 = vadd.f32 0.0, %v9459
    %v9461 = vpop.f32.mrb[0].mxu0
    %v9462 = vadd.f32 0.0, %v9461
    %v9463 = vpop.f32.mrb[0].mxu0
    %v9464 = vadd.f32 0.0, %v9463
    %9465 = vmatprep.mubr.bf16.mxu0 0
    %9466 = vmatmul.mubr.bf16.gmra.mrb[0].mxu0 %v9396
    %v9467 = vpop.f32.mrb[0].mxu0
    %v9468 = vadd.f32 0.0, %v9467
    %v9469 = vpop.f32.mrb[0].mxu0
    %v9470 = vadd.f32 0.0, %v9469
    %v9471 = vpop.f32.mrb[0].mxu0
    %v9472 = vadd.f32 0.0, %v9471
    %v9473 = vpop.f32.mrb[0].mxu0
    %v9474 = vadd.f32 0.0, %v9473
    %9475 = vmatprep.mubr.bf16.mxu0 0
    %9476 = vmatmul.mubr.bf16.gmra.mrb[0].mxu0 %v9399
    %v9477 = vpop.f32.mrb[0].mxu0
    %v9478 = vadd.f32 0.0, %v9477
    %v9479 = vpop.f32.mrb[0].mxu0
    %v9480 = vadd.f32 0.0, %v9479
    %v9481 = vpop.f32.mrb[0].mxu0
    %v9482 = vadd.f32 0.0, %v9481
    %v9483 = vpop.f32.mrb[0].mxu0
    %v9484 = vadd.f32 0.0, %v9483
    %9485 = vdwg.mxu0
    %9486 = vmatprep.subr.bf16.mxu0 %v9364
    %9487 = vmatpush1.bf16.msra.mxu0 %v9363
    %9488 = vmatprep.subr.bf16.mxu0 %v9411
    %9489 = vmatpush1.bf16.msra.mxu0 %v9408
    %9490 = vmatprep.subr.bf16.mxu0 0
    %9491 = vmatpush1.bf16.msra.mxu0 0
    %9492 = vmatprep.subr.bf16.mxu0 0
    %9493 = vmatpush1.bf16.msra.mxu0 0
    %9494 = vmatprep.subr.bf16.mxu0 0
    %9495 = vmatpush1.bf16.msra.mxu0 0
    %9496 = vmatprep.subr.bf16.mxu0 0
    %9497 = vmatpush1.bf16.msra.mxu0 0
    %9498 = vmatprep.subr.bf16.mxu0 0
    %9499 = vmatpush1.bf16.msra.mxu0 0
    %9500 = vmatprep.subr.bf16.mxu0 0
    %9501 = vmatpush1.bf16.msra.mxu0 0
    %9502 = vmatprep.subr.bf16.mxu0 0
    %9503 = vmatpush1.bf16.msra.mxu0 0
    %9504 = vmatprep.subr.bf16.mxu0 0
    %9505 = vmatpush1.bf16.msra.mxu0 0
    %9506 = vmatprep.subr.bf16.mxu0 0
    %9507 = vmatpush1.bf16.msra.mxu0 0
    %9508 = vmatprep.subr.bf16.mxu0 0
    %9509 = vmatpush1.bf16.msra.mxu0 0
    %9510 = vmatprep.subr.bf16.mxu0 0
    %9511 = vmatpush1.bf16.msra.mxu0 0
    %9512 = vmatprep.subr.bf16.mxu0 0
    %9513 = vmatpush1.bf16.msra.mxu0 0
    %9514 = vmatprep.subr.bf16.mxu0 0
    %9515 = vmatpush1.bf16.msra.mxu0 0
    %9516 = vmatprep.subr.bf16.mxu0 0
    %9517 = vmatpush1.bf16.msra.mxu0 0
    %9518 = vmatprep.mubr.bf16.mxu0 0
    %9519 = vmatmul.mubr.bf16.gmra.mrb[0].mxu0 %v9390
    %v9520 = vpop.f32.mrb[0].mxu0
    %v9521 = vadd.f32 0.0, %v9520
    %v9522 = vpop.f32.mrb[0].mxu0
    %v9523 = vadd.f32 0.0, %v9522
    %v9524 = vpop.f32.mrb[0].mxu0
    %v9525 = vadd.f32 0.0, %v9524
    %v9526 = vpop.f32.mrb[0].mxu0
    %v9527 = vadd.f32 0.0, %v9526
    %9528 = vmatprep.mubr.bf16.mxu0 0
    %9529 = vmatmul.mubr.bf16.gmra.mrb[0].mxu0 %v9393
    %v9530 = vpop.f32.mrb[0].mxu0
    %v9531 = vadd.f32 0.0, %v9530
    %v9532 = vpop.f32.mrb[0].mxu0
    %v9533 = vadd.f32 0.0, %v9532
    %v9534 = vpop.f32.mrb[0].mxu0
    %v9535 = vadd.f32 0.0, %v9534
    %v9536 = vpop.f32.mrb[0].mxu0
    %v9537 = vadd.f32 0.0, %v9536
    %9538 = vmatprep.mubr.bf16.mxu0 0
    %9539 = vmatmul.mubr.bf16.gmra.mrb[0].mxu0 %v9396
    %v9540 = vpop.f32.mrb[0].mxu0
    %v9541 = vadd.f32 0.0, %v9540
    %v9542 = vpop.f32.mrb[0].mxu0
    %v9543 = vadd.f32 0.0, %v9542
    %v9544 = vpop.f32.mrb[0].mxu0
    %v9545 = vadd.f32 0.0, %v9544
    %v9546 = vpop.f32.mrb[0].mxu0
    %v9547 = vadd.f32 0.0, %v9546
    %9548 = vmatprep.mubr.bf16.mxu0 0
    %9549 = vmatmul.mubr.bf16.gmra.mrb[0].mxu0 %v9399
    %v9550 = vpop.f32.mrb[0].mxu0
    %v9551 = vadd.f32 0.0, %v9550
    %v9552 = vpop.f32.mrb[0].mxu0
    %v9553 = vadd.f32 0.0, %v9552
    %v9554 = vpop.f32.mrb[0].mxu0
    %v9555 = vadd.f32 0.0, %v9554
    %v9556 = vpop.f32.mrb[0].mxu0
    %v9557 = vadd.f32 0.0, %v9556
    %9558 = vdwg.mxu0
    %v9567 = vunpack.c.l.b16 %v9074
    %v9568 = vunpack.c.l.b16 %v9075
    %v9569 = vunpack.c.l.b16 %v9076
    %v9570 = vunpack.c.l.b16 %v9077
    %v9571 = vunpack.c.l.b16 %v9078
    %v9572 = vunpack.c.l.b16 %v9079
    %v9573 = vunpack.c.l.b16 %v9080
    %v9574 = vunpack.c.l.b16 %v9081
    %v9575 = vpack.c.b16 %v9568, %v9567
    %v9576 = vpack.c.b16 %v9570, %v9569
    %v9577 = vpack.c.b16 %v9572, %v9571
    %v9578 = vpack.c.b16 %v9574, %v9573
    %v9580 = vsel %vm616, %v9575, 0
    %v9583 = vsel %vm616, %v9576, 0
    %v9586 = vsel %vm616, %v9577, 0
    %v9589 = vsel %vm616, %v9578, 0
    %v9592 = vsel %vm623, %v9086, 0
    %v9595 = vsel %vm623, %v9087, 0
    %v9598 = vsel %vm623, %v9088, 0
    %v9601 = vsel %vm623, %v9089, 0
    %9603 = vmatprep.subr.bf16.mxu0 %v9083
    %9604 = vmatpush1.bf16.msra.mxu0 %v9082
    %9605 = vmatprep.subr.bf16.mxu0 %v9595
    %9606 = vmatpush1.bf16.msra.mxu0 %v9592
    %9607 = vmatprep.subr.bf16.mxu0 0
    %9608 = vmatpush1.bf16.msra.mxu0 0
    %9609 = vmatprep.subr.bf16.mxu0 0
    %9610 = vmatpush1.bf16.msra.mxu0 0
    %9611 = vmatprep.subr.bf16.mxu0 0
    %9612 = vmatpush1.bf16.msra.mxu0 0
    %9613 = vmatprep.subr.bf16.mxu0 0
    %9614 = vmatpush1.bf16.msra.mxu0 0
    %9615 = vmatprep.subr.bf16.mxu0 0
    %9616 = vmatpush1.bf16.msra.mxu0 0
    %9617 = vmatprep.subr.bf16.mxu0 0
    %9618 = vmatpush1.bf16.msra.mxu0 0
    %9619 = vmatprep.subr.bf16.mxu0 0
    %9620 = vmatpush1.bf16.msra.mxu0 0
    %9621 = vmatprep.subr.bf16.mxu0 0
    %9622 = vmatpush1.bf16.msra.mxu0 0
    %9623 = vmatprep.subr.bf16.mxu0 0
    %9624 = vmatpush1.bf16.msra.mxu0 0
    %9625 = vmatprep.subr.bf16.mxu0 0
    %9626 = vmatpush1.bf16.msra.mxu0 0
    %9627 = vmatprep.subr.bf16.mxu0 0
    %9628 = vmatpush1.bf16.msra.mxu0 0
    %9629 = vmatprep.subr.bf16.mxu0 0
    %9630 = vmatpush1.bf16.msra.mxu0 0
    %9631 = vmatprep.subr.bf16.mxu0 0
    %9632 = vmatpush1.bf16.msra.mxu0 0
    %9633 = vmatprep.subr.bf16.mxu0 0
    %9634 = vmatpush1.bf16.msra.mxu0 0
    %9635 = vmatprep.mubr.bf16.mxu0 0
    %9636 = vmatmul.mubr.bf16.gmra.mrb[0].mxu0 %v9580
    %v9637 = vpop.f32.mrb[0].mxu0
    %v9638 = vadd.f32 %v9448, %v9637
    %v9639 = vpop.f32.mrb[0].mxu0
    %v9640 = vadd.f32 %v9450, %v9639
    %v9641 = vpop.f32.mrb[0].mxu0
    %v9642 = vadd.f32 %v9452, %v9641
    %v9643 = vpop.f32.mrb[0].mxu0
    %v9644 = vadd.f32 %v9454, %v9643
    %9645 = vmatprep.mubr.bf16.mxu0 0
    %9646 = vmatmul.mubr.bf16.gmra.mrb[0].mxu0 %v9583
    %v9647 = vpop.f32.mrb[0].mxu0
    %v9648 = vadd.f32 %v9458, %v9647
    %v9649 = vpop.f32.mrb[0].mxu0
    %v9650 = vadd.f32 %v9460, %v9649
    %v9651 = vpop.f32.mrb[0].mxu0
    %v9652 = vadd.f32 %v9462, %v9651
    %v9653 = vpop.f32.mrb[0].mxu0
    %v9654 = vadd.f32 %v9464, %v9653
    %9655 = vmatprep.mubr.bf16.mxu0 0
    %9656 = vmatmul.mubr.bf16.gmra.mrb[0].mxu0 %v9586
    %v9657 = vpop.f32.mrb[0].mxu0
    %v9658 = vadd.f32 %v9468, %v9657
    %v9659 = vpop.f32.mrb[0].mxu0
    %v9660 = vadd.f32 %v9470, %v9659
    %v9661 = vpop.f32.mrb[0].mxu0
    %v9662 = vadd.f32 %v9472, %v9661
    %v9663 = vpop.f32.mrb[0].mxu0
    %v9664 = vadd.f32 %v9474, %v9663
    %9665 = vmatprep.mubr.bf16.mxu0 0
    %9666 = vmatmul.mubr.bf16.gmra.mrb[0].mxu0 %v9589
    %v9667 = vpop.f32.mrb[0].mxu0
    %v9668 = vadd.f32 %v9478, %v9667
    %v9669 = vpop.f32.mrb[0].mxu0
    %v9670 = vadd.f32 %v9480, %v9669
    %v9671 = vpop.f32.mrb[0].mxu0
    %v9672 = vadd.f32 %v9482, %v9671
    %v9673 = vpop.f32.mrb[0].mxu0
    %v9674 = vadd.f32 %v9484, %v9673
    %9675 = vdwg.mxu0
    %9676 = vmatprep.subr.bf16.mxu0 %v9085
    %9677 = vmatpush1.bf16.msra.mxu0 %v9084
    %9678 = vmatprep.subr.bf16.mxu0 %v9601
    %9679 = vmatpush1.bf16.msra.mxu0 %v9598
    %9680 = vmatprep.subr.bf16.mxu0 0
    %9681 = vmatpush1.bf16.msra.mxu0 0
    %9682 = vmatprep.subr.bf16.mxu0 0
    %9683 = vmatpush1.bf16.msra.mxu0 0
    %9684 = vmatprep.subr.bf16.mxu0 0
    %9685 = vmatpush1.bf16.msra.mxu0 0
    %9686 = vmatprep.subr.bf16.mxu0 0
    %9687 = vmatpush1.bf16.msra.mxu0 0
    %9688 = vmatprep.subr.bf16.mxu0 0
    %9689 = vmatpush1.bf16.msra.mxu0 0
    %9690 = vmatprep.subr.bf16.mxu0 0
    %9691 = vmatpush1.bf16.msra.mxu0 0
    %9692 = vmatprep.subr.bf16.mxu0 0
    %9693 = vmatpush1.bf16.msra.mxu0 0
    %9694 = vmatprep.subr.bf16.mxu0 0
    %9695 = vmatpush1.bf16.msra.mxu0 0
    %9696 = vmatprep.subr.bf16.mxu0 0
    %9697 = vmatpush1.bf16.msra.mxu0 0
    %9698 = vmatprep.subr.bf16.mxu0 0
    %9699 = vmatpush1.bf16.msra.mxu0 0
    %9700 = vmatprep.subr.bf16.mxu0 0
    %9701 = vmatpush1.bf16.msra.mxu0 0
    %9702 = vmatprep.subr.bf16.mxu0 0
    %9703 = vmatpush1.bf16.msra.mxu0 0
    %9704 = vmatprep.subr.bf16.mxu0 0
    %9705 = vmatpush1.bf16.msra.mxu0 0
    %9706 = vmatprep.subr.bf16.mxu0 0
    %9707 = vmatpush1.bf16.msra.mxu0 0
    %9708 = vmatprep.mubr.bf16.mxu0 0
    %9709 = vmatmul.mubr.bf16.gmra.mrb[0].mxu0 %v9580
    %v9710 = vpop.f32.mrb[0].mxu0
    %v9711 = vadd.f32 %v9521, %v9710
    %v9712 = vpop.f32.mrb[0].mxu0
    %v9713 = vadd.f32 %v9523, %v9712
    %v9714 = vpop.f32.mrb[0].mxu0
    %v9715 = vadd.f32 %v9525, %v9714
    %v9716 = vpop.f32.mrb[0].mxu0
    %v9717 = vadd.f32 %v9527, %v9716
    %9718 = vmatprep.mubr.bf16.mxu0 0
    %9719 = vmatmul.mubr.bf16.gmra.mrb[0].mxu0 %v9583
    %v9720 = vpop.f32.mrb[0].mxu0
    %v9721 = vadd.f32 %v9531, %v9720
    %v9722 = vpop.f32.mrb[0].mxu0
    %v9723 = vadd.f32 %v9533, %v9722
    %v9724 = vpop.f32.mrb[0].mxu0
    %v9725 = vadd.f32 %v9535, %v9724
    %v9726 = vpop.f32.mrb[0].mxu0
    %v9727 = vadd.f32 %v9537, %v9726
    %9728 = vmatprep.mubr.bf16.mxu0 0
    %9729 = vmatmul.mubr.bf16.gmra.mrb[0].mxu0 %v9586
    %v9730 = vpop.f32.mrb[0].mxu0
    %v9731 = vadd.f32 %v9541, %v9730
    %v9732 = vpop.f32.mrb[0].mxu0
    %v9733 = vadd.f32 %v9543, %v9732
    %v9734 = vpop.f32.mrb[0].mxu0
    %v9735 = vadd.f32 %v9545, %v9734
    %v9736 = vpop.f32.mrb[0].mxu0
    %v9737 = vadd.f32 %v9547, %v9736
    %9738 = vmatprep.mubr.bf16.mxu0 0
    %9739 = vmatmul.mubr.bf16.gmra.mrb[0].mxu0 %v9589
    %v9740 = vpop.f32.mrb[0].mxu0
    %v9741 = vadd.f32 %v9551, %v9740
    %v9742 = vpop.f32.mrb[0].mxu0
    %v9743 = vadd.f32 %v9553, %v9742
    %v9744 = vpop.f32.mrb[0].mxu0
    %v9745 = vadd.f32 %v9555, %v9744
    %v9746 = vpop.f32.mrb[0].mxu0
    %v9747 = vadd.f32 %v9557, %v9746
    %9748 = vdwg.mxu0
    %9750 = vset.pattern.permute.xlu0 0
    %9751 = vperm.xlu0 %9750, %v8742
    %v9752 = vpop.permute.xlu0 %9751
    %9755 = vset.pattern.permute.xlu0 0
    %9756 = vperm.xlu0 %9755, %v8743
    %v9757 = vpop.permute.xlu0 %9756
    %9760 = vset.pattern.permute.xlu0 0
    %9761 = vperm.xlu0 %9760, %v8744
    %v9762 = vpop.permute.xlu0 %9761
    %9765 = vset.pattern.permute.xlu0 0
    %9766 = vperm.xlu0 %9765, %v8745
    %v9767 = vpop.permute.xlu0 %9766
    %v9769 = vmul.f32 %v7712, %v9752
    %v9770 = vmul.f32 %v7713, %v9752
    %v9771 = vmul.f32 %v7716, %v9757
    %v9772 = vmul.f32 %v7717, %v9757
    %v9773 = vmul.f32 %v7720, %v9762
    %v9774 = vmul.f32 %v7721, %v9762
    %v9775 = vmul.f32 %v7724, %v9767
    %v9776 = vmul.f32 %v7725, %v9767
    %9778 = vset.pattern.permute.xlu0 0
    %9779 = vperm.xlu0 %9778, %v8810
    %v9780 = vpop.permute.xlu0 %9779
    %9783 = vset.pattern.permute.xlu0 0
    %9784 = vperm.xlu0 %9783, %v8811
    %v9785 = vpop.permute.xlu0 %9784
    %9788 = vset.pattern.permute.xlu0 0
    %9789 = vperm.xlu0 %9788, %v8812
    %v9790 = vpop.permute.xlu0 %9789
    %9793 = vset.pattern.permute.xlu0 0
    %9794 = vperm.xlu0 %9793, %v8813
    %v9795 = vpop.permute.xlu0 %9794
    %v9797 = vmul.f32 %v7714, %v9780
    %v9798 = vmul.f32 %v7715, %v9780
    %v9799 = vmul.f32 %v7718, %v9785
    %v9800 = vmul.f32 %v7719, %v9785
    %v9801 = vmul.f32 %v7722, %v9790
    %v9802 = vmul.f32 %v7723, %v9790
    %v9803 = vmul.f32 %v7726, %v9795
    %v9804 = vmul.f32 %v7727, %v9795
    %s9805 = scalar_lea.vmem %s13, 64
    %v9806 = vld [vmem:[%s9805] sm:$0xff]
    %v9807 = vld [vmem:[%s9805 + $0x8] sm:$0xff]
    %v9808 = vld [vmem:[%s9805 + $0x10] sm:$0xff]
    %v9809 = vld [vmem:[%s9805 + $0x18] sm:$0x3f]
    %s9810 = scalar_lea.vmem %s14, 64
    %v9811 = vld [vmem:[%s9810] sm:$0xff]
    %v9812 = vld [vmem:[%s9810 + $0x8] sm:$0xff]
    %v9813 = vld [vmem:[%s9810 + $0x10] sm:$0xff]
    %v9814 = vld [vmem:[%s9810 + $0x18] sm:$0x3f]
    %v9815 = vadd.f32 %v9769, %v9770
    %v9816 = vadd.f32 %v9815, %v9797
    %v9817 = vadd.f32 %v9816, %v9798
    %9818 = vadd.xlane.f32.xlu0 %v9817
    %v9819 = vpop.xlane.xlu0 %9818
    %v9820 = vadd.f32 %v9771, %v9772
    %v9821 = vadd.f32 %v9820, %v9799
    %v9822 = vadd.f32 %v9821, %v9800
    %9823 = vadd.xlane.f32.xlu0 %v9822
    %v9824 = vpop.xlane.xlu0 %9823
    %v9825 = vadd.f32 %v9773, %v9774
    %v9826 = vadd.f32 %v9825, %v9801
    %v9827 = vadd.f32 %v9826, %v9802
    %9828 = vadd.xlane.f32.xlu0 %v9827
    %v9829 = vpop.xlane.xlu0 %9828
    %v9830 = vsel %vm283, %v9775, 0.0
    %v9831 = vsel %vm283, %v9776, 0.0
    %v9832 = vadd.f32 %v9830, %v9831
    %v9833 = vsel %vm283, %v9803, 0.0
    %v9834 = vadd.f32 %v9832, %v9833
    %v9835 = vsel %vm283, %v9804, 0.0
    %v9836 = vadd.f32 %v9834, %v9835
    %9837 = vadd.xlane.f32.xlu0 %v9836
    %v9838 = vpop.xlane.xlu0 %9837
    %v9839 = vmul.f32 %v9819, %v293
    %v9840 = vmul.f32 %v9824, %v293
    %v9841 = vmul.f32 %v9829, %v293
    %v9842 = vmul.f32 %v9838, %v293
    %v9843 = vsub.f32 %v9769, %v9839
    %v9844 = vsub.f32 %v9770, %v9839
    %v9845 = vsub.f32 %v9797, %v9839
    %v9846 = vsub.f32 %v9798, %v9839
    %v9847 = vsub.f32 %v9771, %v9840
    %v9848 = vsub.f32 %v9772, %v9840
    %v9849 = vsub.f32 %v9799, %v9840
    %v9850 = vsub.f32 %v9800, %v9840
    %v9851 = vsub.f32 %v9773, %v9841
    %v9852 = vsub.f32 %v9774, %v9841
    %v9853 = vsub.f32 %v9801, %v9841
    %v9854 = vsub.f32 %v9802, %v9841
    %v9855 = vsub.f32 %v9775, %v9842
    %v9856 = vsub.f32 %v9776, %v9842
    %v9857 = vsub.f32 %v9803, %v9842
    %v9858 = vsub.f32 %v9804, %v9842
    %v9859 = vmul.f32 %v9843, %v9843
    %v9860 = vmul.f32 %v9844, %v9844
    %v9861 = vmul.f32 %v9845, %v9845
    %v9862 = vmul.f32 %v9846, %v9846
    %v9863 = vmul.f32 %v9847, %v9847
    %v9864 = vmul.f32 %v9848, %v9848
    %v9865 = vmul.f32 %v9849, %v9849
    %v9866 = vmul.f32 %v9850, %v9850
    %v9867 = vmul.f32 %v9851, %v9851
    %v9868 = vmul.f32 %v9852, %v9852
    %v9869 = vmul.f32 %v9853, %v9853
    %v9870 = vmul.f32 %v9854, %v9854
    %v9871 = vmul.f32 %v9855, %v9855
    %v9872 = vmul.f32 %v9856, %v9856
    %v9873 = vmul.f32 %v9857, %v9857
    %v9874 = vmul.f32 %v9858, %v9858
    %v9875 = vadd.f32 %v9859, %v9860
    %v9876 = vadd.f32 %v9875, %v9861
    %v9877 = vadd.f32 %v9876, %v9862
    %9878 = vadd.xlane.f32.xlu0 %v9877
    %v9879 = vpop.xlane.xlu0 %9878
    %v9880 = vadd.f32 %v9863, %v9864
    %v9881 = vadd.f32 %v9880, %v9865
    %v9882 = vadd.f32 %v9881, %v9866
    %9883 = vadd.xlane.f32.xlu0 %v9882
    %v9884 = vpop.xlane.xlu0 %9883
    %v9885 = vadd.f32 %v9867, %v9868
    %v9886 = vadd.f32 %v9885, %v9869
    %v9887 = vadd.f32 %v9886, %v9870
    %9888 = vadd.xlane.f32.xlu0 %v9887
    %v9889 = vpop.xlane.xlu0 %9888
    %v9890 = vsel %vm283, %v9871, 0.0
    %v9891 = vsel %vm283, %v9872, 0.0
    %v9892 = vadd.f32 %v9890, %v9891
    %v9893 = vsel %vm283, %v9873, 0.0
    %v9894 = vadd.f32 %v9892, %v9893
    %v9895 = vsel %vm283, %v9874, 0.0
    %v9896 = vadd.f32 %v9894, %v9895
    %9897 = vadd.xlane.f32.xlu0 %v9896
    %v9898 = vpop.xlane.xlu0 %9897
    %v9899 = vmul.f32 %v9879, %v293
    %v9900 = vmul.f32 %v9884, %v293
    %v9901 = vmul.f32 %v9889, %v293
    %v9902 = vmul.f32 %v9898, %v293
    %v9903 = vadd.f32 %v9899, 1e-05
    %v9904 = vadd.f32 %v9900, 1e-05
    %v9905 = vadd.f32 %v9901, 1e-05
    %v9906 = vadd.f32 %v9902, 1e-05
    %v9907 = vrsqrt.pop %v9903
    %v9908 = vrsqrt.pop %v9904
    %v9909 = vrsqrt.pop %v9905
    %v9910 = vrsqrt.pop %v9906
    %v9911 = vmul.f32 %v9806, %v9907
    %v9912 = vmul.f32 %v9807, %v9908
    %v9913 = vmul.f32 %v9808, %v9909
    %v9914 = vmul.f32 %v9809, %v9910
    %9916 = vset.pattern.permute.xlu0 0
    %9917 = vperm.xlu0 %9916, %v9911
    %v9918 = vpop.permute.xlu0 %9917
    %9921 = vset.pattern.permute.xlu0 0
    %9922 = vperm.xlu0 %9921, %v9912
    %v9923 = vpop.permute.xlu0 %9922
    %9926 = vset.pattern.permute.xlu0 0
    %9927 = vperm.xlu0 %9926, %v9913
    %v9928 = vpop.permute.xlu0 %9927
    %9931 = vset.pattern.permute.xlu0 0
    %9932 = vperm.xlu0 %9931, %v9914
    %v9933 = vpop.permute.xlu0 %9932
    %v9935 = vmul.f32 %v9769, %v9918
    %v9936 = vmul.f32 %v9770, %v9918
    %v9937 = vmul.f32 %v9797, %v9918
    %v9938 = vmul.f32 %v9798, %v9918
    %v9939 = vmul.f32 %v9771, %v9923
    %v9940 = vmul.f32 %v9772, %v9923
    %v9941 = vmul.f32 %v9799, %v9923
    %v9942 = vmul.f32 %v9800, %v9923
    %v9943 = vmul.f32 %v9773, %v9928
    %v9944 = vmul.f32 %v9774, %v9928
    %v9945 = vmul.f32 %v9801, %v9928
    %v9946 = vmul.f32 %v9802, %v9928
    %v9947 = vmul.f32 %v9775, %v9933
    %v9948 = vmul.f32 %v9776, %v9933
    %v9949 = vmul.f32 %v9803, %v9933
    %v9950 = vmul.f32 %v9804, %v9933
    %v9951 = vmul.f32 %v9839, %v9911
    %v9952 = vmul.f32 %v9840, %v9912
    %v9953 = vmul.f32 %v9841, %v9913
    %v9954 = vmul.f32 %v9842, %v9914
    %v9955 = vsub.f32 %v9811, %v9951
    %v9956 = vsub.f32 %v9812, %v9952
    %v9957 = vsub.f32 %v9813, %v9953
    %v9958 = vsub.f32 %v9814, %v9954
    %9960 = vset.pattern.permute.xlu0 0
    %9961 = vperm.xlu0 %9960, %v9955
    %v9962 = vpop.permute.xlu0 %9961
    %9965 = vset.pattern.permute.xlu0 0
    %9966 = vperm.xlu0 %9965, %v9956
    %v9967 = vpop.permute.xlu0 %9966
    %9970 = vset.pattern.permute.xlu0 0
    %9971 = vperm.xlu0 %9970, %v9957
    %v9972 = vpop.permute.xlu0 %9971
    %9975 = vset.pattern.permute.xlu0 0
    %9976 = vperm.xlu0 %9975, %v9958
    %v9977 = vpop.permute.xlu0 %9976
    %v9979 = vadd.f32 %v9935, %v9962
    %v9980 = vadd.f32 %v9936, %v9962
    %v9981 = vadd.f32 %v9937, %v9962
    %v9982 = vadd.f32 %v9938, %v9962
    %v9983 = vadd.f32 %v9939, %v9967
    %v9984 = vadd.f32 %v9940, %v9967
    %v9985 = vadd.f32 %v9941, %v9967
    %v9986 = vadd.f32 %v9942, %v9967
    %v9987 = vadd.f32 %v9943, %v9972
    %v9988 = vadd.f32 %v9944, %v9972
    %v9989 = vadd.f32 %v9945, %v9972
    %v9990 = vadd.f32 %v9946, %v9972
    %v9991 = vadd.f32 %v9947, %v9977
    %v9992 = vadd.f32 %v9948, %v9977
    %v9993 = vadd.f32 %v9949, %v9977
    %v9994 = vadd.f32 %v9950, %v9977
    %v9995 = vmax.f32 %v9979, 0.0
    %v9996 = vmax.f32 %v9980, 0.0
    %v9997 = vmax.f32 %v9981, 0.0
    %v9998 = vmax.f32 %v9982, 0.0
    %v9999 = vmax.f32 %v9983, 0.0
    %v10000 = vmax.f32 %v9984, 0.0
    %v10001 = vmax.f32 %v9985, 0.0
    %v10002 = vmax.f32 %v9986, 0.0
    %v10003 = vmax.f32 %v9987, 0.0
    %v10004 = vmax.f32 %v9988, 0.0
    %v10005 = vmax.f32 %v9989, 0.0
    %v10006 = vmax.f32 %v9990, 0.0
    %v10007 = vmax.f32 %v9991, 0.0
    %v10008 = vmax.f32 %v9992, 0.0
    %v10009 = vmax.f32 %v9993, 0.0
    %v10010 = vmax.f32 %v9994, 0.0
    %s10011 = scalar_lea.vmem %s15, 64
    %v10012 = vld [vmem:[%s10011] sm:$0xf]
    %v10013 = vld [vmem:[%s10011 + $0x4] sm:$0xf]
    %v10014 = vld [vmem:[%s10011 + $0x8] sm:$0xf]
    %v10015 = vld [vmem:[%s10011 + $0xc] sm:$0xf]
    %v10016 = vld [vmem:[%s10011 + $0x10] sm:$0xf]
    %v10017 = vld [vmem:[%s10011 + $0x14] sm:$0xf]
    %v10018 = vld [vmem:[%s10011 + $0x18] sm:$0xf]
    %v10019 = vld [vmem:[%s10011 + $0x1c] sm:$0xf]
    %v10020 = vpack.c.bf16 %v9999, %v9995
    %v10021 = vpack.c.bf16 %v10000, %v9996
    %v10022 = vpack.c.bf16 %v10001, %v9997
    %v10023 = vpack.c.bf16 %v10002, %v9998
    %v10024 = vpack.c.bf16 %v10007, %v10003
    %v10025 = vpack.c.bf16 %v10008, %v10004
    %v10026 = vpack.c.bf16 %v10009, %v10005
    %v10027 = vpack.c.bf16 %v10010, %v10006
    %v10036 = vunpack.c.l.b16 %v10012
    %v10037 = vunpack.c.l.b16 %v10013
    %v10038 = vunpack.c.l.b16 %v10014
    %v10039 = vunpack.c.l.b16 %v10015
    %v10040 = vunpack.c.l.b16 %v10016
    %v10041 = vunpack.c.l.b16 %v10017
    %v10042 = vunpack.c.l.b16 %v10018
    %v10043 = vunpack.c.l.b16 %v10019
    %v10044 = vpack.c.b16 %v10037, %v10036
    %v10045 = vpack.c.b16 %v10039, %v10038
    %v10046 = vpack.c.b16 %v10041, %v10040
    %v10047 = vpack.c.b16 %v10043, %v10042
    %v10049 = vsel %vm616, %v10044, 0
    %v10052 = vsel %vm616, %v10045, 0
    %v10055 = vsel %vm616, %v10046, 0
    %v10058 = vsel %vm616, %v10047, 0
    %v10061 = vsel %vm623, %v10024, 0
    %v10064 = vsel %vm623, %v10025, 0
    %v10067 = vsel %vm623, %v10026, 0
    %v10070 = vsel %vm623, %v10027, 0
    %10072 = vmatprep.subr.bf16.mxu0 %v10021
    %10073 = vmatpush1.bf16.msra.mxu0 %v10020
    %10074 = vmatprep.subr.bf16.mxu0 %v10064
    %10075 = vmatpush1.bf16.msra.mxu0 %v10061
    %10076 = vmatprep.subr.bf16.mxu0 0
    %10077 = vmatpush1.bf16.msra.mxu0 0
    %10078 = vmatprep.subr.bf16.mxu0 0
    %10079 = vmatpush1.bf16.msra.mxu0 0
    %10080 = vmatprep.subr.bf16.mxu0 0
    %10081 = vmatpush1.bf16.msra.mxu0 0
    %10082 = vmatprep.subr.bf16.mxu0 0
    %10083 = vmatpush1.bf16.msra.mxu0 0
    %10084 = vmatprep.subr.bf16.mxu0 0
    %10085 = vmatpush1.bf16.msra.mxu0 0
    %10086 = vmatprep.subr.bf16.mxu0 0
    %10087 = vmatpush1.bf16.msra.mxu0 0
    %10088 = vmatprep.subr.bf16.mxu0 0
    %10089 = vmatpush1.bf16.msra.mxu0 0
    %10090 = vmatprep.subr.bf16.mxu0 0
    %10091 = vmatpush1.bf16.msra.mxu0 0
    %10092 = vmatprep.subr.bf16.mxu0 0
    %10093 = vmatpush1.bf16.msra.mxu0 0
    %10094 = vmatprep.subr.bf16.mxu0 0
    %10095 = vmatpush1.bf16.msra.mxu0 0
    %10096 = vmatprep.subr.bf16.mxu0 0
    %10097 = vmatpush1.bf16.msra.mxu0 0
    %10098 = vmatprep.subr.bf16.mxu0 0
    %10099 = vmatpush1.bf16.msra.mxu0 0
    %10100 = vmatprep.subr.bf16.mxu0 0
    %10101 = vmatpush1.bf16.msra.mxu0 0
    %10102 = vmatprep.subr.bf16.mxu0 0
    %10103 = vmatpush1.bf16.msra.mxu0 0
    %10104 = vmatprep.mubr.bf16.mxu0 0
    %10105 = vmatmul.mubr.bf16.gmra.mrb[0].mxu0 %v10049
    %v10106 = vpop.f32.mrb[0].mxu0
    %v10107 = vadd.f32 0.0, %v10106
    %v10108 = vpop.f32.mrb[0].mxu0
    %v10109 = vadd.f32 0.0, %v10108
    %v10110 = vpop.f32.mrb[0].mxu0
    %v10111 = vadd.f32 0.0, %v10110
    %v10112 = vpop.f32.mrb[0].mxu0
    %v10113 = vadd.f32 0.0, %v10112
    %10114 = vmatprep.mubr.bf16.mxu0 0
    %10115 = vmatmul.mubr.bf16.gmra.mrb[0].mxu0 %v10052
    %v10116 = vpop.f32.mrb[0].mxu0
    %v10117 = vadd.f32 0.0, %v10116
    %v10118 = vpop.f32.mrb[0].mxu0
    %v10119 = vadd.f32 0.0, %v10118
    %v10120 = vpop.f32.mrb[0].mxu0
    %v10121 = vadd.f32 0.0, %v10120
    %v10122 = vpop.f32.mrb[0].mxu0
    %v10123 = vadd.f32 0.0, %v10122
    %10124 = vmatprep.mubr.bf16.mxu0 0
    %10125 = vmatmul.mubr.bf16.gmra.mrb[0].mxu0 %v10055
    %v10126 = vpop.f32.mrb[0].mxu0
    %v10127 = vadd.f32 0.0, %v10126
    %v10128 = vpop.f32.mrb[0].mxu0
    %v10129 = vadd.f32 0.0, %v10128
    %v10130 = vpop.f32.mrb[0].mxu0
    %v10131 = vadd.f32 0.0, %v10130
    %v10132 = vpop.f32.mrb[0].mxu0
    %v10133 = vadd.f32 0.0, %v10132
    %10134 = vmatprep.mubr.bf16.mxu0 0
    %10135 = vmatmul.mubr.bf16.gmra.mrb[0].mxu0 %v10058
    %v10136 = vpop.f32.mrb[0].mxu0
    %v10137 = vadd.f32 0.0, %v10136
    %v10138 = vpop.f32.mrb[0].mxu0
    %v10139 = vadd.f32 0.0, %v10138
    %v10140 = vpop.f32.mrb[0].mxu0
    %v10141 = vadd.f32 0.0, %v10140
    %v10142 = vpop.f32.mrb[0].mxu0
    %v10143 = vadd.f32 0.0, %v10142
    %10144 = vdwg.mxu0
    %10145 = vmatprep.subr.bf16.mxu0 %v10023
    %10146 = vmatpush1.bf16.msra.mxu0 %v10022
    %10147 = vmatprep.subr.bf16.mxu0 %v10070
    %10148 = vmatpush1.bf16.msra.mxu0 %v10067
    %10149 = vmatprep.subr.bf16.mxu0 0
    %10150 = vmatpush1.bf16.msra.mxu0 0
    %10151 = vmatprep.subr.bf16.mxu0 0
    %10152 = vmatpush1.bf16.msra.mxu0 0
    %10153 = vmatprep.subr.bf16.mxu0 0
    %10154 = vmatpush1.bf16.msra.mxu0 0
    %10155 = vmatprep.subr.bf16.mxu0 0
    %10156 = vmatpush1.bf16.msra.mxu0 0
    %10157 = vmatprep.subr.bf16.mxu0 0
    %10158 = vmatpush1.bf16.msra.mxu0 0
    %10159 = vmatprep.subr.bf16.mxu0 0
    %10160 = vmatpush1.bf16.msra.mxu0 0
    %10161 = vmatprep.subr.bf16.mxu0 0
    %10162 = vmatpush1.bf16.msra.mxu0 0
    %10163 = vmatprep.subr.bf16.mxu0 0
    %10164 = vmatpush1.bf16.msra.mxu0 0
    %10165 = vmatprep.subr.bf16.mxu0 0
    %10166 = vmatpush1.bf16.msra.mxu0 0
    %10167 = vmatprep.subr.bf16.mxu0 0
    %10168 = vmatpush1.bf16.msra.mxu0 0
    %10169 = vmatprep.subr.bf16.mxu0 0
    %10170 = vmatpush1.bf16.msra.mxu0 0
    %10171 = vmatprep.subr.bf16.mxu0 0
    %10172 = vmatpush1.bf16.msra.mxu0 0
    %10173 = vmatprep.subr.bf16.mxu0 0
    %10174 = vmatpush1.bf16.msra.mxu0 0
    %10175 = vmatprep.subr.bf16.mxu0 0
    %10176 = vmatpush1.bf16.msra.mxu0 0
    %10177 = vmatprep.mubr.bf16.mxu0 0
    %10178 = vmatmul.mubr.bf16.gmra.mrb[0].mxu0 %v10049
    %v10179 = vpop.f32.mrb[0].mxu0
    %v10180 = vadd.f32 0.0, %v10179
    %v10181 = vpop.f32.mrb[0].mxu0
    %v10182 = vadd.f32 0.0, %v10181
    %v10183 = vpop.f32.mrb[0].mxu0
    %v10184 = vadd.f32 0.0, %v10183
    %v10185 = vpop.f32.mrb[0].mxu0
    %v10186 = vadd.f32 0.0, %v10185
    %10187 = vmatprep.mubr.bf16.mxu0 0
    %10188 = vmatmul.mubr.bf16.gmra.mrb[0].mxu0 %v10052
    %v10189 = vpop.f32.mrb[0].mxu0
    %v10190 = vadd.f32 0.0, %v10189
    %v10191 = vpop.f32.mrb[0].mxu0
    %v10192 = vadd.f32 0.0, %v10191
    %v10193 = vpop.f32.mrb[0].mxu0
    %v10194 = vadd.f32 0.0, %v10193
    %v10195 = vpop.f32.mrb[0].mxu0
    %v10196 = vadd.f32 0.0, %v10195
    %10197 = vmatprep.mubr.bf16.mxu0 0
    %10198 = vmatmul.mubr.bf16.gmra.mrb[0].mxu0 %v10055
    %v10199 = vpop.f32.mrb[0].mxu0
    %v10200 = vadd.f32 0.0, %v10199
    %v10201 = vpop.f32.mrb[0].mxu0
    %v10202 = vadd.f32 0.0, %v10201
    %v10203 = vpop.f32.mrb[0].mxu0
    %v10204 = vadd.f32 0.0, %v10203
    %v10205 = vpop.f32.mrb[0].mxu0
    %v10206 = vadd.f32 0.0, %v10205
    %10207 = vmatprep.mubr.bf16.mxu0 0
    %10208 = vmatmul.mubr.bf16.gmra.mrb[0].mxu0 %v10058
    %v10209 = vpop.f32.mrb[0].mxu0
    %v10210 = vadd.f32 0.0, %v10209
    %v10211 = vpop.f32.mrb[0].mxu0
    %v10212 = vadd.f32 0.0, %v10211
    %v10213 = vpop.f32.mrb[0].mxu0
    %v10214 = vadd.f32 0.0, %v10213
    %v10215 = vpop.f32.mrb[0].mxu0
    %v10216 = vadd.f32 0.0, %v10215
    %10217 = vdwg.mxu0
    %v10218 = vadd.f32 %v9638, %v10107
    %v10219 = vadd.f32 %v9640, %v10109
    %v10220 = vadd.f32 %v9711, %v10180
    %v10221 = vadd.f32 %v9713, %v10182
    %v10222 = vadd.f32 %v9642, %v10111
    %v10223 = vadd.f32 %v9644, %v10113
    %v10224 = vadd.f32 %v9715, %v10184
    %v10225 = vadd.f32 %v9717, %v10186
    %v10226 = vadd.f32 %v9648, %v10117
    %v10227 = vadd.f32 %v9650, %v10119
    %v10228 = vadd.f32 %v9721, %v10190
    %v10229 = vadd.f32 %v9723, %v10192
    %v10230 = vadd.f32 %v9652, %v10121
    %v10231 = vadd.f32 %v9654, %v10123
    %v10232 = vadd.f32 %v9725, %v10194
    %v10233 = vadd.f32 %v9727, %v10196
    %v10234 = vadd.f32 %v9658, %v10127
    %v10235 = vadd.f32 %v9660, %v10129
    %v10236 = vadd.f32 %v9731, %v10200
    %v10237 = vadd.f32 %v9733, %v10202
    %v10238 = vadd.f32 %v9662, %v10131
    %v10239 = vadd.f32 %v9664, %v10133
    %v10240 = vadd.f32 %v9735, %v10204
    %v10241 = vadd.f32 %v9737, %v10206
    %v10242 = vadd.f32 %v9668, %v10137
    %v10243 = vadd.f32 %v9670, %v10139
    %v10244 = vadd.f32 %v9741, %v10210
    %v10245 = vadd.f32 %v9743, %v10212
    %v10246 = vadd.f32 %v9672, %v10141
    %v10247 = vadd.f32 %v9674, %v10143
    %v10248 = vadd.f32 %v9745, %v10214
    %v10249 = vadd.f32 %v9747, %v10216
    %v10250 = vld [vmem:[%s16] sm:$0xff]
    %v10251 = vld [vmem:[%s16 + $0x8] sm:$0xff]
    %v10252 = vld [vmem:[%s16 + $0x10] sm:$0xff]
    %v10253 = vld [vmem:[%s16 + $0x18] sm:$0xff]
    %v10254 = vld [vmem:[%s16 + $0x20] sm:$0xff]
    %v10255 = vld [vmem:[%s16 + $0x28] sm:$0xff]
    %v10256 = vld [vmem:[%s16 + $0x30] sm:$0xff]
    %v10257 = vld [vmem:[%s16 + $0x38] sm:$0xff]
    %v10258 = vld [vmem:[%s17] sm:$0xff]
    %v10259 = vld [vmem:[%s17 + $0x8] sm:$0xff]
    %v10260 = vld [vmem:[%s17 + $0x10] sm:$0xff]
    %v10261 = vld [vmem:[%s17 + $0x18] sm:$0xff]
    %v10262 = vld [vmem:[%s17 + $0x20] sm:$0xff]
    %v10263 = vld [vmem:[%s17 + $0x28] sm:$0xff]
    %v10264 = vld [vmem:[%s17 + $0x30] sm:$0xff]
    %v10265 = vld [vmem:[%s17 + $0x38] sm:$0xff]
    %v10266 = vadd.f32 %v10218, %v10219
    %v10267 = vadd.f32 %v10266, %v10220
    %v10268 = vadd.f32 %v10267, %v10221
    %10269 = vadd.xlane.f32.xlu0 %v10268
    %v10270 = vpop.xlane.xlu0 %10269
    %v10271 = vadd.f32 %v10222, %v10223
    %v10272 = vadd.f32 %v10271, %v10224
    %v10273 = vadd.f32 %v10272, %v10225
    %10274 = vadd.xlane.f32.xlu0 %v10273
    %v10275 = vpop.xlane.xlu0 %10274
    %v10276 = vadd.f32 %v10226, %v10227
    %v10277 = vadd.f32 %v10276, %v10228
    %v10278 = vadd.f32 %v10277, %v10229
    %10279 = vadd.xlane.f32.xlu0 %v10278
    %v10280 = vpop.xlane.xlu0 %10279
    %v10281 = vadd.f32 %v10230, %v10231
    %v10282 = vadd.f32 %v10281, %v10232
    %v10283 = vadd.f32 %v10282, %v10233
    %10284 = vadd.xlane.f32.xlu0 %v10283
    %v10285 = vpop.xlane.xlu0 %10284
    %v10286 = vadd.f32 %v10234, %v10235
    %v10287 = vadd.f32 %v10286, %v10236
    %v10288 = vadd.f32 %v10287, %v10237
    %10289 = vadd.xlane.f32.xlu0 %v10288
    %v10290 = vpop.xlane.xlu0 %10289
    %v10291 = vadd.f32 %v10238, %v10239
    %v10292 = vadd.f32 %v10291, %v10240
    %v10293 = vadd.f32 %v10292, %v10241
    %10294 = vadd.xlane.f32.xlu0 %v10293
    %v10295 = vpop.xlane.xlu0 %10294
    %v10296 = vadd.f32 %v10242, %v10243
    %v10297 = vadd.f32 %v10296, %v10244
    %v10298 = vadd.f32 %v10297, %v10245
    %10299 = vadd.xlane.f32.xlu0 %v10298
    %v10300 = vpop.xlane.xlu0 %10299
    %v10301 = vadd.f32 %v10246, %v10247
    %v10302 = vadd.f32 %v10301, %v10248
    %v10303 = vadd.f32 %v10302, %v10249
    %10304 = vadd.xlane.f32.xlu0 %v10303
    %v10305 = vpop.xlane.xlu0 %10304
    %v10306 = vmul.f32 %v10270, %v293
    %v10307 = vmul.f32 %v10275, %v293
    %v10308 = vmul.f32 %v10280, %v293
    %v10309 = vmul.f32 %v10285, %v293
    %v10310 = vmul.f32 %v10290, %v293
    %v10311 = vmul.f32 %v10295, %v293
    %v10312 = vmul.f32 %v10300, %v293
    %v10313 = vmul.f32 %v10305, %v293
    %v10314 = vsub.f32 %v10218, %v10306
    %v10315 = vsub.f32 %v10219, %v10306
    %v10316 = vsub.f32 %v10220, %v10306
    %v10317 = vsub.f32 %v10221, %v10306
    %v10318 = vsub.f32 %v10222, %v10307
    %v10319 = vsub.f32 %v10223, %v10307
    %v10320 = vsub.f32 %v10224, %v10307
    %v10321 = vsub.f32 %v10225, %v10307
    %v10322 = vsub.f32 %v10226, %v10308
    %v10323 = vsub.f32 %v10227, %v10308
    %v10324 = vsub.f32 %v10228, %v10308
    %v10325 = vsub.f32 %v10229, %v10308
    %v10326 = vsub.f32 %v10230, %v10309
    %v10327 = vsub.f32 %v10231, %v10309
    %v10328 = vsub.f32 %v10232, %v10309
    %v10329 = vsub.f32 %v10233, %v10309
    %v10330 = vsub.f32 %v10234, %v10310
    %v10331 = vsub.f32 %v10235, %v10310
    %v10332 = vsub.f32 %v10236, %v10310
    %v10333 = vsub.f32 %v10237, %v10310
    %v10334 = vsub.f32 %v10238, %v10311
    %v10335 = vsub.f32 %v10239, %v10311
    %v10336 = vsub.f32 %v10240, %v10311
    %v10337 = vsub.f32 %v10241, %v10311
    %v10338 = vsub.f32 %v10242, %v10312
    %v10339 = vsub.f32 %v10243, %v10312
    %v10340 = vsub.f32 %v10244, %v10312
    %v10341 = vsub.f32 %v10245, %v10312
    %v10342 = vsub.f32 %v10246, %v10313
    %v10343 = vsub.f32 %v10247, %v10313
    %v10344 = vsub.f32 %v10248, %v10313
    %v10345 = vsub.f32 %v10249, %v10313
    %v10346 = vmul.f32 %v10314, %v10314
    %v10347 = vmul.f32 %v10315, %v10315
    %v10348 = vmul.f32 %v10316, %v10316
    %v10349 = vmul.f32 %v10317, %v10317
    %v10350 = vmul.f32 %v10318, %v10318
    %v10351 = vmul.f32 %v10319, %v10319
    %v10352 = vmul.f32 %v10320, %v10320
    %v10353 = vmul.f32 %v10321, %v10321
    %v10354 = vmul.f32 %v10322, %v10322
    %v10355 = vmul.f32 %v10323, %v10323
    %v10356 = vmul.f32 %v10324, %v10324
    %v10357 = vmul.f32 %v10325, %v10325
    %v10358 = vmul.f32 %v10326, %v10326
    %v10359 = vmul.f32 %v10327, %v10327
    %v10360 = vmul.f32 %v10328, %v10328
    %v10361 = vmul.f32 %v10329, %v10329
    %v10362 = vmul.f32 %v10330, %v10330
    %v10363 = vmul.f32 %v10331, %v10331
    %v10364 = vmul.f32 %v10332, %v10332
    %v10365 = vmul.f32 %v10333, %v10333
    %v10366 = vmul.f32 %v10334, %v10334
    %v10367 = vmul.f32 %v10335, %v10335
    %v10368 = vmul.f32 %v10336, %v10336
    %v10369 = vmul.f32 %v10337, %v10337
    %v10370 = vmul.f32 %v10338, %v10338
    %v10371 = vmul.f32 %v10339, %v10339
    %v10372 = vmul.f32 %v10340, %v10340
    %v10373 = vmul.f32 %v10341, %v10341
    %v10374 = vmul.f32 %v10342, %v10342
    %v10375 = vmul.f32 %v10343, %v10343
    %v10376 = vmul.f32 %v10344, %v10344
    %v10377 = vmul.f32 %v10345, %v10345
    %v10378 = vadd.f32 %v10346, %v10347
    %v10379 = vadd.f32 %v10378, %v10348
    %v10380 = vadd.f32 %v10379, %v10349
    %10381 = vadd.xlane.f32.xlu0 %v10380
    %v10382 = vpop.xlane.xlu0 %10381
    %v10383 = vadd.f32 %v10350, %v10351
    %v10384 = vadd.f32 %v10383, %v10352
    %v10385 = vadd.f32 %v10384, %v10353
    %10386 = vadd.xlane.f32.xlu0 %v10385
    %v10387 = vpop.xlane.xlu0 %10386
    %v10388 = vadd.f32 %v10354, %v10355
    %v10389 = vadd.f32 %v10388, %v10356
    %v10390 = vadd.f32 %v10389, %v10357
    %10391 = vadd.xlane.f32.xlu0 %v10390
    %v10392 = vpop.xlane.xlu0 %10391
    %v10393 = vadd.f32 %v10358, %v10359
    %v10394 = vadd.f32 %v10393, %v10360
    %v10395 = vadd.f32 %v10394, %v10361
    %10396 = vadd.xlane.f32.xlu0 %v10395
    %v10397 = vpop.xlane.xlu0 %10396
    %v10398 = vadd.f32 %v10362, %v10363
    %v10399 = vadd.f32 %v10398, %v10364
    %v10400 = vadd.f32 %v10399, %v10365
    %10401 = vadd.xlane.f32.xlu0 %v10400
    %v10402 = vpop.xlane.xlu0 %10401
    %v10403 = vadd.f32 %v10366, %v10367
    %v10404 = vadd.f32 %v10403, %v10368
    %v10405 = vadd.f32 %v10404, %v10369
    %10406 = vadd.xlane.f32.xlu0 %v10405
    %v10407 = vpop.xlane.xlu0 %10406
    %v10408 = vadd.f32 %v10370, %v10371
    %v10409 = vadd.f32 %v10408, %v10372
    %v10410 = vadd.f32 %v10409, %v10373
    %10411 = vadd.xlane.f32.xlu0 %v10410
    %v10412 = vpop.xlane.xlu0 %10411
    %v10413 = vadd.f32 %v10374, %v10375
    %v10414 = vadd.f32 %v10413, %v10376
    %v10415 = vadd.f32 %v10414, %v10377
    %10416 = vadd.xlane.f32.xlu0 %v10415
    %v10417 = vpop.xlane.xlu0 %10416
    %v10418 = vmul.f32 %v10382, %v293
    %v10419 = vmul.f32 %v10387, %v293
    %v10420 = vmul.f32 %v10392, %v293
    %v10421 = vmul.f32 %v10397, %v293
    %v10422 = vmul.f32 %v10402, %v293
    %v10423 = vmul.f32 %v10407, %v293
    %v10424 = vmul.f32 %v10412, %v293
    %v10425 = vmul.f32 %v10417, %v293
    %v10426 = vadd.f32 %v10418, 1e-05
    %v10427 = vadd.f32 %v10419, 1e-05
    %v10428 = vadd.f32 %v10420, 1e-05
    %v10429 = vadd.f32 %v10421, 1e-05
    %v10430 = vadd.f32 %v10422, 1e-05
    %v10431 = vadd.f32 %v10423, 1e-05
    %v10432 = vadd.f32 %v10424, 1e-05
    %v10433 = vadd.f32 %v10425, 1e-05
    %v10434 = vrsqrt.pop %v10426
    %v10435 = vrsqrt.pop %v10427
    %v10436 = vrsqrt.pop %v10428
    %v10437 = vrsqrt.pop %v10429
    %v10438 = vrsqrt.pop %v10430
    %v10439 = vrsqrt.pop %v10431
    %v10440 = vrsqrt.pop %v10432
    %v10441 = vrsqrt.pop %v10433
    %v10442 = vmul.f32 %v10250, %v10434
    %v10443 = vmul.f32 %v10251, %v10435
    %v10444 = vmul.f32 %v10252, %v10436
    %v10445 = vmul.f32 %v10253, %v10437
    %v10446 = vmul.f32 %v10254, %v10438
    %v10447 = vmul.f32 %v10255, %v10439
    %v10448 = vmul.f32 %v10256, %v10440
    %v10449 = vmul.f32 %v10257, %v10441
    %10451 = vset.pattern.permute.xlu0 0
    %10452 = vperm.xlu0 %10451, %v10442
    %v10453 = vpop.permute.xlu0 %10452
    %10456 = vset.pattern.permute.xlu0 0
    %10457 = vperm.xlu0 %10456, %v10443
    %v10458 = vpop.permute.xlu0 %10457
    %10461 = vset.pattern.permute.xlu0 0
    %10462 = vperm.xlu0 %10461, %v10444
    %v10463 = vpop.permute.xlu0 %10462
    %10466 = vset.pattern.permute.xlu0 0
    %10467 = vperm.xlu0 %10466, %v10445
    %v10468 = vpop.permute.xlu0 %10467
    %10471 = vset.pattern.permute.xlu0 0
    %10472 = vperm.xlu0 %10471, %v10446
    %v10473 = vpop.permute.xlu0 %10472
    %10476 = vset.pattern.permute.xlu0 0
    %10477 = vperm.xlu0 %10476, %v10447
    %v10478 = vpop.permute.xlu0 %10477
    %10481 = vset.pattern.permute.xlu0 0
    %10482 = vperm.xlu0 %10481, %v10448
    %v10483 = vpop.permute.xlu0 %10482
    %10486 = vset.pattern.permute.xlu0 0
    %10487 = vperm.xlu0 %10486, %v10449
    %v10488 = vpop.permute.xlu0 %10487
    %v10490 = vmul.f32 %v10218, %v10453
    %v10491 = vmul.f32 %v10219, %v10453
    %v10492 = vmul.f32 %v10220, %v10453
    %v10493 = vmul.f32 %v10221, %v10453
    %v10494 = vmul.f32 %v10222, %v10458
    %v10495 = vmul.f32 %v10223, %v10458
    %v10496 = vmul.f32 %v10224, %v10458
    %v10497 = vmul.f32 %v10225, %v10458
    %v10498 = vmul.f32 %v10226, %v10463
    %v10499 = vmul.f32 %v10227, %v10463
    %v10500 = vmul.f32 %v10228, %v10463
    %v10501 = vmul.f32 %v10229, %v10463
    %v10502 = vmul.f32 %v10230, %v10468
    %v10503 = vmul.f32 %v10231, %v10468
    %v10504 = vmul.f32 %v10232, %v10468
    %v10505 = vmul.f32 %v10233, %v10468
    %v10506 = vmul.f32 %v10234, %v10473
    %v10507 = vmul.f32 %v10235, %v10473
    %v10508 = vmul.f32 %v10236, %v10473
    %v10509 = vmul.f32 %v10237, %v10473
    %v10510 = vmul.f32 %v10238, %v10478
    %v10511 = vmul.f32 %v10239, %v10478
    %v10512 = vmul.f32 %v10240, %v10478
    %v10513 = vmul.f32 %v10241, %v10478
    %v10514 = vmul.f32 %v10242, %v10483
    %v10515 = vmul.f32 %v10243, %v10483
    %v10516 = vmul.f32 %v10244, %v10483
    %v10517 = vmul.f32 %v10245, %v10483
    %v10518 = vmul.f32 %v10246, %v10488
    %v10519 = vmul.f32 %v10247, %v10488
    %v10520 = vmul.f32 %v10248, %v10488
    %v10521 = vmul.f32 %v10249, %v10488
    %v10522 = vmul.f32 %v10306, %v10442
    %v10523 = vmul.f32 %v10307, %v10443
    %v10524 = vmul.f32 %v10308, %v10444
    %v10525 = vmul.f32 %v10309, %v10445
    %v10526 = vmul.f32 %v10310, %v10446
    %v10527 = vmul.f32 %v10311, %v10447
    %v10528 = vmul.f32 %v10312, %v10448
    %v10529 = vmul.f32 %v10313, %v10449
    %v10530 = vsub.f32 %v10258, %v10522
    %v10531 = vsub.f32 %v10259, %v10523
    %v10532 = vsub.f32 %v10260, %v10524
    %v10533 = vsub.f32 %v10261, %v10525
    %v10534 = vsub.f32 %v10262, %v10526
    %v10535 = vsub.f32 %v10263, %v10527
    %v10536 = vsub.f32 %v10264, %v10528
    %v10537 = vsub.f32 %v10265, %v10529
    %10539 = vset.pattern.permute.xlu0 0
    %10540 = vperm.xlu0 %10539, %v10530
    %v10541 = vpop.permute.xlu0 %10540
    %10544 = vset.pattern.permute.xlu0 0
    %10545 = vperm.xlu0 %10544, %v10531
    %v10546 = vpop.permute.xlu0 %10545
    %10549 = vset.pattern.permute.xlu0 0
    %10550 = vperm.xlu0 %10549, %v10532
    %v10551 = vpop.permute.xlu0 %10550
    %10554 = vset.pattern.permute.xlu0 0
    %10555 = vperm.xlu0 %10554, %v10533
    %v10556 = vpop.permute.xlu0 %10555
    %10559 = vset.pattern.permute.xlu0 0
    %10560 = vperm.xlu0 %10559, %v10534
    %v10561 = vpop.permute.xlu0 %10560
    %10564 = vset.pattern.permute.xlu0 0
    %10565 = vperm.xlu0 %10564, %v10535
    %v10566 = vpop.permute.xlu0 %10565
    %10569 = vset.pattern.permute.xlu0 0
    %10570 = vperm.xlu0 %10569, %v10536
    %v10571 = vpop.permute.xlu0 %10570
    %10574 = vset.pattern.permute.xlu0 0
    %10575 = vperm.xlu0 %10574, %v10537
    %v10576 = vpop.permute.xlu0 %10575
    %v10578 = vadd.f32 %v10490, %v10541
    %v10579 = vadd.f32 %v10491, %v10541
    %v10580 = vadd.f32 %v10492, %v10541
    %v10581 = vadd.f32 %v10493, %v10541
    %v10582 = vadd.f32 %v10494, %v10546
    %v10583 = vadd.f32 %v10495, %v10546
    %v10584 = vadd.f32 %v10496, %v10546
    %v10585 = vadd.f32 %v10497, %v10546
    %v10586 = vadd.f32 %v10498, %v10551
    %v10587 = vadd.f32 %v10499, %v10551
    %v10588 = vadd.f32 %v10500, %v10551
    %v10589 = vadd.f32 %v10501, %v10551
    %v10590 = vadd.f32 %v10502, %v10556
    %v10591 = vadd.f32 %v10503, %v10556
    %v10592 = vadd.f32 %v10504, %v10556
    %v10593 = vadd.f32 %v10505, %v10556
    %v10594 = vadd.f32 %v10506, %v10561
    %v10595 = vadd.f32 %v10507, %v10561
    %v10596 = vadd.f32 %v10508, %v10561
    %v10597 = vadd.f32 %v10509, %v10561
    %v10598 = vadd.f32 %v10510, %v10566
    %v10599 = vadd.f32 %v10511, %v10566
    %v10600 = vadd.f32 %v10512, %v10566
    %v10601 = vadd.f32 %v10513, %v10566
    %v10602 = vadd.f32 %v10514, %v10571
    %v10603 = vadd.f32 %v10515, %v10571
    %v10604 = vadd.f32 %v10516, %v10571
    %v10605 = vadd.f32 %v10517, %v10571
    %v10606 = vadd.f32 %v10518, %v10576
    %v10607 = vadd.f32 %v10519, %v10576
    %v10608 = vadd.f32 %v10520, %v10576
    %v10609 = vadd.f32 %v10521, %v10576
    %v10610 = vadd.f32 %v10578, %v77
    %v10611 = vadd.f32 %v10579, %v78
    %v10612 = vadd.f32 %v10580, %v79
    %v10613 = vadd.f32 %v10581, %v80
    %v10614 = vadd.f32 %v10582, %v81
    %v10615 = vadd.f32 %v10583, %v82
    %v10616 = vadd.f32 %v10584, %v83
    %v10617 = vadd.f32 %v10585, %v84
    %v10618 = vadd.f32 %v10586, %v85
    %v10619 = vadd.f32 %v10587, %v86
    %v10620 = vadd.f32 %v10588, %v87
    %v10621 = vadd.f32 %v10589, %v88
    %v10622 = vadd.f32 %v10590, %v89
    %v10623 = vadd.f32 %v10591, %v90
    %v10624 = vadd.f32 %v10592, %v91
    %v10625 = vadd.f32 %v10593, %v92
    %v10626 = vadd.f32 %v10594, %v93
    %v10627 = vadd.f32 %v10595, %v94
    %v10628 = vadd.f32 %v10596, %v95
    %v10629 = vadd.f32 %v10597, %v96
    %v10630 = vadd.f32 %v10598, %v97
    %v10631 = vadd.f32 %v10599, %v98
    %v10632 = vadd.f32 %v10600, %v99
    %v10633 = vadd.f32 %v10601, %v100
    %v10634 = vadd.f32 %v10602, %v101
    %v10635 = vadd.f32 %v10603, %v102
    %v10636 = vadd.f32 %v10604, %v103
    %v10637 = vadd.f32 %v10605, %v104
    %v10638 = vadd.f32 %v10606, %v105
    %v10639 = vadd.f32 %v10607, %v106
    %v10640 = vadd.f32 %v10608, %v107
    %v10641 = vadd.f32 %v10609, %v108
    %v10642 = vmax.f32 %v10610, 0.0
    %v10643 = vmax.f32 %v10611, 0.0
    %v10644 = vmax.f32 %v10612, 0.0
    %v10645 = vmax.f32 %v10613, 0.0
    %v10646 = vmax.f32 %v10614, 0.0
    %v10647 = vmax.f32 %v10615, 0.0
    %v10648 = vmax.f32 %v10616, 0.0
    %v10649 = vmax.f32 %v10617, 0.0
    %v10650 = vmax.f32 %v10618, 0.0
    %v10651 = vmax.f32 %v10619, 0.0
    %v10652 = vmax.f32 %v10620, 0.0
    %v10653 = vmax.f32 %v10621, 0.0
    %v10654 = vmax.f32 %v10622, 0.0
    %v10655 = vmax.f32 %v10623, 0.0
    %v10656 = vmax.f32 %v10624, 0.0
    %v10657 = vmax.f32 %v10625, 0.0
    %v10658 = vmax.f32 %v10626, 0.0
    %v10659 = vmax.f32 %v10627, 0.0
    %v10660 = vmax.f32 %v10628, 0.0
    %v10661 = vmax.f32 %v10629, 0.0
    %v10662 = vmax.f32 %v10630, 0.0
    %v10663 = vmax.f32 %v10631, 0.0
    %v10664 = vmax.f32 %v10632, 0.0
    %v10665 = vmax.f32 %v10633, 0.0
    %v10666 = vmax.f32 %v10634, 0.0
    %v10667 = vmax.f32 %v10635, 0.0
    %v10668 = vmax.f32 %v10636, 0.0
    %v10669 = vmax.f32 %v10637, 0.0
    %v10670 = vmax.f32 %v10638, 0.0
    %v10671 = vmax.f32 %v10639, 0.0
    %v10672 = vmax.f32 %v10640, 0.0
    %v10673 = vmax.f32 %v10641, 0.0
    %10674 = vst [vmem:[#allocation6] sm:$0xff] %v10642
    %10675 = vst [vmem:[#allocation6 + $0x8] sm:$0xff] %v10643
    %10676 = vst [vmem:[#allocation6 + $0x10] sm:$0xff] %v10644
    %10677 = vst [vmem:[#allocation6 + $0x18] sm:$0xff] %v10645
    %10678 = vst [vmem:[#allocation6 + $0x20] sm:$0xff] %v10646
    %10679 = vst [vmem:[#allocation6 + $0x28] sm:$0xff] %v10647
    %10680 = vst [vmem:[#allocation6 + $0x30] sm:$0xff] %v10648
    %10681 = vst [vmem:[#allocation6 + $0x38] sm:$0xff] %v10649
    %10682 = vst [vmem:[#allocation6 + $0x40] sm:$0xff] %v10650
    %10683 = vst [vmem:[#allocation6 + $0x48] sm:$0xff] %v10651
    %10684 = vst [vmem:[#allocation6 + $0x50] sm:$0xff] %v10652
    %10685 = vst [vmem:[#allocation6 + $0x58] sm:$0xff] %v10653
    %10686 = vst [vmem:[#allocation6 + $0x60] sm:$0xff] %v10654
    %10687 = vst [vmem:[#allocation6 + $0x68] sm:$0xff] %v10655
    %10688 = vst [vmem:[#allocation6 + $0x70] sm:$0xff] %v10656
    %10689 = vst [vmem:[#allocation6 + $0x78] sm:$0xff] %v10657
    %10690 = vst [vmem:[#allocation6 + $0x80] sm:$0xff] %v10658
    %10691 = vst [vmem:[#allocation6 + $0x88] sm:$0xff] %v10659
    %10692 = vst [vmem:[#allocation6 + $0x90] sm:$0xff] %v10660
    %10693 = vst [vmem:[#allocation6 + $0x98] sm:$0xff] %v10661
    %10694 = vst [vmem:[#allocation6 + $0xa0] sm:$0xff] %v10662
    %10695 = vst [vmem:[#allocation6 + $0xa8] sm:$0xff] %v10663
    %10696 = vst [vmem:[#allocation6 + $0xb0] sm:$0xff] %v10664
    %10697 = vst [vmem:[#allocation6 + $0xb8] sm:$0xff] %v10665
    %10698 = vst [vmem:[#allocation6 + $0xc0] sm:$0xff] %v10666
    %10699 = vst [vmem:[#allocation6 + $0xc8] sm:$0xff] %v10667
    %10700 = vst [vmem:[#allocation6 + $0xd0] sm:$0xff] %v10668
    %10701 = vst [vmem:[#allocation6 + $0xd8] sm:$0xff] %v10669
    %10702 = vst [vmem:[#allocation6 + $0xe0] sm:$0xff] %v10670
    %10703 = vst [vmem:[#allocation6 + $0xe8] sm:$0xff] %v10671
    %10704 = vst [vmem:[#allocation6 + $0xf0] sm:$0xff] %v10672
    %10705 = vst [vmem:[#allocation6 + $0xf8] sm:$0xff] %v10673
    // Predicated region
    $region78: #{tpu_custom_call.1} parent=1 // pred_check
      _
    $region79: #{tpu_custom_call.1} parent=1 // pred_check_branch
      %10707 = sbr.rel (0) target = $region81
    $region80: #{tpu_custom_call.1} parent=1 // pred_region
      %s10709 = ssub.s32 4096, 4096
      %10710 = vsyncadd [#allocation5], %s10709
      %s10711 = sshll.u32 [#allocation6], 4
      %s10712 = int_to_ptr.vmem [resolvable:$true] %s10711
      %10717 = dma.vmem_to_hbm [thread:$0]  %s10712, 4096, %s18, [#allocation5], 512, 512, 32
    $region81: #{tpu_custom_call.1} parent=1 // pred_fallthru
      _
    // Predicated region
    $region82: #{tpu_custom_call.1} parent=1 // pred_check
      _
    $region83: #{tpu_custom_call.1} parent=1 // pred_check_branch
      %10719 = sbr.rel (0) target = $region85
    $region84: #{tpu_custom_call.1} parent=1 // pred_region
      %10720 = dma.done [#allocation5], 4096
    $region85: #{tpu_custom_call.1} parent=1 // pred_fallthru
      _
    %10721 = vsyncpa [#allocation4], 1
    %10722 = vsyncpa [#allocation5], 1

</llo_original>
